<compile_context>
chip_gen: v7x
topology: tpu7x:2x2x1
jax: 0.10.0
libtpu: 0.0.40
codegen_flags: <defaults>
</compile_context>

<pallas_src>
import functools

import jax
import jax.numpy as jnp
from jax import lax
from jax.experimental import pallas as pl
from jax.experimental.pallas import tpu as pltpu

# ---------------------------------------------------------------------------
# Constants
# ---------------------------------------------------------------------------
LANE = 128                 # TPU lane width
TM = 512                   # edges per tile (feeds the 256-wide MXU, amortizes grid overhead)
NC = 2                     # edge-split "parallel" axis (megacore on v7x; harmless on v5e/v6e)
S = 32                     # stat_dim (fixed by the architecture)
SS = S * S                 # 1024  (Xi output width)
KPAD = 128                 # padded edge-feature width (2*ln + 10 -> 128)
NCOL = SS + LANE           # 1152  (merged Xi|Rou output width)
MU = 0.9
# Flip to jnp.bfloat16 on v6e/v7x for ~2x MXU throughput / half the operand DMA
# bytes (accumulation stays f32; the bf16 path is exercised by the smoke test
# in __main__).  Kept f32 by default for exact parity with the f32 reference.
COMPUTE_DTYPE = jnp.float32


# ---------------------------------------------------------------------------
# Fused GNN propagation step kernel (gather + Hw + AggrSum)
# ---------------------------------------------------------------------------
def fused_gnn_step_kernel(x_ref, scale_ref, gidx_ref, nids_ref, hrep_ref,
                          w_ref, b_ref, red_ref, o_ref):
    """One tile of TM edges; accumulates destination-node messages into o_ref.

    o[v, i] += sum_{e in tile, x_neis[e] == v}
                 scale[e] * sum_j tanh(X W_xi + b_xi)[e, i*S+j] * H[x_node[e]-1, j]
                 + tanh(X W_rou + b_rou)[e, i]          (i < S; pad lanes stay 0)
    """
    @pl.when(pl.program_id(1) == 0)          # first edge tile of this core
    def _init():
        o_ref[...] = jnp.zeros_like(o_ref)

    cdt = x_ref.dtype                         # compute dtype (f32 or bf16)
    tm = x_ref.shape[0]
    v_pad = hrep_ref.shape[0]
    ss = red_ref.shape[0]

    # --- per-edge gather of the lane-replicated node state (one-hot @ MXU) ----
    # hrep_ref[v, i*S+j] == H[v, j]  (tiled once per T step in the wrapper), so
    # the replication needed for the batched mat-vec is free inside this matmul.
    v_iota = lax.broadcasted_iota(jnp.int32, (tm, v_pad), 1)
    gmask = (gidx_ref[...] == v_iota).astype(cdt)                    # (TM, v_pad)
    h_rep = jnp.dot(gmask, hrep_ref[...],
                    preferred_element_type=jnp.float32)              # (TM, SS)

    # --- merged Xi | Rou: single matmul, single tanh ---------------------------
    y = jnp.tanh(jnp.dot(x_ref[...], w_ref[...],
                         preferred_element_type=jnp.float32)
                 + b_ref[...])                                       # (TM, SS+LANE)
    xi = y[:, :ss]                                                   # (TM, SS)
    rou = y[:, ss:]                                                  # (TM, LANE), pad lanes 0

    # --- batched mat-vec as elementwise product + block reduce (MXU) ----------
    msg = jnp.dot((xi * h_rep).astype(cdt), red_ref[...],
                  preferred_element_type=jnp.float32)                # (TM, LANE), pad lanes 0
    out_e = scale_ref[...] * msg + rou                               # (TM, LANE)

    # --- fused AggrSum: one-hot scatter-add to destination nodes (MXU) --------
    # Preserves the original off-by-one quirk: nids holds the 1-indexed X_Neis,
    # compared against 0-based rows, so row 0 never receives messages and padded
    # edges (sentinel -1) never match any row.
    n_iota = lax.broadcasted_iota(jnp.int32, (o_ref.shape[0], tm), 0)
    smask = (nids_ref[...] == n_iota).astype(cdt)                    # (v_pad, TM)
    o_ref[...] += jnp.dot(smask, out_e.astype(cdt),
                          preferred_element_type=jnp.float32)


def fused_gnn_step(x_pad, scale, gather_idx, neis_ids, h_rep_nodes, prepped):
    """Run one full propagation step; returns the new (v_pad, LANE) node state."""
    e_pad = x_pad.shape[0]
    v_pad = h_rep_nodes.shape[0]
    tpc = e_pad // (NC * TM)                  # edge tiles per core
    row = lambda c, i: (c * tpc + i, 0)
    col = lambda c, i: (0, c * tpc + i)
    const = lambda c, i: (0, 0)

    out = pl.pallas_call(
        fused_gnn_step_kernel,
        out_shape=jax.ShapeDtypeStruct((NC * v_pad, LANE), jnp.float32),
        grid_spec=pltpu.PrefetchScalarGridSpec(
            num_scalar_prefetch=0,
            grid=(NC, tpc),
            in_specs=[
                pl.BlockSpec((TM, KPAD), row),       # edge features (zero-padded lanes)
                pl.BlockSpec((TM, 1), row),          # mu / s / dg per edge (0 for pad edges)
                pl.BlockSpec((TM, 1), row),          # gather ids = x_node - 1 (int32)
                pl.BlockSpec((1, TM), col),          # scatter ids = x_neis (1-indexed, -1 pad)
                pl.BlockSpec((v_pad, SS), const),    # lane-replicated node state
                pl.BlockSpec((KPAD, NCOL), const),   # merged [W_xi | W_rou] (pre-transposed)
                pl.BlockSpec((1, NCOL), const),      # merged [b_xi | b_rou]
                pl.BlockSpec((SS, LANE), const),     # RED block-reduce matrix (pad cols 0)
            ],
            out_specs=pl.BlockSpec((v_pad, LANE), lambda c, i: (c, 0)),
        ),
        compiler_params=pltpu.CompilerParams(
            # outer axis: 2-way edge split (megacore on v7x, benign loop elsewhere)
            # inner axis: reduction over edge tiles into the resident accumulator
            dimension_semantics=("parallel", "arbitrary"),
            vmem_limit_bytes=32 * 1024 * 1024,
        ),
    )(x_pad, scale, gather_idx, neis_ids, h_rep_nodes,
      prepped["w_combo"], prepped["b_combo"], prepped["red"])
    # Per-core partial node accumulators -> tiny XLA add.
    return out.reshape(NC, v_pad, LANE).sum(axis=0)


# ---------------------------------------------------------------------------
# One-time parameter preparation (hoists transposes / padding / merging)
# ---------------------------------------------------------------------------
def prep_gnn_params(raw, feat_dim, dtype=COMPUTE_DTYPE):
    ln = feat_dim
    in_f = 2 * ln + 10
    # Merged [W_xi | W_rou] in (in_features, out_features) layout, zero-padded
    # to (KPAD, NCOL).  Rou acts on neis_embeds == X[:, ln:2*ln].
    w = jnp.zeros((KPAD, NCOL), jnp.float32)
    w = w.at[:in_f, :SS].set(raw["xi_w"].T)
    w = w.at[ln:2 * ln, SS:SS + S].set(raw["rou_w"].T)
    b = jnp.zeros((1, NCOL), jnp.float32)
    b = b.at[0, :SS].set(raw["xi_b"])
    b = b.at[0, SS:SS + S].set(raw["rou_b"])
    # RED[k, i] = 1 iff k // S == i: segment-sum of S-sized blocks; pad cols are 0.
    k_idx = lax.broadcasted_iota(jnp.int32, (SS, LANE), 0)
    i_idx = lax.broadcasted_iota(jnp.int32, (SS, LANE), 1)
    red = ((k_idx // S) == i_idx).astype(jnp.float32)
    return {
        "w_combo": w.astype(dtype),
        "b_combo": b,                       # bias added post f32-accum -> keep f32
        "red": red.astype(dtype),           # cast so the K=1024 reduce gets bf16 too
    }


# ---------------------------------------------------------------------------
# Edge-input preparation (XLA glue, built once per graph)
# ---------------------------------------------------------------------------
def build_edge_inputs(feat_matrix, x_node, x_neis, edge_type_index, dg_list,
                      dtype=COMPUTE_DTYPE):
    V, ln = feat_matrix.shape
    E = x_node.shape[0]
    in_f = 2 * ln + 10
    e_pad = ((E + NC * TM - 1) // (NC * TM)) * (NC * TM)
    v_pad = ((V + LANE - 1) // LANE) * LANE   # 128-aligned -> all one-hot matmuls aligned
    # TODO(synk): row gathers / one-hot edge-type encoding are left to XLA.
    node_embeds = feat_matrix[x_node - 1]
    neis_embeds = feat_matrix[x_neis - 1]
    edge_onehot = jax.nn.one_hot(edge_type_index - 1, 10, dtype=jnp.float32)
    x_feat = jnp.concatenate([node_embeds, neis_embeds, edge_onehot], axis=1)

    x_pad = (jnp.zeros((e_pad, KPAD), jnp.float32)
             .at[:E, :in_f].set(x_feat).astype(dtype))
    scale = jnp.zeros((e_pad, 1), jnp.float32).at[:E, 0].set(MU / S / dg_list)
    gather_idx = (jnp.zeros((e_pad, 1), jnp.int32)
                  .at[:E, 0].set(x_node.astype(jnp.int32) - 1))
    # The original AggrSum compares the *1-indexed* X_Neis against node ids
    # 0..V-1 (its off-by-one quirk); we preserve that.  -1 marks padded edges
    # (never matches the non-negative node iota, so pad rows never contribute).
    neis_ids = (jnp.full((1, e_pad), -1, jnp.int32)
                .at[0, :E].set(x_neis.astype(jnp.int32)))
    return dict(x_pad=x_pad, scale=scale, gather_idx=gather_idx, neis_ids=neis_ids,
                x_feat=x_feat, neis_embeds=neis_embeds,
                e_pad=e_pad, v_pad=v_pad, E=E, V=V)


# ---------------------------------------------------------------------------
# GNN (OriLinearGNN) forward — fused Pallas step + thin XLA glue
# ---------------------------------------------------------------------------
def gnn_forward(raw, prepped, feat_matrix, x_node, x_neis, edge_type_index,
                dg_list, key_h, T, dtype=COMPUTE_DTYPE):
    g = build_edge_inputs(feat_matrix, x_node, x_neis, edge_type_index, dg_list, dtype)
    # The original uses torch.rand for the initial state; we use a fixed PRNG key.
    h = (jnp.zeros((g["v_pad"], LANE), jnp.float32)
         .at[:g["V"], :S].set(jax.random.uniform(key_h, (g["V"], S), dtype=jnp.float32)))

    for _ in range(T):
        # Tiny (v_pad, 32) -> (v_pad, 1024) lane replication once per step (XLA);
        # the per-edge gather + replication then happens inside the kernel.
        h_rep_nodes = jnp.tile(h[:, :S], (1, S)).astype(dtype)
        h = fused_gnn_step(g["x_pad"], g["scale"], g["gather_idx"], g["neis_ids"],
                           h_rep_nodes, prepped)

    h = h[:g["V"], :S]
    # Attention readout — (V, 32) x (32, 1): too small to beat XLA fusion.
    logits = jnp.dot(h, raw["attn_w"].T) + raw["attn_b"]
    attn = jax.nn.softmax(logits[:, 0], axis=0)
    return jnp.tanh(jnp.sum(h * attn[:, None], axis=0))


def gnn_forward_reference(raw, feat_matrix, x_node, x_neis, edge_type_index,
                          dg_list, key_h, T):
    """Pure-JAX (high-precision) reference of OriLinearGNN.forward."""
    HIGH = jax.lax.Precision.HIGHEST
    V, _ = feat_matrix.shape
    node_embeds = feat_matrix[x_node - 1]
    neis_embeds = feat_matrix[x_neis - 1]
    edge_onehot = jax.nn.one_hot(edge_type_index - 1, 10, dtype=jnp.float32)
    x_feat = jnp.concatenate([node_embeds, neis_embeds, edge_onehot], axis=1)
    h = jax.random.uniform(key_h, (V, S), dtype=jnp.float32)
    for _ in range(T):
        h_e = h[x_node - 1]
        a = jnp.tanh(jnp.dot(x_feat, raw["xi_w"].T, precision=HIGH) + raw["xi_b"])
        a = a.reshape(-1, S, S) * (MU / S) / dg_list[:, None, None]
        b = jnp.tanh(jnp.dot(neis_embeds, raw["rou_w"].T, precision=HIGH) + raw["rou_b"])
        out = jnp.einsum("eij,ej->ei", a, h_e, precision=HIGH) + b
        mask = (x_neis[None, :] == jnp.arange(V, dtype=jnp.int32)[:, None]).astype(jnp.float32)
        h = jnp.dot(mask, out, precision=HIGH)
    logits = jnp.dot(h, raw["attn_w"].T, precision=HIGH) + raw["attn_b"]
    attn = jax.nn.softmax(logits[:, 0], axis=0)
    return jnp.tanh(jnp.sum(h * attn[:, None], axis=0))


# ---------------------------------------------------------------------------
# LSTM branch (plain JAX)
# ---------------------------------------------------------------------------
def lstm_layer(x_seq, p_fwd, p_bwd, hidden):
    """x_seq: (L, B, D) time-major.  Returns (L, B, 2*hidden)."""
    B = x_seq.shape[1]

    def direction(p, xs):
        w_ih, w_hh, b = p

        def step(carry, x_t):
            h, c = carry
            gates = jnp.dot(x_t, w_ih.T) + jnp.dot(h, w_hh.T) + b
            i, f, g, o = jnp.split(gates, 4, axis=-1)          # PyTorch gate order
            c = jax.nn.sigmoid(f) * c + jax.nn.sigmoid(i) * jnp.tanh(g)
            h = jax.nn.sigmoid(o) * jnp.tanh(c)
            return (h, c), h

        init = (jnp.zeros((B, hidden), jnp.float32), jnp.zeros((B, hidden), jnp.float32))
        _, hs = lax.scan(step, init, xs)
        return hs

    hs_f = direction(p_fwd, x_seq)
    hs_b = direction(p_bwd, x_seq[::-1])[::-1]
    return jnp.concatenate([hs_f, hs_b], axis=-1)


def lstm_net_forward(p, tokens):
    # TODO(synk): the sequential bidirectional LSTM recurrence stays in XLA
    # (lax.scan); it has no clean single-kernel Pallas mapping at these sizes.
    x = p["embed"][tokens]                     # (B, L, 128)
    xs = jnp.swapaxes(x, 0, 1)                 # time-major
    h1 = lstm_layer(xs, p["l0_f"], p["l0_b"], 256)
    h2 = lstm_layer(h1, p["l1_f"], p["l1_b"], 256)   # dropout inactive at inference
    last = h2[-1]                              # == output[:, -1, :] of batch-first LSTM
    f1 = jnp.tanh(jnp.dot(last, p["fc1_w"].T) + p["fc1_b"])
    f2 = jnp.tanh(jnp.dot(f1, p["fc2_w"].T) + p["fc2_b"])
    return jnp.tanh(jnp.mean(f2, axis=0))      # (32,)


# ---------------------------------------------------------------------------
# Hybrid_Network forward
# ---------------------------------------------------------------------------
def hybrid_forward(params, prepped, inputs, key_h, T):
    gnn_out = gnn_forward(params["gnn"], prepped,
                          inputs["feat_matrix"], inputs["x_node"], inputs["x_neis"],
                          inputs["edge_type_index"], inputs["dg_list"], key_h, T)
    lstm_out = lstm_net_forward(params["lstm"], inputs["lstm_feature"])
    net = jnp.concatenate([gnn_out.reshape(-1, S), lstm_out.reshape(-1, S)], axis=1)
    logits = jnp.dot(net, params["head_w"].T) + params["head_b"]
    return jax.nn.softmax(logits, axis=-1)     # (1, 2)


# ---------------------------------------------------------------------------
# Parameter init (PyTorch-style uniform init, deterministic)
# ---------------------------------------------------------------------------
def init_params(key, feat_dim, vocab):
    ln = feat_dim
    in_f = 2 * ln + 10
    keys = iter(jax.random.split(key, 32))

    def lin(out_f, fan_in):
        bound = 1.0 / (fan_in ** 0.5)
        w = jax.random.uniform(next(keys), (out_f, fan_in), jnp.float32, -bound, bound)
        b = jax.random.uniform(next(keys), (out_f,), jnp.float32, -bound, bound)
        return w, b

    def lstm_dir(in_dim, hidden):
        bound = 1.0 / (hidden ** 0.5)
        w_ih = jax.random.uniform(next(keys), (4 * hidden, in_dim), jnp.float32, -bound, bound)
        w_hh = jax.random.uniform(next(keys), (4 * hidden, hidden), jnp.float32, -bound, bound)
        b = jax.random.uniform(next(keys), (4 * hidden,), jnp.float32, -bound, bound)
        return (w_ih, w_hh, b)

    xi_w, xi_b = lin(SS, in_f)
    rou_w, rou_b = lin(S, ln)
    attn_w, attn_b = lin(1, S)
    head_w, head_b = lin(2, 2 * S)
    embed = jax.random.normal(next(keys), (vocab, 128), jnp.float32)
    fc1_w, fc1_b = lin(64, 512)
    fc2_w, fc2_b = lin(32, 64)
    return {
        "gnn": {"xi_w": xi_w, "xi_b": xi_b, "rou_w": rou_w, "rou_b": rou_b,
                "attn_w": attn_w, "attn_b": attn_b},
        "lstm": {"embed": embed,
                 "l0_f": lstm_dir(128, 256), "l0_b": lstm_dir(128, 256),
                 "l1_f": lstm_dir(512, 256), "l1_b": lstm_dir(512, 256),
                 "fc1_w": fc1_w, "fc1_b": fc1_b, "fc2_w": fc2_w, "fc2_b": fc2_b},
        "head_w": head_w, "head_b": head_b,
    }


# ---------------------------------------------------------------------------
# Demo / self-check
# ---------------------------------------------------------------------------
if __name__ == "__main__":
    FEAT_DIM = 16          # ln
    T = 2
    V = 24                 # graph nodes
    E = 600                # graph edges (padded to a multiple of NC*TM in the wrapper)
    VOCAB = 232            # TODO(synk): len(opcode_dict) normally comes from opcodes_encoding.txt.
    B_SEQ, L_SEQ = 4, 12

    root = jax.random.PRNGKey(0)
    k_param, k_graph, k_feat, k_dg, k_etype, k_tok, k_h = jax.random.split(root, 7)

    params = init_params(k_param, FEAT_DIM, VOCAB)
    prepped = prep_gnn_params(params["gnn"], FEAT_DIM)   # one-time merge/transpose/pad

    k_src, k_dst = jax.random.split(k_graph)
    feat_matrix = jax.random.normal(k_feat, (V, FEAT_DIM), jnp.float32)
    x_node = jax.random.randint(k_src, (E,), 1, V + 1, dtype=jnp.int32)      # 1-indexed
    x_neis = jax.random.randint(k_dst, (E,), 1, V + 1, dtype=jnp.int32)      # 1-indexed
    edge_type_index = jax.random.randint(k_etype, (E,), 1, 11, dtype=jnp.int32)
    dg_list = jax.random.randint(k_dg, (E,), 1, 5, dtype=jnp.int32).astype(jnp.float32)
    lstm_feature = jax.random.randint(k_tok, (B_SEQ, L_SEQ), 0, VOCAB, dtype=jnp.int32)

    inputs = {"feat_matrix": feat_matrix, "x_node": x_node, "x_neis": x_neis,
              "edge_type_index": edge_type_index, "dg_list": dg_list,
              "lstm_feature": lstm_feature}

    # Full forward pass (jitted; contains T fused pallas_calls).
    fwd = jax.jit(functools.partial(hybrid_forward, T=T))
    out = jax.block_until_ready(fwd(params, prepped, inputs, k_h))
    assert out.shape == (1, 2)

    HIGH = jax.lax.Precision.HIGHEST
    gp = params["gnn"]
    g = build_edge_inputs(feat_matrix, x_node, x_neis, edge_type_index, dg_list)

    # --- (1) one fused propagation step (gather + Hw + AggrSum) vs reference ---
    h0 = jax.random.uniform(k_h, (V, S), dtype=jnp.float32)
    h0_pad = jnp.zeros((g["v_pad"], LANE), jnp.float32).at[:V, :S].set(h0)
    hrep0 = jnp.tile(h0_pad[:, :S], (1, S)).astype(COMPUTE_DTYPE)
    h1 = jax.block_until_ready(
        fused_gnn_step(g["x_pad"], g["scale"], g["gather_idx"], g["neis_ids"],
                       hrep0, prepped))

    a_ref = jnp.tanh(jnp.dot(g["x_feat"], gp["xi_w"].T, precision=HIGH) + gp["xi_b"])
    a_ref = a_ref.reshape(E, S, S) * (MU / S) / dg_list[:, None, None]
    b_ref = jnp.tanh(jnp.dot(g["neis_embeds"], gp["rou_w"].T, precision=HIGH) + gp["rou_b"])
    edge_out_ref = jnp.einsum("eij,ej->ei", a_ref, h0[x_node - 1], precision=HIGH) + b_ref
    mask_ref = (x_neis[None, :] == jnp.arange(V, dtype=jnp.int32)[:, None]).astype(jnp.float32)
    h1_ref = jnp.dot(mask_ref, edge_out_ref, precision=HIGH)
    err1 = float(jnp.max(jnp.abs(h1[:V, :S] - h1_ref)))
    assert jnp.allclose(h1[:V, :S], h1_ref, atol=5e-2, rtol=5e-2), err1
    assert float(jnp.max(jnp.abs(h1[:, S:]))) <= 1e-6    # pad lanes stay exactly zero
    assert float(jnp.max(jnp.abs(h1[0, :]))) <= 1e-6     # AggrSum off-by-one quirk: node 0 gets nothing

    # --- (2) end-to-end GNN branch vs pure-JAX reference ----------------------
    gnn_pallas = gnn_forward(gp, prepped, feat_matrix, x_node, x_neis,
                             edge_type_index, dg_list, k_h, T)
    gnn_ref = gnn_forward_reference(gp, feat_matrix, x_node, x_neis,
                                    edge_type_index, dg_list, k_h, T)
    err2 = float(jnp.max(jnp.abs(gnn_pallas - gnn_ref)))
    # Loose bound: tolerates MXU contraction-precision differences across TPU
    # generations; the per-step check above pins the kernel math.
    assert jnp.allclose(gnn_pallas, gnn_ref, atol=5e-2, rtol=5e-2), err2

    # --- (3) bf16 fast-path smoke test (the v6e/v7x configuration) ------------
    prepped_bf = prep_gnn_params(gp, FEAT_DIM, dtype=jnp.bfloat16)
    g_bf = build_edge_inputs(feat_matrix, x_node, x_neis, edge_type_index, dg_list,
                             dtype=jnp.bfloat16)
    h1_bf = jax.block_until_ready(
        fused_gnn_step(g_bf["x_pad"], g_bf["scale"], g_bf["gather_idx"],
                       g_bf["neis_ids"], hrep0.astype(jnp.bfloat16), prepped_bf))
    assert bool(jnp.all(jnp.isfinite(h1_bf)))
    assert float(jnp.max(jnp.abs(h1_bf[:, S:]))) <= 1e-5
    assert float(jnp.max(jnp.abs(h1_bf[:V, :S] - h1[:V, :S]))) < 0.5   # loose bf16 bound

    # --- (4) final output sanity ------------------------------------------------
    assert bool(jnp.all(jnp.isfinite(out)))
    assert abs(float(jnp.sum(out)) - 1.0) < 1e-3       # softmax row sums to 1

    print("KERNEL_OK")
</pallas_src>

<mosaic_0001>
module attributes {stable_mosaic.version = 11 : i64} {
  func.func @fused_gnn_step_kernel(%arg0: i32, %arg1: i32, %arg2: memref<512x128xf32, #tpu.memory_space<vmem>>, %arg3: memref<512x1xf32, #tpu.memory_space<vmem>>, %arg4: memref<512x1xi32, #tpu.memory_space<vmem>>, %arg5: memref<1x512xi32, #tpu.memory_space<vmem>>, %arg6: memref<128x1024xf32, #tpu.memory_space<vmem>>, %arg7: memref<128x1152xf32, #tpu.memory_space<vmem>>, %arg8: memref<1x1152xf32, #tpu.memory_space<vmem>>, %arg9: memref<1024x128xf32, #tpu.memory_space<vmem>>, %arg10: memref<128x128xf32, #tpu.memory_space<vmem>>) attributes {dimension_semantics = [#tpu.dimension_semantics<parallel>, #tpu.dimension_semantics<arbitrary>], iteration_bounds = array<i64: 2, 1>, scalar_prefetch = 0 : i64, scratch_operands = 0 : i64, tpu.core_type = #tpu.core_type<tc>, window_params = [{transform_indices = @transform_0, window_bounds = array<i64: 512, 128>}, {transform_indices = @transform_1, window_bounds = array<i64: 512, 1>}, {transform_indices = @transform_2, window_bounds = array<i64: 512, 1>}, {transform_indices = @transform_3, window_bounds = array<i64: 1, 512>}, {pipeline_mode = #tpu.pipeline_mode<synchronous>, transform_indices = @transform_4, window_bounds = array<i64: 128, 1024>}, {pipeline_mode = #tpu.pipeline_mode<synchronous>, transform_indices = @transform_5, window_bounds = array<i64: 128, 1152>}, {pipeline_mode = #tpu.pipeline_mode<synchronous>, transform_indices = @transform_6, window_bounds = array<i64: 1, 1152>}, {pipeline_mode = #tpu.pipeline_mode<synchronous>, transform_indices = @transform_7, window_bounds = array<i64: 1024, 128>}, {transform_indices = @transform_8, window_bounds = array<i64: 128, 128>}]} {
    %c0_i32 = arith.constant 0 : i32
    %0 = arith.cmpi eq, %arg1, %c0_i32 : i32
    %1 = arith.extui %0 : i1 to i32
    %c0_i32_0 = arith.constant 0 : i32
    %2 = arith.cmpi ne, %1, %c0_i32_0 : i32
    scf.if %2 {
      %cst_23 = arith.constant 0.000000e+00 : f32
      %37 = vector.broadcast %cst_23 : f32 to vector<128x128xf32>
      %c0_24 = arith.constant 0 : index
      %c0_25 = arith.constant 0 : index
      %38 = vector.load %arg10[%c0_24, %c0_25] : memref<128x128xf32, #tpu.memory_space<vmem>>, vector<128x128xf32>
      tpu.vector_store %arg10[%c0_24, %c0_25], %37 {strides = array<i32>} : memref<128x128xf32, #tpu.memory_space<vmem>>, vector<128x128xf32>,
    } else {
    }
    %3 = tpu.iota {dimensions = array<i32: 1>} : vector<512x128xi32>
    %c0 = arith.constant 0 : index
    %c0_1 = arith.constant 0 : index
    %4 = vector.load %arg4[%c0, %c0_1] : memref<512x1xi32, #tpu.memory_space<vmem>>, vector<512x1xi32>
    %5 = vector.broadcast %4 : vector<512x1xi32> to vector<512x128xi32>
    %6 = arith.cmpi eq, %5, %3 : vector<512x128xi32>
    %7 = arith.extui %6 : vector<512x128xi1> to vector<512x128xi32>
    %8 = arith.sitofp %7 : vector<512x128xi32> to vector<512x128xf32>
    %c0_2 = arith.constant 0 : index
    %c0_3 = arith.constant 0 : index
    %9 = vector.load %arg6[%c0_2, %c0_3] : memref<128x1024xf32, #tpu.memory_space<vmem>>, vector<128x1024xf32>
    %cst = arith.constant dense<0.000000e+00> : vector<512x1024xf32>
    %10 = tpu.matmul %8, %9, %cst {dimension_numbers = #tpu.dot_dimension_numbers<[1], [0], [0], [1], [0, 0, 1, 1], [], []>} : vector<512x128xf32>, vector<128x1024xf32>, vector<512x1024xf32> -> vector<512x1024xf32>
    %c0_4 = arith.constant 0 : index
    %c0_5 = arith.constant 0 : index
    %11 = vector.load %arg2[%c0_4, %c0_5] : memref<512x128xf32, #tpu.memory_space<vmem>>, vector<512x128xf32>
    %c0_6 = arith.constant 0 : index
    %c0_7 = arith.constant 0 : index
    %12 = vector.load %arg7[%c0_6, %c0_7] : memref<128x1152xf32, #tpu.memory_space<vmem>>, vector<128x1152xf32>
    %cst_8 = arith.constant dense<0.000000e+00> : vector<512x1152xf32>
    %13 = tpu.matmul %11, %12, %cst_8 {dimension_numbers = #tpu.dot_dimension_numbers<[1], [0], [0], [1], [0, 0, 1, 1], [], []>} : vector<512x128xf32>, vector<128x1152xf32>, vector<512x1152xf32> -> vector<512x1152xf32>
    %c0_9 = arith.constant 0 : index
    %c0_10 = arith.constant 0 : index
    %14 = vector.load %arg8[%c0_9, %c0_10] : memref<1x1152xf32, #tpu.memory_space<vmem>>, vector<1x1152xf32>
    %15 = vector.broadcast %14 : vector<1x1152xf32> to vector<512x1152xf32>
    %16 = arith.addf %13, %15 : vector<512x1152xf32>
    %17 = math.tanh %16 : vector<512x1152xf32>
    %18 = vector.extract_strided_slice %17 {offsets = [0, 0], sizes = [512, 1024], strides = [1, 1]} : vector<512x1152xf32> to vector<512x1024xf32>
    %19 = vector.extract_strided_slice %17 {offsets = [0, 1024], sizes = [512, 128], strides = [1, 1]} : vector<512x1152xf32> to vector<512x128xf32>
    %20 = arith.mulf %18, %10 : vector<512x1024xf32>
    %c0_11 = arith.constant 0 : index
    %c0_12 = arith.constant 0 : index
    %21 = vector.load %arg9[%c0_11, %c0_12] : memref<1024x128xf32, #tpu.memory_space<vmem>>, vector<1024x128xf32>
    %cst_13 = arith.constant dense<0.000000e+00> : vector<512x128xf32>
    %22 = tpu.matmul %20, %21, %cst_13 {dimension_numbers = #tpu.dot_dimension_numbers<[1], [0], [0], [1], [0, 0, 1, 1], [], []>} : vector<512x1024xf32>, vector<1024x128xf32>, vector<512x128xf32> -> vector<512x128xf32>
    %c0_14 = arith.constant 0 : index
    %c0_15 = arith.constant 0 : index
    %23 = vector.load %arg3[%c0_14, %c0_15] : memref<512x1xf32, #tpu.memory_space<vmem>>, vector<512x1xf32>
    %24 = vector.broadcast %23 : vector<512x1xf32> to vector<512x128xf32>
    %25 = arith.mulf %24, %22 : vector<512x128xf32>
    %26 = arith.addf %25, %19 : vector<512x128xf32>
    %27 = tpu.iota {dimensions = array<i32: 0>} : vector<128x512xi32>
    %c0_16 = arith.constant 0 : index
    %c0_17 = arith.constant 0 : index
    %28 = vector.load %arg5[%c0_16, %c0_17] : memref<1x512xi32, #tpu.memory_space<vmem>>, vector<1x512xi32>
    %29 = vector.broadcast %28 : vector<1x512xi32> to vector<128x512xi32>
    %30 = arith.cmpi eq, %29, %27 : vector<128x512xi32>
    %31 = arith.extui %30 : vector<128x512xi1> to vector<128x512xi32>
    %32 = arith.sitofp %31 : vector<128x512xi32> to vector<128x512xf32>
    %c0_18 = arith.constant 0 : index
    %c0_19 = arith.constant 0 : index
    %33 = vector.load %arg10[%c0_18, %c0_19] : memref<128x128xf32, #tpu.memory_space<vmem>>, vector<128x128xf32>
    %cst_20 = arith.constant dense<0.000000e+00> : vector<128x128xf32>
    %34 = tpu.matmul %32, %26, %cst_20 {dimension_numbers = #tpu.dot_dimension_numbers<[1], [0], [0], [1], [0, 0, 1, 1], [], []>} : vector<128x512xf32>, vector<512x128xf32>, vector<128x128xf32> -> vector<128x128xf32>
    %35 = arith.addf %33, %34 : vector<128x128xf32>
    %c0_21 = arith.constant 0 : index
    %c0_22 = arith.constant 0 : index
    %36 = vector.load %arg10[%c0_21, %c0_22] : memref<128x128xf32, #tpu.memory_space<vmem>>, vector<128x128xf32>
    tpu.vector_store %arg10[%c0_21, %c0_22], %35 {strides = array<i32>} : memref<128x128xf32, #tpu.memory_space<vmem>>, vector<128x128xf32>,
    return
  }
  func.func @transform_0(%arg0: i32, %arg1: i32) -> (i32, i32) {
    %c1_i32 = arith.constant 1 : i32
    %0 = arith.muli %arg0, %c1_i32 : i32
    %1 = arith.addi %0, %arg1 : i32
    %c0_i32 = arith.constant 0 : i32
    %c0_i32_0 = arith.constant 0 : i32
    return %1, %c0_i32 : i32, i32
  }
  func.func @transform_1(%arg0: i32, %arg1: i32) -> (i32, i32) {
    %c1_i32 = arith.constant 1 : i32
    %0 = arith.muli %arg0, %c1_i32 : i32
    %1 = arith.addi %0, %arg1 : i32
    %c0_i32 = arith.constant 0 : i32
    %c0_i32_0 = arith.constant 0 : i32
    return %1, %c0_i32 : i32, i32
  }
  func.func @transform_2(%arg0: i32, %arg1: i32) -> (i32, i32) {
    %c1_i32 = arith.constant 1 : i32
    %0 = arith.muli %arg0, %c1_i32 : i32
    %1 = arith.addi %0, %arg1 : i32
    %c0_i32 = arith.constant 0 : i32
    %c0_i32_0 = arith.constant 0 : i32
    return %1, %c0_i32 : i32, i32
  }
  func.func @transform_3(%arg0: i32, %arg1: i32) -> (i32, i32) {
    %c1_i32 = arith.constant 1 : i32
    %0 = arith.muli %arg0, %c1_i32 : i32
    %1 = arith.addi %0, %arg1 : i32
    %c0_i32 = arith.constant 0 : i32
    %c0_i32_0 = arith.constant 0 : i32
    return %c0_i32, %1 : i32, i32
  }
  func.func @transform_4(%arg0: i32, %arg1: i32) -> (i32, i32) {
    %c0_i32 = arith.constant 0 : i32
    %c0_i32_0 = arith.constant 0 : i32
    %c0_i32_1 = arith.constant 0 : i32
    return %c0_i32, %c0_i32_0 : i32, i32
  }
  func.func @transform_5(%arg0: i32, %arg1: i32) -> (i32, i32) {
    %c0_i32 = arith.constant 0 : i32
    %c0_i32_0 = arith.constant 0 : i32
    %c0_i32_1 = arith.constant 0 : i32
    return %c0_i32, %c0_i32_0 : i32, i32
  }
  func.func @transform_6(%arg0: i32, %arg1: i32) -> (i32, i32) {
    %c0_i32 = arith.constant 0 : i32
    %c0_i32_0 = arith.constant 0 : i32
    %c0_i32_1 = arith.constant 0 : i32
    return %c0_i32, %c0_i32_0 : i32, i32
  }
  func.func @transform_7(%arg0: i32, %arg1: i32) -> (i32, i32) {
    %c0_i32 = arith.constant 0 : i32
    %c0_i32_0 = arith.constant 0 : i32
    %c0_i32_1 = arith.constant 0 : i32
    return %c0_i32, %c0_i32_0 : i32, i32
  }
  func.func @transform_8(%arg0: i32, %arg1: i32) -> (i32, i32) {
    %c0_i32 = arith.constant 0 : i32
    %c0_i32_0 = arith.constant 0 : i32
    return %arg0, %c0_i32 : i32, i32
  }
}

</mosaic_0001>

<llo_original>
// kernel: custom-call.3
$region0: #{custom-call.3}
  %s0 = inlined_call_operand.vmem [shape: f32[4,256], index: 0, kind: output, shape index: {}]

// kernel: custom-call.2
$region0: #{custom-call.2}
  %s0 = inlined_call_operand.vmem [shape: bf16[4,256], index: 0, kind: output, shape index: {}]

// kernel: hybrid_forward.2
$region0: #{hybrid_forward.2}
  #allocation0 [shape = 'u32[]', space=smem, size = 0x4, offset = 0x4, fixed_abs, tag = 'smem constant byte address 0x4 - core index']
  #allocation1 [shape = 'u32[144,128]{1,0:T(1,128)}', space=vmem, size = 0x12000, scoped, tag = 'internal scratch']
  %s0 = inlined_call_operand.vmem [shape: f32[1024,128], index: 0, kind: input, shape index: {}]
  %s1 = inlined_call_operand.vmem [shape: f32[1024,1], index: 1, kind: input, shape index: {}]
  %s2 = inlined_call_operand.vmem [shape: s32[1024,1], index: 2, kind: input, shape index: {}]
  %s3 = inlined_call_operand.vmem [shape: s32[1,1024], index: 3, kind: input, shape index: {}]
  %s4 = inlined_call_operand.vmem [shape: f32[128,1024], index: 4, kind: input, shape index: {}]
  %s5 = inlined_call_operand.vmem [shape: f32[128,1152], index: 5, kind: input, shape index: {}]
  %s6 = inlined_call_operand.vmem [shape: f32[1,1152], index: 6, kind: input, shape index: {}]
  %s7 = inlined_call_operand.vmem [shape: f32[1024,128], index: 7, kind: input, shape index: {}]
  %s8 = inlined_call_operand.vmem [shape: f32[256,128], index: 8, kind: output, shape index: {}]
  %s9 = sld [smem:[#allocation0]]
  $region69: #{hybrid_forward.2} parent=0
    _
  %s11 = ssub.s32 1, %s9
  %s12 = scalar_select 0, %s11, %s9
  loop: start=0, step=1, limit=4
  $region2: #{hybrid_forward.2} parent=0 // loop_pre_header
    _
  $region3: #{hybrid_forward.2} parent=0 // loop_header
    %s14 = sphi 0, %s18
    %p15 = scmp.ge.s32.totalorder %s14, 4
    %s21 = sphi 0, %s33
    %s22 = sphi 0, %s29
    %s23 = sphi 0, %s21
    %s24 = sphi 0, %s22
    %s25 = sphi 0, %s23
    %s26 = sphi 0, %s24
    %s38 = sphi 0, %s40
    %s41 = sphi 0, %s38
    %s42 = sphi 0, %s41
    %s58 = sphi 0, %s42
    %s66 = sphi 0, %s68
    %s69 = sphi 0, %s66
    %s70 = sphi 0, %s69
    %s86 = sphi 0, %s70
    %s94 = sphi 0, %s96
    %s97 = sphi 0, %s94
    %s98 = sphi 0, %s97
    %s114 = sphi 0, %s98
    %s122 = sphi 0, %s124
    %s125 = sphi 0, %s122
    %s126 = sphi 0, %s125
    %s142 = sphi 0, %s126
    %s146 = sphi 0, %s146
    %s148 = sphi 0, %s146
    %s149 = sphi 0, %s148
    %s163 = sphi 0, %s149
    %s167 = sphi 0, %s167
    %s169 = sphi 0, %s167
    %s170 = sphi 0, %s169
    %s184 = sphi 0, %s170
    %s188 = sphi 0, %s188
    %s190 = sphi 0, %s188
    %s191 = sphi 0, %s190
    %s205 = sphi 0, %s191
    %s209 = sphi 0, %s209
    %s211 = sphi 0, %s209
    %s212 = sphi 0, %s211
    %s226 = sphi 0, %s212
    %s232 = sphi 0, %s234
    %s235 = sphi 0, %s232
    %s236 = sphi 0, %s235
    %s252 = sphi 0, %s236
  $region4: #{hybrid_forward.2} parent=0 // loop_header_branch
    %17 = sbr.rel (%p15) target = $region8
  $region5: #{hybrid_forward.2} parent=0 // loop_body
    %s19 = ssub.s32 %s14, 1
    %s20 = ssub.s32 %s14, 2
    %s27 = sadd.s32 1, %s22
    %p28 = scmp.ge.s32.totalorder %s27, 1
    %s29 = scalar_select %p28, 0, %s27
    %s30 = sadd.s32 1, %s21
    %s31 = scalar_select %p28, %s30, %s21
    %p32 = scmp.ge.s32.totalorder %s31, 2
    %s33 = scalar_select %p32, 0, %s31
    %s34 = sadd.s32 %s21, %s22
    %s35 = sadd.s32 %s33, %s29
    %s36 = ssub.s32 %s34, %s35
    %p37 = scmp.eq.s32.totalorder %s36, 0
    %s39 = sadd.s32 %s38, 1
    %s40 = scalar_select %p37, %s38, %s39
    %p43 = pneg %p37
    %p44 = scmp.eq.s32.totalorder %s14, 1
    %p45 = por %p43, %p44
    %p46 = scmp.ne.s32.totalorder %s38, %s41
    %p47 = scmp.eq.s32.totalorder %s14, 0
    %p48 = por %p46, %p47
    %p49 = scmp.ne.s32.totalorder %s38, %s41
    %p50 = scmp.eq.s32.totalorder %s19, 1
    %p51 = por %p49, %p50
    %p52 = scmp.ne.s32.totalorder %s41, %s42
    %p53 = scmp.eq.s32.totalorder %s19, 0
    %p54 = por %p52, %p53
    %p55 = scmp.ne.s32.totalorder %s41, %s42
    %p56 = scmp.eq.s32.totalorder %s20, 1
    %p57 = por %p55, %p56
    %p59 = scmp.ne.s32.totalorder %s42, %s58
    %p60 = scmp.eq.s32.totalorder %s20, 0
    %p61 = por %p59, %p60
    %s62 = sadd.s32 %s21, %s22
    %s63 = sadd.s32 %s33, %s29
    %s64 = ssub.s32 %s62, %s63
    %p65 = scmp.eq.s32.totalorder %s64, 0
    %s67 = sadd.s32 %s66, 1
    %s68 = scalar_select %p65, %s66, %s67
    %p71 = pneg %p65
    %p72 = scmp.eq.s32.totalorder %s14, 1
    %p73 = por %p71, %p72
    %p74 = scmp.ne.s32.totalorder %s66, %s69
    %p75 = scmp.eq.s32.totalorder %s14, 0
    %p76 = por %p74, %p75
    %p77 = scmp.ne.s32.totalorder %s66, %s69
    %p78 = scmp.eq.s32.totalorder %s19, 1
    %p79 = por %p77, %p78
    %p80 = scmp.ne.s32.totalorder %s69, %s70
    %p81 = scmp.eq.s32.totalorder %s19, 0
    %p82 = por %p80, %p81
    %p83 = scmp.ne.s32.totalorder %s69, %s70
    %p84 = scmp.eq.s32.totalorder %s20, 1
    %p85 = por %p83, %p84
    %p87 = scmp.ne.s32.totalorder %s70, %s86
    %p88 = scmp.eq.s32.totalorder %s20, 0
    %p89 = por %p87, %p88
    %s90 = sadd.s32 %s21, %s22
    %s91 = sadd.s32 %s33, %s29
    %s92 = ssub.s32 %s90, %s91
    %p93 = scmp.eq.s32.totalorder %s92, 0
    %s95 = sadd.s32 %s94, 1
    %s96 = scalar_select %p93, %s94, %s95
    %p99 = pneg %p93
    %p100 = scmp.eq.s32.totalorder %s14, 1
    %p101 = por %p99, %p100
    %p102 = scmp.ne.s32.totalorder %s94, %s97
    %p103 = scmp.eq.s32.totalorder %s14, 0
    %p104 = por %p102, %p103
    %p105 = scmp.ne.s32.totalorder %s94, %s97
    %p106 = scmp.eq.s32.totalorder %s19, 1
    %p107 = por %p105, %p106
    %p108 = scmp.ne.s32.totalorder %s97, %s98
    %p109 = scmp.eq.s32.totalorder %s19, 0
    %p110 = por %p108, %p109
    %p111 = scmp.ne.s32.totalorder %s97, %s98
    %p112 = scmp.eq.s32.totalorder %s20, 1
    %p113 = por %p111, %p112
    %p115 = scmp.ne.s32.totalorder %s98, %s114
    %p116 = scmp.eq.s32.totalorder %s20, 0
    %p117 = por %p115, %p116
    %s118 = sadd.s32 %s21, %s22
    %s119 = sadd.s32 %s33, %s29
    %s120 = ssub.s32 %s118, %s119
    %p121 = scmp.eq.s32.totalorder %s120, 0
    %s123 = sadd.s32 %s122, 1
    %s124 = scalar_select %p121, %s122, %s123
    %p127 = pneg %p121
    %p128 = scmp.eq.s32.totalorder %s14, 1
    %p129 = por %p127, %p128
    %p130 = scmp.ne.s32.totalorder %s122, %s125
    %p131 = scmp.eq.s32.totalorder %s14, 0
    %p132 = por %p130, %p131
    %p133 = scmp.ne.s32.totalorder %s122, %s125
    %p134 = scmp.eq.s32.totalorder %s19, 1
    %p135 = por %p133, %p134
    %p136 = scmp.ne.s32.totalorder %s125, %s126
    %p137 = scmp.eq.s32.totalorder %s19, 0
    %p138 = por %p136, %p137
    %p139 = scmp.ne.s32.totalorder %s125, %s126
    %p140 = scmp.eq.s32.totalorder %s20, 1
    %p141 = por %p139, %p140
    %p143 = scmp.ne.s32.totalorder %s126, %s142
    %p144 = scmp.eq.s32.totalorder %s20, 0
    %p145 = por %p143, %p144
    %s147 = sadd.s32 %s146, 1
    %p150 = scmp.eq.s32.totalorder %s14, 1
    %p151 = scmp.ne.s32.totalorder %s146, %s148
    %p152 = scmp.eq.s32.totalorder %s14, 0
    %p153 = por %p151, %p152
    %p154 = scmp.ne.s32.totalorder %s146, %s148
    %p155 = scmp.eq.s32.totalorder %s19, 1
    %p156 = por %p154, %p155
    %p157 = scmp.ne.s32.totalorder %s148, %s149
    %p158 = scmp.eq.s32.totalorder %s19, 0
    %p159 = por %p157, %p158
    %p160 = scmp.ne.s32.totalorder %s148, %s149
    %p161 = scmp.eq.s32.totalorder %s20, 1
    %p162 = por %p160, %p161
    %p164 = scmp.ne.s32.totalorder %s149, %s163
    %p165 = scmp.eq.s32.totalorder %s20, 0
    %p166 = por %p164, %p165
    %s168 = sadd.s32 %s167, 1
    %p171 = scmp.eq.s32.totalorder %s14, 1
    %p172 = scmp.ne.s32.totalorder %s167, %s169
    %p173 = scmp.eq.s32.totalorder %s14, 0
    %p174 = por %p172, %p173
    %p175 = scmp.ne.s32.totalorder %s167, %s169
    %p176 = scmp.eq.s32.totalorder %s19, 1
    %p177 = por %p175, %p176
    %p178 = scmp.ne.s32.totalorder %s169, %s170
    %p179 = scmp.eq.s32.totalorder %s19, 0
    %p180 = por %p178, %p179
    %p181 = scmp.ne.s32.totalorder %s169, %s170
    %p182 = scmp.eq.s32.totalorder %s20, 1
    %p183 = por %p181, %p182
    %p185 = scmp.ne.s32.totalorder %s170, %s184
    %p186 = scmp.eq.s32.totalorder %s20, 0
    %p187 = por %p185, %p186
    %s189 = sadd.s32 %s188, 1
    %p192 = scmp.eq.s32.totalorder %s14, 1
    %p193 = scmp.ne.s32.totalorder %s188, %s190
    %p194 = scmp.eq.s32.totalorder %s14, 0
    %p195 = por %p193, %p194
    %p196 = scmp.ne.s32.totalorder %s188, %s190
    %p197 = scmp.eq.s32.totalorder %s19, 1
    %p198 = por %p196, %p197
    %p199 = scmp.ne.s32.totalorder %s190, %s191
    %p200 = scmp.eq.s32.totalorder %s19, 0
    %p201 = por %p199, %p200
    %p202 = scmp.ne.s32.totalorder %s190, %s191
    %p203 = scmp.eq.s32.totalorder %s20, 1
    %p204 = por %p202, %p203
    %p206 = scmp.ne.s32.totalorder %s191, %s205
    %p207 = scmp.eq.s32.totalorder %s20, 0
    %p208 = por %p206, %p207
    %s210 = sadd.s32 %s209, 1
    %p213 = scmp.eq.s32.totalorder %s14, 1
    %p214 = scmp.ne.s32.totalorder %s209, %s211
    %p215 = scmp.eq.s32.totalorder %s14, 0
    %p216 = por %p214, %p215
    %p217 = scmp.ne.s32.totalorder %s209, %s211
    %p218 = scmp.eq.s32.totalorder %s19, 1
    %p219 = por %p217, %p218
    %p220 = scmp.ne.s32.totalorder %s211, %s212
    %p221 = scmp.eq.s32.totalorder %s19, 0
    %p222 = por %p220, %p221
    %p223 = scmp.ne.s32.totalorder %s211, %s212
    %p224 = scmp.eq.s32.totalorder %s20, 1
    %p225 = por %p223, %p224
    %p227 = scmp.ne.s32.totalorder %s212, %s226
    %p228 = scmp.eq.s32.totalorder %s20, 0
    %p229 = por %p227, %p228
    %s230 = ssub.s32 %s21, %s33
    %p231 = scmp.eq.s32.totalorder %s230, 0
    %s233 = sadd.s32 %s232, 1
    %s234 = scalar_select %p231, %s232, %s233
    %p237 = pneg %p231
    %p238 = scmp.eq.s32.totalorder %s14, 1
    %p239 = por %p237, %p238
    %p240 = scmp.ne.s32.totalorder %s232, %s235
    %p241 = scmp.eq.s32.totalorder %s14, 0
    %p242 = por %p240, %p241
    %p243 = scmp.ne.s32.totalorder %s232, %s235
    %p244 = scmp.eq.s32.totalorder %s19, 1
    %p245 = por %p243, %p244
    %p246 = scmp.ne.s32.totalorder %s235, %s236
    %p247 = scmp.eq.s32.totalorder %s19, 0
    %p248 = por %p246, %p247
    %p249 = scmp.ne.s32.totalorder %s235, %s236
    %p250 = scmp.eq.s32.totalorder %s20, 1
    %p251 = por %p249, %p250
    %p253 = scmp.ne.s32.totalorder %s236, %s252
    %p254 = scmp.eq.s32.totalorder %s20, 0
    %p255 = por %p253, %p254
    %p256 = scmp.le.s32.totalorder 1, %s14
    %p257 = scmp.lt.s32.totalorder %s14, 3
    %p258 = pnand %p256, %p257
    %p259 = pneg %p258
    // Predicated region
    $region9: #{hybrid_forward.2} parent=5 // pred_check
      _
    $region10: #{hybrid_forward.2} parent=5 // pred_check_branch
      %261 = sbr.rel (%p258) target = $region12
    $region11: #{hybrid_forward.2} parent=5 // pred_region
      %s262 = ssub.s32 %s14, 1
      // Predicated region
      $region13: #{hybrid_forward.2} parent=11 // pred_check
        %p263 = pneg %p159
      $region14: #{hybrid_forward.2} parent=11 // pred_check_branch
        %265 = sbr.rel (%p263) target = $region16
      $region15: #{hybrid_forward.2} parent=11 // pred_region
        _
      $region16: #{hybrid_forward.2} parent=11 // pred_fallthru
        _
      // Predicated region
      $region17: #{hybrid_forward.2} parent=11 // pred_check
        %p266 = pneg %p180
      $region18: #{hybrid_forward.2} parent=11 // pred_check_branch
        %268 = sbr.rel (%p266) target = $region20
      $region19: #{hybrid_forward.2} parent=11 // pred_region
        _
      $region20: #{hybrid_forward.2} parent=11 // pred_fallthru
        _
      // Predicated region
      $region21: #{hybrid_forward.2} parent=11 // pred_check
        %p269 = pneg %p201
      $region22: #{hybrid_forward.2} parent=11 // pred_check_branch
        %271 = sbr.rel (%p269) target = $region24
      $region23: #{hybrid_forward.2} parent=11 // pred_region
        _
      $region24: #{hybrid_forward.2} parent=11 // pred_fallthru
        _
      // Predicated region
      $region25: #{hybrid_forward.2} parent=11 // pred_check
        %p272 = pneg %p222
      $region26: #{hybrid_forward.2} parent=11 // pred_check_branch
        %274 = sbr.rel (%p272) target = $region28
      $region27: #{hybrid_forward.2} parent=11 // pred_region
        _
      $region28: #{hybrid_forward.2} parent=11 // pred_fallthru
        _
    $region12: #{hybrid_forward.2} parent=5 // pred_fallthru
      _
    %p275 = scmp.lt.s32.totalorder %s14, 2
    // Predicated region
    $region29: #{hybrid_forward.2} parent=5 // pred_check
      %p276 = pneg %p275
    $region30: #{hybrid_forward.2} parent=5 // pred_check_branch
      %278 = sbr.rel (%p276) target = $region32
    $region31: #{hybrid_forward.2} parent=5 // pred_region
      // Predicated region
      $region33: #{hybrid_forward.2} parent=31 // pred_check
        %p279 = pneg %p48
      $region34: #{hybrid_forward.2} parent=31 // pred_check_branch
        %281 = sbr.rel (%p279) target = $region36
      $region35: #{hybrid_forward.2} parent=31 // pred_region
        %s282 = sadd.s32 %s21, %s22
        %s283 = smul.u32 64, %s282
        %p284 = scmp.lt.s32.totalorder %s283, 127
        %s285 = scalar_select %p284, %s283, 127
        %s286 = smul.addr %s285, 8
        %s287 = scalar_lea.vmem %s0, %s286
        %s288 = sadd.s32 %s21, %s22
        %s289 = smul.u32 64, %s288
      $region36: #{hybrid_forward.2} parent=31 // pred_fallthru
        _
      // Predicated region
      $region37: #{hybrid_forward.2} parent=31 // pred_check
        %p290 = pneg %p76
      $region38: #{hybrid_forward.2} parent=31 // pred_check_branch
        %292 = sbr.rel (%p290) target = $region40
      $region39: #{hybrid_forward.2} parent=31 // pred_region
        %s293 = sadd.s32 %s21, %s22
        %s294 = smul.u32 64, %s293
        %p295 = scmp.lt.s32.totalorder %s294, 127
        %s296 = scalar_select %p295, %s294, 127
        %s297 = smul.addr %s296, 8
        %s298 = scalar_lea.vmem %s1, %s297
        %s299 = sadd.s32 %s21, %s22
        %s300 = smul.u32 64, %s299
      $region40: #{hybrid_forward.2} parent=31 // pred_fallthru
        _
      // Predicated region
      $region41: #{hybrid_forward.2} parent=31 // pred_check
        %p301 = pneg %p104
      $region42: #{hybrid_forward.2} parent=31 // pred_check_branch
        %303 = sbr.rel (%p301) target = $region44
      $region43: #{hybrid_forward.2} parent=31 // pred_region
        %s304 = sadd.s32 %s21, %s22
        %s305 = smul.u32 64, %s304
        %p306 = scmp.lt.s32.totalorder %s305, 127
        %s307 = scalar_select %p306, %s305, 127
        %s308 = smul.addr %s307, 8
        %s309 = scalar_lea.vmem %s2, %s308
        %s310 = sadd.s32 %s21, %s22
        %s311 = smul.u32 64, %s310
      $region44: #{hybrid_forward.2} parent=31 // pred_fallthru
        _
      // Predicated region
      $region45: #{hybrid_forward.2} parent=31 // pred_check
        %p312 = pneg %p132
      $region46: #{hybrid_forward.2} parent=31 // pred_check_branch
        %314 = sbr.rel (%p312) target = $region48
      $region47: #{hybrid_forward.2} parent=31 // pred_region
        %s315 = sadd.s32 %s21, %s22
        %s316 = smul.u32 4, %s315
        %p317 = scmp.lt.s32.totalorder %s316, 7
        %s318 = scalar_select %p317, %s316, 7
        %s319 = scalar_lea.vmem %s3, %s318
        %s320 = sadd.s32 %s21, %s22
        %s321 = smul.u32 4, %s320
      $region48: #{hybrid_forward.2} parent=31 // pred_fallthru
        _
    $region32: #{hybrid_forward.2} parent=5 // pred_fallthru
      _
    %p322 = scmp.le.s32.totalorder 1, %s14
    %p323 = scmp.lt.s32.totalorder %s14, 3
    %p324 = pnand %p322, %p323
    %p325 = pneg %p324
    // Predicated region
    $region49: #{hybrid_forward.2} parent=5 // pred_check
      _
    $region50: #{hybrid_forward.2} parent=5 // pred_check_branch
      %327 = sbr.rel (%p324) target = $region52
    $region51: #{hybrid_forward.2} parent=5 // pred_region
      %s328 = ssub.s32 %s14, 1
      %s329 = sadd.s32 %s23, %s24
      %s330 = smul.u32 64, %s329
      %p331 = scmp.lt.s32.totalorder %s330, 127
      %s332 = scalar_select %p331, %s330, 127
      %s333 = smul.addr %s332, 8
      %s334 = scalar_lea.vmem %s0, %s333
      %p335 = pneg %p54
      %p336 = pneg %p51
      %s337 = sadd.s32 %s23, %s24
      %s338 = smul.u32 64, %s337
      %p339 = scmp.lt.s32.totalorder %s338, 127
      %s340 = scalar_select %p339, %s338, 127
      %s341 = smul.addr %s340, 8
      %s342 = scalar_lea.vmem %s1, %s341
      %p343 = pneg %p82
      %p344 = pneg %p79
      %s345 = sadd.s32 %s23, %s24
      %s346 = smul.u32 64, %s345
      %p347 = scmp.lt.s32.totalorder %s346, 127
      %s348 = scalar_select %p347, %s346, 127
      %s349 = smul.addr %s348, 8
      %s350 = scalar_lea.vmem %s2, %s349
      %p351 = pneg %p110
      %p352 = pneg %p107
      %s353 = sadd.s32 %s23, %s24
      %s354 = smul.u32 4, %s353
      %p355 = scmp.lt.s32.totalorder %s354, 7
      %s356 = scalar_select %p355, %s354, 7
      %s357 = scalar_lea.vmem %s3, %s356
      %p358 = pneg %p138
      %p359 = pneg %p135
      %p360 = pneg %p159
      %p361 = pneg %p156
      %p362 = pneg %p180
      %p363 = pneg %p177
      %p364 = pneg %p201
      %p365 = pneg %p198
      %p366 = pneg %p222
      %p367 = pneg %p219
      %p368 = pneg %p248
      %p369 = pneg %p245
      %s370 = smul.u32 16, %s23
      %p371 = scmp.lt.s32.totalorder %s370, 31
      %s372 = scalar_select %p371, %s370, 31
      %s373 = smul.addr %s372, 8
      %s374 = scalar_lea.vmem %s8, %s373
      %s375 = sadd.s32 %s23, %s24
      %s376 = smul.u32 64, %s375
      %p377 = scmp.lt.s32.totalorder %s376, 127
      %s378 = scalar_select %p377, %s376, 127
      %s379 = smul.addr %s378, 8
      %s380 = scalar_lea.vmem %s0, %s379
      %s381 = sadd.s32 %s23, %s24
      %s382 = smul.u32 64, %s381
      %s383 = sadd.s32 %s23, %s24
      %s384 = smul.u32 64, %s383
      %p385 = scmp.lt.s32.totalorder %s384, 127
      %s386 = scalar_select %p385, %s384, 127
      %s387 = smul.addr %s386, 8
      %s388 = scalar_lea.vmem %s1, %s387
      %s389 = sadd.s32 %s23, %s24
      %s390 = smul.u32 64, %s389
      %s391 = sadd.s32 %s23, %s24
      %s392 = smul.u32 64, %s391
      %p393 = scmp.lt.s32.totalorder %s392, 127
      %s394 = scalar_select %p393, %s392, 127
      %s395 = smul.addr %s394, 8
      %s396 = scalar_lea.vmem %s2, %s395
      %s397 = sadd.s32 %s23, %s24
      %s398 = smul.u32 64, %s397
      %s399 = sadd.s32 %s23, %s24
      %s400 = smul.u32 4, %s399
      %p401 = scmp.lt.s32.totalorder %s400, 7
      %s402 = scalar_select %p401, %s400, 7
      %s403 = scalar_lea.vmem %s3, %s402
      %s404 = sadd.s32 %s23, %s24
      %s405 = smul.u32 4, %s404
      %s406 = smul.u32 16, %s23
      %p407 = scmp.lt.s32.totalorder %s406, 31
      %s408 = scalar_select %p407, %s406, 31
      %s409 = smul.addr %s408, 8
      %s410 = scalar_lea.vmem %s8, %s409
      %s411 = smul.u32 16, %s23
      %p412 = scmp.eq.s32.totalorder %s24, 0
      // Predicated region
      $region53: #{hybrid_forward.2} parent=51 // pred_check
        %p413 = pneg %p412
      $region54: #{hybrid_forward.2} parent=51 // pred_check_branch
        %415 = sbr.rel (%p413) target = $region56
      $region55: #{hybrid_forward.2} parent=51 // pred_region
        %416 = vst [vmem:[%s410] sm:$0xff] 0.0
        %417 = vst [vmem:[%s410 + $0x8] sm:$0xff] 0.0
        %418 = vst [vmem:[%s410 + $0x10] sm:$0xff] 0.0
        %419 = vst [vmem:[%s410 + $0x18] sm:$0xff] 0.0
        %420 = vst [vmem:[%s410 + $0x20] sm:$0xff] 0.0
        %421 = vst [vmem:[%s410 + $0x28] sm:$0xff] 0.0
        %422 = vst [vmem:[%s410 + $0x30] sm:$0xff] 0.0
        %423 = vst [vmem:[%s410 + $0x38] sm:$0xff] 0.0
        %424 = vst [vmem:[%s410 + $0x40] sm:$0xff] 0.0
        %425 = vst [vmem:[%s410 + $0x48] sm:$0xff] 0.0
        %426 = vst [vmem:[%s410 + $0x50] sm:$0xff] 0.0
        %427 = vst [vmem:[%s410 + $0x58] sm:$0xff] 0.0
        %428 = vst [vmem:[%s410 + $0x60] sm:$0xff] 0.0
        %429 = vst [vmem:[%s410 + $0x68] sm:$0xff] 0.0
        %430 = vst [vmem:[%s410 + $0x70] sm:$0xff] 0.0
        %431 = vst [vmem:[%s410 + $0x78] sm:$0xff] 0.0
      $region56: #{hybrid_forward.2} parent=51 // pred_fallthru
        _
      %v432 = vlaneseq
      %v433 = vand.u32 %v432, 127
      %v434 = vld [vmem:[%s396] sm:$0xff]
      %v435 = vld [vmem:[%s396 + $0x8] sm:$0xff]
      %v436 = vld [vmem:[%s396 + $0x10] sm:$0xff]
      %v437 = vld [vmem:[%s396 + $0x18] sm:$0xff]
      %v438 = vld [vmem:[%s396 + $0x20] sm:$0xff]
      %v439 = vld [vmem:[%s396 + $0x28] sm:$0xff]
      %v440 = vld [vmem:[%s396 + $0x30] sm:$0xff]
      %v441 = vld [vmem:[%s396 + $0x38] sm:$0xff]
      %v442 = vld [vmem:[%s396 + $0x40] sm:$0xff]
      %v443 = vld [vmem:[%s396 + $0x48] sm:$0xff]
      %v444 = vld [vmem:[%s396 + $0x50] sm:$0xff]
      %v445 = vld [vmem:[%s396 + $0x58] sm:$0xff]
      %v446 = vld [vmem:[%s396 + $0x60] sm:$0xff]
      %v447 = vld [vmem:[%s396 + $0x68] sm:$0xff]
      %v448 = vld [vmem:[%s396 + $0x70] sm:$0xff]
      %v449 = vld [vmem:[%s396 + $0x78] sm:$0xff]
      %v450 = vld [vmem:[%s396 + $0x80] sm:$0xff]
      %v451 = vld [vmem:[%s396 + $0x88] sm:$0xff]
      %v452 = vld [vmem:[%s396 + $0x90] sm:$0xff]
      %v453 = vld [vmem:[%s396 + $0x98] sm:$0xff]
      %v454 = vld [vmem:[%s396 + $0xa0] sm:$0xff]
      %v455 = vld [vmem:[%s396 + $0xa8] sm:$0xff]
      %v456 = vld [vmem:[%s396 + $0xb0] sm:$0xff]
      %v457 = vld [vmem:[%s396 + $0xb8] sm:$0xff]
      %v458 = vld [vmem:[%s396 + $0xc0] sm:$0xff]
      %v459 = vld [vmem:[%s396 + $0xc8] sm:$0xff]
      %v460 = vld [vmem:[%s396 + $0xd0] sm:$0xff]
      %v461 = vld [vmem:[%s396 + $0xd8] sm:$0xff]
      %v462 = vld [vmem:[%s396 + $0xe0] sm:$0xff]
      %v463 = vld [vmem:[%s396 + $0xe8] sm:$0xff]
      %v464 = vld [vmem:[%s396 + $0xf0] sm:$0xff]
      %v465 = vld [vmem:[%s396 + $0xf8] sm:$0xff]
      %v466 = vld [vmem:[%s396 + $0x100] sm:$0xff]
      %v467 = vld [vmem:[%s396 + $0x108] sm:$0xff]
      %v468 = vld [vmem:[%s396 + $0x110] sm:$0xff]
      %v469 = vld [vmem:[%s396 + $0x118] sm:$0xff]
      %v470 = vld [vmem:[%s396 + $0x120] sm:$0xff]
      %v471 = vld [vmem:[%s396 + $0x128] sm:$0xff]
      %v472 = vld [vmem:[%s396 + $0x130] sm:$0xff]
      %v473 = vld [vmem:[%s396 + $0x138] sm:$0xff]
      %v474 = vld [vmem:[%s396 + $0x140] sm:$0xff]
      %v475 = vld [vmem:[%s396 + $0x148] sm:$0xff]
      %v476 = vld [vmem:[%s396 + $0x150] sm:$0xff]
      %v477 = vld [vmem:[%s396 + $0x158] sm:$0xff]
      %v478 = vld [vmem:[%s396 + $0x160] sm:$0xff]
      %v479 = vld [vmem:[%s396 + $0x168] sm:$0xff]
      %v480 = vld [vmem:[%s396 + $0x170] sm:$0xff]
      %v481 = vld [vmem:[%s396 + $0x178] sm:$0xff]
      %v482 = vld [vmem:[%s396 + $0x180] sm:$0xff]
      %v483 = vld [vmem:[%s396 + $0x188] sm:$0xff]
      %v484 = vld [vmem:[%s396 + $0x190] sm:$0xff]
      %v485 = vld [vmem:[%s396 + $0x198] sm:$0xff]
      %v486 = vld [vmem:[%s396 + $0x1a0] sm:$0xff]
      %v487 = vld [vmem:[%s396 + $0x1a8] sm:$0xff]
      %v488 = vld [vmem:[%s396 + $0x1b0] sm:$0xff]
      %v489 = vld [vmem:[%s396 + $0x1b8] sm:$0xff]
      %v490 = vld [vmem:[%s396 + $0x1c0] sm:$0xff]
      %v491 = vld [vmem:[%s396 + $0x1c8] sm:$0xff]
      %v492 = vld [vmem:[%s396 + $0x1d0] sm:$0xff]
      %v493 = vld [vmem:[%s396 + $0x1d8] sm:$0xff]
      %v494 = vld [vmem:[%s396 + $0x1e0] sm:$0xff]
      %v495 = vld [vmem:[%s396 + $0x1e8] sm:$0xff]
      %v496 = vld [vmem:[%s396 + $0x1f0] sm:$0xff]
      %v497 = vld [vmem:[%s396 + $0x1f8] sm:$0xff]
      %498 = vset.pattern.permute.xlu0 0
      %499 = vperm.xlu0 %498, %v434
      %v500 = vpop.permute.xlu0 %499
      %501 = vset.pattern.permute.xlu0 0
      %502 = vperm.xlu0 %501, %v435
      %v503 = vpop.permute.xlu0 %502
      %504 = vset.pattern.permute.xlu0 0
      %505 = vperm.xlu0 %504, %v436
      %v506 = vpop.permute.xlu0 %505
      %507 = vset.pattern.permute.xlu0 0
      %508 = vperm.xlu0 %507, %v437
      %v509 = vpop.permute.xlu0 %508
      %510 = vset.pattern.permute.xlu0 0
      %511 = vperm.xlu0 %510, %v438
      %v512 = vpop.permute.xlu0 %511
      %513 = vset.pattern.permute.xlu0 0
      %514 = vperm.xlu0 %513, %v439
      %v515 = vpop.permute.xlu0 %514
      %516 = vset.pattern.permute.xlu0 0
      %517 = vperm.xlu0 %516, %v440
      %v518 = vpop.permute.xlu0 %517
      %519 = vset.pattern.permute.xlu0 0
      %520 = vperm.xlu0 %519, %v441
      %v521 = vpop.permute.xlu0 %520
      %522 = vset.pattern.permute.xlu0 0
      %523 = vperm.xlu0 %522, %v442
      %v524 = vpop.permute.xlu0 %523
      %525 = vset.pattern.permute.xlu0 0
      %526 = vperm.xlu0 %525, %v443
      %v527 = vpop.permute.xlu0 %526
      %528 = vset.pattern.permute.xlu0 0
      %529 = vperm.xlu0 %528, %v444
      %v530 = vpop.permute.xlu0 %529
      %531 = vset.pattern.permute.xlu0 0
      %532 = vperm.xlu0 %531, %v445
      %v533 = vpop.permute.xlu0 %532
      %534 = vset.pattern.permute.xlu0 0
      %535 = vperm.xlu0 %534, %v446
      %v536 = vpop.permute.xlu0 %535
      %537 = vset.pattern.permute.xlu0 0
      %538 = vperm.xlu0 %537, %v447
      %v539 = vpop.permute.xlu0 %538
      %540 = vset.pattern.permute.xlu0 0
      %541 = vperm.xlu0 %540, %v448
      %v542 = vpop.permute.xlu0 %541
      %543 = vset.pattern.permute.xlu0 0
      %544 = vperm.xlu0 %543, %v449
      %v545 = vpop.permute.xlu0 %544
      %546 = vset.pattern.permute.xlu0 0
      %547 = vperm.xlu0 %546, %v450
      %v548 = vpop.permute.xlu0 %547
      %549 = vset.pattern.permute.xlu0 0
      %550 = vperm.xlu0 %549, %v451
      %v551 = vpop.permute.xlu0 %550
      %552 = vset.pattern.permute.xlu0 0
      %553 = vperm.xlu0 %552, %v452
      %v554 = vpop.permute.xlu0 %553
      %555 = vset.pattern.permute.xlu0 0
      %556 = vperm.xlu0 %555, %v453
      %v557 = vpop.permute.xlu0 %556
      %558 = vset.pattern.permute.xlu0 0
      %559 = vperm.xlu0 %558, %v454
      %v560 = vpop.permute.xlu0 %559
      %561 = vset.pattern.permute.xlu0 0
      %562 = vperm.xlu0 %561, %v455
      %v563 = vpop.permute.xlu0 %562
      %564 = vset.pattern.permute.xlu0 0
      %565 = vperm.xlu0 %564, %v456
      %v566 = vpop.permute.xlu0 %565
      %567 = vset.pattern.permute.xlu0 0
      %568 = vperm.xlu0 %567, %v457
      %v569 = vpop.permute.xlu0 %568
      %570 = vset.pattern.permute.xlu0 0
      %571 = vperm.xlu0 %570, %v458
      %v572 = vpop.permute.xlu0 %571
      %573 = vset.pattern.permute.xlu0 0
      %574 = vperm.xlu0 %573, %v459
      %v575 = vpop.permute.xlu0 %574
      %576 = vset.pattern.permute.xlu0 0
      %577 = vperm.xlu0 %576, %v460
      %v578 = vpop.permute.xlu0 %577
      %579 = vset.pattern.permute.xlu0 0
      %580 = vperm.xlu0 %579, %v461
      %v581 = vpop.permute.xlu0 %580
      %582 = vset.pattern.permute.xlu0 0
      %583 = vperm.xlu0 %582, %v462
      %v584 = vpop.permute.xlu0 %583
      %585 = vset.pattern.permute.xlu0 0
      %586 = vperm.xlu0 %585, %v463
      %v587 = vpop.permute.xlu0 %586
      %588 = vset.pattern.permute.xlu0 0
      %589 = vperm.xlu0 %588, %v464
      %v590 = vpop.permute.xlu0 %589
      %591 = vset.pattern.permute.xlu0 0
      %592 = vperm.xlu0 %591, %v465
      %v593 = vpop.permute.xlu0 %592
      %594 = vset.pattern.permute.xlu0 0
      %595 = vperm.xlu0 %594, %v466
      %v596 = vpop.permute.xlu0 %595
      %597 = vset.pattern.permute.xlu0 0
      %598 = vperm.xlu0 %597, %v467
      %v599 = vpop.permute.xlu0 %598
      %600 = vset.pattern.permute.xlu0 0
      %601 = vperm.xlu0 %600, %v468
      %v602 = vpop.permute.xlu0 %601
      %603 = vset.pattern.permute.xlu0 0
      %604 = vperm.xlu0 %603, %v469
      %v605 = vpop.permute.xlu0 %604
      %606 = vset.pattern.permute.xlu0 0
      %607 = vperm.xlu0 %606, %v470
      %v608 = vpop.permute.xlu0 %607
      %609 = vset.pattern.permute.xlu0 0
      %610 = vperm.xlu0 %609, %v471
      %v611 = vpop.permute.xlu0 %610
      %612 = vset.pattern.permute.xlu0 0
      %613 = vperm.xlu0 %612, %v472
      %v614 = vpop.permute.xlu0 %613
      %615 = vset.pattern.permute.xlu0 0
      %616 = vperm.xlu0 %615, %v473
      %v617 = vpop.permute.xlu0 %616
      %618 = vset.pattern.permute.xlu0 0
      %619 = vperm.xlu0 %618, %v474
      %v620 = vpop.permute.xlu0 %619
      %621 = vset.pattern.permute.xlu0 0
      %622 = vperm.xlu0 %621, %v475
      %v623 = vpop.permute.xlu0 %622
      %624 = vset.pattern.permute.xlu0 0
      %625 = vperm.xlu0 %624, %v476
      %v626 = vpop.permute.xlu0 %625
      %627 = vset.pattern.permute.xlu0 0
      %628 = vperm.xlu0 %627, %v477
      %v629 = vpop.permute.xlu0 %628
      %630 = vset.pattern.permute.xlu0 0
      %631 = vperm.xlu0 %630, %v478
      %v632 = vpop.permute.xlu0 %631
      %633 = vset.pattern.permute.xlu0 0
      %634 = vperm.xlu0 %633, %v479
      %v635 = vpop.permute.xlu0 %634
      %636 = vset.pattern.permute.xlu0 0
      %637 = vperm.xlu0 %636, %v480
      %v638 = vpop.permute.xlu0 %637
      %639 = vset.pattern.permute.xlu0 0
      %640 = vperm.xlu0 %639, %v481
      %v641 = vpop.permute.xlu0 %640
      %642 = vset.pattern.permute.xlu0 0
      %643 = vperm.xlu0 %642, %v482
      %v644 = vpop.permute.xlu0 %643
      %645 = vset.pattern.permute.xlu0 0
      %646 = vperm.xlu0 %645, %v483
      %v647 = vpop.permute.xlu0 %646
      %648 = vset.pattern.permute.xlu0 0
      %649 = vperm.xlu0 %648, %v484
      %v650 = vpop.permute.xlu0 %649
      %651 = vset.pattern.permute.xlu0 0
      %652 = vperm.xlu0 %651, %v485
      %v653 = vpop.permute.xlu0 %652
      %654 = vset.pattern.permute.xlu0 0
      %655 = vperm.xlu0 %654, %v486
      %v656 = vpop.permute.xlu0 %655
      %657 = vset.pattern.permute.xlu0 0
      %658 = vperm.xlu0 %657, %v487
      %v659 = vpop.permute.xlu0 %658
      %660 = vset.pattern.permute.xlu0 0
      %661 = vperm.xlu0 %660, %v488
      %v662 = vpop.permute.xlu0 %661
      %663 = vset.pattern.permute.xlu0 0
      %664 = vperm.xlu0 %663, %v489
      %v665 = vpop.permute.xlu0 %664
      %666 = vset.pattern.permute.xlu0 0
      %667 = vperm.xlu0 %666, %v490
      %v668 = vpop.permute.xlu0 %667
      %669 = vset.pattern.permute.xlu0 0
      %670 = vperm.xlu0 %669, %v491
      %v671 = vpop.permute.xlu0 %670
      %672 = vset.pattern.permute.xlu0 0
      %673 = vperm.xlu0 %672, %v492
      %v674 = vpop.permute.xlu0 %673
      %675 = vset.pattern.permute.xlu0 0
      %676 = vperm.xlu0 %675, %v493
      %v677 = vpop.permute.xlu0 %676
      %678 = vset.pattern.permute.xlu0 0
      %679 = vperm.xlu0 %678, %v494
      %v680 = vpop.permute.xlu0 %679
      %681 = vset.pattern.permute.xlu0 0
      %682 = vperm.xlu0 %681, %v495
      %v683 = vpop.permute.xlu0 %682
      %684 = vset.pattern.permute.xlu0 0
      %685 = vperm.xlu0 %684, %v496
      %v686 = vpop.permute.xlu0 %685
      %687 = vset.pattern.permute.xlu0 0
      %688 = vperm.xlu0 %687, %v497
      %v689 = vpop.permute.xlu0 %688
      %vm690 = vcmp.eq.s32.totalorder %v500, %v433
      %vm691 = vcmp.eq.s32.totalorder %v503, %v433
      %vm692 = vcmp.eq.s32.totalorder %v506, %v433
      %vm693 = vcmp.eq.s32.totalorder %v509, %v433
      %vm694 = vcmp.eq.s32.totalorder %v512, %v433
      %vm695 = vcmp.eq.s32.totalorder %v515, %v433
      %vm696 = vcmp.eq.s32.totalorder %v518, %v433
      %vm697 = vcmp.eq.s32.totalorder %v521, %v433
      %vm698 = vcmp.eq.s32.totalorder %v524, %v433
      %vm699 = vcmp.eq.s32.totalorder %v527, %v433
      %vm700 = vcmp.eq.s32.totalorder %v530, %v433
      %vm701 = vcmp.eq.s32.totalorder %v533, %v433
      %vm702 = vcmp.eq.s32.totalorder %v536, %v433
      %vm703 = vcmp.eq.s32.totalorder %v539, %v433
      %vm704 = vcmp.eq.s32.totalorder %v542, %v433
      %vm705 = vcmp.eq.s32.totalorder %v545, %v433
      %vm706 = vcmp.eq.s32.totalorder %v548, %v433
      %vm707 = vcmp.eq.s32.totalorder %v551, %v433
      %vm708 = vcmp.eq.s32.totalorder %v554, %v433
      %vm709 = vcmp.eq.s32.totalorder %v557, %v433
      %vm710 = vcmp.eq.s32.totalorder %v560, %v433
      %vm711 = vcmp.eq.s32.totalorder %v563, %v433
      %vm712 = vcmp.eq.s32.totalorder %v566, %v433
      %vm713 = vcmp.eq.s32.totalorder %v569, %v433
      %vm714 = vcmp.eq.s32.totalorder %v572, %v433
      %vm715 = vcmp.eq.s32.totalorder %v575, %v433
      %vm716 = vcmp.eq.s32.totalorder %v578, %v433
      %vm717 = vcmp.eq.s32.totalorder %v581, %v433
      %vm718 = vcmp.eq.s32.totalorder %v584, %v433
      %vm719 = vcmp.eq.s32.totalorder %v587, %v433
      %vm720 = vcmp.eq.s32.totalorder %v590, %v433
      %vm721 = vcmp.eq.s32.totalorder %v593, %v433
      %vm722 = vcmp.eq.s32.totalorder %v596, %v433
      %vm723 = vcmp.eq.s32.totalorder %v599, %v433
      %vm724 = vcmp.eq.s32.totalorder %v602, %v433
      %vm725 = vcmp.eq.s32.totalorder %v605, %v433
      %vm726 = vcmp.eq.s32.totalorder %v608, %v433
      %vm727 = vcmp.eq.s32.totalorder %v611, %v433
      %vm728 = vcmp.eq.s32.totalorder %v614, %v433
      %vm729 = vcmp.eq.s32.totalorder %v617, %v433
      %vm730 = vcmp.eq.s32.totalorder %v620, %v433
      %vm731 = vcmp.eq.s32.totalorder %v623, %v433
      %vm732 = vcmp.eq.s32.totalorder %v626, %v433
      %vm733 = vcmp.eq.s32.totalorder %v629, %v433
      %vm734 = vcmp.eq.s32.totalorder %v632, %v433
      %vm735 = vcmp.eq.s32.totalorder %v635, %v433
      %vm736 = vcmp.eq.s32.totalorder %v638, %v433
      %vm737 = vcmp.eq.s32.totalorder %v641, %v433
      %vm738 = vcmp.eq.s32.totalorder %v644, %v433
      %vm739 = vcmp.eq.s32.totalorder %v647, %v433
      %vm740 = vcmp.eq.s32.totalorder %v650, %v433
      %vm741 = vcmp.eq.s32.totalorder %v653, %v433
      %vm742 = vcmp.eq.s32.totalorder %v656, %v433
      %vm743 = vcmp.eq.s32.totalorder %v659, %v433
      %vm744 = vcmp.eq.s32.totalorder %v662, %v433
      %vm745 = vcmp.eq.s32.totalorder %v665, %v433
      %vm746 = vcmp.eq.s32.totalorder %v668, %v433
      %vm747 = vcmp.eq.s32.totalorder %v671, %v433
      %vm748 = vcmp.eq.s32.totalorder %v674, %v433
      %vm749 = vcmp.eq.s32.totalorder %v677, %v433
      %vm750 = vcmp.eq.s32.totalorder %v680, %v433
      %vm751 = vcmp.eq.s32.totalorder %v683, %v433
      %vm752 = vcmp.eq.s32.totalorder %v686, %v433
      %vm753 = vcmp.eq.s32.totalorder %v689, %v433
      %v754 = vsel %vm690, 1, 0
      %v755 = vsel %vm691, 1, 0
      %v756 = vsel %vm692, 1, 0
      %v757 = vsel %vm693, 1, 0
      %v758 = vsel %vm694, 1, 0
      %v759 = vsel %vm695, 1, 0
      %v760 = vsel %vm696, 1, 0
      %v761 = vsel %vm697, 1, 0
      %v762 = vsel %vm698, 1, 0
      %v763 = vsel %vm699, 1, 0
      %v764 = vsel %vm700, 1, 0
      %v765 = vsel %vm701, 1, 0
      %v766 = vsel %vm702, 1, 0
      %v767 = vsel %vm703, 1, 0
      %v768 = vsel %vm704, 1, 0
      %v769 = vsel %vm705, 1, 0
      %v770 = vsel %vm706, 1, 0
      %v771 = vsel %vm707, 1, 0
      %v772 = vsel %vm708, 1, 0
      %v773 = vsel %vm709, 1, 0
      %v774 = vsel %vm710, 1, 0
      %v775 = vsel %vm711, 1, 0
      %v776 = vsel %vm712, 1, 0
      %v777 = vsel %vm713, 1, 0
      %v778 = vsel %vm714, 1, 0
      %v779 = vsel %vm715, 1, 0
      %v780 = vsel %vm716, 1, 0
      %v781 = vsel %vm717, 1, 0
      %v782 = vsel %vm718, 1, 0
      %v783 = vsel %vm719, 1, 0
      %v784 = vsel %vm720, 1, 0
      %v785 = vsel %vm721, 1, 0
      %v786 = vsel %vm722, 1, 0
      %v787 = vsel %vm723, 1, 0
      %v788 = vsel %vm724, 1, 0
      %v789 = vsel %vm725, 1, 0
      %v790 = vsel %vm726, 1, 0
      %v791 = vsel %vm727, 1, 0
      %v792 = vsel %vm728, 1, 0
      %v793 = vsel %vm729, 1, 0
      %v794 = vsel %vm730, 1, 0
      %v795 = vsel %vm731, 1, 0
      %v796 = vsel %vm732, 1, 0
      %v797 = vsel %vm733, 1, 0
      %v798 = vsel %vm734, 1, 0
      %v799 = vsel %vm735, 1, 0
      %v800 = vsel %vm736, 1, 0
      %v801 = vsel %vm737, 1, 0
      %v802 = vsel %vm738, 1, 0
      %v803 = vsel %vm739, 1, 0
      %v804 = vsel %vm740, 1, 0
      %v805 = vsel %vm741, 1, 0
      %v806 = vsel %vm742, 1, 0
      %v807 = vsel %vm743, 1, 0
      %v808 = vsel %vm744, 1, 0
      %v809 = vsel %vm745, 1, 0
      %v810 = vsel %vm746, 1, 0
      %v811 = vsel %vm747, 1, 0
      %v812 = vsel %vm748, 1, 0
      %v813 = vsel %vm749, 1, 0
      %v814 = vsel %vm750, 1, 0
      %v815 = vsel %vm751, 1, 0
      %v816 = vsel %vm752, 1, 0
      %v817 = vsel %vm753, 1, 0
      %v818 = vcvt.s32.f32 %v754
      %v819 = vcvt.s32.f32 %v755
      %v820 = vcvt.s32.f32 %v756
      %v821 = vcvt.s32.f32 %v757
      %v822 = vcvt.s32.f32 %v758
      %v823 = vcvt.s32.f32 %v759
      %v824 = vcvt.s32.f32 %v760
      %v825 = vcvt.s32.f32 %v761
      %v826 = vcvt.s32.f32 %v762
      %v827 = vcvt.s32.f32 %v763
      %v828 = vcvt.s32.f32 %v764
      %v829 = vcvt.s32.f32 %v765
      %v830 = vcvt.s32.f32 %v766
      %v831 = vcvt.s32.f32 %v767
      %v832 = vcvt.s32.f32 %v768
      %v833 = vcvt.s32.f32 %v769
      %v834 = vcvt.s32.f32 %v770
      %v835 = vcvt.s32.f32 %v771
      %v836 = vcvt.s32.f32 %v772
      %v837 = vcvt.s32.f32 %v773
      %v838 = vcvt.s32.f32 %v774
      %v839 = vcvt.s32.f32 %v775
      %v840 = vcvt.s32.f32 %v776
      %v841 = vcvt.s32.f32 %v777
      %v842 = vcvt.s32.f32 %v778
      %v843 = vcvt.s32.f32 %v779
      %v844 = vcvt.s32.f32 %v780
      %v845 = vcvt.s32.f32 %v781
      %v846 = vcvt.s32.f32 %v782
      %v847 = vcvt.s32.f32 %v783
      %v848 = vcvt.s32.f32 %v784
      %v849 = vcvt.s32.f32 %v785
      %v850 = vcvt.s32.f32 %v786
      %v851 = vcvt.s32.f32 %v787
      %v852 = vcvt.s32.f32 %v788
      %v853 = vcvt.s32.f32 %v789
      %v854 = vcvt.s32.f32 %v790
      %v855 = vcvt.s32.f32 %v791
      %v856 = vcvt.s32.f32 %v792
      %v857 = vcvt.s32.f32 %v793
      %v858 = vcvt.s32.f32 %v794
      %v859 = vcvt.s32.f32 %v795
      %v860 = vcvt.s32.f32 %v796
      %v861 = vcvt.s32.f32 %v797
      %v862 = vcvt.s32.f32 %v798
      %v863 = vcvt.s32.f32 %v799
      %v864 = vcvt.s32.f32 %v800
      %v865 = vcvt.s32.f32 %v801
      %v866 = vcvt.s32.f32 %v802
      %v867 = vcvt.s32.f32 %v803
      %v868 = vcvt.s32.f32 %v804
      %v869 = vcvt.s32.f32 %v805
      %v870 = vcvt.s32.f32 %v806
      %v871 = vcvt.s32.f32 %v807
      %v872 = vcvt.s32.f32 %v808
      %v873 = vcvt.s32.f32 %v809
      %v874 = vcvt.s32.f32 %v810
      %v875 = vcvt.s32.f32 %v811
      %v876 = vcvt.s32.f32 %v812
      %v877 = vcvt.s32.f32 %v813
      %v878 = vcvt.s32.f32 %v814
      %v879 = vcvt.s32.f32 %v815
      %v880 = vcvt.s32.f32 %v816
      %v881 = vcvt.s32.f32 %v817
      %v882 = vld [vmem:[%s4] sm:$0xff]
      %v883 = vld [vmem:[%s4 + $0x8] sm:$0xff]
      %v884 = vld [vmem:[%s4 + $0x10] sm:$0xff]
      %v885 = vld [vmem:[%s4 + $0x18] sm:$0xff]
      %v886 = vld [vmem:[%s4 + $0x20] sm:$0xff]
      %v887 = vld [vmem:[%s4 + $0x28] sm:$0xff]
      %v888 = vld [vmem:[%s4 + $0x30] sm:$0xff]
      %v889 = vld [vmem:[%s4 + $0x38] sm:$0xff]
      %v890 = vld [vmem:[%s4 + $0x40] sm:$0xff]
      %v891 = vld [vmem:[%s4 + $0x48] sm:$0xff]
      %v892 = vld [vmem:[%s4 + $0x50] sm:$0xff]
      %v893 = vld [vmem:[%s4 + $0x58] sm:$0xff]
      %v894 = vld [vmem:[%s4 + $0x60] sm:$0xff]
      %v895 = vld [vmem:[%s4 + $0x68] sm:$0xff]
      %v896 = vld [vmem:[%s4 + $0x70] sm:$0xff]
      %v897 = vld [vmem:[%s4 + $0x78] sm:$0xff]
      %v898 = vld [vmem:[%s4 + $0x80] sm:$0xff]
      %v899 = vld [vmem:[%s4 + $0x88] sm:$0xff]
      %v900 = vld [vmem:[%s4 + $0x90] sm:$0xff]
      %v901 = vld [vmem:[%s4 + $0x98] sm:$0xff]
      %v902 = vld [vmem:[%s4 + $0xa0] sm:$0xff]
      %v903 = vld [vmem:[%s4 + $0xa8] sm:$0xff]
      %v904 = vld [vmem:[%s4 + $0xb0] sm:$0xff]
      %v905 = vld [vmem:[%s4 + $0xb8] sm:$0xff]
      %v906 = vld [vmem:[%s4 + $0xc0] sm:$0xff]
      %v907 = vld [vmem:[%s4 + $0xc8] sm:$0xff]
      %v908 = vld [vmem:[%s4 + $0xd0] sm:$0xff]
      %v909 = vld [vmem:[%s4 + $0xd8] sm:$0xff]
      %v910 = vld [vmem:[%s4 + $0xe0] sm:$0xff]
      %v911 = vld [vmem:[%s4 + $0xe8] sm:$0xff]
      %v912 = vld [vmem:[%s4 + $0xf0] sm:$0xff]
      %v913 = vld [vmem:[%s4 + $0xf8] sm:$0xff]
      %v914 = vld [vmem:[%s4 + $0x100] sm:$0xff]
      %v915 = vld [vmem:[%s4 + $0x108] sm:$0xff]
      %v916 = vld [vmem:[%s4 + $0x110] sm:$0xff]
      %v917 = vld [vmem:[%s4 + $0x118] sm:$0xff]
      %v918 = vld [vmem:[%s4 + $0x120] sm:$0xff]
      %v919 = vld [vmem:[%s4 + $0x128] sm:$0xff]
      %v920 = vld [vmem:[%s4 + $0x130] sm:$0xff]
      %v921 = vld [vmem:[%s4 + $0x138] sm:$0xff]
      %v922 = vld [vmem:[%s4 + $0x140] sm:$0xff]
      %v923 = vld [vmem:[%s4 + $0x148] sm:$0xff]
      %v924 = vld [vmem:[%s4 + $0x150] sm:$0xff]
      %v925 = vld [vmem:[%s4 + $0x158] sm:$0xff]
      %v926 = vld [vmem:[%s4 + $0x160] sm:$0xff]
      %v927 = vld [vmem:[%s4 + $0x168] sm:$0xff]
      %v928 = vld [vmem:[%s4 + $0x170] sm:$0xff]
      %v929 = vld [vmem:[%s4 + $0x178] sm:$0xff]
      %v930 = vld [vmem:[%s4 + $0x180] sm:$0xff]
      %v931 = vld [vmem:[%s4 + $0x188] sm:$0xff]
      %v932 = vld [vmem:[%s4 + $0x190] sm:$0xff]
      %v933 = vld [vmem:[%s4 + $0x198] sm:$0xff]
      %v934 = vld [vmem:[%s4 + $0x1a0] sm:$0xff]
      %v935 = vld [vmem:[%s4 + $0x1a8] sm:$0xff]
      %v936 = vld [vmem:[%s4 + $0x1b0] sm:$0xff]
      %v937 = vld [vmem:[%s4 + $0x1b8] sm:$0xff]
      %v938 = vld [vmem:[%s4 + $0x1c0] sm:$0xff]
      %v939 = vld [vmem:[%s4 + $0x1c8] sm:$0xff]
      %v940 = vld [vmem:[%s4 + $0x1d0] sm:$0xff]
      %v941 = vld [vmem:[%s4 + $0x1d8] sm:$0xff]
      %v942 = vld [vmem:[%s4 + $0x1e0] sm:$0xff]
      %v943 = vld [vmem:[%s4 + $0x1e8] sm:$0xff]
      %v944 = vld [vmem:[%s4 + $0x1f0] sm:$0xff]
      %v945 = vld [vmem:[%s4 + $0x1f8] sm:$0xff]
      %v946 = vld [vmem:[%s4 + $0x200] sm:$0xff]
      %v947 = vld [vmem:[%s4 + $0x208] sm:$0xff]
      %v948 = vld [vmem:[%s4 + $0x210] sm:$0xff]
      %v949 = vld [vmem:[%s4 + $0x218] sm:$0xff]
      %v950 = vld [vmem:[%s4 + $0x220] sm:$0xff]
      %v951 = vld [vmem:[%s4 + $0x228] sm:$0xff]
      %v952 = vld [vmem:[%s4 + $0x230] sm:$0xff]
      %v953 = vld [vmem:[%s4 + $0x238] sm:$0xff]
      %v954 = vld [vmem:[%s4 + $0x240] sm:$0xff]
      %v955 = vld [vmem:[%s4 + $0x248] sm:$0xff]
      %v956 = vld [vmem:[%s4 + $0x250] sm:$0xff]
      %v957 = vld [vmem:[%s4 + $0x258] sm:$0xff]
      %v958 = vld [vmem:[%s4 + $0x260] sm:$0xff]
      %v959 = vld [vmem:[%s4 + $0x268] sm:$0xff]
      %v960 = vld [vmem:[%s4 + $0x270] sm:$0xff]
      %v961 = vld [vmem:[%s4 + $0x278] sm:$0xff]
      %v962 = vld [vmem:[%s4 + $0x280] sm:$0xff]
      %v963 = vld [vmem:[%s4 + $0x288] sm:$0xff]
      %v964 = vld [vmem:[%s4 + $0x290] sm:$0xff]
      %v965 = vld [vmem:[%s4 + $0x298] sm:$0xff]
      %v966 = vld [vmem:[%s4 + $0x2a0] sm:$0xff]
      %v967 = vld [vmem:[%s4 + $0x2a8] sm:$0xff]
      %v968 = vld [vmem:[%s4 + $0x2b0] sm:$0xff]
      %v969 = vld [vmem:[%s4 + $0x2b8] sm:$0xff]
      %v970 = vld [vmem:[%s4 + $0x2c0] sm:$0xff]
      %v971 = vld [vmem:[%s4 + $0x2c8] sm:$0xff]
      %v972 = vld [vmem:[%s4 + $0x2d0] sm:$0xff]
      %v973 = vld [vmem:[%s4 + $0x2d8] sm:$0xff]
      %v974 = vld [vmem:[%s4 + $0x2e0] sm:$0xff]
      %v975 = vld [vmem:[%s4 + $0x2e8] sm:$0xff]
      %v976 = vld [vmem:[%s4 + $0x2f0] sm:$0xff]
      %v977 = vld [vmem:[%s4 + $0x2f8] sm:$0xff]
      %v978 = vld [vmem:[%s4 + $0x300] sm:$0xff]
      %v979 = vld [vmem:[%s4 + $0x308] sm:$0xff]
      %v980 = vld [vmem:[%s4 + $0x310] sm:$0xff]
      %v981 = vld [vmem:[%s4 + $0x318] sm:$0xff]
      %v982 = vld [vmem:[%s4 + $0x320] sm:$0xff]
      %v983 = vld [vmem:[%s4 + $0x328] sm:$0xff]
      %v984 = vld [vmem:[%s4 + $0x330] sm:$0xff]
      %v985 = vld [vmem:[%s4 + $0x338] sm:$0xff]
      %v986 = vld [vmem:[%s4 + $0x340] sm:$0xff]
      %v987 = vld [vmem:[%s4 + $0x348] sm:$0xff]
      %v988 = vld [vmem:[%s4 + $0x350] sm:$0xff]
      %v989 = vld [vmem:[%s4 + $0x358] sm:$0xff]
      %v990 = vld [vmem:[%s4 + $0x360] sm:$0xff]
      %v991 = vld [vmem:[%s4 + $0x368] sm:$0xff]
      %v992 = vld [vmem:[%s4 + $0x370] sm:$0xff]
      %v993 = vld [vmem:[%s4 + $0x378] sm:$0xff]
      %v994 = vld [vmem:[%s4 + $0x380] sm:$0xff]
      %v995 = vld [vmem:[%s4 + $0x388] sm:$0xff]
      %v996 = vld [vmem:[%s4 + $0x390] sm:$0xff]
      %v997 = vld [vmem:[%s4 + $0x398] sm:$0xff]
      %v998 = vld [vmem:[%s4 + $0x3a0] sm:$0xff]
      %v999 = vld [vmem:[%s4 + $0x3a8] sm:$0xff]
      %v1000 = vld [vmem:[%s4 + $0x3b0] sm:$0xff]
      %v1001 = vld [vmem:[%s4 + $0x3b8] sm:$0xff]
      %v1002 = vld [vmem:[%s4 + $0x3c0] sm:$0xff]
      %v1003 = vld [vmem:[%s4 + $0x3c8] sm:$0xff]
      %v1004 = vld [vmem:[%s4 + $0x3d0] sm:$0xff]
      %v1005 = vld [vmem:[%s4 + $0x3d8] sm:$0xff]
      %v1006 = vld [vmem:[%s4 + $0x3e0] sm:$0xff]
      %v1007 = vld [vmem:[%s4 + $0x3e8] sm:$0xff]
      %v1008 = vld [vmem:[%s4 + $0x3f0] sm:$0xff]
      %v1009 = vld [vmem:[%s4 + $0x3f8] sm:$0xff]
      %1010 = vmatprep.subr.mxu0 %v883
      %1011 = vmatpush1.msra.mxu0 %v882
      %1012 = vmatprep.subr.mxu0 %v891
      %1013 = vmatpush1.msra.mxu0 %v890
      %1014 = vmatprep.subr.mxu0 %v899
      %1015 = vmatpush1.msra.mxu0 %v898
      %1016 = vmatprep.subr.mxu0 %v907
      %1017 = vmatpush1.msra.mxu0 %v906
      %1018 = vmatprep.subr.mxu0 %v915
      %1019 = vmatpush1.msra.mxu0 %v914
      %1020 = vmatprep.subr.mxu0 %v923
      %1021 = vmatpush1.msra.mxu0 %v922
      %1022 = vmatprep.subr.mxu0 %v931
      %1023 = vmatpush1.msra.mxu0 %v930
      %1024 = vmatprep.subr.mxu0 %v939
      %1025 = vmatpush1.msra.mxu0 %v938
      %1026 = vmatprep.subr.mxu0 %v947
      %1027 = vmatpush1.msra.mxu0 %v946
      %1028 = vmatprep.subr.mxu0 %v955
      %1029 = vmatpush1.msra.mxu0 %v954
      %1030 = vmatprep.subr.mxu0 %v963
      %1031 = vmatpush1.msra.mxu0 %v962
      %1032 = vmatprep.subr.mxu0 %v971
      %1033 = vmatpush1.msra.mxu0 %v970
      %1034 = vmatprep.subr.mxu0 %v979
      %1035 = vmatpush1.msra.mxu0 %v978
      %1036 = vmatprep.subr.mxu0 %v987
      %1037 = vmatpush1.msra.mxu0 %v986
      %1038 = vmatprep.subr.mxu0 %v995
      %1039 = vmatpush1.msra.mxu0 %v994
      %1040 = vmatprep.subr.mxu0 %v1003
      %1041 = vmatpush1.msra.mxu0 %v1002
      %1042 = vmatprep.subr.mxu0 0.0
      %1043 = vmatpush1.msra.mxu0 0.0
      %1044 = vmatprep.subr.mxu0 0.0
      %1045 = vmatpush1.msra.mxu0 0.0
      %1046 = vmatprep.subr.mxu0 0.0
      %1047 = vmatpush1.msra.mxu0 0.0
      %1048 = vmatprep.subr.mxu0 0.0
      %1049 = vmatpush1.msra.mxu0 0.0
      %1050 = vmatprep.subr.mxu0 0.0
      %1051 = vmatpush1.msra.mxu0 0.0
      %1052 = vmatprep.subr.mxu0 0.0
      %1053 = vmatpush1.msra.mxu0 0.0
      %1054 = vmatprep.subr.mxu0 0.0
      %1055 = vmatpush1.msra.mxu0 0.0
      %1056 = vmatprep.subr.mxu0 0.0
      %1057 = vmatpush1.msra.mxu0 0.0
      %1058 = vmatprep.subr.mxu0 0.0
      %1059 = vmatpush1.msra.mxu0 0.0
      %1060 = vmatprep.subr.mxu0 0.0
      %1061 = vmatpush1.msra.mxu0 0.0
      %1062 = vmatprep.subr.mxu0 0.0
      %1063 = vmatpush1.msra.mxu0 0.0
      %1064 = vmatprep.subr.mxu0 0.0
      %1065 = vmatpush1.msra.mxu0 0.0
      %1066 = vmatprep.subr.mxu0 0.0
      %1067 = vmatpush1.msra.mxu0 0.0
      %1068 = vmatprep.subr.mxu0 0.0
      %1069 = vmatpush1.msra.mxu0 0.0
      %1070 = vmatprep.subr.mxu0 0.0
      %1071 = vmatpush1.msra.mxu0 0.0
      %1072 = vmatprep.subr.mxu0 0.0
      %1073 = vmatpush1.msra.mxu0 0.0
      %1074 = vmatprep.mubr.f32.mxu0 0.0
      %1075 = vmatmul.mubr.f32.gmra.mrb[0].mxu0 %v818
      %v1076 = vpop.f32.mrb[0].mxu0
      %v1077 = vadd.f32 0.0, %v1076
      %v1078 = vpop.f32.mrb[0].mxu0
      %v1079 = vadd.f32 0.0, %v1078
      %1080 = vmatprep.mubr.f32.mxu0 0.0
      %1081 = vmatmul.mubr.f32.gmra.mrb[0].mxu0 %v819
      %v1082 = vpop.f32.mrb[0].mxu0
      %v1083 = vadd.f32 0.0, %v1082
      %v1084 = vpop.f32.mrb[0].mxu0
      %v1085 = vadd.f32 0.0, %v1084
      %1086 = vmatprep.mubr.f32.mxu0 0.0
      %1087 = vmatmul.mubr.f32.gmra.mrb[0].mxu0 %v820
      %v1088 = vpop.f32.mrb[0].mxu0
      %v1089 = vadd.f32 0.0, %v1088
      %v1090 = vpop.f32.mrb[0].mxu0
      %v1091 = vadd.f32 0.0, %v1090
      %1092 = vmatprep.mubr.f32.mxu0 0.0
      %1093 = vmatmul.mubr.f32.gmra.mrb[0].mxu0 %v821
      %v1094 = vpop.f32.mrb[0].mxu0
      %v1095 = vadd.f32 0.0, %v1094
      %v1096 = vpop.f32.mrb[0].mxu0
      %v1097 = vadd.f32 0.0, %v1096
      %1098 = vmatprep.mubr.f32.mxu0 0.0
      %1099 = vmatmul.mubr.f32.gmra.mrb[0].mxu0 %v822
      %v1100 = vpop.f32.mrb[0].mxu0
      %v1101 = vadd.f32 0.0, %v1100
      %v1102 = vpop.f32.mrb[0].mxu0
      %v1103 = vadd.f32 0.0, %v1102
      %1104 = vmatprep.mubr.f32.mxu0 0.0
      %1105 = vmatmul.mubr.f32.gmra.mrb[0].mxu0 %v823
      %v1106 = vpop.f32.mrb[0].mxu0
      %v1107 = vadd.f32 0.0, %v1106
      %v1108 = vpop.f32.mrb[0].mxu0
      %v1109 = vadd.f32 0.0, %v1108
      %1110 = vmatprep.mubr.f32.mxu0 0.0
      %1111 = vmatmul.mubr.f32.gmra.mrb[0].mxu0 %v824
      %v1112 = vpop.f32.mrb[0].mxu0
      %v1113 = vadd.f32 0.0, %v1112
      %v1114 = vpop.f32.mrb[0].mxu0
      %v1115 = vadd.f32 0.0, %v1114
      %1116 = vmatprep.mubr.f32.mxu0 0.0
      %1117 = vmatmul.mubr.f32.gmra.mrb[0].mxu0 %v825
      %v1118 = vpop.f32.mrb[0].mxu0
      %v1119 = vadd.f32 0.0, %v1118
      %v1120 = vpop.f32.mrb[0].mxu0
      %v1121 = vadd.f32 0.0, %v1120
      %1122 = vmatprep.mubr.f32.mxu0 0.0
      %1123 = vmatmul.mubr.f32.gmra.mrb[0].mxu0 %v826
      %v1124 = vpop.f32.mrb[0].mxu0
      %v1125 = vadd.f32 0.0, %v1124
      %v1126 = vpop.f32.mrb[0].mxu0
      %v1127 = vadd.f32 0.0, %v1126
      %1128 = vmatprep.mubr.f32.mxu0 0.0
      %1129 = vmatmul.mubr.f32.gmra.mrb[0].mxu0 %v827
      %v1130 = vpop.f32.mrb[0].mxu0
      %v1131 = vadd.f32 0.0, %v1130
      %v1132 = vpop.f32.mrb[0].mxu0
      %v1133 = vadd.f32 0.0, %v1132
      %1134 = vmatprep.mubr.f32.mxu0 0.0
      %1135 = vmatmul.mubr.f32.gmra.mrb[0].mxu0 %v828
      %v1136 = vpop.f32.mrb[0].mxu0
      %v1137 = vadd.f32 0.0, %v1136
      %v1138 = vpop.f32.mrb[0].mxu0
      %v1139 = vadd.f32 0.0, %v1138
      %1140 = vmatprep.mubr.f32.mxu0 0.0
      %1141 = vmatmul.mubr.f32.gmra.mrb[0].mxu0 %v829
      %v1142 = vpop.f32.mrb[0].mxu0
      %v1143 = vadd.f32 0.0, %v1142
      %v1144 = vpop.f32.mrb[0].mxu0
      %v1145 = vadd.f32 0.0, %v1144
      %1146 = vmatprep.mubr.f32.mxu0 0.0
      %1147 = vmatmul.mubr.f32.gmra.mrb[0].mxu0 %v830
      %v1148 = vpop.f32.mrb[0].mxu0
      %v1149 = vadd.f32 0.0, %v1148
      %v1150 = vpop.f32.mrb[0].mxu0
      %v1151 = vadd.f32 0.0, %v1150
      %1152 = vmatprep.mubr.f32.mxu0 0.0
      %1153 = vmatmul.mubr.f32.gmra.mrb[0].mxu0 %v831
      %v1154 = vpop.f32.mrb[0].mxu0
      %v1155 = vadd.f32 0.0, %v1154
      %v1156 = vpop.f32.mrb[0].mxu0
      %v1157 = vadd.f32 0.0, %v1156
      %1158 = vmatprep.mubr.f32.mxu0 0.0
      %1159 = vmatmul.mubr.f32.gmra.mrb[0].mxu0 %v832
      %v1160 = vpop.f32.mrb[0].mxu0
      %v1161 = vadd.f32 0.0, %v1160
      %v1162 = vpop.f32.mrb[0].mxu0
      %v1163 = vadd.f32 0.0, %v1162
      %1164 = vmatprep.mubr.f32.mxu0 0.0
      %1165 = vmatmul.mubr.f32.gmra.mrb[0].mxu0 %v833
      %v1166 = vpop.f32.mrb[0].mxu0
      %v1167 = vadd.f32 0.0, %v1166
      %v1168 = vpop.f32.mrb[0].mxu0
      %v1169 = vadd.f32 0.0, %v1168
      %1170 = vmatprep.mubr.f32.mxu0 0.0
      %1171 = vmatmul.mubr.f32.gmra.mrb[0].mxu0 %v834
      %v1172 = vpop.f32.mrb[0].mxu0
      %v1173 = vadd.f32 0.0, %v1172
      %v1174 = vpop.f32.mrb[0].mxu0
      %v1175 = vadd.f32 0.0, %v1174
      %1176 = vmatprep.mubr.f32.mxu0 0.0
      %1177 = vmatmul.mubr.f32.gmra.mrb[0].mxu0 %v835
      %v1178 = vpop.f32.mrb[0].mxu0
      %v1179 = vadd.f32 0.0, %v1178
      %v1180 = vpop.f32.mrb[0].mxu0
      %v1181 = vadd.f32 0.0, %v1180
      %1182 = vmatprep.mubr.f32.mxu0 0.0
      %1183 = vmatmul.mubr.f32.gmra.mrb[0].mxu0 %v836
      %v1184 = vpop.f32.mrb[0].mxu0
      %v1185 = vadd.f32 0.0, %v1184
      %v1186 = vpop.f32.mrb[0].mxu0
      %v1187 = vadd.f32 0.0, %v1186
      %1188 = vmatprep.mubr.f32.mxu0 0.0
      %1189 = vmatmul.mubr.f32.gmra.mrb[0].mxu0 %v837
      %v1190 = vpop.f32.mrb[0].mxu0
      %v1191 = vadd.f32 0.0, %v1190
      %v1192 = vpop.f32.mrb[0].mxu0
      %v1193 = vadd.f32 0.0, %v1192
      %1194 = vmatprep.mubr.f32.mxu0 0.0
      %1195 = vmatmul.mubr.f32.gmra.mrb[0].mxu0 %v838
      %v1196 = vpop.f32.mrb[0].mxu0
      %v1197 = vadd.f32 0.0, %v1196
      %v1198 = vpop.f32.mrb[0].mxu0
      %v1199 = vadd.f32 0.0, %v1198
      %1200 = vmatprep.mubr.f32.mxu0 0.0
      %1201 = vmatmul.mubr.f32.gmra.mrb[0].mxu0 %v839
      %v1202 = vpop.f32.mrb[0].mxu0
      %v1203 = vadd.f32 0.0, %v1202
      %v1204 = vpop.f32.mrb[0].mxu0
      %v1205 = vadd.f32 0.0, %v1204
      %1206 = vmatprep.mubr.f32.mxu0 0.0
      %1207 = vmatmul.mubr.f32.gmra.mrb[0].mxu0 %v840
      %v1208 = vpop.f32.mrb[0].mxu0
      %v1209 = vadd.f32 0.0, %v1208
      %v1210 = vpop.f32.mrb[0].mxu0
      %v1211 = vadd.f32 0.0, %v1210
      %1212 = vmatprep.mubr.f32.mxu0 0.0
      %1213 = vmatmul.mubr.f32.gmra.mrb[0].mxu0 %v841
      %v1214 = vpop.f32.mrb[0].mxu0
      %v1215 = vadd.f32 0.0, %v1214
      %v1216 = vpop.f32.mrb[0].mxu0
      %v1217 = vadd.f32 0.0, %v1216
      %1218 = vmatprep.mubr.f32.mxu0 0.0
      %1219 = vmatmul.mubr.f32.gmra.mrb[0].mxu0 %v842
      %v1220 = vpop.f32.mrb[0].mxu0
      %v1221 = vadd.f32 0.0, %v1220
      %v1222 = vpop.f32.mrb[0].mxu0
      %v1223 = vadd.f32 0.0, %v1222
      %1224 = vmatprep.mubr.f32.mxu0 0.0
      %1225 = vmatmul.mubr.f32.gmra.mrb[0].mxu0 %v843
      %v1226 = vpop.f32.mrb[0].mxu0
      %v1227 = vadd.f32 0.0, %v1226
      %v1228 = vpop.f32.mrb[0].mxu0
      %v1229 = vadd.f32 0.0, %v1228
      %1230 = vmatprep.mubr.f32.mxu0 0.0
      %1231 = vmatmul.mubr.f32.gmra.mrb[0].mxu0 %v844
      %v1232 = vpop.f32.mrb[0].mxu0
      %v1233 = vadd.f32 0.0, %v1232
      %v1234 = vpop.f32.mrb[0].mxu0
      %v1235 = vadd.f32 0.0, %v1234
      %1236 = vmatprep.mubr.f32.mxu0 0.0
      %1237 = vmatmul.mubr.f32.gmra.mrb[0].mxu0 %v845
      %v1238 = vpop.f32.mrb[0].mxu0
      %v1239 = vadd.f32 0.0, %v1238
      %v1240 = vpop.f32.mrb[0].mxu0
      %v1241 = vadd.f32 0.0, %v1240
      %1242 = vmatprep.mubr.f32.mxu0 0.0
      %1243 = vmatmul.mubr.f32.gmra.mrb[0].mxu0 %v846
      %v1244 = vpop.f32.mrb[0].mxu0
      %v1245 = vadd.f32 0.0, %v1244
      %v1246 = vpop.f32.mrb[0].mxu0
      %v1247 = vadd.f32 0.0, %v1246
      %1248 = vmatprep.mubr.f32.mxu0 0.0
      %1249 = vmatmul.mubr.f32.gmra.mrb[0].mxu0 %v847
      %v1250 = vpop.f32.mrb[0].mxu0
      %v1251 = vadd.f32 0.0, %v1250
      %v1252 = vpop.f32.mrb[0].mxu0
      %v1253 = vadd.f32 0.0, %v1252
      %1254 = vmatprep.mubr.f32.mxu0 0.0
      %1255 = vmatmul.mubr.f32.gmra.mrb[0].mxu0 %v848
      %v1256 = vpop.f32.mrb[0].mxu0
      %v1257 = vadd.f32 0.0, %v1256
      %v1258 = vpop.f32.mrb[0].mxu0
      %v1259 = vadd.f32 0.0, %v1258
      %1260 = vmatprep.mubr.f32.mxu0 0.0
      %1261 = vmatmul.mubr.f32.gmra.mrb[0].mxu0 %v849
      %v1262 = vpop.f32.mrb[0].mxu0
      %v1263 = vadd.f32 0.0, %v1262
      %v1264 = vpop.f32.mrb[0].mxu0
      %v1265 = vadd.f32 0.0, %v1264
      %1266 = vmatprep.mubr.f32.mxu0 0.0
      %1267 = vmatmul.mubr.f32.gmra.mrb[0].mxu0 %v850
      %v1268 = vpop.f32.mrb[0].mxu0
      %v1269 = vadd.f32 0.0, %v1268
      %v1270 = vpop.f32.mrb[0].mxu0
      %v1271 = vadd.f32 0.0, %v1270
      %1272 = vmatprep.mubr.f32.mxu0 0.0
      %1273 = vmatmul.mubr.f32.gmra.mrb[0].mxu0 %v851
      %v1274 = vpop.f32.mrb[0].mxu0
      %v1275 = vadd.f32 0.0, %v1274
      %v1276 = vpop.f32.mrb[0].mxu0
      %v1277 = vadd.f32 0.0, %v1276
      %1278 = vmatprep.mubr.f32.mxu0 0.0
      %1279 = vmatmul.mubr.f32.gmra.mrb[0].mxu0 %v852
      %v1280 = vpop.f32.mrb[0].mxu0
      %v1281 = vadd.f32 0.0, %v1280
      %v1282 = vpop.f32.mrb[0].mxu0
      %v1283 = vadd.f32 0.0, %v1282
      %1284 = vmatprep.mubr.f32.mxu0 0.0
      %1285 = vmatmul.mubr.f32.gmra.mrb[0].mxu0 %v853
      %v1286 = vpop.f32.mrb[0].mxu0
      %v1287 = vadd.f32 0.0, %v1286
      %v1288 = vpop.f32.mrb[0].mxu0
      %v1289 = vadd.f32 0.0, %v1288
      %1290 = vmatprep.mubr.f32.mxu0 0.0
      %1291 = vmatmul.mubr.f32.gmra.mrb[0].mxu0 %v854
      %v1292 = vpop.f32.mrb[0].mxu0
      %v1293 = vadd.f32 0.0, %v1292
      %v1294 = vpop.f32.mrb[0].mxu0
      %v1295 = vadd.f32 0.0, %v1294
      %1296 = vmatprep.mubr.f32.mxu0 0.0
      %1297 = vmatmul.mubr.f32.gmra.mrb[0].mxu0 %v855
      %v1298 = vpop.f32.mrb[0].mxu0
      %v1299 = vadd.f32 0.0, %v1298
      %v1300 = vpop.f32.mrb[0].mxu0
      %v1301 = vadd.f32 0.0, %v1300
      %1302 = vmatprep.mubr.f32.mxu0 0.0
      %1303 = vmatmul.mubr.f32.gmra.mrb[0].mxu0 %v856
      %v1304 = vpop.f32.mrb[0].mxu0
      %v1305 = vadd.f32 0.0, %v1304
      %v1306 = vpop.f32.mrb[0].mxu0
      %v1307 = vadd.f32 0.0, %v1306
      %1308 = vmatprep.mubr.f32.mxu0 0.0
      %1309 = vmatmul.mubr.f32.gmra.mrb[0].mxu0 %v857
      %v1310 = vpop.f32.mrb[0].mxu0
      %v1311 = vadd.f32 0.0, %v1310
      %v1312 = vpop.f32.mrb[0].mxu0
      %v1313 = vadd.f32 0.0, %v1312
      %1314 = vmatprep.mubr.f32.mxu0 0.0
      %1315 = vmatmul.mubr.f32.gmra.mrb[0].mxu0 %v858
      %v1316 = vpop.f32.mrb[0].mxu0
      %v1317 = vadd.f32 0.0, %v1316
      %v1318 = vpop.f32.mrb[0].mxu0
      %v1319 = vadd.f32 0.0, %v1318
      %1320 = vmatprep.mubr.f32.mxu0 0.0
      %1321 = vmatmul.mubr.f32.gmra.mrb[0].mxu0 %v859
      %v1322 = vpop.f32.mrb[0].mxu0
      %v1323 = vadd.f32 0.0, %v1322
      %v1324 = vpop.f32.mrb[0].mxu0
      %v1325 = vadd.f32 0.0, %v1324
      %1326 = vmatprep.mubr.f32.mxu0 0.0
      %1327 = vmatmul.mubr.f32.gmra.mrb[0].mxu0 %v860
      %v1328 = vpop.f32.mrb[0].mxu0
      %v1329 = vadd.f32 0.0, %v1328
      %v1330 = vpop.f32.mrb[0].mxu0
      %v1331 = vadd.f32 0.0, %v1330
      %1332 = vmatprep.mubr.f32.mxu0 0.0
      %1333 = vmatmul.mubr.f32.gmra.mrb[0].mxu0 %v861
      %v1334 = vpop.f32.mrb[0].mxu0
      %v1335 = vadd.f32 0.0, %v1334
      %v1336 = vpop.f32.mrb[0].mxu0
      %v1337 = vadd.f32 0.0, %v1336
      %1338 = vmatprep.mubr.f32.mxu0 0.0
      %1339 = vmatmul.mubr.f32.gmra.mrb[0].mxu0 %v862
      %v1340 = vpop.f32.mrb[0].mxu0
      %v1341 = vadd.f32 0.0, %v1340
      %v1342 = vpop.f32.mrb[0].mxu0
      %v1343 = vadd.f32 0.0, %v1342
      %1344 = vmatprep.mubr.f32.mxu0 0.0
      %1345 = vmatmul.mubr.f32.gmra.mrb[0].mxu0 %v863
      %v1346 = vpop.f32.mrb[0].mxu0
      %v1347 = vadd.f32 0.0, %v1346
      %v1348 = vpop.f32.mrb[0].mxu0
      %v1349 = vadd.f32 0.0, %v1348
      %1350 = vmatprep.mubr.f32.mxu0 0.0
      %1351 = vmatmul.mubr.f32.gmra.mrb[0].mxu0 %v864
      %v1352 = vpop.f32.mrb[0].mxu0
      %v1353 = vadd.f32 0.0, %v1352
      %v1354 = vpop.f32.mrb[0].mxu0
      %v1355 = vadd.f32 0.0, %v1354
      %1356 = vmatprep.mubr.f32.mxu0 0.0
      %1357 = vmatmul.mubr.f32.gmra.mrb[0].mxu0 %v865
      %v1358 = vpop.f32.mrb[0].mxu0
      %v1359 = vadd.f32 0.0, %v1358
      %v1360 = vpop.f32.mrb[0].mxu0
      %v1361 = vadd.f32 0.0, %v1360
      %1362 = vmatprep.mubr.f32.mxu0 0.0
      %1363 = vmatmul.mubr.f32.gmra.mrb[0].mxu0 %v866
      %v1364 = vpop.f32.mrb[0].mxu0
      %v1365 = vadd.f32 0.0, %v1364
      %v1366 = vpop.f32.mrb[0].mxu0
      %v1367 = vadd.f32 0.0, %v1366
      %1368 = vmatprep.mubr.f32.mxu0 0.0
      %1369 = vmatmul.mubr.f32.gmra.mrb[0].mxu0 %v867
      %v1370 = vpop.f32.mrb[0].mxu0
      %v1371 = vadd.f32 0.0, %v1370
      %v1372 = vpop.f32.mrb[0].mxu0
      %v1373 = vadd.f32 0.0, %v1372
      %1374 = vmatprep.mubr.f32.mxu0 0.0
      %1375 = vmatmul.mubr.f32.gmra.mrb[0].mxu0 %v868
      %v1376 = vpop.f32.mrb[0].mxu0
      %v1377 = vadd.f32 0.0, %v1376
      %v1378 = vpop.f32.mrb[0].mxu0
      %v1379 = vadd.f32 0.0, %v1378
      %1380 = vmatprep.mubr.f32.mxu0 0.0
      %1381 = vmatmul.mubr.f32.gmra.mrb[0].mxu0 %v869
      %v1382 = vpop.f32.mrb[0].mxu0
      %v1383 = vadd.f32 0.0, %v1382
      %v1384 = vpop.f32.mrb[0].mxu0
      %v1385 = vadd.f32 0.0, %v1384
      %1386 = vmatprep.mubr.f32.mxu0 0.0
      %1387 = vmatmul.mubr.f32.gmra.mrb[0].mxu0 %v870
      %v1388 = vpop.f32.mrb[0].mxu0
      %v1389 = vadd.f32 0.0, %v1388
      %v1390 = vpop.f32.mrb[0].mxu0
      %v1391 = vadd.f32 0.0, %v1390
      %1392 = vmatprep.mubr.f32.mxu0 0.0
      %1393 = vmatmul.mubr.f32.gmra.mrb[0].mxu0 %v871
      %v1394 = vpop.f32.mrb[0].mxu0
      %v1395 = vadd.f32 0.0, %v1394
      %v1396 = vpop.f32.mrb[0].mxu0
      %v1397 = vadd.f32 0.0, %v1396
      %1398 = vmatprep.mubr.f32.mxu0 0.0
      %1399 = vmatmul.mubr.f32.gmra.mrb[0].mxu0 %v872
      %v1400 = vpop.f32.mrb[0].mxu0
      %v1401 = vadd.f32 0.0, %v1400
      %v1402 = vpop.f32.mrb[0].mxu0
      %v1403 = vadd.f32 0.0, %v1402
      %1404 = vmatprep.mubr.f32.mxu0 0.0
      %1405 = vmatmul.mubr.f32.gmra.mrb[0].mxu0 %v873
      %v1406 = vpop.f32.mrb[0].mxu0
      %v1407 = vadd.f32 0.0, %v1406
      %v1408 = vpop.f32.mrb[0].mxu0
      %v1409 = vadd.f32 0.0, %v1408
      %1410 = vmatprep.mubr.f32.mxu0 0.0
      %1411 = vmatmul.mubr.f32.gmra.mrb[0].mxu0 %v874
      %v1412 = vpop.f32.mrb[0].mxu0
      %v1413 = vadd.f32 0.0, %v1412
      %v1414 = vpop.f32.mrb[0].mxu0
      %v1415 = vadd.f32 0.0, %v1414
      %1416 = vmatprep.mubr.f32.mxu0 0.0
      %1417 = vmatmul.mubr.f32.gmra.mrb[0].mxu0 %v875
      %v1418 = vpop.f32.mrb[0].mxu0
      %v1419 = vadd.f32 0.0, %v1418
      %v1420 = vpop.f32.mrb[0].mxu0
      %v1421 = vadd.f32 0.0, %v1420
      %1422 = vmatprep.mubr.f32.mxu0 0.0
      %1423 = vmatmul.mubr.f32.gmra.mrb[0].mxu0 %v876
      %v1424 = vpop.f32.mrb[0].mxu0
      %v1425 = vadd.f32 0.0, %v1424
      %v1426 = vpop.f32.mrb[0].mxu0
      %v1427 = vadd.f32 0.0, %v1426
      %1428 = vmatprep.mubr.f32.mxu0 0.0
      %1429 = vmatmul.mubr.f32.gmra.mrb[0].mxu0 %v877
      %v1430 = vpop.f32.mrb[0].mxu0
      %v1431 = vadd.f32 0.0, %v1430
      %v1432 = vpop.f32.mrb[0].mxu0
      %v1433 = vadd.f32 0.0, %v1432
      %1434 = vmatprep.mubr.f32.mxu0 0.0
      %1435 = vmatmul.mubr.f32.gmra.mrb[0].mxu0 %v878
      %v1436 = vpop.f32.mrb[0].mxu0
      %v1437 = vadd.f32 0.0, %v1436
      %v1438 = vpop.f32.mrb[0].mxu0
      %v1439 = vadd.f32 0.0, %v1438
      %1440 = vmatprep.mubr.f32.mxu0 0.0
      %1441 = vmatmul.mubr.f32.gmra.mrb[0].mxu0 %v879
      %v1442 = vpop.f32.mrb[0].mxu0
      %v1443 = vadd.f32 0.0, %v1442
      %v1444 = vpop.f32.mrb[0].mxu0
      %v1445 = vadd.f32 0.0, %v1444
      %1446 = vmatprep.mubr.f32.mxu0 0.0
      %1447 = vmatmul.mubr.f32.gmra.mrb[0].mxu0 %v880
      %v1448 = vpop.f32.mrb[0].mxu0
      %v1449 = vadd.f32 0.0, %v1448
      %v1450 = vpop.f32.mrb[0].mxu0
      %v1451 = vadd.f32 0.0, %v1450
      %1452 = vmatprep.mubr.f32.mxu0 0.0
      %1453 = vmatmul.mubr.f32.gmra.mrb[0].mxu0 %v881
      %v1454 = vpop.f32.mrb[0].mxu0
      %v1455 = vadd.f32 0.0, %v1454
      %v1456 = vpop.f32.mrb[0].mxu0
      %v1457 = vadd.f32 0.0, %v1456
      %1458 = vdwg.mxu0
      %1459 = vmatprep.subr.mxu0 %v885
      %1460 = vmatpush1.msra.mxu0 %v884
      %1461 = vmatprep.subr.mxu0 %v893
      %1462 = vmatpush1.msra.mxu0 %v892
      %1463 = vmatprep.subr.mxu0 %v901
      %1464 = vmatpush1.msra.mxu0 %v900
      %1465 = vmatprep.subr.mxu0 %v909
      %1466 = vmatpush1.msra.mxu0 %v908
      %1467 = vmatprep.subr.mxu0 %v917
      %1468 = vmatpush1.msra.mxu0 %v916
      %1469 = vmatprep.subr.mxu0 %v925
      %1470 = vmatpush1.msra.mxu0 %v924
      %1471 = vmatprep.subr.mxu0 %v933
      %1472 = vmatpush1.msra.mxu0 %v932
      %1473 = vmatprep.subr.mxu0 %v941
      %1474 = vmatpush1.msra.mxu0 %v940
      %1475 = vmatprep.subr.mxu0 %v949
      %1476 = vmatpush1.msra.mxu0 %v948
      %1477 = vmatprep.subr.mxu0 %v957
      %1478 = vmatpush1.msra.mxu0 %v956
      %1479 = vmatprep.subr.mxu0 %v965
      %1480 = vmatpush1.msra.mxu0 %v964
      %1481 = vmatprep.subr.mxu0 %v973
      %1482 = vmatpush1.msra.mxu0 %v972
      %1483 = vmatprep.subr.mxu0 %v981
      %1484 = vmatpush1.msra.mxu0 %v980
      %1485 = vmatprep.subr.mxu0 %v989
      %1486 = vmatpush1.msra.mxu0 %v988
      %1487 = vmatprep.subr.mxu0 %v997
      %1488 = vmatpush1.msra.mxu0 %v996
      %1489 = vmatprep.subr.mxu0 %v1005
      %1490 = vmatpush1.msra.mxu0 %v1004
      %1491 = vmatprep.subr.mxu0 0.0
      %1492 = vmatpush1.msra.mxu0 0.0
      %1493 = vmatprep.subr.mxu0 0.0
      %1494 = vmatpush1.msra.mxu0 0.0
      %1495 = vmatprep.subr.mxu0 0.0
      %1496 = vmatpush1.msra.mxu0 0.0
      %1497 = vmatprep.subr.mxu0 0.0
      %1498 = vmatpush1.msra.mxu0 0.0
      %1499 = vmatprep.subr.mxu0 0.0
      %1500 = vmatpush1.msra.mxu0 0.0
      %1501 = vmatprep.subr.mxu0 0.0
      %1502 = vmatpush1.msra.mxu0 0.0
      %1503 = vmatprep.subr.mxu0 0.0
      %1504 = vmatpush1.msra.mxu0 0.0
      %1505 = vmatprep.subr.mxu0 0.0
      %1506 = vmatpush1.msra.mxu0 0.0
      %1507 = vmatprep.subr.mxu0 0.0
      %1508 = vmatpush1.msra.mxu0 0.0
      %1509 = vmatprep.subr.mxu0 0.0
      %1510 = vmatpush1.msra.mxu0 0.0
      %1511 = vmatprep.subr.mxu0 0.0
      %1512 = vmatpush1.msra.mxu0 0.0
      %1513 = vmatprep.subr.mxu0 0.0
      %1514 = vmatpush1.msra.mxu0 0.0
      %1515 = vmatprep.subr.mxu0 0.0
      %1516 = vmatpush1.msra.mxu0 0.0
      %1517 = vmatprep.subr.mxu0 0.0
      %1518 = vmatpush1.msra.mxu0 0.0
      %1519 = vmatprep.subr.mxu0 0.0
      %1520 = vmatpush1.msra.mxu0 0.0
      %1521 = vmatprep.subr.mxu0 0.0
      %1522 = vmatpush1.msra.mxu0 0.0
      %1523 = vmatprep.mubr.f32.mxu0 0.0
      %1524 = vmatmul.mubr.f32.gmra.mrb[0].mxu0 %v818
      %v1525 = vpop.f32.mrb[0].mxu0
      %v1526 = vadd.f32 0.0, %v1525
      %v1527 = vpop.f32.mrb[0].mxu0
      %v1528 = vadd.f32 0.0, %v1527
      %1529 = vmatprep.mubr.f32.mxu0 0.0
      %1530 = vmatmul.mubr.f32.gmra.mrb[0].mxu0 %v819
      %v1531 = vpop.f32.mrb[0].mxu0
      %v1532 = vadd.f32 0.0, %v1531
      %v1533 = vpop.f32.mrb[0].mxu0
      %v1534 = vadd.f32 0.0, %v1533
      %1535 = vmatprep.mubr.f32.mxu0 0.0
      %1536 = vmatmul.mubr.f32.gmra.mrb[0].mxu0 %v820
      %v1537 = vpop.f32.mrb[0].mxu0
      %v1538 = vadd.f32 0.0, %v1537
      %v1539 = vpop.f32.mrb[0].mxu0
      %v1540 = vadd.f32 0.0, %v1539
      %1541 = vmatprep.mubr.f32.mxu0 0.0
      %1542 = vmatmul.mubr.f32.gmra.mrb[0].mxu0 %v821
      %v1543 = vpop.f32.mrb[0].mxu0
      %v1544 = vadd.f32 0.0, %v1543
      %v1545 = vpop.f32.mrb[0].mxu0
      %v1546 = vadd.f32 0.0, %v1545
      %1547 = vmatprep.mubr.f32.mxu0 0.0
      %1548 = vmatmul.mubr.f32.gmra.mrb[0].mxu0 %v822
      %v1549 = vpop.f32.mrb[0].mxu0
      %v1550 = vadd.f32 0.0, %v1549
      %v1551 = vpop.f32.mrb[0].mxu0
      %v1552 = vadd.f32 0.0, %v1551
      %1553 = vmatprep.mubr.f32.mxu0 0.0
      %1554 = vmatmul.mubr.f32.gmra.mrb[0].mxu0 %v823
      %v1555 = vpop.f32.mrb[0].mxu0
      %v1556 = vadd.f32 0.0, %v1555
      %v1557 = vpop.f32.mrb[0].mxu0
      %v1558 = vadd.f32 0.0, %v1557
      %1559 = vmatprep.mubr.f32.mxu0 0.0
      %1560 = vmatmul.mubr.f32.gmra.mrb[0].mxu0 %v824
      %v1561 = vpop.f32.mrb[0].mxu0
      %v1562 = vadd.f32 0.0, %v1561
      %v1563 = vpop.f32.mrb[0].mxu0
      %v1564 = vadd.f32 0.0, %v1563
      %1565 = vmatprep.mubr.f32.mxu0 0.0
      %1566 = vmatmul.mubr.f32.gmra.mrb[0].mxu0 %v825
      %v1567 = vpop.f32.mrb[0].mxu0
      %v1568 = vadd.f32 0.0, %v1567
      %v1569 = vpop.f32.mrb[0].mxu0
      %v1570 = vadd.f32 0.0, %v1569
      %1571 = vmatprep.mubr.f32.mxu0 0.0
      %1572 = vmatmul.mubr.f32.gmra.mrb[0].mxu0 %v826
      %v1573 = vpop.f32.mrb[0].mxu0
      %v1574 = vadd.f32 0.0, %v1573
      %v1575 = vpop.f32.mrb[0].mxu0
      %v1576 = vadd.f32 0.0, %v1575
      %1577 = vmatprep.mubr.f32.mxu0 0.0
      %1578 = vmatmul.mubr.f32.gmra.mrb[0].mxu0 %v827
      %v1579 = vpop.f32.mrb[0].mxu0
      %v1580 = vadd.f32 0.0, %v1579
      %v1581 = vpop.f32.mrb[0].mxu0
      %v1582 = vadd.f32 0.0, %v1581
      %1583 = vmatprep.mubr.f32.mxu0 0.0
      %1584 = vmatmul.mubr.f32.gmra.mrb[0].mxu0 %v828
      %v1585 = vpop.f32.mrb[0].mxu0
      %v1586 = vadd.f32 0.0, %v1585
      %v1587 = vpop.f32.mrb[0].mxu0
      %v1588 = vadd.f32 0.0, %v1587
      %1589 = vmatprep.mubr.f32.mxu0 0.0
      %1590 = vmatmul.mubr.f32.gmra.mrb[0].mxu0 %v829
      %v1591 = vpop.f32.mrb[0].mxu0
      %v1592 = vadd.f32 0.0, %v1591
      %v1593 = vpop.f32.mrb[0].mxu0
      %v1594 = vadd.f32 0.0, %v1593
      %1595 = vmatprep.mubr.f32.mxu0 0.0
      %1596 = vmatmul.mubr.f32.gmra.mrb[0].mxu0 %v830
      %v1597 = vpop.f32.mrb[0].mxu0
      %v1598 = vadd.f32 0.0, %v1597
      %v1599 = vpop.f32.mrb[0].mxu0
      %v1600 = vadd.f32 0.0, %v1599
      %1601 = vmatprep.mubr.f32.mxu0 0.0
      %1602 = vmatmul.mubr.f32.gmra.mrb[0].mxu0 %v831
      %v1603 = vpop.f32.mrb[0].mxu0
      %v1604 = vadd.f32 0.0, %v1603
      %v1605 = vpop.f32.mrb[0].mxu0
      %v1606 = vadd.f32 0.0, %v1605
      %1607 = vmatprep.mubr.f32.mxu0 0.0
      %1608 = vmatmul.mubr.f32.gmra.mrb[0].mxu0 %v832
      %v1609 = vpop.f32.mrb[0].mxu0
      %v1610 = vadd.f32 0.0, %v1609
      %v1611 = vpop.f32.mrb[0].mxu0
      %v1612 = vadd.f32 0.0, %v1611
      %1613 = vmatprep.mubr.f32.mxu0 0.0
      %1614 = vmatmul.mubr.f32.gmra.mrb[0].mxu0 %v833
      %v1615 = vpop.f32.mrb[0].mxu0
      %v1616 = vadd.f32 0.0, %v1615
      %v1617 = vpop.f32.mrb[0].mxu0
      %v1618 = vadd.f32 0.0, %v1617
      %1619 = vmatprep.mubr.f32.mxu0 0.0
      %1620 = vmatmul.mubr.f32.gmra.mrb[0].mxu0 %v834
      %v1621 = vpop.f32.mrb[0].mxu0
      %v1622 = vadd.f32 0.0, %v1621
      %v1623 = vpop.f32.mrb[0].mxu0
      %v1624 = vadd.f32 0.0, %v1623
      %1625 = vmatprep.mubr.f32.mxu0 0.0
      %1626 = vmatmul.mubr.f32.gmra.mrb[0].mxu0 %v835
      %v1627 = vpop.f32.mrb[0].mxu0
      %v1628 = vadd.f32 0.0, %v1627
      %v1629 = vpop.f32.mrb[0].mxu0
      %v1630 = vadd.f32 0.0, %v1629
      %1631 = vmatprep.mubr.f32.mxu0 0.0
      %1632 = vmatmul.mubr.f32.gmra.mrb[0].mxu0 %v836
      %v1633 = vpop.f32.mrb[0].mxu0
      %v1634 = vadd.f32 0.0, %v1633
      %v1635 = vpop.f32.mrb[0].mxu0
      %v1636 = vadd.f32 0.0, %v1635
      %1637 = vmatprep.mubr.f32.mxu0 0.0
      %1638 = vmatmul.mubr.f32.gmra.mrb[0].mxu0 %v837
      %v1639 = vpop.f32.mrb[0].mxu0
      %v1640 = vadd.f32 0.0, %v1639
      %v1641 = vpop.f32.mrb[0].mxu0
      %v1642 = vadd.f32 0.0, %v1641
      %1643 = vmatprep.mubr.f32.mxu0 0.0
      %1644 = vmatmul.mubr.f32.gmra.mrb[0].mxu0 %v838
      %v1645 = vpop.f32.mrb[0].mxu0
      %v1646 = vadd.f32 0.0, %v1645
      %v1647 = vpop.f32.mrb[0].mxu0
      %v1648 = vadd.f32 0.0, %v1647
      %1649 = vmatprep.mubr.f32.mxu0 0.0
      %1650 = vmatmul.mubr.f32.gmra.mrb[0].mxu0 %v839
      %v1651 = vpop.f32.mrb[0].mxu0
      %v1652 = vadd.f32 0.0, %v1651
      %v1653 = vpop.f32.mrb[0].mxu0
      %v1654 = vadd.f32 0.0, %v1653
      %1655 = vmatprep.mubr.f32.mxu0 0.0
      %1656 = vmatmul.mubr.f32.gmra.mrb[0].mxu0 %v840
      %v1657 = vpop.f32.mrb[0].mxu0
      %v1658 = vadd.f32 0.0, %v1657
      %v1659 = vpop.f32.mrb[0].mxu0
      %v1660 = vadd.f32 0.0, %v1659
      %1661 = vmatprep.mubr.f32.mxu0 0.0
      %1662 = vmatmul.mubr.f32.gmra.mrb[0].mxu0 %v841
      %v1663 = vpop.f32.mrb[0].mxu0
      %v1664 = vadd.f32 0.0, %v1663
      %v1665 = vpop.f32.mrb[0].mxu0
      %v1666 = vadd.f32 0.0, %v1665
      %1667 = vmatprep.mubr.f32.mxu0 0.0
      %1668 = vmatmul.mubr.f32.gmra.mrb[0].mxu0 %v842
      %v1669 = vpop.f32.mrb[0].mxu0
      %v1670 = vadd.f32 0.0, %v1669
      %v1671 = vpop.f32.mrb[0].mxu0
      %v1672 = vadd.f32 0.0, %v1671
      %1673 = vmatprep.mubr.f32.mxu0 0.0
      %1674 = vmatmul.mubr.f32.gmra.mrb[0].mxu0 %v843
      %v1675 = vpop.f32.mrb[0].mxu0
      %v1676 = vadd.f32 0.0, %v1675
      %v1677 = vpop.f32.mrb[0].mxu0
      %v1678 = vadd.f32 0.0, %v1677
      %1679 = vmatprep.mubr.f32.mxu0 0.0
      %1680 = vmatmul.mubr.f32.gmra.mrb[0].mxu0 %v844
      %v1681 = vpop.f32.mrb[0].mxu0
      %v1682 = vadd.f32 0.0, %v1681
      %v1683 = vpop.f32.mrb[0].mxu0
      %v1684 = vadd.f32 0.0, %v1683
      %1685 = vmatprep.mubr.f32.mxu0 0.0
      %1686 = vmatmul.mubr.f32.gmra.mrb[0].mxu0 %v845
      %v1687 = vpop.f32.mrb[0].mxu0
      %v1688 = vadd.f32 0.0, %v1687
      %v1689 = vpop.f32.mrb[0].mxu0
      %v1690 = vadd.f32 0.0, %v1689
      %1691 = vmatprep.mubr.f32.mxu0 0.0
      %1692 = vmatmul.mubr.f32.gmra.mrb[0].mxu0 %v846
      %v1693 = vpop.f32.mrb[0].mxu0
      %v1694 = vadd.f32 0.0, %v1693
      %v1695 = vpop.f32.mrb[0].mxu0
      %v1696 = vadd.f32 0.0, %v1695
      %1697 = vmatprep.mubr.f32.mxu0 0.0
      %1698 = vmatmul.mubr.f32.gmra.mrb[0].mxu0 %v847
      %v1699 = vpop.f32.mrb[0].mxu0
      %v1700 = vadd.f32 0.0, %v1699
      %v1701 = vpop.f32.mrb[0].mxu0
      %v1702 = vadd.f32 0.0, %v1701
      %1703 = vmatprep.mubr.f32.mxu0 0.0
      %1704 = vmatmul.mubr.f32.gmra.mrb[0].mxu0 %v848
      %v1705 = vpop.f32.mrb[0].mxu0
      %v1706 = vadd.f32 0.0, %v1705
      %v1707 = vpop.f32.mrb[0].mxu0
      %v1708 = vadd.f32 0.0, %v1707
      %1709 = vmatprep.mubr.f32.mxu0 0.0
      %1710 = vmatmul.mubr.f32.gmra.mrb[0].mxu0 %v849
      %v1711 = vpop.f32.mrb[0].mxu0
      %v1712 = vadd.f32 0.0, %v1711
      %v1713 = vpop.f32.mrb[0].mxu0
      %v1714 = vadd.f32 0.0, %v1713
      %1715 = vmatprep.mubr.f32.mxu0 0.0
      %1716 = vmatmul.mubr.f32.gmra.mrb[0].mxu0 %v850
      %v1717 = vpop.f32.mrb[0].mxu0
      %v1718 = vadd.f32 0.0, %v1717
      %v1719 = vpop.f32.mrb[0].mxu0
      %v1720 = vadd.f32 0.0, %v1719
      %1721 = vmatprep.mubr.f32.mxu0 0.0
      %1722 = vmatmul.mubr.f32.gmra.mrb[0].mxu0 %v851
      %v1723 = vpop.f32.mrb[0].mxu0
      %v1724 = vadd.f32 0.0, %v1723
      %v1725 = vpop.f32.mrb[0].mxu0
      %v1726 = vadd.f32 0.0, %v1725
      %1727 = vmatprep.mubr.f32.mxu0 0.0
      %1728 = vmatmul.mubr.f32.gmra.mrb[0].mxu0 %v852
      %v1729 = vpop.f32.mrb[0].mxu0
      %v1730 = vadd.f32 0.0, %v1729
      %v1731 = vpop.f32.mrb[0].mxu0
      %v1732 = vadd.f32 0.0, %v1731
      %1733 = vmatprep.mubr.f32.mxu0 0.0
      %1734 = vmatmul.mubr.f32.gmra.mrb[0].mxu0 %v853
      %v1735 = vpop.f32.mrb[0].mxu0
      %v1736 = vadd.f32 0.0, %v1735
      %v1737 = vpop.f32.mrb[0].mxu0
      %v1738 = vadd.f32 0.0, %v1737
      %1739 = vmatprep.mubr.f32.mxu0 0.0
      %1740 = vmatmul.mubr.f32.gmra.mrb[0].mxu0 %v854
      %v1741 = vpop.f32.mrb[0].mxu0
      %v1742 = vadd.f32 0.0, %v1741
      %v1743 = vpop.f32.mrb[0].mxu0
      %v1744 = vadd.f32 0.0, %v1743
      %1745 = vmatprep.mubr.f32.mxu0 0.0
      %1746 = vmatmul.mubr.f32.gmra.mrb[0].mxu0 %v855
      %v1747 = vpop.f32.mrb[0].mxu0
      %v1748 = vadd.f32 0.0, %v1747
      %v1749 = vpop.f32.mrb[0].mxu0
      %v1750 = vadd.f32 0.0, %v1749
      %1751 = vmatprep.mubr.f32.mxu0 0.0
      %1752 = vmatmul.mubr.f32.gmra.mrb[0].mxu0 %v856
      %v1753 = vpop.f32.mrb[0].mxu0
      %v1754 = vadd.f32 0.0, %v1753
      %v1755 = vpop.f32.mrb[0].mxu0
      %v1756 = vadd.f32 0.0, %v1755
      %1757 = vmatprep.mubr.f32.mxu0 0.0
      %1758 = vmatmul.mubr.f32.gmra.mrb[0].mxu0 %v857
      %v1759 = vpop.f32.mrb[0].mxu0
      %v1760 = vadd.f32 0.0, %v1759
      %v1761 = vpop.f32.mrb[0].mxu0
      %v1762 = vadd.f32 0.0, %v1761
      %1763 = vmatprep.mubr.f32.mxu0 0.0
      %1764 = vmatmul.mubr.f32.gmra.mrb[0].mxu0 %v858
      %v1765 = vpop.f32.mrb[0].mxu0
      %v1766 = vadd.f32 0.0, %v1765
      %v1767 = vpop.f32.mrb[0].mxu0
      %v1768 = vadd.f32 0.0, %v1767
      %1769 = vmatprep.mubr.f32.mxu0 0.0
      %1770 = vmatmul.mubr.f32.gmra.mrb[0].mxu0 %v859
      %v1771 = vpop.f32.mrb[0].mxu0
      %v1772 = vadd.f32 0.0, %v1771
      %v1773 = vpop.f32.mrb[0].mxu0
      %v1774 = vadd.f32 0.0, %v1773
      %1775 = vmatprep.mubr.f32.mxu0 0.0
      %1776 = vmatmul.mubr.f32.gmra.mrb[0].mxu0 %v860
      %v1777 = vpop.f32.mrb[0].mxu0
      %v1778 = vadd.f32 0.0, %v1777
      %v1779 = vpop.f32.mrb[0].mxu0
      %v1780 = vadd.f32 0.0, %v1779
      %1781 = vmatprep.mubr.f32.mxu0 0.0
      %1782 = vmatmul.mubr.f32.gmra.mrb[0].mxu0 %v861
      %v1783 = vpop.f32.mrb[0].mxu0
      %v1784 = vadd.f32 0.0, %v1783
      %v1785 = vpop.f32.mrb[0].mxu0
      %v1786 = vadd.f32 0.0, %v1785
      %1787 = vmatprep.mubr.f32.mxu0 0.0
      %1788 = vmatmul.mubr.f32.gmra.mrb[0].mxu0 %v862
      %v1789 = vpop.f32.mrb[0].mxu0
      %v1790 = vadd.f32 0.0, %v1789
      %v1791 = vpop.f32.mrb[0].mxu0
      %v1792 = vadd.f32 0.0, %v1791
      %1793 = vmatprep.mubr.f32.mxu0 0.0
      %1794 = vmatmul.mubr.f32.gmra.mrb[0].mxu0 %v863
      %v1795 = vpop.f32.mrb[0].mxu0
      %v1796 = vadd.f32 0.0, %v1795
      %v1797 = vpop.f32.mrb[0].mxu0
      %v1798 = vadd.f32 0.0, %v1797
      %1799 = vmatprep.mubr.f32.mxu0 0.0
      %1800 = vmatmul.mubr.f32.gmra.mrb[0].mxu0 %v864
      %v1801 = vpop.f32.mrb[0].mxu0
      %v1802 = vadd.f32 0.0, %v1801
      %v1803 = vpop.f32.mrb[0].mxu0
      %v1804 = vadd.f32 0.0, %v1803
      %1805 = vmatprep.mubr.f32.mxu0 0.0
      %1806 = vmatmul.mubr.f32.gmra.mrb[0].mxu0 %v865
      %v1807 = vpop.f32.mrb[0].mxu0
      %v1808 = vadd.f32 0.0, %v1807
      %v1809 = vpop.f32.mrb[0].mxu0
      %v1810 = vadd.f32 0.0, %v1809
      %1811 = vmatprep.mubr.f32.mxu0 0.0
      %1812 = vmatmul.mubr.f32.gmra.mrb[0].mxu0 %v866
      %v1813 = vpop.f32.mrb[0].mxu0
      %v1814 = vadd.f32 0.0, %v1813
      %v1815 = vpop.f32.mrb[0].mxu0
      %v1816 = vadd.f32 0.0, %v1815
      %1817 = vmatprep.mubr.f32.mxu0 0.0
      %1818 = vmatmul.mubr.f32.gmra.mrb[0].mxu0 %v867
      %v1819 = vpop.f32.mrb[0].mxu0
      %v1820 = vadd.f32 0.0, %v1819
      %v1821 = vpop.f32.mrb[0].mxu0
      %v1822 = vadd.f32 0.0, %v1821
      %1823 = vmatprep.mubr.f32.mxu0 0.0
      %1824 = vmatmul.mubr.f32.gmra.mrb[0].mxu0 %v868
      %v1825 = vpop.f32.mrb[0].mxu0
      %v1826 = vadd.f32 0.0, %v1825
      %v1827 = vpop.f32.mrb[0].mxu0
      %v1828 = vadd.f32 0.0, %v1827
      %1829 = vmatprep.mubr.f32.mxu0 0.0
      %1830 = vmatmul.mubr.f32.gmra.mrb[0].mxu0 %v869
      %v1831 = vpop.f32.mrb[0].mxu0
      %v1832 = vadd.f32 0.0, %v1831
      %v1833 = vpop.f32.mrb[0].mxu0
      %v1834 = vadd.f32 0.0, %v1833
      %1835 = vmatprep.mubr.f32.mxu0 0.0
      %1836 = vmatmul.mubr.f32.gmra.mrb[0].mxu0 %v870
      %v1837 = vpop.f32.mrb[0].mxu0
      %v1838 = vadd.f32 0.0, %v1837
      %v1839 = vpop.f32.mrb[0].mxu0
      %v1840 = vadd.f32 0.0, %v1839
      %1841 = vmatprep.mubr.f32.mxu0 0.0
      %1842 = vmatmul.mubr.f32.gmra.mrb[0].mxu0 %v871
      %v1843 = vpop.f32.mrb[0].mxu0
      %v1844 = vadd.f32 0.0, %v1843
      %v1845 = vpop.f32.mrb[0].mxu0
      %v1846 = vadd.f32 0.0, %v1845
      %1847 = vmatprep.mubr.f32.mxu0 0.0
      %1848 = vmatmul.mubr.f32.gmra.mrb[0].mxu0 %v872
      %v1849 = vpop.f32.mrb[0].mxu0
      %v1850 = vadd.f32 0.0, %v1849
      %v1851 = vpop.f32.mrb[0].mxu0
      %v1852 = vadd.f32 0.0, %v1851
      %1853 = vmatprep.mubr.f32.mxu0 0.0
      %1854 = vmatmul.mubr.f32.gmra.mrb[0].mxu0 %v873
      %v1855 = vpop.f32.mrb[0].mxu0
      %v1856 = vadd.f32 0.0, %v1855
      %v1857 = vpop.f32.mrb[0].mxu0
      %v1858 = vadd.f32 0.0, %v1857
      %1859 = vmatprep.mubr.f32.mxu0 0.0
      %1860 = vmatmul.mubr.f32.gmra.mrb[0].mxu0 %v874
      %v1861 = vpop.f32.mrb[0].mxu0
      %v1862 = vadd.f32 0.0, %v1861
      %v1863 = vpop.f32.mrb[0].mxu0
      %v1864 = vadd.f32 0.0, %v1863
      %1865 = vmatprep.mubr.f32.mxu0 0.0
      %1866 = vmatmul.mubr.f32.gmra.mrb[0].mxu0 %v875
      %v1867 = vpop.f32.mrb[0].mxu0
      %v1868 = vadd.f32 0.0, %v1867
      %v1869 = vpop.f32.mrb[0].mxu0
      %v1870 = vadd.f32 0.0, %v1869
      %1871 = vmatprep.mubr.f32.mxu0 0.0
      %1872 = vmatmul.mubr.f32.gmra.mrb[0].mxu0 %v876
      %v1873 = vpop.f32.mrb[0].mxu0
      %v1874 = vadd.f32 0.0, %v1873
      %v1875 = vpop.f32.mrb[0].mxu0
      %v1876 = vadd.f32 0.0, %v1875
      %1877 = vmatprep.mubr.f32.mxu0 0.0
      %1878 = vmatmul.mubr.f32.gmra.mrb[0].mxu0 %v877
      %v1879 = vpop.f32.mrb[0].mxu0
      %v1880 = vadd.f32 0.0, %v1879
      %v1881 = vpop.f32.mrb[0].mxu0
      %v1882 = vadd.f32 0.0, %v1881
      %1883 = vmatprep.mubr.f32.mxu0 0.0
      %1884 = vmatmul.mubr.f32.gmra.mrb[0].mxu0 %v878
      %v1885 = vpop.f32.mrb[0].mxu0
      %v1886 = vadd.f32 0.0, %v1885
      %v1887 = vpop.f32.mrb[0].mxu0
      %v1888 = vadd.f32 0.0, %v1887
      %1889 = vmatprep.mubr.f32.mxu0 0.0
      %1890 = vmatmul.mubr.f32.gmra.mrb[0].mxu0 %v879
      %v1891 = vpop.f32.mrb[0].mxu0
      %v1892 = vadd.f32 0.0, %v1891
      %v1893 = vpop.f32.mrb[0].mxu0
      %v1894 = vadd.f32 0.0, %v1893
      %1895 = vmatprep.mubr.f32.mxu0 0.0
      %1896 = vmatmul.mubr.f32.gmra.mrb[0].mxu0 %v880
      %v1897 = vpop.f32.mrb[0].mxu0
      %v1898 = vadd.f32 0.0, %v1897
      %v1899 = vpop.f32.mrb[0].mxu0
      %v1900 = vadd.f32 0.0, %v1899
      %1901 = vmatprep.mubr.f32.mxu0 0.0
      %1902 = vmatmul.mubr.f32.gmra.mrb[0].mxu0 %v881
      %v1903 = vpop.f32.mrb[0].mxu0
      %v1904 = vadd.f32 0.0, %v1903
      %v1905 = vpop.f32.mrb[0].mxu0
      %v1906 = vadd.f32 0.0, %v1905
      %1907 = vdwg.mxu0
      %1908 = vmatprep.subr.mxu0 %v887
      %1909 = vmatpush1.msra.mxu0 %v886
      %1910 = vmatprep.subr.mxu0 %v895
      %1911 = vmatpush1.msra.mxu0 %v894
      %1912 = vmatprep.subr.mxu0 %v903
      %1913 = vmatpush1.msra.mxu0 %v902
      %1914 = vmatprep.subr.mxu0 %v911
      %1915 = vmatpush1.msra.mxu0 %v910
      %1916 = vmatprep.subr.mxu0 %v919
      %1917 = vmatpush1.msra.mxu0 %v918
      %1918 = vmatprep.subr.mxu0 %v927
      %1919 = vmatpush1.msra.mxu0 %v926
      %1920 = vmatprep.subr.mxu0 %v935
      %1921 = vmatpush1.msra.mxu0 %v934
      %1922 = vmatprep.subr.mxu0 %v943
      %1923 = vmatpush1.msra.mxu0 %v942
      %1924 = vmatprep.subr.mxu0 %v951
      %1925 = vmatpush1.msra.mxu0 %v950
      %1926 = vmatprep.subr.mxu0 %v959
      %1927 = vmatpush1.msra.mxu0 %v958
      %1928 = vmatprep.subr.mxu0 %v967
      %1929 = vmatpush1.msra.mxu0 %v966
      %1930 = vmatprep.subr.mxu0 %v975
      %1931 = vmatpush1.msra.mxu0 %v974
      %1932 = vmatprep.subr.mxu0 %v983
      %1933 = vmatpush1.msra.mxu0 %v982
      %1934 = vmatprep.subr.mxu0 %v991
      %1935 = vmatpush1.msra.mxu0 %v990
      %1936 = vmatprep.subr.mxu0 %v999
      %1937 = vmatpush1.msra.mxu0 %v998
      %1938 = vmatprep.subr.mxu0 %v1007
      %1939 = vmatpush1.msra.mxu0 %v1006
      %1940 = vmatprep.subr.mxu0 0.0
      %1941 = vmatpush1.msra.mxu0 0.0
      %1942 = vmatprep.subr.mxu0 0.0
      %1943 = vmatpush1.msra.mxu0 0.0
      %1944 = vmatprep.subr.mxu0 0.0
      %1945 = vmatpush1.msra.mxu0 0.0
      %1946 = vmatprep.subr.mxu0 0.0
      %1947 = vmatpush1.msra.mxu0 0.0
      %1948 = vmatprep.subr.mxu0 0.0
      %1949 = vmatpush1.msra.mxu0 0.0
      %1950 = vmatprep.subr.mxu0 0.0
      %1951 = vmatpush1.msra.mxu0 0.0
      %1952 = vmatprep.subr.mxu0 0.0
      %1953 = vmatpush1.msra.mxu0 0.0
      %1954 = vmatprep.subr.mxu0 0.0
      %1955 = vmatpush1.msra.mxu0 0.0
      %1956 = vmatprep.subr.mxu0 0.0
      %1957 = vmatpush1.msra.mxu0 0.0
      %1958 = vmatprep.subr.mxu0 0.0
      %1959 = vmatpush1.msra.mxu0 0.0
      %1960 = vmatprep.subr.mxu0 0.0
      %1961 = vmatpush1.msra.mxu0 0.0
      %1962 = vmatprep.subr.mxu0 0.0
      %1963 = vmatpush1.msra.mxu0 0.0
      %1964 = vmatprep.subr.mxu0 0.0
      %1965 = vmatpush1.msra.mxu0 0.0
      %1966 = vmatprep.subr.mxu0 0.0
      %1967 = vmatpush1.msra.mxu0 0.0
      %1968 = vmatprep.subr.mxu0 0.0
      %1969 = vmatpush1.msra.mxu0 0.0
      %1970 = vmatprep.subr.mxu0 0.0
      %1971 = vmatpush1.msra.mxu0 0.0
      %1972 = vmatprep.mubr.f32.mxu0 0.0
      %1973 = vmatmul.mubr.f32.gmra.mrb[0].mxu0 %v818
      %v1974 = vpop.f32.mrb[0].mxu0
      %v1975 = vadd.f32 0.0, %v1974
      %v1976 = vpop.f32.mrb[0].mxu0
      %v1977 = vadd.f32 0.0, %v1976
      %1978 = vmatprep.mubr.f32.mxu0 0.0
      %1979 = vmatmul.mubr.f32.gmra.mrb[0].mxu0 %v819
      %v1980 = vpop.f32.mrb[0].mxu0
      %v1981 = vadd.f32 0.0, %v1980
      %v1982 = vpop.f32.mrb[0].mxu0
      %v1983 = vadd.f32 0.0, %v1982
      %1984 = vmatprep.mubr.f32.mxu0 0.0
      %1985 = vmatmul.mubr.f32.gmra.mrb[0].mxu0 %v820
      %v1986 = vpop.f32.mrb[0].mxu0
      %v1987 = vadd.f32 0.0, %v1986
      %v1988 = vpop.f32.mrb[0].mxu0
      %v1989 = vadd.f32 0.0, %v1988
      %1990 = vmatprep.mubr.f32.mxu0 0.0
      %1991 = vmatmul.mubr.f32.gmra.mrb[0].mxu0 %v821
      %v1992 = vpop.f32.mrb[0].mxu0
      %v1993 = vadd.f32 0.0, %v1992
      %v1994 = vpop.f32.mrb[0].mxu0
      %v1995 = vadd.f32 0.0, %v1994
      %1996 = vmatprep.mubr.f32.mxu0 0.0
      %1997 = vmatmul.mubr.f32.gmra.mrb[0].mxu0 %v822
      %v1998 = vpop.f32.mrb[0].mxu0
      %v1999 = vadd.f32 0.0, %v1998
      %v2000 = vpop.f32.mrb[0].mxu0
      %v2001 = vadd.f32 0.0, %v2000
      %2002 = vmatprep.mubr.f32.mxu0 0.0
      %2003 = vmatmul.mubr.f32.gmra.mrb[0].mxu0 %v823
      %v2004 = vpop.f32.mrb[0].mxu0
      %v2005 = vadd.f32 0.0, %v2004
      %v2006 = vpop.f32.mrb[0].mxu0
      %v2007 = vadd.f32 0.0, %v2006
      %2008 = vmatprep.mubr.f32.mxu0 0.0
      %2009 = vmatmul.mubr.f32.gmra.mrb[0].mxu0 %v824
      %v2010 = vpop.f32.mrb[0].mxu0
      %v2011 = vadd.f32 0.0, %v2010
      %v2012 = vpop.f32.mrb[0].mxu0
      %v2013 = vadd.f32 0.0, %v2012
      %2014 = vmatprep.mubr.f32.mxu0 0.0
      %2015 = vmatmul.mubr.f32.gmra.mrb[0].mxu0 %v825
      %v2016 = vpop.f32.mrb[0].mxu0
      %v2017 = vadd.f32 0.0, %v2016
      %v2018 = vpop.f32.mrb[0].mxu0
      %v2019 = vadd.f32 0.0, %v2018
      %2020 = vmatprep.mubr.f32.mxu0 0.0
      %2021 = vmatmul.mubr.f32.gmra.mrb[0].mxu0 %v826
      %v2022 = vpop.f32.mrb[0].mxu0
      %v2023 = vadd.f32 0.0, %v2022
      %v2024 = vpop.f32.mrb[0].mxu0
      %v2025 = vadd.f32 0.0, %v2024
      %2026 = vmatprep.mubr.f32.mxu0 0.0
      %2027 = vmatmul.mubr.f32.gmra.mrb[0].mxu0 %v827
      %v2028 = vpop.f32.mrb[0].mxu0
      %v2029 = vadd.f32 0.0, %v2028
      %v2030 = vpop.f32.mrb[0].mxu0
      %v2031 = vadd.f32 0.0, %v2030
      %2032 = vmatprep.mubr.f32.mxu0 0.0
      %2033 = vmatmul.mubr.f32.gmra.mrb[0].mxu0 %v828
      %v2034 = vpop.f32.mrb[0].mxu0
      %v2035 = vadd.f32 0.0, %v2034
      %v2036 = vpop.f32.mrb[0].mxu0
      %v2037 = vadd.f32 0.0, %v2036
      %2038 = vmatprep.mubr.f32.mxu0 0.0
      %2039 = vmatmul.mubr.f32.gmra.mrb[0].mxu0 %v829
      %v2040 = vpop.f32.mrb[0].mxu0
      %v2041 = vadd.f32 0.0, %v2040
      %v2042 = vpop.f32.mrb[0].mxu0
      %v2043 = vadd.f32 0.0, %v2042
      %2044 = vmatprep.mubr.f32.mxu0 0.0
      %2045 = vmatmul.mubr.f32.gmra.mrb[0].mxu0 %v830
      %v2046 = vpop.f32.mrb[0].mxu0
      %v2047 = vadd.f32 0.0, %v2046
      %v2048 = vpop.f32.mrb[0].mxu0
      %v2049 = vadd.f32 0.0, %v2048
      %2050 = vmatprep.mubr.f32.mxu0 0.0
      %2051 = vmatmul.mubr.f32.gmra.mrb[0].mxu0 %v831
      %v2052 = vpop.f32.mrb[0].mxu0
      %v2053 = vadd.f32 0.0, %v2052
      %v2054 = vpop.f32.mrb[0].mxu0
      %v2055 = vadd.f32 0.0, %v2054
      %2056 = vmatprep.mubr.f32.mxu0 0.0
      %2057 = vmatmul.mubr.f32.gmra.mrb[0].mxu0 %v832
      %v2058 = vpop.f32.mrb[0].mxu0
      %v2059 = vadd.f32 0.0, %v2058
      %v2060 = vpop.f32.mrb[0].mxu0
      %v2061 = vadd.f32 0.0, %v2060
      %2062 = vmatprep.mubr.f32.mxu0 0.0
      %2063 = vmatmul.mubr.f32.gmra.mrb[0].mxu0 %v833
      %v2064 = vpop.f32.mrb[0].mxu0
      %v2065 = vadd.f32 0.0, %v2064
      %v2066 = vpop.f32.mrb[0].mxu0
      %v2067 = vadd.f32 0.0, %v2066
      %2068 = vmatprep.mubr.f32.mxu0 0.0
      %2069 = vmatmul.mubr.f32.gmra.mrb[0].mxu0 %v834
      %v2070 = vpop.f32.mrb[0].mxu0
      %v2071 = vadd.f32 0.0, %v2070
      %v2072 = vpop.f32.mrb[0].mxu0
      %v2073 = vadd.f32 0.0, %v2072
      %2074 = vmatprep.mubr.f32.mxu0 0.0
      %2075 = vmatmul.mubr.f32.gmra.mrb[0].mxu0 %v835
      %v2076 = vpop.f32.mrb[0].mxu0
      %v2077 = vadd.f32 0.0, %v2076
      %v2078 = vpop.f32.mrb[0].mxu0
      %v2079 = vadd.f32 0.0, %v2078
      %2080 = vmatprep.mubr.f32.mxu0 0.0
      %2081 = vmatmul.mubr.f32.gmra.mrb[0].mxu0 %v836
      %v2082 = vpop.f32.mrb[0].mxu0
      %v2083 = vadd.f32 0.0, %v2082
      %v2084 = vpop.f32.mrb[0].mxu0
      %v2085 = vadd.f32 0.0, %v2084
      %2086 = vmatprep.mubr.f32.mxu0 0.0
      %2087 = vmatmul.mubr.f32.gmra.mrb[0].mxu0 %v837
      %v2088 = vpop.f32.mrb[0].mxu0
      %v2089 = vadd.f32 0.0, %v2088
      %v2090 = vpop.f32.mrb[0].mxu0
      %v2091 = vadd.f32 0.0, %v2090
      %2092 = vmatprep.mubr.f32.mxu0 0.0
      %2093 = vmatmul.mubr.f32.gmra.mrb[0].mxu0 %v838
      %v2094 = vpop.f32.mrb[0].mxu0
      %v2095 = vadd.f32 0.0, %v2094
      %v2096 = vpop.f32.mrb[0].mxu0
      %v2097 = vadd.f32 0.0, %v2096
      %2098 = vmatprep.mubr.f32.mxu0 0.0
      %2099 = vmatmul.mubr.f32.gmra.mrb[0].mxu0 %v839
      %v2100 = vpop.f32.mrb[0].mxu0
      %v2101 = vadd.f32 0.0, %v2100
      %v2102 = vpop.f32.mrb[0].mxu0
      %v2103 = vadd.f32 0.0, %v2102
      %2104 = vmatprep.mubr.f32.mxu0 0.0
      %2105 = vmatmul.mubr.f32.gmra.mrb[0].mxu0 %v840
      %v2106 = vpop.f32.mrb[0].mxu0
      %v2107 = vadd.f32 0.0, %v2106
      %v2108 = vpop.f32.mrb[0].mxu0
      %v2109 = vadd.f32 0.0, %v2108
      %2110 = vmatprep.mubr.f32.mxu0 0.0
      %2111 = vmatmul.mubr.f32.gmra.mrb[0].mxu0 %v841
      %v2112 = vpop.f32.mrb[0].mxu0
      %v2113 = vadd.f32 0.0, %v2112
      %v2114 = vpop.f32.mrb[0].mxu0
      %v2115 = vadd.f32 0.0, %v2114
      %2116 = vmatprep.mubr.f32.mxu0 0.0
      %2117 = vmatmul.mubr.f32.gmra.mrb[0].mxu0 %v842
      %v2118 = vpop.f32.mrb[0].mxu0
      %v2119 = vadd.f32 0.0, %v2118
      %v2120 = vpop.f32.mrb[0].mxu0
      %v2121 = vadd.f32 0.0, %v2120
      %2122 = vmatprep.mubr.f32.mxu0 0.0
      %2123 = vmatmul.mubr.f32.gmra.mrb[0].mxu0 %v843
      %v2124 = vpop.f32.mrb[0].mxu0
      %v2125 = vadd.f32 0.0, %v2124
      %v2126 = vpop.f32.mrb[0].mxu0
      %v2127 = vadd.f32 0.0, %v2126
      %2128 = vmatprep.mubr.f32.mxu0 0.0
      %2129 = vmatmul.mubr.f32.gmra.mrb[0].mxu0 %v844
      %v2130 = vpop.f32.mrb[0].mxu0
      %v2131 = vadd.f32 0.0, %v2130
      %v2132 = vpop.f32.mrb[0].mxu0
      %v2133 = vadd.f32 0.0, %v2132
      %2134 = vmatprep.mubr.f32.mxu0 0.0
      %2135 = vmatmul.mubr.f32.gmra.mrb[0].mxu0 %v845
      %v2136 = vpop.f32.mrb[0].mxu0
      %v2137 = vadd.f32 0.0, %v2136
      %v2138 = vpop.f32.mrb[0].mxu0
      %v2139 = vadd.f32 0.0, %v2138
      %2140 = vmatprep.mubr.f32.mxu0 0.0
      %2141 = vmatmul.mubr.f32.gmra.mrb[0].mxu0 %v846
      %v2142 = vpop.f32.mrb[0].mxu0
      %v2143 = vadd.f32 0.0, %v2142
      %v2144 = vpop.f32.mrb[0].mxu0
      %v2145 = vadd.f32 0.0, %v2144
      %2146 = vmatprep.mubr.f32.mxu0 0.0
      %2147 = vmatmul.mubr.f32.gmra.mrb[0].mxu0 %v847
      %v2148 = vpop.f32.mrb[0].mxu0
      %v2149 = vadd.f32 0.0, %v2148
      %v2150 = vpop.f32.mrb[0].mxu0
      %v2151 = vadd.f32 0.0, %v2150
      %2152 = vmatprep.mubr.f32.mxu0 0.0
      %2153 = vmatmul.mubr.f32.gmra.mrb[0].mxu0 %v848
      %v2154 = vpop.f32.mrb[0].mxu0
      %v2155 = vadd.f32 0.0, %v2154
      %v2156 = vpop.f32.mrb[0].mxu0
      %v2157 = vadd.f32 0.0, %v2156
      %2158 = vmatprep.mubr.f32.mxu0 0.0
      %2159 = vmatmul.mubr.f32.gmra.mrb[0].mxu0 %v849
      %v2160 = vpop.f32.mrb[0].mxu0
      %v2161 = vadd.f32 0.0, %v2160
      %v2162 = vpop.f32.mrb[0].mxu0
      %v2163 = vadd.f32 0.0, %v2162
      %2164 = vmatprep.mubr.f32.mxu0 0.0
      %2165 = vmatmul.mubr.f32.gmra.mrb[0].mxu0 %v850
      %v2166 = vpop.f32.mrb[0].mxu0
      %v2167 = vadd.f32 0.0, %v2166
      %v2168 = vpop.f32.mrb[0].mxu0
      %v2169 = vadd.f32 0.0, %v2168
      %2170 = vmatprep.mubr.f32.mxu0 0.0
      %2171 = vmatmul.mubr.f32.gmra.mrb[0].mxu0 %v851
      %v2172 = vpop.f32.mrb[0].mxu0
      %v2173 = vadd.f32 0.0, %v2172
      %v2174 = vpop.f32.mrb[0].mxu0
      %v2175 = vadd.f32 0.0, %v2174
      %2176 = vmatprep.mubr.f32.mxu0 0.0
      %2177 = vmatmul.mubr.f32.gmra.mrb[0].mxu0 %v852
      %v2178 = vpop.f32.mrb[0].mxu0
      %v2179 = vadd.f32 0.0, %v2178
      %v2180 = vpop.f32.mrb[0].mxu0
      %v2181 = vadd.f32 0.0, %v2180
      %2182 = vmatprep.mubr.f32.mxu0 0.0
      %2183 = vmatmul.mubr.f32.gmra.mrb[0].mxu0 %v853
      %v2184 = vpop.f32.mrb[0].mxu0
      %v2185 = vadd.f32 0.0, %v2184
      %v2186 = vpop.f32.mrb[0].mxu0
      %v2187 = vadd.f32 0.0, %v2186
      %2188 = vmatprep.mubr.f32.mxu0 0.0
      %2189 = vmatmul.mubr.f32.gmra.mrb[0].mxu0 %v854
      %v2190 = vpop.f32.mrb[0].mxu0
      %v2191 = vadd.f32 0.0, %v2190
      %v2192 = vpop.f32.mrb[0].mxu0
      %v2193 = vadd.f32 0.0, %v2192
      %2194 = vmatprep.mubr.f32.mxu0 0.0
      %2195 = vmatmul.mubr.f32.gmra.mrb[0].mxu0 %v855
      %v2196 = vpop.f32.mrb[0].mxu0
      %v2197 = vadd.f32 0.0, %v2196
      %v2198 = vpop.f32.mrb[0].mxu0
      %v2199 = vadd.f32 0.0, %v2198
      %2200 = vmatprep.mubr.f32.mxu0 0.0
      %2201 = vmatmul.mubr.f32.gmra.mrb[0].mxu0 %v856
      %v2202 = vpop.f32.mrb[0].mxu0
      %v2203 = vadd.f32 0.0, %v2202
      %v2204 = vpop.f32.mrb[0].mxu0
      %v2205 = vadd.f32 0.0, %v2204
      %2206 = vmatprep.mubr.f32.mxu0 0.0
      %2207 = vmatmul.mubr.f32.gmra.mrb[0].mxu0 %v857
      %v2208 = vpop.f32.mrb[0].mxu0
      %v2209 = vadd.f32 0.0, %v2208
      %v2210 = vpop.f32.mrb[0].mxu0
      %v2211 = vadd.f32 0.0, %v2210
      %2212 = vmatprep.mubr.f32.mxu0 0.0
      %2213 = vmatmul.mubr.f32.gmra.mrb[0].mxu0 %v858
      %v2214 = vpop.f32.mrb[0].mxu0
      %v2215 = vadd.f32 0.0, %v2214
      %v2216 = vpop.f32.mrb[0].mxu0
      %v2217 = vadd.f32 0.0, %v2216
      %2218 = vmatprep.mubr.f32.mxu0 0.0
      %2219 = vmatmul.mubr.f32.gmra.mrb[0].mxu0 %v859
      %v2220 = vpop.f32.mrb[0].mxu0
      %v2221 = vadd.f32 0.0, %v2220
      %v2222 = vpop.f32.mrb[0].mxu0
      %v2223 = vadd.f32 0.0, %v2222
      %2224 = vmatprep.mubr.f32.mxu0 0.0
      %2225 = vmatmul.mubr.f32.gmra.mrb[0].mxu0 %v860
      %v2226 = vpop.f32.mrb[0].mxu0
      %v2227 = vadd.f32 0.0, %v2226
      %v2228 = vpop.f32.mrb[0].mxu0
      %v2229 = vadd.f32 0.0, %v2228
      %2230 = vmatprep.mubr.f32.mxu0 0.0
      %2231 = vmatmul.mubr.f32.gmra.mrb[0].mxu0 %v861
      %v2232 = vpop.f32.mrb[0].mxu0
      %v2233 = vadd.f32 0.0, %v2232
      %v2234 = vpop.f32.mrb[0].mxu0
      %v2235 = vadd.f32 0.0, %v2234
      %2236 = vmatprep.mubr.f32.mxu0 0.0
      %2237 = vmatmul.mubr.f32.gmra.mrb[0].mxu0 %v862
      %v2238 = vpop.f32.mrb[0].mxu0
      %v2239 = vadd.f32 0.0, %v2238
      %v2240 = vpop.f32.mrb[0].mxu0
      %v2241 = vadd.f32 0.0, %v2240
      %2242 = vmatprep.mubr.f32.mxu0 0.0
      %2243 = vmatmul.mubr.f32.gmra.mrb[0].mxu0 %v863
      %v2244 = vpop.f32.mrb[0].mxu0
      %v2245 = vadd.f32 0.0, %v2244
      %v2246 = vpop.f32.mrb[0].mxu0
      %v2247 = vadd.f32 0.0, %v2246
      %2248 = vmatprep.mubr.f32.mxu0 0.0
      %2249 = vmatmul.mubr.f32.gmra.mrb[0].mxu0 %v864
      %v2250 = vpop.f32.mrb[0].mxu0
      %v2251 = vadd.f32 0.0, %v2250
      %v2252 = vpop.f32.mrb[0].mxu0
      %v2253 = vadd.f32 0.0, %v2252
      %2254 = vmatprep.mubr.f32.mxu0 0.0
      %2255 = vmatmul.mubr.f32.gmra.mrb[0].mxu0 %v865
      %v2256 = vpop.f32.mrb[0].mxu0
      %v2257 = vadd.f32 0.0, %v2256
      %v2258 = vpop.f32.mrb[0].mxu0
      %v2259 = vadd.f32 0.0, %v2258
      %2260 = vmatprep.mubr.f32.mxu0 0.0
      %2261 = vmatmul.mubr.f32.gmra.mrb[0].mxu0 %v866
      %v2262 = vpop.f32.mrb[0].mxu0
      %v2263 = vadd.f32 0.0, %v2262
      %v2264 = vpop.f32.mrb[0].mxu0
      %v2265 = vadd.f32 0.0, %v2264
      %2266 = vmatprep.mubr.f32.mxu0 0.0
      %2267 = vmatmul.mubr.f32.gmra.mrb[0].mxu0 %v867
      %v2268 = vpop.f32.mrb[0].mxu0
      %v2269 = vadd.f32 0.0, %v2268
      %v2270 = vpop.f32.mrb[0].mxu0
      %v2271 = vadd.f32 0.0, %v2270
      %2272 = vmatprep.mubr.f32.mxu0 0.0
      %2273 = vmatmul.mubr.f32.gmra.mrb[0].mxu0 %v868
      %v2274 = vpop.f32.mrb[0].mxu0
      %v2275 = vadd.f32 0.0, %v2274
      %v2276 = vpop.f32.mrb[0].mxu0
      %v2277 = vadd.f32 0.0, %v2276
      %2278 = vmatprep.mubr.f32.mxu0 0.0
      %2279 = vmatmul.mubr.f32.gmra.mrb[0].mxu0 %v869
      %v2280 = vpop.f32.mrb[0].mxu0
      %v2281 = vadd.f32 0.0, %v2280
      %v2282 = vpop.f32.mrb[0].mxu0
      %v2283 = vadd.f32 0.0, %v2282
      %2284 = vmatprep.mubr.f32.mxu0 0.0
      %2285 = vmatmul.mubr.f32.gmra.mrb[0].mxu0 %v870
      %v2286 = vpop.f32.mrb[0].mxu0
      %v2287 = vadd.f32 0.0, %v2286
      %v2288 = vpop.f32.mrb[0].mxu0
      %v2289 = vadd.f32 0.0, %v2288
      %2290 = vmatprep.mubr.f32.mxu0 0.0
      %2291 = vmatmul.mubr.f32.gmra.mrb[0].mxu0 %v871
      %v2292 = vpop.f32.mrb[0].mxu0
      %v2293 = vadd.f32 0.0, %v2292
      %v2294 = vpop.f32.mrb[0].mxu0
      %v2295 = vadd.f32 0.0, %v2294
      %2296 = vmatprep.mubr.f32.mxu0 0.0
      %2297 = vmatmul.mubr.f32.gmra.mrb[0].mxu0 %v872
      %v2298 = vpop.f32.mrb[0].mxu0
      %v2299 = vadd.f32 0.0, %v2298
      %v2300 = vpop.f32.mrb[0].mxu0
      %v2301 = vadd.f32 0.0, %v2300
      %2302 = vmatprep.mubr.f32.mxu0 0.0
      %2303 = vmatmul.mubr.f32.gmra.mrb[0].mxu0 %v873
      %v2304 = vpop.f32.mrb[0].mxu0
      %v2305 = vadd.f32 0.0, %v2304
      %v2306 = vpop.f32.mrb[0].mxu0
      %v2307 = vadd.f32 0.0, %v2306
      %2308 = vmatprep.mubr.f32.mxu0 0.0
      %2309 = vmatmul.mubr.f32.gmra.mrb[0].mxu0 %v874
      %v2310 = vpop.f32.mrb[0].mxu0
      %v2311 = vadd.f32 0.0, %v2310
      %v2312 = vpop.f32.mrb[0].mxu0
      %v2313 = vadd.f32 0.0, %v2312
      %2314 = vmatprep.mubr.f32.mxu0 0.0
      %2315 = vmatmul.mubr.f32.gmra.mrb[0].mxu0 %v875
      %v2316 = vpop.f32.mrb[0].mxu0
      %v2317 = vadd.f32 0.0, %v2316
      %v2318 = vpop.f32.mrb[0].mxu0
      %v2319 = vadd.f32 0.0, %v2318
      %2320 = vmatprep.mubr.f32.mxu0 0.0
      %2321 = vmatmul.mubr.f32.gmra.mrb[0].mxu0 %v876
      %v2322 = vpop.f32.mrb[0].mxu0
      %v2323 = vadd.f32 0.0, %v2322
      %v2324 = vpop.f32.mrb[0].mxu0
      %v2325 = vadd.f32 0.0, %v2324
      %2326 = vmatprep.mubr.f32.mxu0 0.0
      %2327 = vmatmul.mubr.f32.gmra.mrb[0].mxu0 %v877
      %v2328 = vpop.f32.mrb[0].mxu0
      %v2329 = vadd.f32 0.0, %v2328
      %v2330 = vpop.f32.mrb[0].mxu0
      %v2331 = vadd.f32 0.0, %v2330
      %2332 = vmatprep.mubr.f32.mxu0 0.0
      %2333 = vmatmul.mubr.f32.gmra.mrb[0].mxu0 %v878
      %v2334 = vpop.f32.mrb[0].mxu0
      %v2335 = vadd.f32 0.0, %v2334
      %v2336 = vpop.f32.mrb[0].mxu0
      %v2337 = vadd.f32 0.0, %v2336
      %2338 = vmatprep.mubr.f32.mxu0 0.0
      %2339 = vmatmul.mubr.f32.gmra.mrb[0].mxu0 %v879
      %v2340 = vpop.f32.mrb[0].mxu0
      %v2341 = vadd.f32 0.0, %v2340
      %v2342 = vpop.f32.mrb[0].mxu0
      %v2343 = vadd.f32 0.0, %v2342
      %2344 = vmatprep.mubr.f32.mxu0 0.0
      %2345 = vmatmul.mubr.f32.gmra.mrb[0].mxu0 %v880
      %v2346 = vpop.f32.mrb[0].mxu0
      %v2347 = vadd.f32 0.0, %v2346
      %v2348 = vpop.f32.mrb[0].mxu0
      %v2349 = vadd.f32 0.0, %v2348
      %2350 = vmatprep.mubr.f32.mxu0 0.0
      %2351 = vmatmul.mubr.f32.gmra.mrb[0].mxu0 %v881
      %v2352 = vpop.f32.mrb[0].mxu0
      %v2353 = vadd.f32 0.0, %v2352
      %v2354 = vpop.f32.mrb[0].mxu0
      %v2355 = vadd.f32 0.0, %v2354
      %2356 = vdwg.mxu0
      %2357 = vmatprep.subr.mxu0 %v889
      %2358 = vmatpush1.msra.mxu0 %v888
      %2359 = vmatprep.subr.mxu0 %v897
      %2360 = vmatpush1.msra.mxu0 %v896
      %2361 = vmatprep.subr.mxu0 %v905
      %2362 = vmatpush1.msra.mxu0 %v904
      %2363 = vmatprep.subr.mxu0 %v913
      %2364 = vmatpush1.msra.mxu0 %v912
      %2365 = vmatprep.subr.mxu0 %v921
      %2366 = vmatpush1.msra.mxu0 %v920
      %2367 = vmatprep.subr.mxu0 %v929
      %2368 = vmatpush1.msra.mxu0 %v928
      %2369 = vmatprep.subr.mxu0 %v937
      %2370 = vmatpush1.msra.mxu0 %v936
      %2371 = vmatprep.subr.mxu0 %v945
      %2372 = vmatpush1.msra.mxu0 %v944
      %2373 = vmatprep.subr.mxu0 %v953
      %2374 = vmatpush1.msra.mxu0 %v952
      %2375 = vmatprep.subr.mxu0 %v961
      %2376 = vmatpush1.msra.mxu0 %v960
      %2377 = vmatprep.subr.mxu0 %v969
      %2378 = vmatpush1.msra.mxu0 %v968
      %2379 = vmatprep.subr.mxu0 %v977
      %2380 = vmatpush1.msra.mxu0 %v976
      %2381 = vmatprep.subr.mxu0 %v985
      %2382 = vmatpush1.msra.mxu0 %v984
      %2383 = vmatprep.subr.mxu0 %v993
      %2384 = vmatpush1.msra.mxu0 %v992
      %2385 = vmatprep.subr.mxu0 %v1001
      %2386 = vmatpush1.msra.mxu0 %v1000
      %2387 = vmatprep.subr.mxu0 %v1009
      %2388 = vmatpush1.msra.mxu0 %v1008
      %2389 = vmatprep.subr.mxu0 0.0
      %2390 = vmatpush1.msra.mxu0 0.0
      %2391 = vmatprep.subr.mxu0 0.0
      %2392 = vmatpush1.msra.mxu0 0.0
      %2393 = vmatprep.subr.mxu0 0.0
      %2394 = vmatpush1.msra.mxu0 0.0
      %2395 = vmatprep.subr.mxu0 0.0
      %2396 = vmatpush1.msra.mxu0 0.0
      %2397 = vmatprep.subr.mxu0 0.0
      %2398 = vmatpush1.msra.mxu0 0.0
      %2399 = vmatprep.subr.mxu0 0.0
      %2400 = vmatpush1.msra.mxu0 0.0
      %2401 = vmatprep.subr.mxu0 0.0
      %2402 = vmatpush1.msra.mxu0 0.0
      %2403 = vmatprep.subr.mxu0 0.0
      %2404 = vmatpush1.msra.mxu0 0.0
      %2405 = vmatprep.subr.mxu0 0.0
      %2406 = vmatpush1.msra.mxu0 0.0
      %2407 = vmatprep.subr.mxu0 0.0
      %2408 = vmatpush1.msra.mxu0 0.0
      %2409 = vmatprep.subr.mxu0 0.0
      %2410 = vmatpush1.msra.mxu0 0.0
      %2411 = vmatprep.subr.mxu0 0.0
      %2412 = vmatpush1.msra.mxu0 0.0
      %2413 = vmatprep.subr.mxu0 0.0
      %2414 = vmatpush1.msra.mxu0 0.0
      %2415 = vmatprep.subr.mxu0 0.0
      %2416 = vmatpush1.msra.mxu0 0.0
      %2417 = vmatprep.subr.mxu0 0.0
      %2418 = vmatpush1.msra.mxu0 0.0
      %2419 = vmatprep.subr.mxu0 0.0
      %2420 = vmatpush1.msra.mxu0 0.0
      %2421 = vmatprep.mubr.f32.mxu0 0.0
      %2422 = vmatmul.mubr.f32.gmra.mrb[0].mxu0 %v818
      %v2423 = vpop.f32.mrb[0].mxu0
      %v2424 = vadd.f32 0.0, %v2423
      %v2425 = vpop.f32.mrb[0].mxu0
      %v2426 = vadd.f32 0.0, %v2425
      %2427 = vmatprep.mubr.f32.mxu0 0.0
      %2428 = vmatmul.mubr.f32.gmra.mrb[0].mxu0 %v819
      %v2429 = vpop.f32.mrb[0].mxu0
      %v2430 = vadd.f32 0.0, %v2429
      %v2431 = vpop.f32.mrb[0].mxu0
      %v2432 = vadd.f32 0.0, %v2431
      %2433 = vmatprep.mubr.f32.mxu0 0.0
      %2434 = vmatmul.mubr.f32.gmra.mrb[0].mxu0 %v820
      %v2435 = vpop.f32.mrb[0].mxu0
      %v2436 = vadd.f32 0.0, %v2435
      %v2437 = vpop.f32.mrb[0].mxu0
      %v2438 = vadd.f32 0.0, %v2437
      %2439 = vmatprep.mubr.f32.mxu0 0.0
      %2440 = vmatmul.mubr.f32.gmra.mrb[0].mxu0 %v821
      %v2441 = vpop.f32.mrb[0].mxu0
      %v2442 = vadd.f32 0.0, %v2441
      %v2443 = vpop.f32.mrb[0].mxu0
      %v2444 = vadd.f32 0.0, %v2443
      %2445 = vmatprep.mubr.f32.mxu0 0.0
      %2446 = vmatmul.mubr.f32.gmra.mrb[0].mxu0 %v822
      %v2447 = vpop.f32.mrb[0].mxu0
      %v2448 = vadd.f32 0.0, %v2447
      %v2449 = vpop.f32.mrb[0].mxu0
      %v2450 = vadd.f32 0.0, %v2449
      %2451 = vmatprep.mubr.f32.mxu0 0.0
      %2452 = vmatmul.mubr.f32.gmra.mrb[0].mxu0 %v823
      %v2453 = vpop.f32.mrb[0].mxu0
      %v2454 = vadd.f32 0.0, %v2453
      %v2455 = vpop.f32.mrb[0].mxu0
      %v2456 = vadd.f32 0.0, %v2455
      %2457 = vmatprep.mubr.f32.mxu0 0.0
      %2458 = vmatmul.mubr.f32.gmra.mrb[0].mxu0 %v824
      %v2459 = vpop.f32.mrb[0].mxu0
      %v2460 = vadd.f32 0.0, %v2459
      %v2461 = vpop.f32.mrb[0].mxu0
      %v2462 = vadd.f32 0.0, %v2461
      %2463 = vmatprep.mubr.f32.mxu0 0.0
      %2464 = vmatmul.mubr.f32.gmra.mrb[0].mxu0 %v825
      %v2465 = vpop.f32.mrb[0].mxu0
      %v2466 = vadd.f32 0.0, %v2465
      %v2467 = vpop.f32.mrb[0].mxu0
      %v2468 = vadd.f32 0.0, %v2467
      %2469 = vmatprep.mubr.f32.mxu0 0.0
      %2470 = vmatmul.mubr.f32.gmra.mrb[0].mxu0 %v826
      %v2471 = vpop.f32.mrb[0].mxu0
      %v2472 = vadd.f32 0.0, %v2471
      %v2473 = vpop.f32.mrb[0].mxu0
      %v2474 = vadd.f32 0.0, %v2473
      %2475 = vmatprep.mubr.f32.mxu0 0.0
      %2476 = vmatmul.mubr.f32.gmra.mrb[0].mxu0 %v827
      %v2477 = vpop.f32.mrb[0].mxu0
      %v2478 = vadd.f32 0.0, %v2477
      %v2479 = vpop.f32.mrb[0].mxu0
      %v2480 = vadd.f32 0.0, %v2479
      %2481 = vmatprep.mubr.f32.mxu0 0.0
      %2482 = vmatmul.mubr.f32.gmra.mrb[0].mxu0 %v828
      %v2483 = vpop.f32.mrb[0].mxu0
      %v2484 = vadd.f32 0.0, %v2483
      %v2485 = vpop.f32.mrb[0].mxu0
      %v2486 = vadd.f32 0.0, %v2485
      %2487 = vmatprep.mubr.f32.mxu0 0.0
      %2488 = vmatmul.mubr.f32.gmra.mrb[0].mxu0 %v829
      %v2489 = vpop.f32.mrb[0].mxu0
      %v2490 = vadd.f32 0.0, %v2489
      %v2491 = vpop.f32.mrb[0].mxu0
      %v2492 = vadd.f32 0.0, %v2491
      %2493 = vmatprep.mubr.f32.mxu0 0.0
      %2494 = vmatmul.mubr.f32.gmra.mrb[0].mxu0 %v830
      %v2495 = vpop.f32.mrb[0].mxu0
      %v2496 = vadd.f32 0.0, %v2495
      %v2497 = vpop.f32.mrb[0].mxu0
      %v2498 = vadd.f32 0.0, %v2497
      %2499 = vmatprep.mubr.f32.mxu0 0.0
      %2500 = vmatmul.mubr.f32.gmra.mrb[0].mxu0 %v831
      %v2501 = vpop.f32.mrb[0].mxu0
      %v2502 = vadd.f32 0.0, %v2501
      %v2503 = vpop.f32.mrb[0].mxu0
      %v2504 = vadd.f32 0.0, %v2503
      %2505 = vmatprep.mubr.f32.mxu0 0.0
      %2506 = vmatmul.mubr.f32.gmra.mrb[0].mxu0 %v832
      %v2507 = vpop.f32.mrb[0].mxu0
      %v2508 = vadd.f32 0.0, %v2507
      %v2509 = vpop.f32.mrb[0].mxu0
      %v2510 = vadd.f32 0.0, %v2509
      %2511 = vmatprep.mubr.f32.mxu0 0.0
      %2512 = vmatmul.mubr.f32.gmra.mrb[0].mxu0 %v833
      %v2513 = vpop.f32.mrb[0].mxu0
      %v2514 = vadd.f32 0.0, %v2513
      %v2515 = vpop.f32.mrb[0].mxu0
      %v2516 = vadd.f32 0.0, %v2515
      %2517 = vmatprep.mubr.f32.mxu0 0.0
      %2518 = vmatmul.mubr.f32.gmra.mrb[0].mxu0 %v834
      %v2519 = vpop.f32.mrb[0].mxu0
      %v2520 = vadd.f32 0.0, %v2519
      %v2521 = vpop.f32.mrb[0].mxu0
      %v2522 = vadd.f32 0.0, %v2521
      %2523 = vmatprep.mubr.f32.mxu0 0.0
      %2524 = vmatmul.mubr.f32.gmra.mrb[0].mxu0 %v835
      %v2525 = vpop.f32.mrb[0].mxu0
      %v2526 = vadd.f32 0.0, %v2525
      %v2527 = vpop.f32.mrb[0].mxu0
      %v2528 = vadd.f32 0.0, %v2527
      %2529 = vmatprep.mubr.f32.mxu0 0.0
      %2530 = vmatmul.mubr.f32.gmra.mrb[0].mxu0 %v836
      %v2531 = vpop.f32.mrb[0].mxu0
      %v2532 = vadd.f32 0.0, %v2531
      %v2533 = vpop.f32.mrb[0].mxu0
      %v2534 = vadd.f32 0.0, %v2533
      %2535 = vmatprep.mubr.f32.mxu0 0.0
      %2536 = vmatmul.mubr.f32.gmra.mrb[0].mxu0 %v837
      %v2537 = vpop.f32.mrb[0].mxu0
      %v2538 = vadd.f32 0.0, %v2537
      %v2539 = vpop.f32.mrb[0].mxu0
      %v2540 = vadd.f32 0.0, %v2539
      %2541 = vmatprep.mubr.f32.mxu0 0.0
      %2542 = vmatmul.mubr.f32.gmra.mrb[0].mxu0 %v838
      %v2543 = vpop.f32.mrb[0].mxu0
      %v2544 = vadd.f32 0.0, %v2543
      %v2545 = vpop.f32.mrb[0].mxu0
      %v2546 = vadd.f32 0.0, %v2545
      %2547 = vmatprep.mubr.f32.mxu0 0.0
      %2548 = vmatmul.mubr.f32.gmra.mrb[0].mxu0 %v839
      %v2549 = vpop.f32.mrb[0].mxu0
      %v2550 = vadd.f32 0.0, %v2549
      %v2551 = vpop.f32.mrb[0].mxu0
      %v2552 = vadd.f32 0.0, %v2551
      %2553 = vmatprep.mubr.f32.mxu0 0.0
      %2554 = vmatmul.mubr.f32.gmra.mrb[0].mxu0 %v840
      %v2555 = vpop.f32.mrb[0].mxu0
      %v2556 = vadd.f32 0.0, %v2555
      %v2557 = vpop.f32.mrb[0].mxu0
      %v2558 = vadd.f32 0.0, %v2557
      %2559 = vmatprep.mubr.f32.mxu0 0.0
      %2560 = vmatmul.mubr.f32.gmra.mrb[0].mxu0 %v841
      %v2561 = vpop.f32.mrb[0].mxu0
      %v2562 = vadd.f32 0.0, %v2561
      %v2563 = vpop.f32.mrb[0].mxu0
      %v2564 = vadd.f32 0.0, %v2563
      %2565 = vmatprep.mubr.f32.mxu0 0.0
      %2566 = vmatmul.mubr.f32.gmra.mrb[0].mxu0 %v842
      %v2567 = vpop.f32.mrb[0].mxu0
      %v2568 = vadd.f32 0.0, %v2567
      %v2569 = vpop.f32.mrb[0].mxu0
      %v2570 = vadd.f32 0.0, %v2569
      %2571 = vmatprep.mubr.f32.mxu0 0.0
      %2572 = vmatmul.mubr.f32.gmra.mrb[0].mxu0 %v843
      %v2573 = vpop.f32.mrb[0].mxu0
      %v2574 = vadd.f32 0.0, %v2573
      %v2575 = vpop.f32.mrb[0].mxu0
      %v2576 = vadd.f32 0.0, %v2575
      %2577 = vmatprep.mubr.f32.mxu0 0.0
      %2578 = vmatmul.mubr.f32.gmra.mrb[0].mxu0 %v844
      %v2579 = vpop.f32.mrb[0].mxu0
      %v2580 = vadd.f32 0.0, %v2579
      %v2581 = vpop.f32.mrb[0].mxu0
      %v2582 = vadd.f32 0.0, %v2581
      %2583 = vmatprep.mubr.f32.mxu0 0.0
      %2584 = vmatmul.mubr.f32.gmra.mrb[0].mxu0 %v845
      %v2585 = vpop.f32.mrb[0].mxu0
      %v2586 = vadd.f32 0.0, %v2585
      %v2587 = vpop.f32.mrb[0].mxu0
      %v2588 = vadd.f32 0.0, %v2587
      %2589 = vmatprep.mubr.f32.mxu0 0.0
      %2590 = vmatmul.mubr.f32.gmra.mrb[0].mxu0 %v846
      %v2591 = vpop.f32.mrb[0].mxu0
      %v2592 = vadd.f32 0.0, %v2591
      %v2593 = vpop.f32.mrb[0].mxu0
      %v2594 = vadd.f32 0.0, %v2593
      %2595 = vmatprep.mubr.f32.mxu0 0.0
      %2596 = vmatmul.mubr.f32.gmra.mrb[0].mxu0 %v847
      %v2597 = vpop.f32.mrb[0].mxu0
      %v2598 = vadd.f32 0.0, %v2597
      %v2599 = vpop.f32.mrb[0].mxu0
      %v2600 = vadd.f32 0.0, %v2599
      %2601 = vmatprep.mubr.f32.mxu0 0.0
      %2602 = vmatmul.mubr.f32.gmra.mrb[0].mxu0 %v848
      %v2603 = vpop.f32.mrb[0].mxu0
      %v2604 = vadd.f32 0.0, %v2603
      %v2605 = vpop.f32.mrb[0].mxu0
      %v2606 = vadd.f32 0.0, %v2605
      %2607 = vmatprep.mubr.f32.mxu0 0.0
      %2608 = vmatmul.mubr.f32.gmra.mrb[0].mxu0 %v849
      %v2609 = vpop.f32.mrb[0].mxu0
      %v2610 = vadd.f32 0.0, %v2609
      %v2611 = vpop.f32.mrb[0].mxu0
      %v2612 = vadd.f32 0.0, %v2611
      %2613 = vmatprep.mubr.f32.mxu0 0.0
      %2614 = vmatmul.mubr.f32.gmra.mrb[0].mxu0 %v850
      %v2615 = vpop.f32.mrb[0].mxu0
      %v2616 = vadd.f32 0.0, %v2615
      %v2617 = vpop.f32.mrb[0].mxu0
      %v2618 = vadd.f32 0.0, %v2617
      %2619 = vmatprep.mubr.f32.mxu0 0.0
      %2620 = vmatmul.mubr.f32.gmra.mrb[0].mxu0 %v851
      %v2621 = vpop.f32.mrb[0].mxu0
      %v2622 = vadd.f32 0.0, %v2621
      %v2623 = vpop.f32.mrb[0].mxu0
      %v2624 = vadd.f32 0.0, %v2623
      %2625 = vmatprep.mubr.f32.mxu0 0.0
      %2626 = vmatmul.mubr.f32.gmra.mrb[0].mxu0 %v852
      %v2627 = vpop.f32.mrb[0].mxu0
      %v2628 = vadd.f32 0.0, %v2627
      %v2629 = vpop.f32.mrb[0].mxu0
      %v2630 = vadd.f32 0.0, %v2629
      %2631 = vmatprep.mubr.f32.mxu0 0.0
      %2632 = vmatmul.mubr.f32.gmra.mrb[0].mxu0 %v853
      %v2633 = vpop.f32.mrb[0].mxu0
      %v2634 = vadd.f32 0.0, %v2633
      %v2635 = vpop.f32.mrb[0].mxu0
      %v2636 = vadd.f32 0.0, %v2635
      %2637 = vmatprep.mubr.f32.mxu0 0.0
      %2638 = vmatmul.mubr.f32.gmra.mrb[0].mxu0 %v854
      %v2639 = vpop.f32.mrb[0].mxu0
      %v2640 = vadd.f32 0.0, %v2639
      %v2641 = vpop.f32.mrb[0].mxu0
      %v2642 = vadd.f32 0.0, %v2641
      %2643 = vmatprep.mubr.f32.mxu0 0.0
      %2644 = vmatmul.mubr.f32.gmra.mrb[0].mxu0 %v855
      %v2645 = vpop.f32.mrb[0].mxu0
      %v2646 = vadd.f32 0.0, %v2645
      %v2647 = vpop.f32.mrb[0].mxu0
      %v2648 = vadd.f32 0.0, %v2647
      %2649 = vmatprep.mubr.f32.mxu0 0.0
      %2650 = vmatmul.mubr.f32.gmra.mrb[0].mxu0 %v856
      %v2651 = vpop.f32.mrb[0].mxu0
      %v2652 = vadd.f32 0.0, %v2651
      %v2653 = vpop.f32.mrb[0].mxu0
      %v2654 = vadd.f32 0.0, %v2653
      %2655 = vmatprep.mubr.f32.mxu0 0.0
      %2656 = vmatmul.mubr.f32.gmra.mrb[0].mxu0 %v857
      %v2657 = vpop.f32.mrb[0].mxu0
      %v2658 = vadd.f32 0.0, %v2657
      %v2659 = vpop.f32.mrb[0].mxu0
      %v2660 = vadd.f32 0.0, %v2659
      %2661 = vmatprep.mubr.f32.mxu0 0.0
      %2662 = vmatmul.mubr.f32.gmra.mrb[0].mxu0 %v858
      %v2663 = vpop.f32.mrb[0].mxu0
      %v2664 = vadd.f32 0.0, %v2663
      %v2665 = vpop.f32.mrb[0].mxu0
      %v2666 = vadd.f32 0.0, %v2665
      %2667 = vmatprep.mubr.f32.mxu0 0.0
      %2668 = vmatmul.mubr.f32.gmra.mrb[0].mxu0 %v859
      %v2669 = vpop.f32.mrb[0].mxu0
      %v2670 = vadd.f32 0.0, %v2669
      %v2671 = vpop.f32.mrb[0].mxu0
      %v2672 = vadd.f32 0.0, %v2671
      %2673 = vmatprep.mubr.f32.mxu0 0.0
      %2674 = vmatmul.mubr.f32.gmra.mrb[0].mxu0 %v860
      %v2675 = vpop.f32.mrb[0].mxu0
      %v2676 = vadd.f32 0.0, %v2675
      %v2677 = vpop.f32.mrb[0].mxu0
      %v2678 = vadd.f32 0.0, %v2677
      %2679 = vmatprep.mubr.f32.mxu0 0.0
      %2680 = vmatmul.mubr.f32.gmra.mrb[0].mxu0 %v861
      %v2681 = vpop.f32.mrb[0].mxu0
      %v2682 = vadd.f32 0.0, %v2681
      %v2683 = vpop.f32.mrb[0].mxu0
      %v2684 = vadd.f32 0.0, %v2683
      %2685 = vmatprep.mubr.f32.mxu0 0.0
      %2686 = vmatmul.mubr.f32.gmra.mrb[0].mxu0 %v862
      %v2687 = vpop.f32.mrb[0].mxu0
      %v2688 = vadd.f32 0.0, %v2687
      %v2689 = vpop.f32.mrb[0].mxu0
      %v2690 = vadd.f32 0.0, %v2689
      %2691 = vmatprep.mubr.f32.mxu0 0.0
      %2692 = vmatmul.mubr.f32.gmra.mrb[0].mxu0 %v863
      %v2693 = vpop.f32.mrb[0].mxu0
      %v2694 = vadd.f32 0.0, %v2693
      %v2695 = vpop.f32.mrb[0].mxu0
      %v2696 = vadd.f32 0.0, %v2695
      %2697 = vmatprep.mubr.f32.mxu0 0.0
      %2698 = vmatmul.mubr.f32.gmra.mrb[0].mxu0 %v864
      %v2699 = vpop.f32.mrb[0].mxu0
      %v2700 = vadd.f32 0.0, %v2699
      %v2701 = vpop.f32.mrb[0].mxu0
      %v2702 = vadd.f32 0.0, %v2701
      %2703 = vmatprep.mubr.f32.mxu0 0.0
      %2704 = vmatmul.mubr.f32.gmra.mrb[0].mxu0 %v865
      %v2705 = vpop.f32.mrb[0].mxu0
      %v2706 = vadd.f32 0.0, %v2705
      %v2707 = vpop.f32.mrb[0].mxu0
      %v2708 = vadd.f32 0.0, %v2707
      %2709 = vmatprep.mubr.f32.mxu0 0.0
      %2710 = vmatmul.mubr.f32.gmra.mrb[0].mxu0 %v866
      %v2711 = vpop.f32.mrb[0].mxu0
      %v2712 = vadd.f32 0.0, %v2711
      %v2713 = vpop.f32.mrb[0].mxu0
      %v2714 = vadd.f32 0.0, %v2713
      %2715 = vmatprep.mubr.f32.mxu0 0.0
      %2716 = vmatmul.mubr.f32.gmra.mrb[0].mxu0 %v867
      %v2717 = vpop.f32.mrb[0].mxu0
      %v2718 = vadd.f32 0.0, %v2717
      %v2719 = vpop.f32.mrb[0].mxu0
      %v2720 = vadd.f32 0.0, %v2719
      %2721 = vmatprep.mubr.f32.mxu0 0.0
      %2722 = vmatmul.mubr.f32.gmra.mrb[0].mxu0 %v868
      %v2723 = vpop.f32.mrb[0].mxu0
      %v2724 = vadd.f32 0.0, %v2723
      %v2725 = vpop.f32.mrb[0].mxu0
      %v2726 = vadd.f32 0.0, %v2725
      %2727 = vmatprep.mubr.f32.mxu0 0.0
      %2728 = vmatmul.mubr.f32.gmra.mrb[0].mxu0 %v869
      %v2729 = vpop.f32.mrb[0].mxu0
      %v2730 = vadd.f32 0.0, %v2729
      %v2731 = vpop.f32.mrb[0].mxu0
      %v2732 = vadd.f32 0.0, %v2731
      %2733 = vmatprep.mubr.f32.mxu0 0.0
      %2734 = vmatmul.mubr.f32.gmra.mrb[0].mxu0 %v870
      %v2735 = vpop.f32.mrb[0].mxu0
      %v2736 = vadd.f32 0.0, %v2735
      %v2737 = vpop.f32.mrb[0].mxu0
      %v2738 = vadd.f32 0.0, %v2737
      %2739 = vmatprep.mubr.f32.mxu0 0.0
      %2740 = vmatmul.mubr.f32.gmra.mrb[0].mxu0 %v871
      %v2741 = vpop.f32.mrb[0].mxu0
      %v2742 = vadd.f32 0.0, %v2741
      %v2743 = vpop.f32.mrb[0].mxu0
      %v2744 = vadd.f32 0.0, %v2743
      %2745 = vmatprep.mubr.f32.mxu0 0.0
      %2746 = vmatmul.mubr.f32.gmra.mrb[0].mxu0 %v872
      %v2747 = vpop.f32.mrb[0].mxu0
      %v2748 = vadd.f32 0.0, %v2747
      %v2749 = vpop.f32.mrb[0].mxu0
      %v2750 = vadd.f32 0.0, %v2749
      %2751 = vmatprep.mubr.f32.mxu0 0.0
      %2752 = vmatmul.mubr.f32.gmra.mrb[0].mxu0 %v873
      %v2753 = vpop.f32.mrb[0].mxu0
      %v2754 = vadd.f32 0.0, %v2753
      %v2755 = vpop.f32.mrb[0].mxu0
      %v2756 = vadd.f32 0.0, %v2755
      %2757 = vmatprep.mubr.f32.mxu0 0.0
      %2758 = vmatmul.mubr.f32.gmra.mrb[0].mxu0 %v874
      %v2759 = vpop.f32.mrb[0].mxu0
      %v2760 = vadd.f32 0.0, %v2759
      %v2761 = vpop.f32.mrb[0].mxu0
      %v2762 = vadd.f32 0.0, %v2761
      %2763 = vmatprep.mubr.f32.mxu0 0.0
      %2764 = vmatmul.mubr.f32.gmra.mrb[0].mxu0 %v875
      %v2765 = vpop.f32.mrb[0].mxu0
      %v2766 = vadd.f32 0.0, %v2765
      %v2767 = vpop.f32.mrb[0].mxu0
      %v2768 = vadd.f32 0.0, %v2767
      %2769 = vmatprep.mubr.f32.mxu0 0.0
      %2770 = vmatmul.mubr.f32.gmra.mrb[0].mxu0 %v876
      %v2771 = vpop.f32.mrb[0].mxu0
      %v2772 = vadd.f32 0.0, %v2771
      %v2773 = vpop.f32.mrb[0].mxu0
      %v2774 = vadd.f32 0.0, %v2773
      %2775 = vmatprep.mubr.f32.mxu0 0.0
      %2776 = vmatmul.mubr.f32.gmra.mrb[0].mxu0 %v877
      %v2777 = vpop.f32.mrb[0].mxu0
      %v2778 = vadd.f32 0.0, %v2777
      %v2779 = vpop.f32.mrb[0].mxu0
      %v2780 = vadd.f32 0.0, %v2779
      %2781 = vmatprep.mubr.f32.mxu0 0.0
      %2782 = vmatmul.mubr.f32.gmra.mrb[0].mxu0 %v878
      %v2783 = vpop.f32.mrb[0].mxu0
      %v2784 = vadd.f32 0.0, %v2783
      %v2785 = vpop.f32.mrb[0].mxu0
      %v2786 = vadd.f32 0.0, %v2785
      %2787 = vmatprep.mubr.f32.mxu0 0.0
      %2788 = vmatmul.mubr.f32.gmra.mrb[0].mxu0 %v879
      %v2789 = vpop.f32.mrb[0].mxu0
      %v2790 = vadd.f32 0.0, %v2789
      %v2791 = vpop.f32.mrb[0].mxu0
      %v2792 = vadd.f32 0.0, %v2791
      %2793 = vmatprep.mubr.f32.mxu0 0.0
      %2794 = vmatmul.mubr.f32.gmra.mrb[0].mxu0 %v880
      %v2795 = vpop.f32.mrb[0].mxu0
      %v2796 = vadd.f32 0.0, %v2795
      %v2797 = vpop.f32.mrb[0].mxu0
      %v2798 = vadd.f32 0.0, %v2797
      %2799 = vmatprep.mubr.f32.mxu0 0.0
      %2800 = vmatmul.mubr.f32.gmra.mrb[0].mxu0 %v881
      %v2801 = vpop.f32.mrb[0].mxu0
      %v2802 = vadd.f32 0.0, %v2801
      %v2803 = vpop.f32.mrb[0].mxu0
      %v2804 = vadd.f32 0.0, %v2803
      %2805 = vdwg.mxu0
      %v2806 = vld [vmem:[%s380] sm:$0xff]
      %v2807 = vld [vmem:[%s380 + $0x8] sm:$0xff]
      %v2808 = vld [vmem:[%s380 + $0x10] sm:$0xff]
      %v2809 = vld [vmem:[%s380 + $0x18] sm:$0xff]
      %v2810 = vld [vmem:[%s380 + $0x20] sm:$0xff]
      %v2811 = vld [vmem:[%s380 + $0x28] sm:$0xff]
      %v2812 = vld [vmem:[%s380 + $0x30] sm:$0xff]
      %v2813 = vld [vmem:[%s380 + $0x38] sm:$0xff]
      %v2814 = vld [vmem:[%s380 + $0x40] sm:$0xff]
      %v2815 = vld [vmem:[%s380 + $0x48] sm:$0xff]
      %v2816 = vld [vmem:[%s380 + $0x50] sm:$0xff]
      %v2817 = vld [vmem:[%s380 + $0x58] sm:$0xff]
      %v2818 = vld [vmem:[%s380 + $0x60] sm:$0xff]
      %v2819 = vld [vmem:[%s380 + $0x68] sm:$0xff]
      %v2820 = vld [vmem:[%s380 + $0x70] sm:$0xff]
      %v2821 = vld [vmem:[%s380 + $0x78] sm:$0xff]
      %v2822 = vld [vmem:[%s380 + $0x80] sm:$0xff]
      %v2823 = vld [vmem:[%s380 + $0x88] sm:$0xff]
      %v2824 = vld [vmem:[%s380 + $0x90] sm:$0xff]
      %v2825 = vld [vmem:[%s380 + $0x98] sm:$0xff]
      %v2826 = vld [vmem:[%s380 + $0xa0] sm:$0xff]
      %v2827 = vld [vmem:[%s380 + $0xa8] sm:$0xff]
      %v2828 = vld [vmem:[%s380 + $0xb0] sm:$0xff]
      %v2829 = vld [vmem:[%s380 + $0xb8] sm:$0xff]
      %v2830 = vld [vmem:[%s380 + $0xc0] sm:$0xff]
      %v2831 = vld [vmem:[%s380 + $0xc8] sm:$0xff]
      %v2832 = vld [vmem:[%s380 + $0xd0] sm:$0xff]
      %v2833 = vld [vmem:[%s380 + $0xd8] sm:$0xff]
      %v2834 = vld [vmem:[%s380 + $0xe0] sm:$0xff]
      %v2835 = vld [vmem:[%s380 + $0xe8] sm:$0xff]
      %v2836 = vld [vmem:[%s380 + $0xf0] sm:$0xff]
      %v2837 = vld [vmem:[%s380 + $0xf8] sm:$0xff]
      %v2838 = vld [vmem:[%s380 + $0x100] sm:$0xff]
      %v2839 = vld [vmem:[%s380 + $0x108] sm:$0xff]
      %v2840 = vld [vmem:[%s380 + $0x110] sm:$0xff]
      %v2841 = vld [vmem:[%s380 + $0x118] sm:$0xff]
      %v2842 = vld [vmem:[%s380 + $0x120] sm:$0xff]
      %v2843 = vld [vmem:[%s380 + $0x128] sm:$0xff]
      %v2844 = vld [vmem:[%s380 + $0x130] sm:$0xff]
      %v2845 = vld [vmem:[%s380 + $0x138] sm:$0xff]
      %v2846 = vld [vmem:[%s380 + $0x140] sm:$0xff]
      %v2847 = vld [vmem:[%s380 + $0x148] sm:$0xff]
      %v2848 = vld [vmem:[%s380 + $0x150] sm:$0xff]
      %v2849 = vld [vmem:[%s380 + $0x158] sm:$0xff]
      %v2850 = vld [vmem:[%s380 + $0x160] sm:$0xff]
      %v2851 = vld [vmem:[%s380 + $0x168] sm:$0xff]
      %v2852 = vld [vmem:[%s380 + $0x170] sm:$0xff]
      %v2853 = vld [vmem:[%s380 + $0x178] sm:$0xff]
      %v2854 = vld [vmem:[%s380 + $0x180] sm:$0xff]
      %v2855 = vld [vmem:[%s380 + $0x188] sm:$0xff]
      %v2856 = vld [vmem:[%s380 + $0x190] sm:$0xff]
      %v2857 = vld [vmem:[%s380 + $0x198] sm:$0xff]
      %v2858 = vld [vmem:[%s380 + $0x1a0] sm:$0xff]
      %v2859 = vld [vmem:[%s380 + $0x1a8] sm:$0xff]
      %v2860 = vld [vmem:[%s380 + $0x1b0] sm:$0xff]
      %v2861 = vld [vmem:[%s380 + $0x1b8] sm:$0xff]
      %v2862 = vld [vmem:[%s380 + $0x1c0] sm:$0xff]
      %v2863 = vld [vmem:[%s380 + $0x1c8] sm:$0xff]
      %v2864 = vld [vmem:[%s380 + $0x1d0] sm:$0xff]
      %v2865 = vld [vmem:[%s380 + $0x1d8] sm:$0xff]
      %v2866 = vld [vmem:[%s380 + $0x1e0] sm:$0xff]
      %v2867 = vld [vmem:[%s380 + $0x1e8] sm:$0xff]
      %v2868 = vld [vmem:[%s380 + $0x1f0] sm:$0xff]
      %v2869 = vld [vmem:[%s380 + $0x1f8] sm:$0xff]
      %v2870 = vld [vmem:[%s5] sm:$0xff]
      %v2871 = vld [vmem:[%s5 + $0x8] sm:$0xff]
      %v2872 = vld [vmem:[%s5 + $0x10] sm:$0xff]
      %v2873 = vld [vmem:[%s5 + $0x18] sm:$0xff]
      %v2874 = vld [vmem:[%s5 + $0x20] sm:$0xff]
      %v2875 = vld [vmem:[%s5 + $0x28] sm:$0xff]
      %v2876 = vld [vmem:[%s5 + $0x30] sm:$0xff]
      %v2877 = vld [vmem:[%s5 + $0x38] sm:$0xff]
      %v2878 = vld [vmem:[%s5 + $0x40] sm:$0xff]
      %v2879 = vld [vmem:[%s5 + $0x48] sm:$0xff]
      %v2880 = vld [vmem:[%s5 + $0x50] sm:$0xff]
      %v2881 = vld [vmem:[%s5 + $0x58] sm:$0xff]
      %v2882 = vld [vmem:[%s5 + $0x60] sm:$0xff]
      %v2883 = vld [vmem:[%s5 + $0x68] sm:$0xff]
      %v2884 = vld [vmem:[%s5 + $0x70] sm:$0xff]
      %v2885 = vld [vmem:[%s5 + $0x78] sm:$0xff]
      %v2886 = vld [vmem:[%s5 + $0x80] sm:$0xff]
      %v2887 = vld [vmem:[%s5 + $0x88] sm:$0xff]
      %v2888 = vld [vmem:[%s5 + $0x90] sm:$0xff]
      %v2889 = vld [vmem:[%s5 + $0x98] sm:$0xff]
      %v2890 = vld [vmem:[%s5 + $0xa0] sm:$0xff]
      %v2891 = vld [vmem:[%s5 + $0xa8] sm:$0xff]
      %v2892 = vld [vmem:[%s5 + $0xb0] sm:$0xff]
      %v2893 = vld [vmem:[%s5 + $0xb8] sm:$0xff]
      %v2894 = vld [vmem:[%s5 + $0xc0] sm:$0xff]
      %v2895 = vld [vmem:[%s5 + $0xc8] sm:$0xff]
      %v2896 = vld [vmem:[%s5 + $0xd0] sm:$0xff]
      %v2897 = vld [vmem:[%s5 + $0xd8] sm:$0xff]
      %v2898 = vld [vmem:[%s5 + $0xe0] sm:$0xff]
      %v2899 = vld [vmem:[%s5 + $0xe8] sm:$0xff]
      %v2900 = vld [vmem:[%s5 + $0xf0] sm:$0xff]
      %v2901 = vld [vmem:[%s5 + $0xf8] sm:$0xff]
      %v2902 = vld [vmem:[%s5 + $0x100] sm:$0xff]
      %v2903 = vld [vmem:[%s5 + $0x108] sm:$0xff]
      %v2904 = vld [vmem:[%s5 + $0x110] sm:$0xff]
      %v2905 = vld [vmem:[%s5 + $0x118] sm:$0xff]
      %v2906 = vld [vmem:[%s5 + $0x120] sm:$0xff]
      %v2907 = vld [vmem:[%s5 + $0x128] sm:$0xff]
      %v2908 = vld [vmem:[%s5 + $0x130] sm:$0xff]
      %v2909 = vld [vmem:[%s5 + $0x138] sm:$0xff]
      %v2910 = vld [vmem:[%s5 + $0x140] sm:$0xff]
      %v2911 = vld [vmem:[%s5 + $0x148] sm:$0xff]
      %v2912 = vld [vmem:[%s5 + $0x150] sm:$0xff]
      %v2913 = vld [vmem:[%s5 + $0x158] sm:$0xff]
      %v2914 = vld [vmem:[%s5 + $0x160] sm:$0xff]
      %v2915 = vld [vmem:[%s5 + $0x168] sm:$0xff]
      %v2916 = vld [vmem:[%s5 + $0x170] sm:$0xff]
      %v2917 = vld [vmem:[%s5 + $0x178] sm:$0xff]
      %v2918 = vld [vmem:[%s5 + $0x180] sm:$0xff]
      %v2919 = vld [vmem:[%s5 + $0x188] sm:$0xff]
      %v2920 = vld [vmem:[%s5 + $0x190] sm:$0xff]
      %v2921 = vld [vmem:[%s5 + $0x198] sm:$0xff]
      %v2922 = vld [vmem:[%s5 + $0x1a0] sm:$0xff]
      %v2923 = vld [vmem:[%s5 + $0x1a8] sm:$0xff]
      %v2924 = vld [vmem:[%s5 + $0x1b0] sm:$0xff]
      %v2925 = vld [vmem:[%s5 + $0x1b8] sm:$0xff]
      %v2926 = vld [vmem:[%s5 + $0x1c0] sm:$0xff]
      %v2927 = vld [vmem:[%s5 + $0x1c8] sm:$0xff]
      %v2928 = vld [vmem:[%s5 + $0x1d0] sm:$0xff]
      %v2929 = vld [vmem:[%s5 + $0x1d8] sm:$0xff]
      %v2930 = vld [vmem:[%s5 + $0x1e0] sm:$0xff]
      %v2931 = vld [vmem:[%s5 + $0x1e8] sm:$0xff]
      %v2932 = vld [vmem:[%s5 + $0x1f0] sm:$0xff]
      %v2933 = vld [vmem:[%s5 + $0x1f8] sm:$0xff]
      %v2934 = vld [vmem:[%s5 + $0x200] sm:$0xff]
      %v2935 = vld [vmem:[%s5 + $0x208] sm:$0xff]
      %v2936 = vld [vmem:[%s5 + $0x210] sm:$0xff]
      %v2937 = vld [vmem:[%s5 + $0x218] sm:$0xff]
      %v2938 = vld [vmem:[%s5 + $0x220] sm:$0xff]
      %v2939 = vld [vmem:[%s5 + $0x228] sm:$0xff]
      %v2940 = vld [vmem:[%s5 + $0x230] sm:$0xff]
      %v2941 = vld [vmem:[%s5 + $0x238] sm:$0xff]
      %v2942 = vld [vmem:[%s5 + $0x240] sm:$0xff]
      %v2943 = vld [vmem:[%s5 + $0x248] sm:$0xff]
      %v2944 = vld [vmem:[%s5 + $0x250] sm:$0xff]
      %v2945 = vld [vmem:[%s5 + $0x258] sm:$0xff]
      %v2946 = vld [vmem:[%s5 + $0x260] sm:$0xff]
      %v2947 = vld [vmem:[%s5 + $0x268] sm:$0xff]
      %v2948 = vld [vmem:[%s5 + $0x270] sm:$0xff]
      %v2949 = vld [vmem:[%s5 + $0x278] sm:$0xff]
      %v2950 = vld [vmem:[%s5 + $0x280] sm:$0xff]
      %v2951 = vld [vmem:[%s5 + $0x288] sm:$0xff]
      %v2952 = vld [vmem:[%s5 + $0x290] sm:$0xff]
      %v2953 = vld [vmem:[%s5 + $0x298] sm:$0xff]
      %v2954 = vld [vmem:[%s5 + $0x2a0] sm:$0xff]
      %v2955 = vld [vmem:[%s5 + $0x2a8] sm:$0xff]
      %v2956 = vld [vmem:[%s5 + $0x2b0] sm:$0xff]
      %v2957 = vld [vmem:[%s5 + $0x2b8] sm:$0xff]
      %v2958 = vld [vmem:[%s5 + $0x2c0] sm:$0xff]
      %v2959 = vld [vmem:[%s5 + $0x2c8] sm:$0xff]
      %v2960 = vld [vmem:[%s5 + $0x2d0] sm:$0xff]
      %v2961 = vld [vmem:[%s5 + $0x2d8] sm:$0xff]
      %v2962 = vld [vmem:[%s5 + $0x2e0] sm:$0xff]
      %v2963 = vld [vmem:[%s5 + $0x2e8] sm:$0xff]
      %v2964 = vld [vmem:[%s5 + $0x2f0] sm:$0xff]
      %v2965 = vld [vmem:[%s5 + $0x2f8] sm:$0xff]
      %v2966 = vld [vmem:[%s5 + $0x300] sm:$0xff]
      %v2967 = vld [vmem:[%s5 + $0x308] sm:$0xff]
      %v2968 = vld [vmem:[%s5 + $0x310] sm:$0xff]
      %v2969 = vld [vmem:[%s5 + $0x318] sm:$0xff]
      %v2970 = vld [vmem:[%s5 + $0x320] sm:$0xff]
      %v2971 = vld [vmem:[%s5 + $0x328] sm:$0xff]
      %v2972 = vld [vmem:[%s5 + $0x330] sm:$0xff]
      %v2973 = vld [vmem:[%s5 + $0x338] sm:$0xff]
      %v2974 = vld [vmem:[%s5 + $0x340] sm:$0xff]
      %v2975 = vld [vmem:[%s5 + $0x348] sm:$0xff]
      %v2976 = vld [vmem:[%s5 + $0x350] sm:$0xff]
      %v2977 = vld [vmem:[%s5 + $0x358] sm:$0xff]
      %v2978 = vld [vmem:[%s5 + $0x360] sm:$0xff]
      %v2979 = vld [vmem:[%s5 + $0x368] sm:$0xff]
      %v2980 = vld [vmem:[%s5 + $0x370] sm:$0xff]
      %v2981 = vld [vmem:[%s5 + $0x378] sm:$0xff]
      %v2982 = vld [vmem:[%s5 + $0x380] sm:$0xff]
      %v2983 = vld [vmem:[%s5 + $0x388] sm:$0xff]
      %v2984 = vld [vmem:[%s5 + $0x390] sm:$0xff]
      %v2985 = vld [vmem:[%s5 + $0x398] sm:$0xff]
      %v2986 = vld [vmem:[%s5 + $0x3a0] sm:$0xff]
      %v2987 = vld [vmem:[%s5 + $0x3a8] sm:$0xff]
      %v2988 = vld [vmem:[%s5 + $0x3b0] sm:$0xff]
      %v2989 = vld [vmem:[%s5 + $0x3b8] sm:$0xff]
      %v2990 = vld [vmem:[%s5 + $0x3c0] sm:$0xff]
      %v2991 = vld [vmem:[%s5 + $0x3c8] sm:$0xff]
      %v2992 = vld [vmem:[%s5 + $0x3d0] sm:$0xff]
      %v2993 = vld [vmem:[%s5 + $0x3d8] sm:$0xff]
      %v2994 = vld [vmem:[%s5 + $0x3e0] sm:$0xff]
      %v2995 = vld [vmem:[%s5 + $0x3e8] sm:$0xff]
      %v2996 = vld [vmem:[%s5 + $0x3f0] sm:$0xff]
      %v2997 = vld [vmem:[%s5 + $0x3f8] sm:$0xff]
      %v2998 = vld [vmem:[%s5 + $0x400] sm:$0xff]
      %v2999 = vld [vmem:[%s5 + $0x408] sm:$0xff]
      %v3000 = vld [vmem:[%s5 + $0x410] sm:$0xff]
      %v3001 = vld [vmem:[%s5 + $0x418] sm:$0xff]
      %v3002 = vld [vmem:[%s5 + $0x420] sm:$0xff]
      %v3003 = vld [vmem:[%s5 + $0x428] sm:$0xff]
      %v3004 = vld [vmem:[%s5 + $0x430] sm:$0xff]
      %v3005 = vld [vmem:[%s5 + $0x438] sm:$0xff]
      %v3006 = vld [vmem:[%s5 + $0x440] sm:$0xff]
      %v3007 = vld [vmem:[%s5 + $0x448] sm:$0xff]
      %v3008 = vld [vmem:[%s5 + $0x450] sm:$0xff]
      %v3009 = vld [vmem:[%s5 + $0x458] sm:$0xff]
      %v3010 = vld [vmem:[%s5 + $0x460] sm:$0xff]
      %v3011 = vld [vmem:[%s5 + $0x468] sm:$0xff]
      %v3012 = vld [vmem:[%s5 + $0x470] sm:$0xff]
      %v3013 = vld [vmem:[%s5 + $0x478] sm:$0xff]
      %v3014 = vld [vmem:[%s6] sm:$0xff]
      %v3015 = vld [vmem:[%s6 + $0x8] sm:$0x1]
      %v3018 = vlaneseq
      %v3019 = vshrl.u32 %v3018, 7
      %v3020 = vsub.s32 0, %v3019
      %v3021 = vrot.slane %v3014, %v3020
      %v3022 = vlaneseq
      %v3023 = vshrl.u32 %v3022, 7
      %v3024 = vsub.s32 1, %v3023
      %v3025 = vrot.slane %v3014, %v3024
      %v3026 = vlaneseq
      %v3027 = vshrl.u32 %v3026, 7
      %v3028 = vsub.s32 2, %v3027
      %v3029 = vrot.slane %v3014, %v3028
      %v3030 = vlaneseq
      %v3031 = vshrl.u32 %v3030, 7
      %v3032 = vsub.s32 3, %v3031
      %v3033 = vrot.slane %v3014, %v3032
      %v3034 = vlaneseq
      %v3035 = vshrl.u32 %v3034, 7
      %v3036 = vsub.s32 4, %v3035
      %v3037 = vrot.slane %v3014, %v3036
      %v3038 = vlaneseq
      %v3039 = vshrl.u32 %v3038, 7
      %v3040 = vsub.s32 5, %v3039
      %v3041 = vrot.slane %v3014, %v3040
      %v3042 = vlaneseq
      %v3043 = vshrl.u32 %v3042, 7
      %v3044 = vsub.s32 6, %v3043
      %v3045 = vrot.slane %v3014, %v3044
      %v3046 = vlaneseq
      %v3047 = vshrl.u32 %v3046, 7
      %v3048 = vsub.s32 7, %v3047
      %v3049 = vrot.slane %v3014, %v3048
      %v3050 = vlaneseq
      %v3051 = vshrl.u32 %v3050, 7
      %v3052 = vsub.s32 0, %v3051
      %v3053 = vrot.slane %v3015, %v3052
      %3063 = vmatprep.subr.mxu0 %v2871
      %3064 = vmatpush1.msra.mxu0 %v2870
      %3065 = vmatprep.subr.mxu0 %v2880
      %3066 = vmatpush1.msra.mxu0 %v2879
      %3067 = vmatprep.subr.mxu0 %v2889
      %3068 = vmatpush1.msra.mxu0 %v2888
      %3069 = vmatprep.subr.mxu0 %v2898
      %3070 = vmatpush1.msra.mxu0 %v2897
      %3071 = vmatprep.subr.mxu0 %v2907
      %3072 = vmatpush1.msra.mxu0 %v2906
      %3073 = vmatprep.subr.mxu0 %v2916
      %3074 = vmatpush1.msra.mxu0 %v2915
      %3075 = vmatprep.subr.mxu0 %v2925
      %3076 = vmatpush1.msra.mxu0 %v2924
      %3077 = vmatprep.subr.mxu0 %v2934
      %3078 = vmatpush1.msra.mxu0 %v2933
      %3079 = vmatprep.subr.mxu0 %v2943
      %3080 = vmatpush1.msra.mxu0 %v2942
      %3081 = vmatprep.subr.mxu0 %v2952
      %3082 = vmatpush1.msra.mxu0 %v2951
      %3083 = vmatprep.subr.mxu0 %v2961
      %3084 = vmatpush1.msra.mxu0 %v2960
      %3085 = vmatprep.subr.mxu0 %v2970
      %3086 = vmatpush1.msra.mxu0 %v2969
      %3087 = vmatprep.subr.mxu0 %v2979
      %3088 = vmatpush1.msra.mxu0 %v2978
      %3089 = vmatprep.subr.mxu0 %v2988
      %3090 = vmatpush1.msra.mxu0 %v2987
      %3091 = vmatprep.subr.mxu0 %v2997
      %3092 = vmatpush1.msra.mxu0 %v2996
      %3093 = vmatprep.subr.mxu0 %v3006
      %3094 = vmatpush1.msra.mxu0 %v3005
      %3095 = vmatprep.subr.mxu0 0.0
      %3096 = vmatpush1.msra.mxu0 0.0
      %3097 = vmatprep.subr.mxu0 0.0
      %3098 = vmatpush1.msra.mxu0 0.0
      %3099 = vmatprep.subr.mxu0 0.0
      %3100 = vmatpush1.msra.mxu0 0.0
      %3101 = vmatprep.subr.mxu0 0.0
      %3102 = vmatpush1.msra.mxu0 0.0
      %3103 = vmatprep.subr.mxu0 0.0
      %3104 = vmatpush1.msra.mxu0 0.0
      %3105 = vmatprep.subr.mxu0 0.0
      %3106 = vmatpush1.msra.mxu0 0.0
      %3107 = vmatprep.subr.mxu0 0.0
      %3108 = vmatpush1.msra.mxu0 0.0
      %3109 = vmatprep.subr.mxu0 0.0
      %3110 = vmatpush1.msra.mxu0 0.0
      %3111 = vmatprep.subr.mxu0 0.0
      %3112 = vmatpush1.msra.mxu0 0.0
      %3113 = vmatprep.subr.mxu0 0.0
      %3114 = vmatpush1.msra.mxu0 0.0
      %3115 = vmatprep.subr.mxu0 0.0
      %3116 = vmatpush1.msra.mxu0 0.0
      %3117 = vmatprep.subr.mxu0 0.0
      %3118 = vmatpush1.msra.mxu0 0.0
      %3119 = vmatprep.subr.mxu0 0.0
      %3120 = vmatpush1.msra.mxu0 0.0
      %3121 = vmatprep.subr.mxu0 0.0
      %3122 = vmatpush1.msra.mxu0 0.0
      %3123 = vmatprep.subr.mxu0 0.0
      %3124 = vmatpush1.msra.mxu0 0.0
      %3125 = vmatprep.subr.mxu0 0.0
      %3126 = vmatpush1.msra.mxu0 0.0
      %3127 = vmatprep.mubr.f32.mxu0 0.0
      %3128 = vmatmul.mubr.f32.gmra.mrb[0].mxu0 %v2806
      %v3129 = vpop.f32.mrb[0].mxu0
      %v3130 = vadd.f32 %v3021, %v3129
      %v3131 = vpop.f32.mrb[0].mxu0
      %v3132 = vadd.f32 %v3025, %v3131
      %3133 = vmatprep.mubr.f32.mxu0 0.0
      %3134 = vmatmul.mubr.f32.gmra.mrb[0].mxu0 %v2807
      %v3135 = vpop.f32.mrb[0].mxu0
      %v3136 = vadd.f32 %v3021, %v3135
      %v3137 = vpop.f32.mrb[0].mxu0
      %v3138 = vadd.f32 %v3025, %v3137
      %3139 = vmatprep.mubr.f32.mxu0 0.0
      %3140 = vmatmul.mubr.f32.gmra.mrb[0].mxu0 %v2808
      %v3141 = vpop.f32.mrb[0].mxu0
      %v3142 = vadd.f32 %v3021, %v3141
      %v3143 = vpop.f32.mrb[0].mxu0
      %v3144 = vadd.f32 %v3025, %v3143
      %3145 = vmatprep.mubr.f32.mxu0 0.0
      %3146 = vmatmul.mubr.f32.gmra.mrb[0].mxu0 %v2809
      %v3147 = vpop.f32.mrb[0].mxu0
      %v3148 = vadd.f32 %v3021, %v3147
      %v3149 = vpop.f32.mrb[0].mxu0
      %v3150 = vadd.f32 %v3025, %v3149
      %3151 = vmatprep.mubr.f32.mxu0 0.0
      %3152 = vmatmul.mubr.f32.gmra.mrb[0].mxu0 %v2810
      %v3153 = vpop.f32.mrb[0].mxu0
      %v3154 = vadd.f32 %v3021, %v3153
      %v3155 = vpop.f32.mrb[0].mxu0
      %v3156 = vadd.f32 %v3025, %v3155
      %3157 = vmatprep.mubr.f32.mxu0 0.0
      %3158 = vmatmul.mubr.f32.gmra.mrb[0].mxu0 %v2811
      %v3159 = vpop.f32.mrb[0].mxu0
      %v3160 = vadd.f32 %v3021, %v3159
      %v3161 = vpop.f32.mrb[0].mxu0
      %v3162 = vadd.f32 %v3025, %v3161
      %3163 = vmatprep.mubr.f32.mxu0 0.0
      %3164 = vmatmul.mubr.f32.gmra.mrb[0].mxu0 %v2812
      %v3165 = vpop.f32.mrb[0].mxu0
      %v3166 = vadd.f32 %v3021, %v3165
      %v3167 = vpop.f32.mrb[0].mxu0
      %v3168 = vadd.f32 %v3025, %v3167
      %3169 = vmatprep.mubr.f32.mxu0 0.0
      %3170 = vmatmul.mubr.f32.gmra.mrb[0].mxu0 %v2813
      %v3171 = vpop.f32.mrb[0].mxu0
      %v3172 = vadd.f32 %v3021, %v3171
      %v3173 = vpop.f32.mrb[0].mxu0
      %v3174 = vadd.f32 %v3025, %v3173
      %3175 = vmatprep.mubr.f32.mxu0 0.0
      %3176 = vmatmul.mubr.f32.gmra.mrb[0].mxu0 %v2814
      %v3177 = vpop.f32.mrb[0].mxu0
      %v3178 = vadd.f32 %v3021, %v3177
      %v3179 = vpop.f32.mrb[0].mxu0
      %v3180 = vadd.f32 %v3025, %v3179
      %3181 = vmatprep.mubr.f32.mxu0 0.0
      %3182 = vmatmul.mubr.f32.gmra.mrb[0].mxu0 %v2815
      %v3183 = vpop.f32.mrb[0].mxu0
      %v3184 = vadd.f32 %v3021, %v3183
      %v3185 = vpop.f32.mrb[0].mxu0
      %v3186 = vadd.f32 %v3025, %v3185
      %3187 = vmatprep.mubr.f32.mxu0 0.0
      %3188 = vmatmul.mubr.f32.gmra.mrb[0].mxu0 %v2816
      %v3189 = vpop.f32.mrb[0].mxu0
      %v3190 = vadd.f32 %v3021, %v3189
      %v3191 = vpop.f32.mrb[0].mxu0
      %v3192 = vadd.f32 %v3025, %v3191
      %3193 = vmatprep.mubr.f32.mxu0 0.0
      %3194 = vmatmul.mubr.f32.gmra.mrb[0].mxu0 %v2817
      %v3195 = vpop.f32.mrb[0].mxu0
      %v3196 = vadd.f32 %v3021, %v3195
      %v3197 = vpop.f32.mrb[0].mxu0
      %v3198 = vadd.f32 %v3025, %v3197
      %3199 = vmatprep.mubr.f32.mxu0 0.0
      %3200 = vmatmul.mubr.f32.gmra.mrb[0].mxu0 %v2818
      %v3201 = vpop.f32.mrb[0].mxu0
      %v3202 = vadd.f32 %v3021, %v3201
      %v3203 = vpop.f32.mrb[0].mxu0
      %v3204 = vadd.f32 %v3025, %v3203
      %3205 = vmatprep.mubr.f32.mxu0 0.0
      %3206 = vmatmul.mubr.f32.gmra.mrb[0].mxu0 %v2819
      %v3207 = vpop.f32.mrb[0].mxu0
      %v3208 = vadd.f32 %v3021, %v3207
      %v3209 = vpop.f32.mrb[0].mxu0
      %v3210 = vadd.f32 %v3025, %v3209
      %3211 = vmatprep.mubr.f32.mxu0 0.0
      %3212 = vmatmul.mubr.f32.gmra.mrb[0].mxu0 %v2820
      %v3213 = vpop.f32.mrb[0].mxu0
      %v3214 = vadd.f32 %v3021, %v3213
      %v3215 = vpop.f32.mrb[0].mxu0
      %v3216 = vadd.f32 %v3025, %v3215
      %3217 = vmatprep.mubr.f32.mxu0 0.0
      %3218 = vmatmul.mubr.f32.gmra.mrb[0].mxu0 %v2821
      %v3219 = vpop.f32.mrb[0].mxu0
      %v3220 = vadd.f32 %v3021, %v3219
      %v3221 = vpop.f32.mrb[0].mxu0
      %v3222 = vadd.f32 %v3025, %v3221
      %3223 = vmatprep.mubr.f32.mxu0 0.0
      %3224 = vmatmul.mubr.f32.gmra.mrb[0].mxu0 %v2822
      %v3225 = vpop.f32.mrb[0].mxu0
      %v3226 = vadd.f32 %v3021, %v3225
      %v3227 = vpop.f32.mrb[0].mxu0
      %v3228 = vadd.f32 %v3025, %v3227
      %3229 = vmatprep.mubr.f32.mxu0 0.0
      %3230 = vmatmul.mubr.f32.gmra.mrb[0].mxu0 %v2823
      %v3231 = vpop.f32.mrb[0].mxu0
      %v3232 = vadd.f32 %v3021, %v3231
      %v3233 = vpop.f32.mrb[0].mxu0
      %v3234 = vadd.f32 %v3025, %v3233
      %3235 = vmatprep.mubr.f32.mxu0 0.0
      %3236 = vmatmul.mubr.f32.gmra.mrb[0].mxu0 %v2824
      %v3237 = vpop.f32.mrb[0].mxu0
      %v3238 = vadd.f32 %v3021, %v3237
      %v3239 = vpop.f32.mrb[0].mxu0
      %v3240 = vadd.f32 %v3025, %v3239
      %3241 = vmatprep.mubr.f32.mxu0 0.0
      %3242 = vmatmul.mubr.f32.gmra.mrb[0].mxu0 %v2825
      %v3243 = vpop.f32.mrb[0].mxu0
      %v3244 = vadd.f32 %v3021, %v3243
      %v3245 = vpop.f32.mrb[0].mxu0
      %v3246 = vadd.f32 %v3025, %v3245
      %3247 = vmatprep.mubr.f32.mxu0 0.0
      %3248 = vmatmul.mubr.f32.gmra.mrb[0].mxu0 %v2826
      %v3249 = vpop.f32.mrb[0].mxu0
      %v3250 = vadd.f32 %v3021, %v3249
      %v3251 = vpop.f32.mrb[0].mxu0
      %v3252 = vadd.f32 %v3025, %v3251
      %3253 = vmatprep.mubr.f32.mxu0 0.0
      %3254 = vmatmul.mubr.f32.gmra.mrb[0].mxu0 %v2827
      %v3255 = vpop.f32.mrb[0].mxu0
      %v3256 = vadd.f32 %v3021, %v3255
      %v3257 = vpop.f32.mrb[0].mxu0
      %v3258 = vadd.f32 %v3025, %v3257
      %3259 = vmatprep.mubr.f32.mxu0 0.0
      %3260 = vmatmul.mubr.f32.gmra.mrb[0].mxu0 %v2828
      %v3261 = vpop.f32.mrb[0].mxu0
      %v3262 = vadd.f32 %v3021, %v3261
      %v3263 = vpop.f32.mrb[0].mxu0
      %v3264 = vadd.f32 %v3025, %v3263
      %3265 = vmatprep.mubr.f32.mxu0 0.0
      %3266 = vmatmul.mubr.f32.gmra.mrb[0].mxu0 %v2829
      %v3267 = vpop.f32.mrb[0].mxu0
      %v3268 = vadd.f32 %v3021, %v3267
      %v3269 = vpop.f32.mrb[0].mxu0
      %v3270 = vadd.f32 %v3025, %v3269
      %3271 = vmatprep.mubr.f32.mxu0 0.0
      %3272 = vmatmul.mubr.f32.gmra.mrb[0].mxu0 %v2830
      %v3273 = vpop.f32.mrb[0].mxu0
      %v3274 = vadd.f32 %v3021, %v3273
      %v3275 = vpop.f32.mrb[0].mxu0
      %v3276 = vadd.f32 %v3025, %v3275
      %3277 = vmatprep.mubr.f32.mxu0 0.0
      %3278 = vmatmul.mubr.f32.gmra.mrb[0].mxu0 %v2831
      %v3279 = vpop.f32.mrb[0].mxu0
      %v3280 = vadd.f32 %v3021, %v3279
      %v3281 = vpop.f32.mrb[0].mxu0
      %v3282 = vadd.f32 %v3025, %v3281
      %3283 = vmatprep.mubr.f32.mxu0 0.0
      %3284 = vmatmul.mubr.f32.gmra.mrb[0].mxu0 %v2832
      %v3285 = vpop.f32.mrb[0].mxu0
      %v3286 = vadd.f32 %v3021, %v3285
      %v3287 = vpop.f32.mrb[0].mxu0
      %v3288 = vadd.f32 %v3025, %v3287
      %3289 = vmatprep.mubr.f32.mxu0 0.0
      %3290 = vmatmul.mubr.f32.gmra.mrb[0].mxu0 %v2833
      %v3291 = vpop.f32.mrb[0].mxu0
      %v3292 = vadd.f32 %v3021, %v3291
      %v3293 = vpop.f32.mrb[0].mxu0
      %v3294 = vadd.f32 %v3025, %v3293
      %3295 = vmatprep.mubr.f32.mxu0 0.0
      %3296 = vmatmul.mubr.f32.gmra.mrb[0].mxu0 %v2834
      %v3297 = vpop.f32.mrb[0].mxu0
      %v3298 = vadd.f32 %v3021, %v3297
      %v3299 = vpop.f32.mrb[0].mxu0
      %v3300 = vadd.f32 %v3025, %v3299
      %3301 = vmatprep.mubr.f32.mxu0 0.0
      %3302 = vmatmul.mubr.f32.gmra.mrb[0].mxu0 %v2835
      %v3303 = vpop.f32.mrb[0].mxu0
      %v3304 = vadd.f32 %v3021, %v3303
      %v3305 = vpop.f32.mrb[0].mxu0
      %v3306 = vadd.f32 %v3025, %v3305
      %3307 = vmatprep.mubr.f32.mxu0 0.0
      %3308 = vmatmul.mubr.f32.gmra.mrb[0].mxu0 %v2836
      %v3309 = vpop.f32.mrb[0].mxu0
      %v3310 = vadd.f32 %v3021, %v3309
      %v3311 = vpop.f32.mrb[0].mxu0
      %v3312 = vadd.f32 %v3025, %v3311
      %3313 = vmatprep.mubr.f32.mxu0 0.0
      %3314 = vmatmul.mubr.f32.gmra.mrb[0].mxu0 %v2837
      %v3315 = vpop.f32.mrb[0].mxu0
      %v3316 = vadd.f32 %v3021, %v3315
      %v3317 = vpop.f32.mrb[0].mxu0
      %v3318 = vadd.f32 %v3025, %v3317
      %3319 = vmatprep.mubr.f32.mxu0 0.0
      %3320 = vmatmul.mubr.f32.gmra.mrb[0].mxu0 %v2838
      %v3321 = vpop.f32.mrb[0].mxu0
      %v3322 = vadd.f32 %v3021, %v3321
      %v3323 = vpop.f32.mrb[0].mxu0
      %v3324 = vadd.f32 %v3025, %v3323
      %3325 = vmatprep.mubr.f32.mxu0 0.0
      %3326 = vmatmul.mubr.f32.gmra.mrb[0].mxu0 %v2839
      %v3327 = vpop.f32.mrb[0].mxu0
      %v3328 = vadd.f32 %v3021, %v3327
      %v3329 = vpop.f32.mrb[0].mxu0
      %v3330 = vadd.f32 %v3025, %v3329
      %3331 = vmatprep.mubr.f32.mxu0 0.0
      %3332 = vmatmul.mubr.f32.gmra.mrb[0].mxu0 %v2840
      %v3333 = vpop.f32.mrb[0].mxu0
      %v3334 = vadd.f32 %v3021, %v3333
      %v3335 = vpop.f32.mrb[0].mxu0
      %v3336 = vadd.f32 %v3025, %v3335
      %3337 = vmatprep.mubr.f32.mxu0 0.0
      %3338 = vmatmul.mubr.f32.gmra.mrb[0].mxu0 %v2841
      %v3339 = vpop.f32.mrb[0].mxu0
      %v3340 = vadd.f32 %v3021, %v3339
      %v3341 = vpop.f32.mrb[0].mxu0
      %v3342 = vadd.f32 %v3025, %v3341
      %3343 = vmatprep.mubr.f32.mxu0 0.0
      %3344 = vmatmul.mubr.f32.gmra.mrb[0].mxu0 %v2842
      %v3345 = vpop.f32.mrb[0].mxu0
      %v3346 = vadd.f32 %v3021, %v3345
      %v3347 = vpop.f32.mrb[0].mxu0
      %v3348 = vadd.f32 %v3025, %v3347
      %3349 = vmatprep.mubr.f32.mxu0 0.0
      %3350 = vmatmul.mubr.f32.gmra.mrb[0].mxu0 %v2843
      %v3351 = vpop.f32.mrb[0].mxu0
      %v3352 = vadd.f32 %v3021, %v3351
      %v3353 = vpop.f32.mrb[0].mxu0
      %v3354 = vadd.f32 %v3025, %v3353
      %3355 = vmatprep.mubr.f32.mxu0 0.0
      %3356 = vmatmul.mubr.f32.gmra.mrb[0].mxu0 %v2844
      %v3357 = vpop.f32.mrb[0].mxu0
      %v3358 = vadd.f32 %v3021, %v3357
      %v3359 = vpop.f32.mrb[0].mxu0
      %v3360 = vadd.f32 %v3025, %v3359
      %3361 = vmatprep.mubr.f32.mxu0 0.0
      %3362 = vmatmul.mubr.f32.gmra.mrb[0].mxu0 %v2845
      %v3363 = vpop.f32.mrb[0].mxu0
      %v3364 = vadd.f32 %v3021, %v3363
      %v3365 = vpop.f32.mrb[0].mxu0
      %v3366 = vadd.f32 %v3025, %v3365
      %3367 = vmatprep.mubr.f32.mxu0 0.0
      %3368 = vmatmul.mubr.f32.gmra.mrb[0].mxu0 %v2846
      %v3369 = vpop.f32.mrb[0].mxu0
      %v3370 = vadd.f32 %v3021, %v3369
      %v3371 = vpop.f32.mrb[0].mxu0
      %v3372 = vadd.f32 %v3025, %v3371
      %3373 = vmatprep.mubr.f32.mxu0 0.0
      %3374 = vmatmul.mubr.f32.gmra.mrb[0].mxu0 %v2847
      %v3375 = vpop.f32.mrb[0].mxu0
      %v3376 = vadd.f32 %v3021, %v3375
      %v3377 = vpop.f32.mrb[0].mxu0
      %v3378 = vadd.f32 %v3025, %v3377
      %3379 = vmatprep.mubr.f32.mxu0 0.0
      %3380 = vmatmul.mubr.f32.gmra.mrb[0].mxu0 %v2848
      %v3381 = vpop.f32.mrb[0].mxu0
      %v3382 = vadd.f32 %v3021, %v3381
      %v3383 = vpop.f32.mrb[0].mxu0
      %v3384 = vadd.f32 %v3025, %v3383
      %3385 = vmatprep.mubr.f32.mxu0 0.0
      %3386 = vmatmul.mubr.f32.gmra.mrb[0].mxu0 %v2849
      %v3387 = vpop.f32.mrb[0].mxu0
      %v3388 = vadd.f32 %v3021, %v3387
      %v3389 = vpop.f32.mrb[0].mxu0
      %v3390 = vadd.f32 %v3025, %v3389
      %3391 = vmatprep.mubr.f32.mxu0 0.0
      %3392 = vmatmul.mubr.f32.gmra.mrb[0].mxu0 %v2850
      %v3393 = vpop.f32.mrb[0].mxu0
      %v3394 = vadd.f32 %v3021, %v3393
      %v3395 = vpop.f32.mrb[0].mxu0
      %v3396 = vadd.f32 %v3025, %v3395
      %3397 = vmatprep.mubr.f32.mxu0 0.0
      %3398 = vmatmul.mubr.f32.gmra.mrb[0].mxu0 %v2851
      %v3399 = vpop.f32.mrb[0].mxu0
      %v3400 = vadd.f32 %v3021, %v3399
      %v3401 = vpop.f32.mrb[0].mxu0
      %v3402 = vadd.f32 %v3025, %v3401
      %3403 = vmatprep.mubr.f32.mxu0 0.0
      %3404 = vmatmul.mubr.f32.gmra.mrb[0].mxu0 %v2852
      %v3405 = vpop.f32.mrb[0].mxu0
      %v3406 = vadd.f32 %v3021, %v3405
      %v3407 = vpop.f32.mrb[0].mxu0
      %v3408 = vadd.f32 %v3025, %v3407
      %3409 = vmatprep.mubr.f32.mxu0 0.0
      %3410 = vmatmul.mubr.f32.gmra.mrb[0].mxu0 %v2853
      %v3411 = vpop.f32.mrb[0].mxu0
      %v3412 = vadd.f32 %v3021, %v3411
      %v3413 = vpop.f32.mrb[0].mxu0
      %v3414 = vadd.f32 %v3025, %v3413
      %3415 = vmatprep.mubr.f32.mxu0 0.0
      %3416 = vmatmul.mubr.f32.gmra.mrb[0].mxu0 %v2854
      %v3417 = vpop.f32.mrb[0].mxu0
      %v3418 = vadd.f32 %v3021, %v3417
      %v3419 = vpop.f32.mrb[0].mxu0
      %v3420 = vadd.f32 %v3025, %v3419
      %3421 = vmatprep.mubr.f32.mxu0 0.0
      %3422 = vmatmul.mubr.f32.gmra.mrb[0].mxu0 %v2855
      %v3423 = vpop.f32.mrb[0].mxu0
      %v3424 = vadd.f32 %v3021, %v3423
      %v3425 = vpop.f32.mrb[0].mxu0
      %v3426 = vadd.f32 %v3025, %v3425
      %3427 = vmatprep.mubr.f32.mxu0 0.0
      %3428 = vmatmul.mubr.f32.gmra.mrb[0].mxu0 %v2856
      %v3429 = vpop.f32.mrb[0].mxu0
      %v3430 = vadd.f32 %v3021, %v3429
      %v3431 = vpop.f32.mrb[0].mxu0
      %v3432 = vadd.f32 %v3025, %v3431
      %3433 = vmatprep.mubr.f32.mxu0 0.0
      %3434 = vmatmul.mubr.f32.gmra.mrb[0].mxu0 %v2857
      %v3435 = vpop.f32.mrb[0].mxu0
      %v3436 = vadd.f32 %v3021, %v3435
      %v3437 = vpop.f32.mrb[0].mxu0
      %v3438 = vadd.f32 %v3025, %v3437
      %3439 = vmatprep.mubr.f32.mxu0 0.0
      %3440 = vmatmul.mubr.f32.gmra.mrb[0].mxu0 %v2858
      %v3441 = vpop.f32.mrb[0].mxu0
      %v3442 = vadd.f32 %v3021, %v3441
      %v3443 = vpop.f32.mrb[0].mxu0
      %v3444 = vadd.f32 %v3025, %v3443
      %3445 = vmatprep.mubr.f32.mxu0 0.0
      %3446 = vmatmul.mubr.f32.gmra.mrb[0].mxu0 %v2859
      %v3447 = vpop.f32.mrb[0].mxu0
      %v3448 = vadd.f32 %v3021, %v3447
      %v3449 = vpop.f32.mrb[0].mxu0
      %v3450 = vadd.f32 %v3025, %v3449
      %3451 = vmatprep.mubr.f32.mxu0 0.0
      %3452 = vmatmul.mubr.f32.gmra.mrb[0].mxu0 %v2860
      %v3453 = vpop.f32.mrb[0].mxu0
      %v3454 = vadd.f32 %v3021, %v3453
      %v3455 = vpop.f32.mrb[0].mxu0
      %v3456 = vadd.f32 %v3025, %v3455
      %3457 = vmatprep.mubr.f32.mxu0 0.0
      %3458 = vmatmul.mubr.f32.gmra.mrb[0].mxu0 %v2861
      %v3459 = vpop.f32.mrb[0].mxu0
      %v3460 = vadd.f32 %v3021, %v3459
      %v3461 = vpop.f32.mrb[0].mxu0
      %v3462 = vadd.f32 %v3025, %v3461
      %3463 = vmatprep.mubr.f32.mxu0 0.0
      %3464 = vmatmul.mubr.f32.gmra.mrb[0].mxu0 %v2862
      %v3465 = vpop.f32.mrb[0].mxu0
      %v3466 = vadd.f32 %v3021, %v3465
      %v3467 = vpop.f32.mrb[0].mxu0
      %v3468 = vadd.f32 %v3025, %v3467
      %3469 = vmatprep.mubr.f32.mxu0 0.0
      %3470 = vmatmul.mubr.f32.gmra.mrb[0].mxu0 %v2863
      %v3471 = vpop.f32.mrb[0].mxu0
      %v3472 = vadd.f32 %v3021, %v3471
      %v3473 = vpop.f32.mrb[0].mxu0
      %v3474 = vadd.f32 %v3025, %v3473
      %3475 = vmatprep.mubr.f32.mxu0 0.0
      %3476 = vmatmul.mubr.f32.gmra.mrb[0].mxu0 %v2864
      %v3477 = vpop.f32.mrb[0].mxu0
      %v3478 = vadd.f32 %v3021, %v3477
      %v3479 = vpop.f32.mrb[0].mxu0
      %v3480 = vadd.f32 %v3025, %v3479
      %3481 = vmatprep.mubr.f32.mxu0 0.0
      %3482 = vmatmul.mubr.f32.gmra.mrb[0].mxu0 %v2865
      %v3483 = vpop.f32.mrb[0].mxu0
      %v3484 = vadd.f32 %v3021, %v3483
      %v3485 = vpop.f32.mrb[0].mxu0
      %v3486 = vadd.f32 %v3025, %v3485
      %3487 = vmatprep.mubr.f32.mxu0 0.0
      %3488 = vmatmul.mubr.f32.gmra.mrb[0].mxu0 %v2866
      %v3489 = vpop.f32.mrb[0].mxu0
      %v3490 = vadd.f32 %v3021, %v3489
      %v3491 = vpop.f32.mrb[0].mxu0
      %v3492 = vadd.f32 %v3025, %v3491
      %3493 = vmatprep.mubr.f32.mxu0 0.0
      %3494 = vmatmul.mubr.f32.gmra.mrb[0].mxu0 %v2867
      %v3495 = vpop.f32.mrb[0].mxu0
      %v3496 = vadd.f32 %v3021, %v3495
      %v3497 = vpop.f32.mrb[0].mxu0
      %v3498 = vadd.f32 %v3025, %v3497
      %3499 = vmatprep.mubr.f32.mxu0 0.0
      %3500 = vmatmul.mubr.f32.gmra.mrb[0].mxu0 %v2868
      %v3501 = vpop.f32.mrb[0].mxu0
      %v3502 = vadd.f32 %v3021, %v3501
      %v3503 = vpop.f32.mrb[0].mxu0
      %v3504 = vadd.f32 %v3025, %v3503
      %3505 = vmatprep.mubr.f32.mxu0 0.0
      %3506 = vmatmul.mubr.f32.gmra.mrb[0].mxu0 %v2869
      %v3507 = vpop.f32.mrb[0].mxu0
      %v3508 = vadd.f32 %v3021, %v3507
      %v3509 = vpop.f32.mrb[0].mxu0
      %v3510 = vadd.f32 %v3025, %v3509
      %3511 = vdwg.mxu0
      %3512 = vmatprep.subr.mxu0 %v2873
      %3513 = vmatpush1.msra.mxu0 %v2872
      %3514 = vmatprep.subr.mxu0 %v2882
      %3515 = vmatpush1.msra.mxu0 %v2881
      %3516 = vmatprep.subr.mxu0 %v2891
      %3517 = vmatpush1.msra.mxu0 %v2890
      %3518 = vmatprep.subr.mxu0 %v2900
      %3519 = vmatpush1.msra.mxu0 %v2899
      %3520 = vmatprep.subr.mxu0 %v2909
      %3521 = vmatpush1.msra.mxu0 %v2908
      %3522 = vmatprep.subr.mxu0 %v2918
      %3523 = vmatpush1.msra.mxu0 %v2917
      %3524 = vmatprep.subr.mxu0 %v2927
      %3525 = vmatpush1.msra.mxu0 %v2926
      %3526 = vmatprep.subr.mxu0 %v2936
      %3527 = vmatpush1.msra.mxu0 %v2935
      %3528 = vmatprep.subr.mxu0 %v2945
      %3529 = vmatpush1.msra.mxu0 %v2944
      %3530 = vmatprep.subr.mxu0 %v2954
      %3531 = vmatpush1.msra.mxu0 %v2953
      %3532 = vmatprep.subr.mxu0 %v2963
      %3533 = vmatpush1.msra.mxu0 %v2962
      %3534 = vmatprep.subr.mxu0 %v2972
      %3535 = vmatpush1.msra.mxu0 %v2971
      %3536 = vmatprep.subr.mxu0 %v2981
      %3537 = vmatpush1.msra.mxu0 %v2980
      %3538 = vmatprep.subr.mxu0 %v2990
      %3539 = vmatpush1.msra.mxu0 %v2989
      %3540 = vmatprep.subr.mxu0 %v2999
      %3541 = vmatpush1.msra.mxu0 %v2998
      %3542 = vmatprep.subr.mxu0 %v3008
      %3543 = vmatpush1.msra.mxu0 %v3007
      %3544 = vmatprep.subr.mxu0 0.0
      %3545 = vmatpush1.msra.mxu0 0.0
      %3546 = vmatprep.subr.mxu0 0.0
      %3547 = vmatpush1.msra.mxu0 0.0
      %3548 = vmatprep.subr.mxu0 0.0
      %3549 = vmatpush1.msra.mxu0 0.0
      %3550 = vmatprep.subr.mxu0 0.0
      %3551 = vmatpush1.msra.mxu0 0.0
      %3552 = vmatprep.subr.mxu0 0.0
      %3553 = vmatpush1.msra.mxu0 0.0
      %3554 = vmatprep.subr.mxu0 0.0
      %3555 = vmatpush1.msra.mxu0 0.0
      %3556 = vmatprep.subr.mxu0 0.0
      %3557 = vmatpush1.msra.mxu0 0.0
      %3558 = vmatprep.subr.mxu0 0.0
      %3559 = vmatpush1.msra.mxu0 0.0
      %3560 = vmatprep.subr.mxu0 0.0
      %3561 = vmatpush1.msra.mxu0 0.0
      %3562 = vmatprep.subr.mxu0 0.0
      %3563 = vmatpush1.msra.mxu0 0.0
      %3564 = vmatprep.subr.mxu0 0.0
      %3565 = vmatpush1.msra.mxu0 0.0
      %3566 = vmatprep.subr.mxu0 0.0
      %3567 = vmatpush1.msra.mxu0 0.0
      %3568 = vmatprep.subr.mxu0 0.0
      %3569 = vmatpush1.msra.mxu0 0.0
      %3570 = vmatprep.subr.mxu0 0.0
      %3571 = vmatpush1.msra.mxu0 0.0
      %3572 = vmatprep.subr.mxu0 0.0
      %3573 = vmatpush1.msra.mxu0 0.0
      %3574 = vmatprep.subr.mxu0 0.0
      %3575 = vmatpush1.msra.mxu0 0.0
      %3576 = vmatprep.mubr.f32.mxu0 0.0
      %3577 = vmatmul.mubr.f32.gmra.mrb[0].mxu0 %v2806
      %v3578 = vpop.f32.mrb[0].mxu0
      %v3579 = vadd.f32 %v3029, %v3578
      %v3580 = vpop.f32.mrb[0].mxu0
      %v3581 = vadd.f32 %v3033, %v3580
      %3582 = vmatprep.mubr.f32.mxu0 0.0
      %3583 = vmatmul.mubr.f32.gmra.mrb[0].mxu0 %v2807
      %v3584 = vpop.f32.mrb[0].mxu0
      %v3585 = vadd.f32 %v3029, %v3584
      %v3586 = vpop.f32.mrb[0].mxu0
      %v3587 = vadd.f32 %v3033, %v3586
      %3588 = vmatprep.mubr.f32.mxu0 0.0
      %3589 = vmatmul.mubr.f32.gmra.mrb[0].mxu0 %v2808
      %v3590 = vpop.f32.mrb[0].mxu0
      %v3591 = vadd.f32 %v3029, %v3590
      %v3592 = vpop.f32.mrb[0].mxu0
      %v3593 = vadd.f32 %v3033, %v3592
      %3594 = vmatprep.mubr.f32.mxu0 0.0
      %3595 = vmatmul.mubr.f32.gmra.mrb[0].mxu0 %v2809
      %v3596 = vpop.f32.mrb[0].mxu0
      %v3597 = vadd.f32 %v3029, %v3596
      %v3598 = vpop.f32.mrb[0].mxu0
      %v3599 = vadd.f32 %v3033, %v3598
      %3600 = vmatprep.mubr.f32.mxu0 0.0
      %3601 = vmatmul.mubr.f32.gmra.mrb[0].mxu0 %v2810
      %v3602 = vpop.f32.mrb[0].mxu0
      %v3603 = vadd.f32 %v3029, %v3602
      %v3604 = vpop.f32.mrb[0].mxu0
      %v3605 = vadd.f32 %v3033, %v3604
      %3606 = vmatprep.mubr.f32.mxu0 0.0
      %3607 = vmatmul.mubr.f32.gmra.mrb[0].mxu0 %v2811
      %v3608 = vpop.f32.mrb[0].mxu0
      %v3609 = vadd.f32 %v3029, %v3608
      %v3610 = vpop.f32.mrb[0].mxu0
      %v3611 = vadd.f32 %v3033, %v3610
      %3612 = vmatprep.mubr.f32.mxu0 0.0
      %3613 = vmatmul.mubr.f32.gmra.mrb[0].mxu0 %v2812
      %v3614 = vpop.f32.mrb[0].mxu0
      %v3615 = vadd.f32 %v3029, %v3614
      %v3616 = vpop.f32.mrb[0].mxu0
      %v3617 = vadd.f32 %v3033, %v3616
      %3618 = vmatprep.mubr.f32.mxu0 0.0
      %3619 = vmatmul.mubr.f32.gmra.mrb[0].mxu0 %v2813
      %v3620 = vpop.f32.mrb[0].mxu0
      %v3621 = vadd.f32 %v3029, %v3620
      %v3622 = vpop.f32.mrb[0].mxu0
      %v3623 = vadd.f32 %v3033, %v3622
      %3624 = vmatprep.mubr.f32.mxu0 0.0
      %3625 = vmatmul.mubr.f32.gmra.mrb[0].mxu0 %v2814
      %v3626 = vpop.f32.mrb[0].mxu0
      %v3627 = vadd.f32 %v3029, %v3626
      %v3628 = vpop.f32.mrb[0].mxu0
      %v3629 = vadd.f32 %v3033, %v3628
      %3630 = vmatprep.mubr.f32.mxu0 0.0
      %3631 = vmatmul.mubr.f32.gmra.mrb[0].mxu0 %v2815
      %v3632 = vpop.f32.mrb[0].mxu0
      %v3633 = vadd.f32 %v3029, %v3632
      %v3634 = vpop.f32.mrb[0].mxu0
      %v3635 = vadd.f32 %v3033, %v3634
      %3636 = vmatprep.mubr.f32.mxu0 0.0
      %3637 = vmatmul.mubr.f32.gmra.mrb[0].mxu0 %v2816
      %v3638 = vpop.f32.mrb[0].mxu0
      %v3639 = vadd.f32 %v3029, %v3638
      %v3640 = vpop.f32.mrb[0].mxu0
      %v3641 = vadd.f32 %v3033, %v3640
      %3642 = vmatprep.mubr.f32.mxu0 0.0
      %3643 = vmatmul.mubr.f32.gmra.mrb[0].mxu0 %v2817
      %v3644 = vpop.f32.mrb[0].mxu0
      %v3645 = vadd.f32 %v3029, %v3644
      %v3646 = vpop.f32.mrb[0].mxu0
      %v3647 = vadd.f32 %v3033, %v3646
      %3648 = vmatprep.mubr.f32.mxu0 0.0
      %3649 = vmatmul.mubr.f32.gmra.mrb[0].mxu0 %v2818
      %v3650 = vpop.f32.mrb[0].mxu0
      %v3651 = vadd.f32 %v3029, %v3650
      %v3652 = vpop.f32.mrb[0].mxu0
      %v3653 = vadd.f32 %v3033, %v3652
      %3654 = vmatprep.mubr.f32.mxu0 0.0
      %3655 = vmatmul.mubr.f32.gmra.mrb[0].mxu0 %v2819
      %v3656 = vpop.f32.mrb[0].mxu0
      %v3657 = vadd.f32 %v3029, %v3656
      %v3658 = vpop.f32.mrb[0].mxu0
      %v3659 = vadd.f32 %v3033, %v3658
      %3660 = vmatprep.mubr.f32.mxu0 0.0
      %3661 = vmatmul.mubr.f32.gmra.mrb[0].mxu0 %v2820
      %v3662 = vpop.f32.mrb[0].mxu0
      %v3663 = vadd.f32 %v3029, %v3662
      %v3664 = vpop.f32.mrb[0].mxu0
      %v3665 = vadd.f32 %v3033, %v3664
      %3666 = vmatprep.mubr.f32.mxu0 0.0
      %3667 = vmatmul.mubr.f32.gmra.mrb[0].mxu0 %v2821
      %v3668 = vpop.f32.mrb[0].mxu0
      %v3669 = vadd.f32 %v3029, %v3668
      %v3670 = vpop.f32.mrb[0].mxu0
      %v3671 = vadd.f32 %v3033, %v3670
      %3672 = vmatprep.mubr.f32.mxu0 0.0
      %3673 = vmatmul.mubr.f32.gmra.mrb[0].mxu0 %v2822
      %v3674 = vpop.f32.mrb[0].mxu0
      %v3675 = vadd.f32 %v3029, %v3674
      %v3676 = vpop.f32.mrb[0].mxu0
      %v3677 = vadd.f32 %v3033, %v3676
      %3678 = vmatprep.mubr.f32.mxu0 0.0
      %3679 = vmatmul.mubr.f32.gmra.mrb[0].mxu0 %v2823
      %v3680 = vpop.f32.mrb[0].mxu0
      %v3681 = vadd.f32 %v3029, %v3680
      %v3682 = vpop.f32.mrb[0].mxu0
      %v3683 = vadd.f32 %v3033, %v3682
      %3684 = vmatprep.mubr.f32.mxu0 0.0
      %3685 = vmatmul.mubr.f32.gmra.mrb[0].mxu0 %v2824
      %v3686 = vpop.f32.mrb[0].mxu0
      %v3687 = vadd.f32 %v3029, %v3686
      %v3688 = vpop.f32.mrb[0].mxu0
      %v3689 = vadd.f32 %v3033, %v3688
      %3690 = vmatprep.mubr.f32.mxu0 0.0
      %3691 = vmatmul.mubr.f32.gmra.mrb[0].mxu0 %v2825
      %v3692 = vpop.f32.mrb[0].mxu0
      %v3693 = vadd.f32 %v3029, %v3692
      %v3694 = vpop.f32.mrb[0].mxu0
      %v3695 = vadd.f32 %v3033, %v3694
      %3696 = vmatprep.mubr.f32.mxu0 0.0
      %3697 = vmatmul.mubr.f32.gmra.mrb[0].mxu0 %v2826
      %v3698 = vpop.f32.mrb[0].mxu0
      %v3699 = vadd.f32 %v3029, %v3698
      %v3700 = vpop.f32.mrb[0].mxu0
      %v3701 = vadd.f32 %v3033, %v3700
      %3702 = vmatprep.mubr.f32.mxu0 0.0
      %3703 = vmatmul.mubr.f32.gmra.mrb[0].mxu0 %v2827
      %v3704 = vpop.f32.mrb[0].mxu0
      %v3705 = vadd.f32 %v3029, %v3704
      %v3706 = vpop.f32.mrb[0].mxu0
      %v3707 = vadd.f32 %v3033, %v3706
      %3708 = vmatprep.mubr.f32.mxu0 0.0
      %3709 = vmatmul.mubr.f32.gmra.mrb[0].mxu0 %v2828
      %v3710 = vpop.f32.mrb[0].mxu0
      %v3711 = vadd.f32 %v3029, %v3710
      %v3712 = vpop.f32.mrb[0].mxu0
      %v3713 = vadd.f32 %v3033, %v3712
      %3714 = vmatprep.mubr.f32.mxu0 0.0
      %3715 = vmatmul.mubr.f32.gmra.mrb[0].mxu0 %v2829
      %v3716 = vpop.f32.mrb[0].mxu0
      %v3717 = vadd.f32 %v3029, %v3716
      %v3718 = vpop.f32.mrb[0].mxu0
      %v3719 = vadd.f32 %v3033, %v3718
      %3720 = vmatprep.mubr.f32.mxu0 0.0
      %3721 = vmatmul.mubr.f32.gmra.mrb[0].mxu0 %v2830
      %v3722 = vpop.f32.mrb[0].mxu0
      %v3723 = vadd.f32 %v3029, %v3722
      %v3724 = vpop.f32.mrb[0].mxu0
      %v3725 = vadd.f32 %v3033, %v3724
      %3726 = vmatprep.mubr.f32.mxu0 0.0
      %3727 = vmatmul.mubr.f32.gmra.mrb[0].mxu0 %v2831
      %v3728 = vpop.f32.mrb[0].mxu0
      %v3729 = vadd.f32 %v3029, %v3728
      %v3730 = vpop.f32.mrb[0].mxu0
      %v3731 = vadd.f32 %v3033, %v3730
      %3732 = vmatprep.mubr.f32.mxu0 0.0
      %3733 = vmatmul.mubr.f32.gmra.mrb[0].mxu0 %v2832
      %v3734 = vpop.f32.mrb[0].mxu0
      %v3735 = vadd.f32 %v3029, %v3734
      %v3736 = vpop.f32.mrb[0].mxu0
      %v3737 = vadd.f32 %v3033, %v3736
      %3738 = vmatprep.mubr.f32.mxu0 0.0
      %3739 = vmatmul.mubr.f32.gmra.mrb[0].mxu0 %v2833
      %v3740 = vpop.f32.mrb[0].mxu0
      %v3741 = vadd.f32 %v3029, %v3740
      %v3742 = vpop.f32.mrb[0].mxu0
      %v3743 = vadd.f32 %v3033, %v3742
      %3744 = vmatprep.mubr.f32.mxu0 0.0
      %3745 = vmatmul.mubr.f32.gmra.mrb[0].mxu0 %v2834
      %v3746 = vpop.f32.mrb[0].mxu0
      %v3747 = vadd.f32 %v3029, %v3746
      %v3748 = vpop.f32.mrb[0].mxu0
      %v3749 = vadd.f32 %v3033, %v3748
      %3750 = vmatprep.mubr.f32.mxu0 0.0
      %3751 = vmatmul.mubr.f32.gmra.mrb[0].mxu0 %v2835
      %v3752 = vpop.f32.mrb[0].mxu0
      %v3753 = vadd.f32 %v3029, %v3752
      %v3754 = vpop.f32.mrb[0].mxu0
      %v3755 = vadd.f32 %v3033, %v3754
      %3756 = vmatprep.mubr.f32.mxu0 0.0
      %3757 = vmatmul.mubr.f32.gmra.mrb[0].mxu0 %v2836
      %v3758 = vpop.f32.mrb[0].mxu0
      %v3759 = vadd.f32 %v3029, %v3758
      %v3760 = vpop.f32.mrb[0].mxu0
      %v3761 = vadd.f32 %v3033, %v3760
      %3762 = vmatprep.mubr.f32.mxu0 0.0
      %3763 = vmatmul.mubr.f32.gmra.mrb[0].mxu0 %v2837
      %v3764 = vpop.f32.mrb[0].mxu0
      %v3765 = vadd.f32 %v3029, %v3764
      %v3766 = vpop.f32.mrb[0].mxu0
      %v3767 = vadd.f32 %v3033, %v3766
      %3768 = vmatprep.mubr.f32.mxu0 0.0
      %3769 = vmatmul.mubr.f32.gmra.mrb[0].mxu0 %v2838
      %v3770 = vpop.f32.mrb[0].mxu0
      %v3771 = vadd.f32 %v3029, %v3770
      %v3772 = vpop.f32.mrb[0].mxu0
      %v3773 = vadd.f32 %v3033, %v3772
      %3774 = vmatprep.mubr.f32.mxu0 0.0
      %3775 = vmatmul.mubr.f32.gmra.mrb[0].mxu0 %v2839
      %v3776 = vpop.f32.mrb[0].mxu0
      %v3777 = vadd.f32 %v3029, %v3776
      %v3778 = vpop.f32.mrb[0].mxu0
      %v3779 = vadd.f32 %v3033, %v3778
      %3780 = vmatprep.mubr.f32.mxu0 0.0
      %3781 = vmatmul.mubr.f32.gmra.mrb[0].mxu0 %v2840
      %v3782 = vpop.f32.mrb[0].mxu0
      %v3783 = vadd.f32 %v3029, %v3782
      %v3784 = vpop.f32.mrb[0].mxu0
      %v3785 = vadd.f32 %v3033, %v3784
      %3786 = vmatprep.mubr.f32.mxu0 0.0
      %3787 = vmatmul.mubr.f32.gmra.mrb[0].mxu0 %v2841
      %v3788 = vpop.f32.mrb[0].mxu0
      %v3789 = vadd.f32 %v3029, %v3788
      %v3790 = vpop.f32.mrb[0].mxu0
      %v3791 = vadd.f32 %v3033, %v3790
      %3792 = vmatprep.mubr.f32.mxu0 0.0
      %3793 = vmatmul.mubr.f32.gmra.mrb[0].mxu0 %v2842
      %v3794 = vpop.f32.mrb[0].mxu0
      %v3795 = vadd.f32 %v3029, %v3794
      %v3796 = vpop.f32.mrb[0].mxu0
      %v3797 = vadd.f32 %v3033, %v3796
      %3798 = vmatprep.mubr.f32.mxu0 0.0
      %3799 = vmatmul.mubr.f32.gmra.mrb[0].mxu0 %v2843
      %v3800 = vpop.f32.mrb[0].mxu0
      %v3801 = vadd.f32 %v3029, %v3800
      %v3802 = vpop.f32.mrb[0].mxu0
      %v3803 = vadd.f32 %v3033, %v3802
      %3804 = vmatprep.mubr.f32.mxu0 0.0
      %3805 = vmatmul.mubr.f32.gmra.mrb[0].mxu0 %v2844
      %v3806 = vpop.f32.mrb[0].mxu0
      %v3807 = vadd.f32 %v3029, %v3806
      %v3808 = vpop.f32.mrb[0].mxu0
      %v3809 = vadd.f32 %v3033, %v3808
      %3810 = vmatprep.mubr.f32.mxu0 0.0
      %3811 = vmatmul.mubr.f32.gmra.mrb[0].mxu0 %v2845
      %v3812 = vpop.f32.mrb[0].mxu0
      %v3813 = vadd.f32 %v3029, %v3812
      %v3814 = vpop.f32.mrb[0].mxu0
      %v3815 = vadd.f32 %v3033, %v3814
      %3816 = vmatprep.mubr.f32.mxu0 0.0
      %3817 = vmatmul.mubr.f32.gmra.mrb[0].mxu0 %v2846
      %v3818 = vpop.f32.mrb[0].mxu0
      %v3819 = vadd.f32 %v3029, %v3818
      %v3820 = vpop.f32.mrb[0].mxu0
      %v3821 = vadd.f32 %v3033, %v3820
      %3822 = vmatprep.mubr.f32.mxu0 0.0
      %3823 = vmatmul.mubr.f32.gmra.mrb[0].mxu0 %v2847
      %v3824 = vpop.f32.mrb[0].mxu0
      %v3825 = vadd.f32 %v3029, %v3824
      %v3826 = vpop.f32.mrb[0].mxu0
      %v3827 = vadd.f32 %v3033, %v3826
      %3828 = vmatprep.mubr.f32.mxu0 0.0
      %3829 = vmatmul.mubr.f32.gmra.mrb[0].mxu0 %v2848
      %v3830 = vpop.f32.mrb[0].mxu0
      %v3831 = vadd.f32 %v3029, %v3830
      %v3832 = vpop.f32.mrb[0].mxu0
      %v3833 = vadd.f32 %v3033, %v3832
      %3834 = vmatprep.mubr.f32.mxu0 0.0
      %3835 = vmatmul.mubr.f32.gmra.mrb[0].mxu0 %v2849
      %v3836 = vpop.f32.mrb[0].mxu0
      %v3837 = vadd.f32 %v3029, %v3836
      %v3838 = vpop.f32.mrb[0].mxu0
      %v3839 = vadd.f32 %v3033, %v3838
      %3840 = vmatprep.mubr.f32.mxu0 0.0
      %3841 = vmatmul.mubr.f32.gmra.mrb[0].mxu0 %v2850
      %v3842 = vpop.f32.mrb[0].mxu0
      %v3843 = vadd.f32 %v3029, %v3842
      %v3844 = vpop.f32.mrb[0].mxu0
      %v3845 = vadd.f32 %v3033, %v3844
      %3846 = vmatprep.mubr.f32.mxu0 0.0
      %3847 = vmatmul.mubr.f32.gmra.mrb[0].mxu0 %v2851
      %v3848 = vpop.f32.mrb[0].mxu0
      %v3849 = vadd.f32 %v3029, %v3848
      %v3850 = vpop.f32.mrb[0].mxu0
      %v3851 = vadd.f32 %v3033, %v3850
      %3852 = vmatprep.mubr.f32.mxu0 0.0
      %3853 = vmatmul.mubr.f32.gmra.mrb[0].mxu0 %v2852
      %v3854 = vpop.f32.mrb[0].mxu0
      %v3855 = vadd.f32 %v3029, %v3854
      %v3856 = vpop.f32.mrb[0].mxu0
      %v3857 = vadd.f32 %v3033, %v3856
      %3858 = vmatprep.mubr.f32.mxu0 0.0
      %3859 = vmatmul.mubr.f32.gmra.mrb[0].mxu0 %v2853
      %v3860 = vpop.f32.mrb[0].mxu0
      %v3861 = vadd.f32 %v3029, %v3860
      %v3862 = vpop.f32.mrb[0].mxu0
      %v3863 = vadd.f32 %v3033, %v3862
      %3864 = vmatprep.mubr.f32.mxu0 0.0
      %3865 = vmatmul.mubr.f32.gmra.mrb[0].mxu0 %v2854
      %v3866 = vpop.f32.mrb[0].mxu0
      %v3867 = vadd.f32 %v3029, %v3866
      %v3868 = vpop.f32.mrb[0].mxu0
      %v3869 = vadd.f32 %v3033, %v3868
      %3870 = vmatprep.mubr.f32.mxu0 0.0
      %3871 = vmatmul.mubr.f32.gmra.mrb[0].mxu0 %v2855
      %v3872 = vpop.f32.mrb[0].mxu0
      %v3873 = vadd.f32 %v3029, %v3872
      %v3874 = vpop.f32.mrb[0].mxu0
      %v3875 = vadd.f32 %v3033, %v3874
      %3876 = vmatprep.mubr.f32.mxu0 0.0
      %3877 = vmatmul.mubr.f32.gmra.mrb[0].mxu0 %v2856
      %v3878 = vpop.f32.mrb[0].mxu0
      %v3879 = vadd.f32 %v3029, %v3878
      %v3880 = vpop.f32.mrb[0].mxu0
      %v3881 = vadd.f32 %v3033, %v3880
      %3882 = vmatprep.mubr.f32.mxu0 0.0
      %3883 = vmatmul.mubr.f32.gmra.mrb[0].mxu0 %v2857
      %v3884 = vpop.f32.mrb[0].mxu0
      %v3885 = vadd.f32 %v3029, %v3884
      %v3886 = vpop.f32.mrb[0].mxu0
      %v3887 = vadd.f32 %v3033, %v3886
      %3888 = vmatprep.mubr.f32.mxu0 0.0
      %3889 = vmatmul.mubr.f32.gmra.mrb[0].mxu0 %v2858
      %v3890 = vpop.f32.mrb[0].mxu0
      %v3891 = vadd.f32 %v3029, %v3890
      %v3892 = vpop.f32.mrb[0].mxu0
      %v3893 = vadd.f32 %v3033, %v3892
      %3894 = vmatprep.mubr.f32.mxu0 0.0
      %3895 = vmatmul.mubr.f32.gmra.mrb[0].mxu0 %v2859
      %v3896 = vpop.f32.mrb[0].mxu0
      %v3897 = vadd.f32 %v3029, %v3896
      %v3898 = vpop.f32.mrb[0].mxu0
      %v3899 = vadd.f32 %v3033, %v3898
      %3900 = vmatprep.mubr.f32.mxu0 0.0
      %3901 = vmatmul.mubr.f32.gmra.mrb[0].mxu0 %v2860
      %v3902 = vpop.f32.mrb[0].mxu0
      %v3903 = vadd.f32 %v3029, %v3902
      %v3904 = vpop.f32.mrb[0].mxu0
      %v3905 = vadd.f32 %v3033, %v3904
      %3906 = vmatprep.mubr.f32.mxu0 0.0
      %3907 = vmatmul.mubr.f32.gmra.mrb[0].mxu0 %v2861
      %v3908 = vpop.f32.mrb[0].mxu0
      %v3909 = vadd.f32 %v3029, %v3908
      %v3910 = vpop.f32.mrb[0].mxu0
      %v3911 = vadd.f32 %v3033, %v3910
      %3912 = vmatprep.mubr.f32.mxu0 0.0
      %3913 = vmatmul.mubr.f32.gmra.mrb[0].mxu0 %v2862
      %v3914 = vpop.f32.mrb[0].mxu0
      %v3915 = vadd.f32 %v3029, %v3914
      %v3916 = vpop.f32.mrb[0].mxu0
      %v3917 = vadd.f32 %v3033, %v3916
      %3918 = vmatprep.mubr.f32.mxu0 0.0
      %3919 = vmatmul.mubr.f32.gmra.mrb[0].mxu0 %v2863
      %v3920 = vpop.f32.mrb[0].mxu0
      %v3921 = vadd.f32 %v3029, %v3920
      %v3922 = vpop.f32.mrb[0].mxu0
      %v3923 = vadd.f32 %v3033, %v3922
      %3924 = vmatprep.mubr.f32.mxu0 0.0
      %3925 = vmatmul.mubr.f32.gmra.mrb[0].mxu0 %v2864
      %v3926 = vpop.f32.mrb[0].mxu0
      %v3927 = vadd.f32 %v3029, %v3926
      %v3928 = vpop.f32.mrb[0].mxu0
      %v3929 = vadd.f32 %v3033, %v3928
      %3930 = vmatprep.mubr.f32.mxu0 0.0
      %3931 = vmatmul.mubr.f32.gmra.mrb[0].mxu0 %v2865
      %v3932 = vpop.f32.mrb[0].mxu0
      %v3933 = vadd.f32 %v3029, %v3932
      %v3934 = vpop.f32.mrb[0].mxu0
      %v3935 = vadd.f32 %v3033, %v3934
      %3936 = vmatprep.mubr.f32.mxu0 0.0
      %3937 = vmatmul.mubr.f32.gmra.mrb[0].mxu0 %v2866
      %v3938 = vpop.f32.mrb[0].mxu0
      %v3939 = vadd.f32 %v3029, %v3938
      %v3940 = vpop.f32.mrb[0].mxu0
      %v3941 = vadd.f32 %v3033, %v3940
      %3942 = vmatprep.mubr.f32.mxu0 0.0
      %3943 = vmatmul.mubr.f32.gmra.mrb[0].mxu0 %v2867
      %v3944 = vpop.f32.mrb[0].mxu0
      %v3945 = vadd.f32 %v3029, %v3944
      %v3946 = vpop.f32.mrb[0].mxu0
      %v3947 = vadd.f32 %v3033, %v3946
      %3948 = vmatprep.mubr.f32.mxu0 0.0
      %3949 = vmatmul.mubr.f32.gmra.mrb[0].mxu0 %v2868
      %v3950 = vpop.f32.mrb[0].mxu0
      %v3951 = vadd.f32 %v3029, %v3950
      %v3952 = vpop.f32.mrb[0].mxu0
      %v3953 = vadd.f32 %v3033, %v3952
      %3954 = vmatprep.mubr.f32.mxu0 0.0
      %3955 = vmatmul.mubr.f32.gmra.mrb[0].mxu0 %v2869
      %v3956 = vpop.f32.mrb[0].mxu0
      %v3957 = vadd.f32 %v3029, %v3956
      %v3958 = vpop.f32.mrb[0].mxu0
      %v3959 = vadd.f32 %v3033, %v3958
      %3960 = vdwg.mxu0
      %3961 = vmatprep.subr.mxu0 %v2875
      %3962 = vmatpush1.msra.mxu0 %v2874
      %3963 = vmatprep.subr.mxu0 %v2884
      %3964 = vmatpush1.msra.mxu0 %v2883
      %3965 = vmatprep.subr.mxu0 %v2893
      %3966 = vmatpush1.msra.mxu0 %v2892
      %3967 = vmatprep.subr.mxu0 %v2902
      %3968 = vmatpush1.msra.mxu0 %v2901
      %3969 = vmatprep.subr.mxu0 %v2911
      %3970 = vmatpush1.msra.mxu0 %v2910
      %3971 = vmatprep.subr.mxu0 %v2920
      %3972 = vmatpush1.msra.mxu0 %v2919
      %3973 = vmatprep.subr.mxu0 %v2929
      %3974 = vmatpush1.msra.mxu0 %v2928
      %3975 = vmatprep.subr.mxu0 %v2938
      %3976 = vmatpush1.msra.mxu0 %v2937
      %3977 = vmatprep.subr.mxu0 %v2947
      %3978 = vmatpush1.msra.mxu0 %v2946
      %3979 = vmatprep.subr.mxu0 %v2956
      %3980 = vmatpush1.msra.mxu0 %v2955
      %3981 = vmatprep.subr.mxu0 %v2965
      %3982 = vmatpush1.msra.mxu0 %v2964
      %3983 = vmatprep.subr.mxu0 %v2974
      %3984 = vmatpush1.msra.mxu0 %v2973
      %3985 = vmatprep.subr.mxu0 %v2983
      %3986 = vmatpush1.msra.mxu0 %v2982
      %3987 = vmatprep.subr.mxu0 %v2992
      %3988 = vmatpush1.msra.mxu0 %v2991
      %3989 = vmatprep.subr.mxu0 %v3001
      %3990 = vmatpush1.msra.mxu0 %v3000
      %3991 = vmatprep.subr.mxu0 %v3010
      %3992 = vmatpush1.msra.mxu0 %v3009
      %3993 = vmatprep.subr.mxu0 0.0
      %3994 = vmatpush1.msra.mxu0 0.0
      %3995 = vmatprep.subr.mxu0 0.0
      %3996 = vmatpush1.msra.mxu0 0.0
      %3997 = vmatprep.subr.mxu0 0.0
      %3998 = vmatpush1.msra.mxu0 0.0
      %3999 = vmatprep.subr.mxu0 0.0
      %4000 = vmatpush1.msra.mxu0 0.0
      %4001 = vmatprep.subr.mxu0 0.0
      %4002 = vmatpush1.msra.mxu0 0.0
      %4003 = vmatprep.subr.mxu0 0.0
      %4004 = vmatpush1.msra.mxu0 0.0
      %4005 = vmatprep.subr.mxu0 0.0
      %4006 = vmatpush1.msra.mxu0 0.0
      %4007 = vmatprep.subr.mxu0 0.0
      %4008 = vmatpush1.msra.mxu0 0.0
      %4009 = vmatprep.subr.mxu0 0.0
      %4010 = vmatpush1.msra.mxu0 0.0
      %4011 = vmatprep.subr.mxu0 0.0
      %4012 = vmatpush1.msra.mxu0 0.0
      %4013 = vmatprep.subr.mxu0 0.0
      %4014 = vmatpush1.msra.mxu0 0.0
      %4015 = vmatprep.subr.mxu0 0.0
      %4016 = vmatpush1.msra.mxu0 0.0
      %4017 = vmatprep.subr.mxu0 0.0
      %4018 = vmatpush1.msra.mxu0 0.0
      %4019 = vmatprep.subr.mxu0 0.0
      %4020 = vmatpush1.msra.mxu0 0.0
      %4021 = vmatprep.subr.mxu0 0.0
      %4022 = vmatpush1.msra.mxu0 0.0
      %4023 = vmatprep.subr.mxu0 0.0
      %4024 = vmatpush1.msra.mxu0 0.0
      %4025 = vmatprep.mubr.f32.mxu0 0.0
      %4026 = vmatmul.mubr.f32.gmra.mrb[0].mxu0 %v2806
      %v4027 = vpop.f32.mrb[0].mxu0
      %v4028 = vadd.f32 %v3037, %v4027
      %v4029 = vpop.f32.mrb[0].mxu0
      %v4030 = vadd.f32 %v3041, %v4029
      %4031 = vmatprep.mubr.f32.mxu0 0.0
      %4032 = vmatmul.mubr.f32.gmra.mrb[0].mxu0 %v2807
      %v4033 = vpop.f32.mrb[0].mxu0
      %v4034 = vadd.f32 %v3037, %v4033
      %v4035 = vpop.f32.mrb[0].mxu0
      %v4036 = vadd.f32 %v3041, %v4035
      %4037 = vmatprep.mubr.f32.mxu0 0.0
      %4038 = vmatmul.mubr.f32.gmra.mrb[0].mxu0 %v2808
      %v4039 = vpop.f32.mrb[0].mxu0
      %v4040 = vadd.f32 %v3037, %v4039
      %v4041 = vpop.f32.mrb[0].mxu0
      %v4042 = vadd.f32 %v3041, %v4041
      %4043 = vmatprep.mubr.f32.mxu0 0.0
      %4044 = vmatmul.mubr.f32.gmra.mrb[0].mxu0 %v2809
      %v4045 = vpop.f32.mrb[0].mxu0
      %v4046 = vadd.f32 %v3037, %v4045
      %v4047 = vpop.f32.mrb[0].mxu0
      %v4048 = vadd.f32 %v3041, %v4047
      %4049 = vmatprep.mubr.f32.mxu0 0.0
      %4050 = vmatmul.mubr.f32.gmra.mrb[0].mxu0 %v2810
      %v4051 = vpop.f32.mrb[0].mxu0
      %v4052 = vadd.f32 %v3037, %v4051
      %v4053 = vpop.f32.mrb[0].mxu0
      %v4054 = vadd.f32 %v3041, %v4053
      %4055 = vmatprep.mubr.f32.mxu0 0.0
      %4056 = vmatmul.mubr.f32.gmra.mrb[0].mxu0 %v2811
      %v4057 = vpop.f32.mrb[0].mxu0
      %v4058 = vadd.f32 %v3037, %v4057
      %v4059 = vpop.f32.mrb[0].mxu0
      %v4060 = vadd.f32 %v3041, %v4059
      %4061 = vmatprep.mubr.f32.mxu0 0.0
      %4062 = vmatmul.mubr.f32.gmra.mrb[0].mxu0 %v2812
      %v4063 = vpop.f32.mrb[0].mxu0
      %v4064 = vadd.f32 %v3037, %v4063
      %v4065 = vpop.f32.mrb[0].mxu0
      %v4066 = vadd.f32 %v3041, %v4065
      %4067 = vmatprep.mubr.f32.mxu0 0.0
      %4068 = vmatmul.mubr.f32.gmra.mrb[0].mxu0 %v2813
      %v4069 = vpop.f32.mrb[0].mxu0
      %v4070 = vadd.f32 %v3037, %v4069
      %v4071 = vpop.f32.mrb[0].mxu0
      %v4072 = vadd.f32 %v3041, %v4071
      %4073 = vmatprep.mubr.f32.mxu0 0.0
      %4074 = vmatmul.mubr.f32.gmra.mrb[0].mxu0 %v2814
      %v4075 = vpop.f32.mrb[0].mxu0
      %v4076 = vadd.f32 %v3037, %v4075
      %v4077 = vpop.f32.mrb[0].mxu0
      %v4078 = vadd.f32 %v3041, %v4077
      %4079 = vmatprep.mubr.f32.mxu0 0.0
      %4080 = vmatmul.mubr.f32.gmra.mrb[0].mxu0 %v2815
      %v4081 = vpop.f32.mrb[0].mxu0
      %v4082 = vadd.f32 %v3037, %v4081
      %v4083 = vpop.f32.mrb[0].mxu0
      %v4084 = vadd.f32 %v3041, %v4083
      %4085 = vmatprep.mubr.f32.mxu0 0.0
      %4086 = vmatmul.mubr.f32.gmra.mrb[0].mxu0 %v2816
      %v4087 = vpop.f32.mrb[0].mxu0
      %v4088 = vadd.f32 %v3037, %v4087
      %v4089 = vpop.f32.mrb[0].mxu0
      %v4090 = vadd.f32 %v3041, %v4089
      %4091 = vmatprep.mubr.f32.mxu0 0.0
      %4092 = vmatmul.mubr.f32.gmra.mrb[0].mxu0 %v2817
      %v4093 = vpop.f32.mrb[0].mxu0
      %v4094 = vadd.f32 %v3037, %v4093
      %v4095 = vpop.f32.mrb[0].mxu0
      %v4096 = vadd.f32 %v3041, %v4095
      %4097 = vmatprep.mubr.f32.mxu0 0.0
      %4098 = vmatmul.mubr.f32.gmra.mrb[0].mxu0 %v2818
      %v4099 = vpop.f32.mrb[0].mxu0
      %v4100 = vadd.f32 %v3037, %v4099
      %v4101 = vpop.f32.mrb[0].mxu0
      %v4102 = vadd.f32 %v3041, %v4101
      %4103 = vmatprep.mubr.f32.mxu0 0.0
      %4104 = vmatmul.mubr.f32.gmra.mrb[0].mxu0 %v2819
      %v4105 = vpop.f32.mrb[0].mxu0
      %v4106 = vadd.f32 %v3037, %v4105
      %v4107 = vpop.f32.mrb[0].mxu0
      %v4108 = vadd.f32 %v3041, %v4107
      %4109 = vmatprep.mubr.f32.mxu0 0.0
      %4110 = vmatmul.mubr.f32.gmra.mrb[0].mxu0 %v2820
      %v4111 = vpop.f32.mrb[0].mxu0
      %v4112 = vadd.f32 %v3037, %v4111
      %v4113 = vpop.f32.mrb[0].mxu0
      %v4114 = vadd.f32 %v3041, %v4113
      %4115 = vmatprep.mubr.f32.mxu0 0.0
      %4116 = vmatmul.mubr.f32.gmra.mrb[0].mxu0 %v2821
      %v4117 = vpop.f32.mrb[0].mxu0
      %v4118 = vadd.f32 %v3037, %v4117
      %v4119 = vpop.f32.mrb[0].mxu0
      %v4120 = vadd.f32 %v3041, %v4119
      %4121 = vmatprep.mubr.f32.mxu0 0.0
      %4122 = vmatmul.mubr.f32.gmra.mrb[0].mxu0 %v2822
      %v4123 = vpop.f32.mrb[0].mxu0
      %v4124 = vadd.f32 %v3037, %v4123
      %v4125 = vpop.f32.mrb[0].mxu0
      %v4126 = vadd.f32 %v3041, %v4125
      %4127 = vmatprep.mubr.f32.mxu0 0.0
      %4128 = vmatmul.mubr.f32.gmra.mrb[0].mxu0 %v2823
      %v4129 = vpop.f32.mrb[0].mxu0
      %v4130 = vadd.f32 %v3037, %v4129
      %v4131 = vpop.f32.mrb[0].mxu0
      %v4132 = vadd.f32 %v3041, %v4131
      %4133 = vmatprep.mubr.f32.mxu0 0.0
      %4134 = vmatmul.mubr.f32.gmra.mrb[0].mxu0 %v2824
      %v4135 = vpop.f32.mrb[0].mxu0
      %v4136 = vadd.f32 %v3037, %v4135
      %v4137 = vpop.f32.mrb[0].mxu0
      %v4138 = vadd.f32 %v3041, %v4137
      %4139 = vmatprep.mubr.f32.mxu0 0.0
      %4140 = vmatmul.mubr.f32.gmra.mrb[0].mxu0 %v2825
      %v4141 = vpop.f32.mrb[0].mxu0
      %v4142 = vadd.f32 %v3037, %v4141
      %v4143 = vpop.f32.mrb[0].mxu0
      %v4144 = vadd.f32 %v3041, %v4143
      %4145 = vmatprep.mubr.f32.mxu0 0.0
      %4146 = vmatmul.mubr.f32.gmra.mrb[0].mxu0 %v2826
      %v4147 = vpop.f32.mrb[0].mxu0
      %v4148 = vadd.f32 %v3037, %v4147
      %v4149 = vpop.f32.mrb[0].mxu0
      %v4150 = vadd.f32 %v3041, %v4149
      %4151 = vmatprep.mubr.f32.mxu0 0.0
      %4152 = vmatmul.mubr.f32.gmra.mrb[0].mxu0 %v2827
      %v4153 = vpop.f32.mrb[0].mxu0
      %v4154 = vadd.f32 %v3037, %v4153
      %v4155 = vpop.f32.mrb[0].mxu0
      %v4156 = vadd.f32 %v3041, %v4155
      %4157 = vmatprep.mubr.f32.mxu0 0.0
      %4158 = vmatmul.mubr.f32.gmra.mrb[0].mxu0 %v2828
      %v4159 = vpop.f32.mrb[0].mxu0
      %v4160 = vadd.f32 %v3037, %v4159
      %v4161 = vpop.f32.mrb[0].mxu0
      %v4162 = vadd.f32 %v3041, %v4161
      %4163 = vmatprep.mubr.f32.mxu0 0.0
      %4164 = vmatmul.mubr.f32.gmra.mrb[0].mxu0 %v2829
      %v4165 = vpop.f32.mrb[0].mxu0
      %v4166 = vadd.f32 %v3037, %v4165
      %v4167 = vpop.f32.mrb[0].mxu0
      %v4168 = vadd.f32 %v3041, %v4167
      %4169 = vmatprep.mubr.f32.mxu0 0.0
      %4170 = vmatmul.mubr.f32.gmra.mrb[0].mxu0 %v2830
      %v4171 = vpop.f32.mrb[0].mxu0
      %v4172 = vadd.f32 %v3037, %v4171
      %v4173 = vpop.f32.mrb[0].mxu0
      %v4174 = vadd.f32 %v3041, %v4173
      %4175 = vmatprep.mubr.f32.mxu0 0.0
      %4176 = vmatmul.mubr.f32.gmra.mrb[0].mxu0 %v2831
      %v4177 = vpop.f32.mrb[0].mxu0
      %v4178 = vadd.f32 %v3037, %v4177
      %v4179 = vpop.f32.mrb[0].mxu0
      %v4180 = vadd.f32 %v3041, %v4179
      %4181 = vmatprep.mubr.f32.mxu0 0.0
      %4182 = vmatmul.mubr.f32.gmra.mrb[0].mxu0 %v2832
      %v4183 = vpop.f32.mrb[0].mxu0
      %v4184 = vadd.f32 %v3037, %v4183
      %v4185 = vpop.f32.mrb[0].mxu0
      %v4186 = vadd.f32 %v3041, %v4185
      %4187 = vmatprep.mubr.f32.mxu0 0.0
      %4188 = vmatmul.mubr.f32.gmra.mrb[0].mxu0 %v2833
      %v4189 = vpop.f32.mrb[0].mxu0
      %v4190 = vadd.f32 %v3037, %v4189
      %v4191 = vpop.f32.mrb[0].mxu0
      %v4192 = vadd.f32 %v3041, %v4191
      %4193 = vmatprep.mubr.f32.mxu0 0.0
      %4194 = vmatmul.mubr.f32.gmra.mrb[0].mxu0 %v2834
      %v4195 = vpop.f32.mrb[0].mxu0
      %v4196 = vadd.f32 %v3037, %v4195
      %v4197 = vpop.f32.mrb[0].mxu0
      %v4198 = vadd.f32 %v3041, %v4197
      %4199 = vmatprep.mubr.f32.mxu0 0.0
      %4200 = vmatmul.mubr.f32.gmra.mrb[0].mxu0 %v2835
      %v4201 = vpop.f32.mrb[0].mxu0
      %v4202 = vadd.f32 %v3037, %v4201
      %v4203 = vpop.f32.mrb[0].mxu0
      %v4204 = vadd.f32 %v3041, %v4203
      %4205 = vmatprep.mubr.f32.mxu0 0.0
      %4206 = vmatmul.mubr.f32.gmra.mrb[0].mxu0 %v2836
      %v4207 = vpop.f32.mrb[0].mxu0
      %v4208 = vadd.f32 %v3037, %v4207
      %v4209 = vpop.f32.mrb[0].mxu0
      %v4210 = vadd.f32 %v3041, %v4209
      %4211 = vmatprep.mubr.f32.mxu0 0.0
      %4212 = vmatmul.mubr.f32.gmra.mrb[0].mxu0 %v2837
      %v4213 = vpop.f32.mrb[0].mxu0
      %v4214 = vadd.f32 %v3037, %v4213
      %v4215 = vpop.f32.mrb[0].mxu0
      %v4216 = vadd.f32 %v3041, %v4215
      %4217 = vmatprep.mubr.f32.mxu0 0.0
      %4218 = vmatmul.mubr.f32.gmra.mrb[0].mxu0 %v2838
      %v4219 = vpop.f32.mrb[0].mxu0
      %v4220 = vadd.f32 %v3037, %v4219
      %v4221 = vpop.f32.mrb[0].mxu0
      %v4222 = vadd.f32 %v3041, %v4221
      %4223 = vmatprep.mubr.f32.mxu0 0.0
      %4224 = vmatmul.mubr.f32.gmra.mrb[0].mxu0 %v2839
      %v4225 = vpop.f32.mrb[0].mxu0
      %v4226 = vadd.f32 %v3037, %v4225
      %v4227 = vpop.f32.mrb[0].mxu0
      %v4228 = vadd.f32 %v3041, %v4227
      %4229 = vmatprep.mubr.f32.mxu0 0.0
      %4230 = vmatmul.mubr.f32.gmra.mrb[0].mxu0 %v2840
      %v4231 = vpop.f32.mrb[0].mxu0
      %v4232 = vadd.f32 %v3037, %v4231
      %v4233 = vpop.f32.mrb[0].mxu0
      %v4234 = vadd.f32 %v3041, %v4233
      %4235 = vmatprep.mubr.f32.mxu0 0.0
      %4236 = vmatmul.mubr.f32.gmra.mrb[0].mxu0 %v2841
      %v4237 = vpop.f32.mrb[0].mxu0
      %v4238 = vadd.f32 %v3037, %v4237
      %v4239 = vpop.f32.mrb[0].mxu0
      %v4240 = vadd.f32 %v3041, %v4239
      %4241 = vmatprep.mubr.f32.mxu0 0.0
      %4242 = vmatmul.mubr.f32.gmra.mrb[0].mxu0 %v2842
      %v4243 = vpop.f32.mrb[0].mxu0
      %v4244 = vadd.f32 %v3037, %v4243
      %v4245 = vpop.f32.mrb[0].mxu0
      %v4246 = vadd.f32 %v3041, %v4245
      %4247 = vmatprep.mubr.f32.mxu0 0.0
      %4248 = vmatmul.mubr.f32.gmra.mrb[0].mxu0 %v2843
      %v4249 = vpop.f32.mrb[0].mxu0
      %v4250 = vadd.f32 %v3037, %v4249
      %v4251 = vpop.f32.mrb[0].mxu0
      %v4252 = vadd.f32 %v3041, %v4251
      %4253 = vmatprep.mubr.f32.mxu0 0.0
      %4254 = vmatmul.mubr.f32.gmra.mrb[0].mxu0 %v2844
      %v4255 = vpop.f32.mrb[0].mxu0
      %v4256 = vadd.f32 %v3037, %v4255
      %v4257 = vpop.f32.mrb[0].mxu0
      %v4258 = vadd.f32 %v3041, %v4257
      %4259 = vmatprep.mubr.f32.mxu0 0.0
      %4260 = vmatmul.mubr.f32.gmra.mrb[0].mxu0 %v2845
      %v4261 = vpop.f32.mrb[0].mxu0
      %v4262 = vadd.f32 %v3037, %v4261
      %v4263 = vpop.f32.mrb[0].mxu0
      %v4264 = vadd.f32 %v3041, %v4263
      %4265 = vmatprep.mubr.f32.mxu0 0.0
      %4266 = vmatmul.mubr.f32.gmra.mrb[0].mxu0 %v2846
      %v4267 = vpop.f32.mrb[0].mxu0
      %v4268 = vadd.f32 %v3037, %v4267
      %v4269 = vpop.f32.mrb[0].mxu0
      %v4270 = vadd.f32 %v3041, %v4269
      %4271 = vmatprep.mubr.f32.mxu0 0.0
      %4272 = vmatmul.mubr.f32.gmra.mrb[0].mxu0 %v2847
      %v4273 = vpop.f32.mrb[0].mxu0
      %v4274 = vadd.f32 %v3037, %v4273
      %v4275 = vpop.f32.mrb[0].mxu0
      %v4276 = vadd.f32 %v3041, %v4275
      %4277 = vmatprep.mubr.f32.mxu0 0.0
      %4278 = vmatmul.mubr.f32.gmra.mrb[0].mxu0 %v2848
      %v4279 = vpop.f32.mrb[0].mxu0
      %v4280 = vadd.f32 %v3037, %v4279
      %v4281 = vpop.f32.mrb[0].mxu0
      %v4282 = vadd.f32 %v3041, %v4281
      %4283 = vmatprep.mubr.f32.mxu0 0.0
      %4284 = vmatmul.mubr.f32.gmra.mrb[0].mxu0 %v2849
      %v4285 = vpop.f32.mrb[0].mxu0
      %v4286 = vadd.f32 %v3037, %v4285
      %v4287 = vpop.f32.mrb[0].mxu0
      %v4288 = vadd.f32 %v3041, %v4287
      %4289 = vmatprep.mubr.f32.mxu0 0.0
      %4290 = vmatmul.mubr.f32.gmra.mrb[0].mxu0 %v2850
      %v4291 = vpop.f32.mrb[0].mxu0
      %v4292 = vadd.f32 %v3037, %v4291
      %v4293 = vpop.f32.mrb[0].mxu0
      %v4294 = vadd.f32 %v3041, %v4293
      %4295 = vmatprep.mubr.f32.mxu0 0.0
      %4296 = vmatmul.mubr.f32.gmra.mrb[0].mxu0 %v2851
      %v4297 = vpop.f32.mrb[0].mxu0
      %v4298 = vadd.f32 %v3037, %v4297
      %v4299 = vpop.f32.mrb[0].mxu0
      %v4300 = vadd.f32 %v3041, %v4299
      %4301 = vmatprep.mubr.f32.mxu0 0.0
      %4302 = vmatmul.mubr.f32.gmra.mrb[0].mxu0 %v2852
      %v4303 = vpop.f32.mrb[0].mxu0
      %v4304 = vadd.f32 %v3037, %v4303
      %v4305 = vpop.f32.mrb[0].mxu0
      %v4306 = vadd.f32 %v3041, %v4305
      %4307 = vmatprep.mubr.f32.mxu0 0.0
      %4308 = vmatmul.mubr.f32.gmra.mrb[0].mxu0 %v2853
      %v4309 = vpop.f32.mrb[0].mxu0
      %v4310 = vadd.f32 %v3037, %v4309
      %v4311 = vpop.f32.mrb[0].mxu0
      %v4312 = vadd.f32 %v3041, %v4311
      %4313 = vmatprep.mubr.f32.mxu0 0.0
      %4314 = vmatmul.mubr.f32.gmra.mrb[0].mxu0 %v2854
      %v4315 = vpop.f32.mrb[0].mxu0
      %v4316 = vadd.f32 %v3037, %v4315
      %v4317 = vpop.f32.mrb[0].mxu0
      %v4318 = vadd.f32 %v3041, %v4317
      %4319 = vmatprep.mubr.f32.mxu0 0.0
      %4320 = vmatmul.mubr.f32.gmra.mrb[0].mxu0 %v2855
      %v4321 = vpop.f32.mrb[0].mxu0
      %v4322 = vadd.f32 %v3037, %v4321
      %v4323 = vpop.f32.mrb[0].mxu0
      %v4324 = vadd.f32 %v3041, %v4323
      %4325 = vmatprep.mubr.f32.mxu0 0.0
      %4326 = vmatmul.mubr.f32.gmra.mrb[0].mxu0 %v2856
      %v4327 = vpop.f32.mrb[0].mxu0
      %v4328 = vadd.f32 %v3037, %v4327
      %v4329 = vpop.f32.mrb[0].mxu0
      %v4330 = vadd.f32 %v3041, %v4329
      %4331 = vmatprep.mubr.f32.mxu0 0.0
      %4332 = vmatmul.mubr.f32.gmra.mrb[0].mxu0 %v2857
      %v4333 = vpop.f32.mrb[0].mxu0
      %v4334 = vadd.f32 %v3037, %v4333
      %v4335 = vpop.f32.mrb[0].mxu0
      %v4336 = vadd.f32 %v3041, %v4335
      %4337 = vmatprep.mubr.f32.mxu0 0.0
      %4338 = vmatmul.mubr.f32.gmra.mrb[0].mxu0 %v2858
      %v4339 = vpop.f32.mrb[0].mxu0
      %v4340 = vadd.f32 %v3037, %v4339
      %v4341 = vpop.f32.mrb[0].mxu0
      %v4342 = vadd.f32 %v3041, %v4341
      %4343 = vmatprep.mubr.f32.mxu0 0.0
      %4344 = vmatmul.mubr.f32.gmra.mrb[0].mxu0 %v2859
      %v4345 = vpop.f32.mrb[0].mxu0
      %v4346 = vadd.f32 %v3037, %v4345
      %v4347 = vpop.f32.mrb[0].mxu0
      %v4348 = vadd.f32 %v3041, %v4347
      %4349 = vmatprep.mubr.f32.mxu0 0.0
      %4350 = vmatmul.mubr.f32.gmra.mrb[0].mxu0 %v2860
      %v4351 = vpop.f32.mrb[0].mxu0
      %v4352 = vadd.f32 %v3037, %v4351
      %v4353 = vpop.f32.mrb[0].mxu0
      %v4354 = vadd.f32 %v3041, %v4353
      %4355 = vmatprep.mubr.f32.mxu0 0.0
      %4356 = vmatmul.mubr.f32.gmra.mrb[0].mxu0 %v2861
      %v4357 = vpop.f32.mrb[0].mxu0
      %v4358 = vadd.f32 %v3037, %v4357
      %v4359 = vpop.f32.mrb[0].mxu0
      %v4360 = vadd.f32 %v3041, %v4359
      %4361 = vmatprep.mubr.f32.mxu0 0.0
      %4362 = vmatmul.mubr.f32.gmra.mrb[0].mxu0 %v2862
      %v4363 = vpop.f32.mrb[0].mxu0
      %v4364 = vadd.f32 %v3037, %v4363
      %v4365 = vpop.f32.mrb[0].mxu0
      %v4366 = vadd.f32 %v3041, %v4365
      %4367 = vmatprep.mubr.f32.mxu0 0.0
      %4368 = vmatmul.mubr.f32.gmra.mrb[0].mxu0 %v2863
      %v4369 = vpop.f32.mrb[0].mxu0
      %v4370 = vadd.f32 %v3037, %v4369
      %v4371 = vpop.f32.mrb[0].mxu0
      %v4372 = vadd.f32 %v3041, %v4371
      %4373 = vmatprep.mubr.f32.mxu0 0.0
      %4374 = vmatmul.mubr.f32.gmra.mrb[0].mxu0 %v2864
      %v4375 = vpop.f32.mrb[0].mxu0
      %v4376 = vadd.f32 %v3037, %v4375
      %v4377 = vpop.f32.mrb[0].mxu0
      %v4378 = vadd.f32 %v3041, %v4377
      %4379 = vmatprep.mubr.f32.mxu0 0.0
      %4380 = vmatmul.mubr.f32.gmra.mrb[0].mxu0 %v2865
      %v4381 = vpop.f32.mrb[0].mxu0
      %v4382 = vadd.f32 %v3037, %v4381
      %v4383 = vpop.f32.mrb[0].mxu0
      %v4384 = vadd.f32 %v3041, %v4383
      %4385 = vmatprep.mubr.f32.mxu0 0.0
      %4386 = vmatmul.mubr.f32.gmra.mrb[0].mxu0 %v2866
      %v4387 = vpop.f32.mrb[0].mxu0
      %v4388 = vadd.f32 %v3037, %v4387
      %v4389 = vpop.f32.mrb[0].mxu0
      %v4390 = vadd.f32 %v3041, %v4389
      %4391 = vmatprep.mubr.f32.mxu0 0.0
      %4392 = vmatmul.mubr.f32.gmra.mrb[0].mxu0 %v2867
      %v4393 = vpop.f32.mrb[0].mxu0
      %v4394 = vadd.f32 %v3037, %v4393
      %v4395 = vpop.f32.mrb[0].mxu0
      %v4396 = vadd.f32 %v3041, %v4395
      %4397 = vmatprep.mubr.f32.mxu0 0.0
      %4398 = vmatmul.mubr.f32.gmra.mrb[0].mxu0 %v2868
      %v4399 = vpop.f32.mrb[0].mxu0
      %v4400 = vadd.f32 %v3037, %v4399
      %v4401 = vpop.f32.mrb[0].mxu0
      %v4402 = vadd.f32 %v3041, %v4401
      %4403 = vmatprep.mubr.f32.mxu0 0.0
      %4404 = vmatmul.mubr.f32.gmra.mrb[0].mxu0 %v2869
      %v4405 = vpop.f32.mrb[0].mxu0
      %v4406 = vadd.f32 %v3037, %v4405
      %v4407 = vpop.f32.mrb[0].mxu0
      %v4408 = vadd.f32 %v3041, %v4407
      %4409 = vdwg.mxu0
      %4410 = vmatprep.subr.mxu0 %v2877
      %4411 = vmatpush1.msra.mxu0 %v2876
      %4412 = vmatprep.subr.mxu0 %v2886
      %4413 = vmatpush1.msra.mxu0 %v2885
      %4414 = vmatprep.subr.mxu0 %v2895
      %4415 = vmatpush1.msra.mxu0 %v2894
      %4416 = vmatprep.subr.mxu0 %v2904
      %4417 = vmatpush1.msra.mxu0 %v2903
      %4418 = vmatprep.subr.mxu0 %v2913
      %4419 = vmatpush1.msra.mxu0 %v2912
      %4420 = vmatprep.subr.mxu0 %v2922
      %4421 = vmatpush1.msra.mxu0 %v2921
      %4422 = vmatprep.subr.mxu0 %v2931
      %4423 = vmatpush1.msra.mxu0 %v2930
      %4424 = vmatprep.subr.mxu0 %v2940
      %4425 = vmatpush1.msra.mxu0 %v2939
      %4426 = vmatprep.subr.mxu0 %v2949
      %4427 = vmatpush1.msra.mxu0 %v2948
      %4428 = vmatprep.subr.mxu0 %v2958
      %4429 = vmatpush1.msra.mxu0 %v2957
      %4430 = vmatprep.subr.mxu0 %v2967
      %4431 = vmatpush1.msra.mxu0 %v2966
      %4432 = vmatprep.subr.mxu0 %v2976
      %4433 = vmatpush1.msra.mxu0 %v2975
      %4434 = vmatprep.subr.mxu0 %v2985
      %4435 = vmatpush1.msra.mxu0 %v2984
      %4436 = vmatprep.subr.mxu0 %v2994
      %4437 = vmatpush1.msra.mxu0 %v2993
      %4438 = vmatprep.subr.mxu0 %v3003
      %4439 = vmatpush1.msra.mxu0 %v3002
      %4440 = vmatprep.subr.mxu0 %v3012
      %4441 = vmatpush1.msra.mxu0 %v3011
      %4442 = vmatprep.subr.mxu0 0.0
      %4443 = vmatpush1.msra.mxu0 0.0
      %4444 = vmatprep.subr.mxu0 0.0
      %4445 = vmatpush1.msra.mxu0 0.0
      %4446 = vmatprep.subr.mxu0 0.0
      %4447 = vmatpush1.msra.mxu0 0.0
      %4448 = vmatprep.subr.mxu0 0.0
      %4449 = vmatpush1.msra.mxu0 0.0
      %4450 = vmatprep.subr.mxu0 0.0
      %4451 = vmatpush1.msra.mxu0 0.0
      %4452 = vmatprep.subr.mxu0 0.0
      %4453 = vmatpush1.msra.mxu0 0.0
      %4454 = vmatprep.subr.mxu0 0.0
      %4455 = vmatpush1.msra.mxu0 0.0
      %4456 = vmatprep.subr.mxu0 0.0
      %4457 = vmatpush1.msra.mxu0 0.0
      %4458 = vmatprep.subr.mxu0 0.0
      %4459 = vmatpush1.msra.mxu0 0.0
      %4460 = vmatprep.subr.mxu0 0.0
      %4461 = vmatpush1.msra.mxu0 0.0
      %4462 = vmatprep.subr.mxu0 0.0
      %4463 = vmatpush1.msra.mxu0 0.0
      %4464 = vmatprep.subr.mxu0 0.0
      %4465 = vmatpush1.msra.mxu0 0.0
      %4466 = vmatprep.subr.mxu0 0.0
      %4467 = vmatpush1.msra.mxu0 0.0
      %4468 = vmatprep.subr.mxu0 0.0
      %4469 = vmatpush1.msra.mxu0 0.0
      %4470 = vmatprep.subr.mxu0 0.0
      %4471 = vmatpush1.msra.mxu0 0.0
      %4472 = vmatprep.subr.mxu0 0.0
      %4473 = vmatpush1.msra.mxu0 0.0
      %4474 = vmatprep.mubr.f32.mxu0 0.0
      %4475 = vmatmul.mubr.f32.gmra.mrb[0].mxu0 %v2806
      %v4476 = vpop.f32.mrb[0].mxu0
      %v4477 = vadd.f32 %v3045, %v4476
      %v4478 = vpop.f32.mrb[0].mxu0
      %v4479 = vadd.f32 %v3049, %v4478
      %4480 = vmatprep.mubr.f32.mxu0 0.0
      %4481 = vmatmul.mubr.f32.gmra.mrb[0].mxu0 %v2807
      %v4482 = vpop.f32.mrb[0].mxu0
      %v4483 = vadd.f32 %v3045, %v4482
      %v4484 = vpop.f32.mrb[0].mxu0
      %v4485 = vadd.f32 %v3049, %v4484
      %4486 = vmatprep.mubr.f32.mxu0 0.0
      %4487 = vmatmul.mubr.f32.gmra.mrb[0].mxu0 %v2808
      %v4488 = vpop.f32.mrb[0].mxu0
      %v4489 = vadd.f32 %v3045, %v4488
      %v4490 = vpop.f32.mrb[0].mxu0
      %v4491 = vadd.f32 %v3049, %v4490
      %4492 = vmatprep.mubr.f32.mxu0 0.0
      %4493 = vmatmul.mubr.f32.gmra.mrb[0].mxu0 %v2809
      %v4494 = vpop.f32.mrb[0].mxu0
      %v4495 = vadd.f32 %v3045, %v4494
      %v4496 = vpop.f32.mrb[0].mxu0
      %v4497 = vadd.f32 %v3049, %v4496
      %4498 = vmatprep.mubr.f32.mxu0 0.0
      %4499 = vmatmul.mubr.f32.gmra.mrb[0].mxu0 %v2810
      %v4500 = vpop.f32.mrb[0].mxu0
      %v4501 = vadd.f32 %v3045, %v4500
      %v4502 = vpop.f32.mrb[0].mxu0
      %v4503 = vadd.f32 %v3049, %v4502
      %4504 = vmatprep.mubr.f32.mxu0 0.0
      %4505 = vmatmul.mubr.f32.gmra.mrb[0].mxu0 %v2811
      %v4506 = vpop.f32.mrb[0].mxu0
      %v4507 = vadd.f32 %v3045, %v4506
      %v4508 = vpop.f32.mrb[0].mxu0
      %v4509 = vadd.f32 %v3049, %v4508
      %4510 = vmatprep.mubr.f32.mxu0 0.0
      %4511 = vmatmul.mubr.f32.gmra.mrb[0].mxu0 %v2812
      %v4512 = vpop.f32.mrb[0].mxu0
      %v4513 = vadd.f32 %v3045, %v4512
      %v4514 = vpop.f32.mrb[0].mxu0
      %v4515 = vadd.f32 %v3049, %v4514
      %4516 = vmatprep.mubr.f32.mxu0 0.0
      %4517 = vmatmul.mubr.f32.gmra.mrb[0].mxu0 %v2813
      %v4518 = vpop.f32.mrb[0].mxu0
      %v4519 = vadd.f32 %v3045, %v4518
      %v4520 = vpop.f32.mrb[0].mxu0
      %v4521 = vadd.f32 %v3049, %v4520
      %4522 = vmatprep.mubr.f32.mxu0 0.0
      %4523 = vmatmul.mubr.f32.gmra.mrb[0].mxu0 %v2814
      %v4524 = vpop.f32.mrb[0].mxu0
      %v4525 = vadd.f32 %v3045, %v4524
      %v4526 = vpop.f32.mrb[0].mxu0
      %v4527 = vadd.f32 %v3049, %v4526
      %4528 = vmatprep.mubr.f32.mxu0 0.0
      %4529 = vmatmul.mubr.f32.gmra.mrb[0].mxu0 %v2815
      %v4530 = vpop.f32.mrb[0].mxu0
      %v4531 = vadd.f32 %v3045, %v4530
      %v4532 = vpop.f32.mrb[0].mxu0
      %v4533 = vadd.f32 %v3049, %v4532
      %4534 = vmatprep.mubr.f32.mxu0 0.0
      %4535 = vmatmul.mubr.f32.gmra.mrb[0].mxu0 %v2816
      %v4536 = vpop.f32.mrb[0].mxu0
      %v4537 = vadd.f32 %v3045, %v4536
      %v4538 = vpop.f32.mrb[0].mxu0
      %v4539 = vadd.f32 %v3049, %v4538
      %4540 = vmatprep.mubr.f32.mxu0 0.0
      %4541 = vmatmul.mubr.f32.gmra.mrb[0].mxu0 %v2817
      %v4542 = vpop.f32.mrb[0].mxu0
      %v4543 = vadd.f32 %v3045, %v4542
      %v4544 = vpop.f32.mrb[0].mxu0
      %v4545 = vadd.f32 %v3049, %v4544
      %4546 = vmatprep.mubr.f32.mxu0 0.0
      %4547 = vmatmul.mubr.f32.gmra.mrb[0].mxu0 %v2818
      %v4548 = vpop.f32.mrb[0].mxu0
      %v4549 = vadd.f32 %v3045, %v4548
      %v4550 = vpop.f32.mrb[0].mxu0
      %v4551 = vadd.f32 %v3049, %v4550
      %4552 = vmatprep.mubr.f32.mxu0 0.0
      %4553 = vmatmul.mubr.f32.gmra.mrb[0].mxu0 %v2819
      %v4554 = vpop.f32.mrb[0].mxu0
      %v4555 = vadd.f32 %v3045, %v4554
      %v4556 = vpop.f32.mrb[0].mxu0
      %v4557 = vadd.f32 %v3049, %v4556
      %4558 = vmatprep.mubr.f32.mxu0 0.0
      %4559 = vmatmul.mubr.f32.gmra.mrb[0].mxu0 %v2820
      %v4560 = vpop.f32.mrb[0].mxu0
      %v4561 = vadd.f32 %v3045, %v4560
      %v4562 = vpop.f32.mrb[0].mxu0
      %v4563 = vadd.f32 %v3049, %v4562
      %4564 = vmatprep.mubr.f32.mxu0 0.0
      %4565 = vmatmul.mubr.f32.gmra.mrb[0].mxu0 %v2821
      %v4566 = vpop.f32.mrb[0].mxu0
      %v4567 = vadd.f32 %v3045, %v4566
      %v4568 = vpop.f32.mrb[0].mxu0
      %v4569 = vadd.f32 %v3049, %v4568
      %4570 = vmatprep.mubr.f32.mxu0 0.0
      %4571 = vmatmul.mubr.f32.gmra.mrb[0].mxu0 %v2822
      %v4572 = vpop.f32.mrb[0].mxu0
      %v4573 = vadd.f32 %v3045, %v4572
      %v4574 = vpop.f32.mrb[0].mxu0
      %v4575 = vadd.f32 %v3049, %v4574
      %4576 = vmatprep.mubr.f32.mxu0 0.0
      %4577 = vmatmul.mubr.f32.gmra.mrb[0].mxu0 %v2823
      %v4578 = vpop.f32.mrb[0].mxu0
      %v4579 = vadd.f32 %v3045, %v4578
      %v4580 = vpop.f32.mrb[0].mxu0
      %v4581 = vadd.f32 %v3049, %v4580
      %4582 = vmatprep.mubr.f32.mxu0 0.0
      %4583 = vmatmul.mubr.f32.gmra.mrb[0].mxu0 %v2824
      %v4584 = vpop.f32.mrb[0].mxu0
      %v4585 = vadd.f32 %v3045, %v4584
      %v4586 = vpop.f32.mrb[0].mxu0
      %v4587 = vadd.f32 %v3049, %v4586
      %4588 = vmatprep.mubr.f32.mxu0 0.0
      %4589 = vmatmul.mubr.f32.gmra.mrb[0].mxu0 %v2825
      %v4590 = vpop.f32.mrb[0].mxu0
      %v4591 = vadd.f32 %v3045, %v4590
      %v4592 = vpop.f32.mrb[0].mxu0
      %v4593 = vadd.f32 %v3049, %v4592
      %4594 = vmatprep.mubr.f32.mxu0 0.0
      %4595 = vmatmul.mubr.f32.gmra.mrb[0].mxu0 %v2826
      %v4596 = vpop.f32.mrb[0].mxu0
      %v4597 = vadd.f32 %v3045, %v4596
      %v4598 = vpop.f32.mrb[0].mxu0
      %v4599 = vadd.f32 %v3049, %v4598
      %4600 = vmatprep.mubr.f32.mxu0 0.0
      %4601 = vmatmul.mubr.f32.gmra.mrb[0].mxu0 %v2827
      %v4602 = vpop.f32.mrb[0].mxu0
      %v4603 = vadd.f32 %v3045, %v4602
      %v4604 = vpop.f32.mrb[0].mxu0
      %v4605 = vadd.f32 %v3049, %v4604
      %4606 = vmatprep.mubr.f32.mxu0 0.0
      %4607 = vmatmul.mubr.f32.gmra.mrb[0].mxu0 %v2828
      %v4608 = vpop.f32.mrb[0].mxu0
      %v4609 = vadd.f32 %v3045, %v4608
      %v4610 = vpop.f32.mrb[0].mxu0
      %v4611 = vadd.f32 %v3049, %v4610
      %4612 = vmatprep.mubr.f32.mxu0 0.0
      %4613 = vmatmul.mubr.f32.gmra.mrb[0].mxu0 %v2829
      %v4614 = vpop.f32.mrb[0].mxu0
      %v4615 = vadd.f32 %v3045, %v4614
      %v4616 = vpop.f32.mrb[0].mxu0
      %v4617 = vadd.f32 %v3049, %v4616
      %4618 = vmatprep.mubr.f32.mxu0 0.0
      %4619 = vmatmul.mubr.f32.gmra.mrb[0].mxu0 %v2830
      %v4620 = vpop.f32.mrb[0].mxu0
      %v4621 = vadd.f32 %v3045, %v4620
      %v4622 = vpop.f32.mrb[0].mxu0
      %v4623 = vadd.f32 %v3049, %v4622
      %4624 = vmatprep.mubr.f32.mxu0 0.0
      %4625 = vmatmul.mubr.f32.gmra.mrb[0].mxu0 %v2831
      %v4626 = vpop.f32.mrb[0].mxu0
      %v4627 = vadd.f32 %v3045, %v4626
      %v4628 = vpop.f32.mrb[0].mxu0
      %v4629 = vadd.f32 %v3049, %v4628
      %4630 = vmatprep.mubr.f32.mxu0 0.0
      %4631 = vmatmul.mubr.f32.gmra.mrb[0].mxu0 %v2832
      %v4632 = vpop.f32.mrb[0].mxu0
      %v4633 = vadd.f32 %v3045, %v4632
      %v4634 = vpop.f32.mrb[0].mxu0
      %v4635 = vadd.f32 %v3049, %v4634
      %4636 = vmatprep.mubr.f32.mxu0 0.0
      %4637 = vmatmul.mubr.f32.gmra.mrb[0].mxu0 %v2833
      %v4638 = vpop.f32.mrb[0].mxu0
      %v4639 = vadd.f32 %v3045, %v4638
      %v4640 = vpop.f32.mrb[0].mxu0
      %v4641 = vadd.f32 %v3049, %v4640
      %4642 = vmatprep.mubr.f32.mxu0 0.0
      %4643 = vmatmul.mubr.f32.gmra.mrb[0].mxu0 %v2834
      %v4644 = vpop.f32.mrb[0].mxu0
      %v4645 = vadd.f32 %v3045, %v4644
      %v4646 = vpop.f32.mrb[0].mxu0
      %v4647 = vadd.f32 %v3049, %v4646
      %4648 = vmatprep.mubr.f32.mxu0 0.0
      %4649 = vmatmul.mubr.f32.gmra.mrb[0].mxu0 %v2835
      %v4650 = vpop.f32.mrb[0].mxu0
      %v4651 = vadd.f32 %v3045, %v4650
      %v4652 = vpop.f32.mrb[0].mxu0
      %v4653 = vadd.f32 %v3049, %v4652
      %4654 = vmatprep.mubr.f32.mxu0 0.0
      %4655 = vmatmul.mubr.f32.gmra.mrb[0].mxu0 %v2836
      %v4656 = vpop.f32.mrb[0].mxu0
      %v4657 = vadd.f32 %v3045, %v4656
      %v4658 = vpop.f32.mrb[0].mxu0
      %v4659 = vadd.f32 %v3049, %v4658
      %4660 = vmatprep.mubr.f32.mxu0 0.0
      %4661 = vmatmul.mubr.f32.gmra.mrb[0].mxu0 %v2837
      %v4662 = vpop.f32.mrb[0].mxu0
      %v4663 = vadd.f32 %v3045, %v4662
      %v4664 = vpop.f32.mrb[0].mxu0
      %v4665 = vadd.f32 %v3049, %v4664
      %4666 = vmatprep.mubr.f32.mxu0 0.0
      %4667 = vmatmul.mubr.f32.gmra.mrb[0].mxu0 %v2838
      %v4668 = vpop.f32.mrb[0].mxu0
      %v4669 = vadd.f32 %v3045, %v4668
      %v4670 = vpop.f32.mrb[0].mxu0
      %v4671 = vadd.f32 %v3049, %v4670
      %4672 = vmatprep.mubr.f32.mxu0 0.0
      %4673 = vmatmul.mubr.f32.gmra.mrb[0].mxu0 %v2839
      %v4674 = vpop.f32.mrb[0].mxu0
      %v4675 = vadd.f32 %v3045, %v4674
      %v4676 = vpop.f32.mrb[0].mxu0
      %v4677 = vadd.f32 %v3049, %v4676
      %4678 = vmatprep.mubr.f32.mxu0 0.0
      %4679 = vmatmul.mubr.f32.gmra.mrb[0].mxu0 %v2840
      %v4680 = vpop.f32.mrb[0].mxu0
      %v4681 = vadd.f32 %v3045, %v4680
      %v4682 = vpop.f32.mrb[0].mxu0
      %v4683 = vadd.f32 %v3049, %v4682
      %4684 = vmatprep.mubr.f32.mxu0 0.0
      %4685 = vmatmul.mubr.f32.gmra.mrb[0].mxu0 %v2841
      %v4686 = vpop.f32.mrb[0].mxu0
      %v4687 = vadd.f32 %v3045, %v4686
      %v4688 = vpop.f32.mrb[0].mxu0
      %v4689 = vadd.f32 %v3049, %v4688
      %4690 = vmatprep.mubr.f32.mxu0 0.0
      %4691 = vmatmul.mubr.f32.gmra.mrb[0].mxu0 %v2842
      %v4692 = vpop.f32.mrb[0].mxu0
      %v4693 = vadd.f32 %v3045, %v4692
      %v4694 = vpop.f32.mrb[0].mxu0
      %v4695 = vadd.f32 %v3049, %v4694
      %4696 = vmatprep.mubr.f32.mxu0 0.0
      %4697 = vmatmul.mubr.f32.gmra.mrb[0].mxu0 %v2843
      %v4698 = vpop.f32.mrb[0].mxu0
      %v4699 = vadd.f32 %v3045, %v4698
      %v4700 = vpop.f32.mrb[0].mxu0
      %v4701 = vadd.f32 %v3049, %v4700
      %4702 = vmatprep.mubr.f32.mxu0 0.0
      %4703 = vmatmul.mubr.f32.gmra.mrb[0].mxu0 %v2844
      %v4704 = vpop.f32.mrb[0].mxu0
      %v4705 = vadd.f32 %v3045, %v4704
      %v4706 = vpop.f32.mrb[0].mxu0
      %v4707 = vadd.f32 %v3049, %v4706
      %4708 = vmatprep.mubr.f32.mxu0 0.0
      %4709 = vmatmul.mubr.f32.gmra.mrb[0].mxu0 %v2845
      %v4710 = vpop.f32.mrb[0].mxu0
      %v4711 = vadd.f32 %v3045, %v4710
      %v4712 = vpop.f32.mrb[0].mxu0
      %v4713 = vadd.f32 %v3049, %v4712
      %4714 = vmatprep.mubr.f32.mxu0 0.0
      %4715 = vmatmul.mubr.f32.gmra.mrb[0].mxu0 %v2846
      %v4716 = vpop.f32.mrb[0].mxu0
      %v4717 = vadd.f32 %v3045, %v4716
      %v4718 = vpop.f32.mrb[0].mxu0
      %v4719 = vadd.f32 %v3049, %v4718
      %4720 = vmatprep.mubr.f32.mxu0 0.0
      %4721 = vmatmul.mubr.f32.gmra.mrb[0].mxu0 %v2847
      %v4722 = vpop.f32.mrb[0].mxu0
      %v4723 = vadd.f32 %v3045, %v4722
      %v4724 = vpop.f32.mrb[0].mxu0
      %v4725 = vadd.f32 %v3049, %v4724
      %4726 = vmatprep.mubr.f32.mxu0 0.0
      %4727 = vmatmul.mubr.f32.gmra.mrb[0].mxu0 %v2848
      %v4728 = vpop.f32.mrb[0].mxu0
      %v4729 = vadd.f32 %v3045, %v4728
      %v4730 = vpop.f32.mrb[0].mxu0
      %v4731 = vadd.f32 %v3049, %v4730
      %4732 = vmatprep.mubr.f32.mxu0 0.0
      %4733 = vmatmul.mubr.f32.gmra.mrb[0].mxu0 %v2849
      %v4734 = vpop.f32.mrb[0].mxu0
      %v4735 = vadd.f32 %v3045, %v4734
      %v4736 = vpop.f32.mrb[0].mxu0
      %v4737 = vadd.f32 %v3049, %v4736
      %4738 = vmatprep.mubr.f32.mxu0 0.0
      %4739 = vmatmul.mubr.f32.gmra.mrb[0].mxu0 %v2850
      %v4740 = vpop.f32.mrb[0].mxu0
      %v4741 = vadd.f32 %v3045, %v4740
      %v4742 = vpop.f32.mrb[0].mxu0
      %v4743 = vadd.f32 %v3049, %v4742
      %4744 = vmatprep.mubr.f32.mxu0 0.0
      %4745 = vmatmul.mubr.f32.gmra.mrb[0].mxu0 %v2851
      %v4746 = vpop.f32.mrb[0].mxu0
      %v4747 = vadd.f32 %v3045, %v4746
      %v4748 = vpop.f32.mrb[0].mxu0
      %v4749 = vadd.f32 %v3049, %v4748
      %4750 = vmatprep.mubr.f32.mxu0 0.0
      %4751 = vmatmul.mubr.f32.gmra.mrb[0].mxu0 %v2852
      %v4752 = vpop.f32.mrb[0].mxu0
      %v4753 = vadd.f32 %v3045, %v4752
      %v4754 = vpop.f32.mrb[0].mxu0
      %v4755 = vadd.f32 %v3049, %v4754
      %4756 = vmatprep.mubr.f32.mxu0 0.0
      %4757 = vmatmul.mubr.f32.gmra.mrb[0].mxu0 %v2853
      %v4758 = vpop.f32.mrb[0].mxu0
      %v4759 = vadd.f32 %v3045, %v4758
      %v4760 = vpop.f32.mrb[0].mxu0
      %v4761 = vadd.f32 %v3049, %v4760
      %4762 = vmatprep.mubr.f32.mxu0 0.0
      %4763 = vmatmul.mubr.f32.gmra.mrb[0].mxu0 %v2854
      %v4764 = vpop.f32.mrb[0].mxu0
      %v4765 = vadd.f32 %v3045, %v4764
      %v4766 = vpop.f32.mrb[0].mxu0
      %v4767 = vadd.f32 %v3049, %v4766
      %4768 = vmatprep.mubr.f32.mxu0 0.0
      %4769 = vmatmul.mubr.f32.gmra.mrb[0].mxu0 %v2855
      %v4770 = vpop.f32.mrb[0].mxu0
      %v4771 = vadd.f32 %v3045, %v4770
      %v4772 = vpop.f32.mrb[0].mxu0
      %v4773 = vadd.f32 %v3049, %v4772
      %4774 = vmatprep.mubr.f32.mxu0 0.0
      %4775 = vmatmul.mubr.f32.gmra.mrb[0].mxu0 %v2856
      %v4776 = vpop.f32.mrb[0].mxu0
      %v4777 = vadd.f32 %v3045, %v4776
      %v4778 = vpop.f32.mrb[0].mxu0
      %v4779 = vadd.f32 %v3049, %v4778
      %4780 = vmatprep.mubr.f32.mxu0 0.0
      %4781 = vmatmul.mubr.f32.gmra.mrb[0].mxu0 %v2857
      %v4782 = vpop.f32.mrb[0].mxu0
      %v4783 = vadd.f32 %v3045, %v4782
      %v4784 = vpop.f32.mrb[0].mxu0
      %v4785 = vadd.f32 %v3049, %v4784
      %4786 = vmatprep.mubr.f32.mxu0 0.0
      %4787 = vmatmul.mubr.f32.gmra.mrb[0].mxu0 %v2858
      %v4788 = vpop.f32.mrb[0].mxu0
      %v4789 = vadd.f32 %v3045, %v4788
      %v4790 = vpop.f32.mrb[0].mxu0
      %v4791 = vadd.f32 %v3049, %v4790
      %4792 = vmatprep.mubr.f32.mxu0 0.0
      %4793 = vmatmul.mubr.f32.gmra.mrb[0].mxu0 %v2859
      %v4794 = vpop.f32.mrb[0].mxu0
      %v4795 = vadd.f32 %v3045, %v4794
      %v4796 = vpop.f32.mrb[0].mxu0
      %v4797 = vadd.f32 %v3049, %v4796
      %4798 = vmatprep.mubr.f32.mxu0 0.0
      %4799 = vmatmul.mubr.f32.gmra.mrb[0].mxu0 %v2860
      %v4800 = vpop.f32.mrb[0].mxu0
      %v4801 = vadd.f32 %v3045, %v4800
      %v4802 = vpop.f32.mrb[0].mxu0
      %v4803 = vadd.f32 %v3049, %v4802
      %4804 = vmatprep.mubr.f32.mxu0 0.0
      %4805 = vmatmul.mubr.f32.gmra.mrb[0].mxu0 %v2861
      %v4806 = vpop.f32.mrb[0].mxu0
      %v4807 = vadd.f32 %v3045, %v4806
      %v4808 = vpop.f32.mrb[0].mxu0
      %v4809 = vadd.f32 %v3049, %v4808
      %4810 = vmatprep.mubr.f32.mxu0 0.0
      %4811 = vmatmul.mubr.f32.gmra.mrb[0].mxu0 %v2862
      %v4812 = vpop.f32.mrb[0].mxu0
      %v4813 = vadd.f32 %v3045, %v4812
      %v4814 = vpop.f32.mrb[0].mxu0
      %v4815 = vadd.f32 %v3049, %v4814
      %4816 = vmatprep.mubr.f32.mxu0 0.0
      %4817 = vmatmul.mubr.f32.gmra.mrb[0].mxu0 %v2863
      %v4818 = vpop.f32.mrb[0].mxu0
      %v4819 = vadd.f32 %v3045, %v4818
      %v4820 = vpop.f32.mrb[0].mxu0
      %v4821 = vadd.f32 %v3049, %v4820
      %4822 = vmatprep.mubr.f32.mxu0 0.0
      %4823 = vmatmul.mubr.f32.gmra.mrb[0].mxu0 %v2864
      %v4824 = vpop.f32.mrb[0].mxu0
      %v4825 = vadd.f32 %v3045, %v4824
      %v4826 = vpop.f32.mrb[0].mxu0
      %v4827 = vadd.f32 %v3049, %v4826
      %4828 = vmatprep.mubr.f32.mxu0 0.0
      %4829 = vmatmul.mubr.f32.gmra.mrb[0].mxu0 %v2865
      %v4830 = vpop.f32.mrb[0].mxu0
      %v4831 = vadd.f32 %v3045, %v4830
      %v4832 = vpop.f32.mrb[0].mxu0
      %v4833 = vadd.f32 %v3049, %v4832
      %4834 = vmatprep.mubr.f32.mxu0 0.0
      %4835 = vmatmul.mubr.f32.gmra.mrb[0].mxu0 %v2866
      %v4836 = vpop.f32.mrb[0].mxu0
      %v4837 = vadd.f32 %v3045, %v4836
      %v4838 = vpop.f32.mrb[0].mxu0
      %v4839 = vadd.f32 %v3049, %v4838
      %4840 = vmatprep.mubr.f32.mxu0 0.0
      %4841 = vmatmul.mubr.f32.gmra.mrb[0].mxu0 %v2867
      %v4842 = vpop.f32.mrb[0].mxu0
      %v4843 = vadd.f32 %v3045, %v4842
      %v4844 = vpop.f32.mrb[0].mxu0
      %v4845 = vadd.f32 %v3049, %v4844
      %4846 = vmatprep.mubr.f32.mxu0 0.0
      %4847 = vmatmul.mubr.f32.gmra.mrb[0].mxu0 %v2868
      %v4848 = vpop.f32.mrb[0].mxu0
      %v4849 = vadd.f32 %v3045, %v4848
      %v4850 = vpop.f32.mrb[0].mxu0
      %v4851 = vadd.f32 %v3049, %v4850
      %4852 = vmatprep.mubr.f32.mxu0 0.0
      %4853 = vmatmul.mubr.f32.gmra.mrb[0].mxu0 %v2869
      %v4854 = vpop.f32.mrb[0].mxu0
      %v4855 = vadd.f32 %v3045, %v4854
      %v4856 = vpop.f32.mrb[0].mxu0
      %v4857 = vadd.f32 %v3049, %v4856
      %4858 = vdwg.mxu0
      %4859 = vmatprep.subr.mxu0 0.0
      %4860 = vmatpush1.msra.mxu0 %v2878
      %4861 = vmatprep.subr.mxu0 0.0
      %4862 = vmatpush1.msra.mxu0 %v2887
      %4863 = vmatprep.subr.mxu0 0.0
      %4864 = vmatpush1.msra.mxu0 %v2896
      %4865 = vmatprep.subr.mxu0 0.0
      %4866 = vmatpush1.msra.mxu0 %v2905
      %4867 = vmatprep.subr.mxu0 0.0
      %4868 = vmatpush1.msra.mxu0 %v2914
      %4869 = vmatprep.subr.mxu0 0.0
      %4870 = vmatpush1.msra.mxu0 %v2923
      %4871 = vmatprep.subr.mxu0 0.0
      %4872 = vmatpush1.msra.mxu0 %v2932
      %4873 = vmatprep.subr.mxu0 0.0
      %4874 = vmatpush1.msra.mxu0 %v2941
      %4875 = vmatprep.subr.mxu0 0.0
      %4876 = vmatpush1.msra.mxu0 %v2950
      %4877 = vmatprep.subr.mxu0 0.0
      %4878 = vmatpush1.msra.mxu0 %v2959
      %4879 = vmatprep.subr.mxu0 0.0
      %4880 = vmatpush1.msra.mxu0 %v2968
      %4881 = vmatprep.subr.mxu0 0.0
      %4882 = vmatpush1.msra.mxu0 %v2977
      %4883 = vmatprep.subr.mxu0 0.0
      %4884 = vmatpush1.msra.mxu0 %v2986
      %4885 = vmatprep.subr.mxu0 0.0
      %4886 = vmatpush1.msra.mxu0 %v2995
      %4887 = vmatprep.subr.mxu0 0.0
      %4888 = vmatpush1.msra.mxu0 %v3004
      %4889 = vmatprep.subr.mxu0 0.0
      %4890 = vmatpush1.msra.mxu0 %v3013
      %4891 = vmatprep.subr.mxu0 0.0
      %4892 = vmatpush1.msra.mxu0 0.0
      %4893 = vmatprep.subr.mxu0 0.0
      %4894 = vmatpush1.msra.mxu0 0.0
      %4895 = vmatprep.subr.mxu0 0.0
      %4896 = vmatpush1.msra.mxu0 0.0
      %4897 = vmatprep.subr.mxu0 0.0
      %4898 = vmatpush1.msra.mxu0 0.0
      %4899 = vmatprep.subr.mxu0 0.0
      %4900 = vmatpush1.msra.mxu0 0.0
      %4901 = vmatprep.subr.mxu0 0.0
      %4902 = vmatpush1.msra.mxu0 0.0
      %4903 = vmatprep.subr.mxu0 0.0
      %4904 = vmatpush1.msra.mxu0 0.0
      %4905 = vmatprep.subr.mxu0 0.0
      %4906 = vmatpush1.msra.mxu0 0.0
      %4907 = vmatprep.subr.mxu0 0.0
      %4908 = vmatpush1.msra.mxu0 0.0
      %4909 = vmatprep.subr.mxu0 0.0
      %4910 = vmatpush1.msra.mxu0 0.0
      %4911 = vmatprep.subr.mxu0 0.0
      %4912 = vmatpush1.msra.mxu0 0.0
      %4913 = vmatprep.subr.mxu0 0.0
      %4914 = vmatpush1.msra.mxu0 0.0
      %4915 = vmatprep.subr.mxu0 0.0
      %4916 = vmatpush1.msra.mxu0 0.0
      %4917 = vmatprep.subr.mxu0 0.0
      %4918 = vmatpush1.msra.mxu0 0.0
      %4919 = vmatprep.subr.mxu0 0.0
      %4920 = vmatpush1.msra.mxu0 0.0
      %4921 = vmatprep.subr.mxu0 0.0
      %4922 = vmatpush1.msra.mxu0 0.0
      %4923 = vmatprep.mubr.f32.mxu0 0.0
      %4924 = vmatmul.mubr.f32.gmra.mrb[0].mxu0 %v2806
      %v4925 = vpop.f32.mrb[0].mxu0
      %v4926 = vadd.f32 %v3053, %v4925
      %v4927 = vpop.f32.mrb[0].mxu0
      %4928 = vmatprep.mubr.f32.mxu0 0.0
      %4929 = vmatmul.mubr.f32.gmra.mrb[0].mxu0 %v2807
      %v4930 = vpop.f32.mrb[0].mxu0
      %v4931 = vadd.f32 %v3053, %v4930
      %v4932 = vpop.f32.mrb[0].mxu0
      %4933 = vmatprep.mubr.f32.mxu0 0.0
      %4934 = vmatmul.mubr.f32.gmra.mrb[0].mxu0 %v2808
      %v4935 = vpop.f32.mrb[0].mxu0
      %v4936 = vadd.f32 %v3053, %v4935
      %v4937 = vpop.f32.mrb[0].mxu0
      %4938 = vmatprep.mubr.f32.mxu0 0.0
      %4939 = vmatmul.mubr.f32.gmra.mrb[0].mxu0 %v2809
      %v4940 = vpop.f32.mrb[0].mxu0
      %v4941 = vadd.f32 %v3053, %v4940
      %v4942 = vpop.f32.mrb[0].mxu0
      %4943 = vmatprep.mubr.f32.mxu0 0.0
      %4944 = vmatmul.mubr.f32.gmra.mrb[0].mxu0 %v2810
      %v4945 = vpop.f32.mrb[0].mxu0
      %v4946 = vadd.f32 %v3053, %v4945
      %v4947 = vpop.f32.mrb[0].mxu0
      %4948 = vmatprep.mubr.f32.mxu0 0.0
      %4949 = vmatmul.mubr.f32.gmra.mrb[0].mxu0 %v2811
      %v4950 = vpop.f32.mrb[0].mxu0
      %v4951 = vadd.f32 %v3053, %v4950
      %v4952 = vpop.f32.mrb[0].mxu0
      %4953 = vmatprep.mubr.f32.mxu0 0.0
      %4954 = vmatmul.mubr.f32.gmra.mrb[0].mxu0 %v2812
      %v4955 = vpop.f32.mrb[0].mxu0
      %v4956 = vadd.f32 %v3053, %v4955
      %v4957 = vpop.f32.mrb[0].mxu0
      %4958 = vmatprep.mubr.f32.mxu0 0.0
      %4959 = vmatmul.mubr.f32.gmra.mrb[0].mxu0 %v2813
      %v4960 = vpop.f32.mrb[0].mxu0
      %v4961 = vadd.f32 %v3053, %v4960
      %v4962 = vpop.f32.mrb[0].mxu0
      %4963 = vmatprep.mubr.f32.mxu0 0.0
      %4964 = vmatmul.mubr.f32.gmra.mrb[0].mxu0 %v2814
      %v4965 = vpop.f32.mrb[0].mxu0
      %v4966 = vadd.f32 %v3053, %v4965
      %v4967 = vpop.f32.mrb[0].mxu0
      %4968 = vmatprep.mubr.f32.mxu0 0.0
      %4969 = vmatmul.mubr.f32.gmra.mrb[0].mxu0 %v2815
      %v4970 = vpop.f32.mrb[0].mxu0
      %v4971 = vadd.f32 %v3053, %v4970
      %v4972 = vpop.f32.mrb[0].mxu0
      %4973 = vmatprep.mubr.f32.mxu0 0.0
      %4974 = vmatmul.mubr.f32.gmra.mrb[0].mxu0 %v2816
      %v4975 = vpop.f32.mrb[0].mxu0
      %v4976 = vadd.f32 %v3053, %v4975
      %v4977 = vpop.f32.mrb[0].mxu0
      %4978 = vmatprep.mubr.f32.mxu0 0.0
      %4979 = vmatmul.mubr.f32.gmra.mrb[0].mxu0 %v2817
      %v4980 = vpop.f32.mrb[0].mxu0
      %v4981 = vadd.f32 %v3053, %v4980
      %v4982 = vpop.f32.mrb[0].mxu0
      %4983 = vmatprep.mubr.f32.mxu0 0.0
      %4984 = vmatmul.mubr.f32.gmra.mrb[0].mxu0 %v2818
      %v4985 = vpop.f32.mrb[0].mxu0
      %v4986 = vadd.f32 %v3053, %v4985
      %v4987 = vpop.f32.mrb[0].mxu0
      %4988 = vmatprep.mubr.f32.mxu0 0.0
      %4989 = vmatmul.mubr.f32.gmra.mrb[0].mxu0 %v2819
      %v4990 = vpop.f32.mrb[0].mxu0
      %v4991 = vadd.f32 %v3053, %v4990
      %v4992 = vpop.f32.mrb[0].mxu0
      %4993 = vmatprep.mubr.f32.mxu0 0.0
      %4994 = vmatmul.mubr.f32.gmra.mrb[0].mxu0 %v2820
      %v4995 = vpop.f32.mrb[0].mxu0
      %v4996 = vadd.f32 %v3053, %v4995
      %v4997 = vpop.f32.mrb[0].mxu0
      %4998 = vmatprep.mubr.f32.mxu0 0.0
      %4999 = vmatmul.mubr.f32.gmra.mrb[0].mxu0 %v2821
      %v5000 = vpop.f32.mrb[0].mxu0
      %v5001 = vadd.f32 %v3053, %v5000
      %v5002 = vpop.f32.mrb[0].mxu0
      %5003 = vmatprep.mubr.f32.mxu0 0.0
      %5004 = vmatmul.mubr.f32.gmra.mrb[0].mxu0 %v2822
      %v5005 = vpop.f32.mrb[0].mxu0
      %v5006 = vadd.f32 %v3053, %v5005
      %v5007 = vpop.f32.mrb[0].mxu0
      %5008 = vmatprep.mubr.f32.mxu0 0.0
      %5009 = vmatmul.mubr.f32.gmra.mrb[0].mxu0 %v2823
      %v5010 = vpop.f32.mrb[0].mxu0
      %v5011 = vadd.f32 %v3053, %v5010
      %v5012 = vpop.f32.mrb[0].mxu0
      %5013 = vmatprep.mubr.f32.mxu0 0.0
      %5014 = vmatmul.mubr.f32.gmra.mrb[0].mxu0 %v2824
      %v5015 = vpop.f32.mrb[0].mxu0
      %v5016 = vadd.f32 %v3053, %v5015
      %v5017 = vpop.f32.mrb[0].mxu0
      %5018 = vmatprep.mubr.f32.mxu0 0.0
      %5019 = vmatmul.mubr.f32.gmra.mrb[0].mxu0 %v2825
      %v5020 = vpop.f32.mrb[0].mxu0
      %v5021 = vadd.f32 %v3053, %v5020
      %v5022 = vpop.f32.mrb[0].mxu0
      %5023 = vmatprep.mubr.f32.mxu0 0.0
      %5024 = vmatmul.mubr.f32.gmra.mrb[0].mxu0 %v2826
      %v5025 = vpop.f32.mrb[0].mxu0
      %v5026 = vadd.f32 %v3053, %v5025
      %v5027 = vpop.f32.mrb[0].mxu0
      %5028 = vmatprep.mubr.f32.mxu0 0.0
      %5029 = vmatmul.mubr.f32.gmra.mrb[0].mxu0 %v2827
      %v5030 = vpop.f32.mrb[0].mxu0
      %v5031 = vadd.f32 %v3053, %v5030
      %v5032 = vpop.f32.mrb[0].mxu0
      %5033 = vmatprep.mubr.f32.mxu0 0.0
      %5034 = vmatmul.mubr.f32.gmra.mrb[0].mxu0 %v2828
      %v5035 = vpop.f32.mrb[0].mxu0
      %v5036 = vadd.f32 %v3053, %v5035
      %v5037 = vpop.f32.mrb[0].mxu0
      %5038 = vmatprep.mubr.f32.mxu0 0.0
      %5039 = vmatmul.mubr.f32.gmra.mrb[0].mxu0 %v2829
      %v5040 = vpop.f32.mrb[0].mxu0
      %v5041 = vadd.f32 %v3053, %v5040
      %v5042 = vpop.f32.mrb[0].mxu0
      %5043 = vmatprep.mubr.f32.mxu0 0.0
      %5044 = vmatmul.mubr.f32.gmra.mrb[0].mxu0 %v2830
      %v5045 = vpop.f32.mrb[0].mxu0
      %v5046 = vadd.f32 %v3053, %v5045
      %v5047 = vpop.f32.mrb[0].mxu0
      %5048 = vmatprep.mubr.f32.mxu0 0.0
      %5049 = vmatmul.mubr.f32.gmra.mrb[0].mxu0 %v2831
      %v5050 = vpop.f32.mrb[0].mxu0
      %v5051 = vadd.f32 %v3053, %v5050
      %v5052 = vpop.f32.mrb[0].mxu0
      %5053 = vmatprep.mubr.f32.mxu0 0.0
      %5054 = vmatmul.mubr.f32.gmra.mrb[0].mxu0 %v2832
      %v5055 = vpop.f32.mrb[0].mxu0
      %v5056 = vadd.f32 %v3053, %v5055
      %v5057 = vpop.f32.mrb[0].mxu0
      %5058 = vmatprep.mubr.f32.mxu0 0.0
      %5059 = vmatmul.mubr.f32.gmra.mrb[0].mxu0 %v2833
      %v5060 = vpop.f32.mrb[0].mxu0
      %v5061 = vadd.f32 %v3053, %v5060
      %v5062 = vpop.f32.mrb[0].mxu0
      %5063 = vmatprep.mubr.f32.mxu0 0.0
      %5064 = vmatmul.mubr.f32.gmra.mrb[0].mxu0 %v2834
      %v5065 = vpop.f32.mrb[0].mxu0
      %v5066 = vadd.f32 %v3053, %v5065
      %v5067 = vpop.f32.mrb[0].mxu0
      %5068 = vmatprep.mubr.f32.mxu0 0.0
      %5069 = vmatmul.mubr.f32.gmra.mrb[0].mxu0 %v2835
      %v5070 = vpop.f32.mrb[0].mxu0
      %v5071 = vadd.f32 %v3053, %v5070
      %v5072 = vpop.f32.mrb[0].mxu0
      %5073 = vmatprep.mubr.f32.mxu0 0.0
      %5074 = vmatmul.mubr.f32.gmra.mrb[0].mxu0 %v2836
      %v5075 = vpop.f32.mrb[0].mxu0
      %v5076 = vadd.f32 %v3053, %v5075
      %v5077 = vpop.f32.mrb[0].mxu0
      %5078 = vmatprep.mubr.f32.mxu0 0.0
      %5079 = vmatmul.mubr.f32.gmra.mrb[0].mxu0 %v2837
      %v5080 = vpop.f32.mrb[0].mxu0
      %v5081 = vadd.f32 %v3053, %v5080
      %v5082 = vpop.f32.mrb[0].mxu0
      %5083 = vmatprep.mubr.f32.mxu0 0.0
      %5084 = vmatmul.mubr.f32.gmra.mrb[0].mxu0 %v2838
      %v5085 = vpop.f32.mrb[0].mxu0
      %v5086 = vadd.f32 %v3053, %v5085
      %v5087 = vpop.f32.mrb[0].mxu0
      %5088 = vmatprep.mubr.f32.mxu0 0.0
      %5089 = vmatmul.mubr.f32.gmra.mrb[0].mxu0 %v2839
      %v5090 = vpop.f32.mrb[0].mxu0
      %v5091 = vadd.f32 %v3053, %v5090
      %v5092 = vpop.f32.mrb[0].mxu0
      %5093 = vmatprep.mubr.f32.mxu0 0.0
      %5094 = vmatmul.mubr.f32.gmra.mrb[0].mxu0 %v2840
      %v5095 = vpop.f32.mrb[0].mxu0
      %v5096 = vadd.f32 %v3053, %v5095
      %v5097 = vpop.f32.mrb[0].mxu0
      %5098 = vmatprep.mubr.f32.mxu0 0.0
      %5099 = vmatmul.mubr.f32.gmra.mrb[0].mxu0 %v2841
      %v5100 = vpop.f32.mrb[0].mxu0
      %v5101 = vadd.f32 %v3053, %v5100
      %v5102 = vpop.f32.mrb[0].mxu0
      %5103 = vmatprep.mubr.f32.mxu0 0.0
      %5104 = vmatmul.mubr.f32.gmra.mrb[0].mxu0 %v2842
      %v5105 = vpop.f32.mrb[0].mxu0
      %v5106 = vadd.f32 %v3053, %v5105
      %v5107 = vpop.f32.mrb[0].mxu0
      %5108 = vmatprep.mubr.f32.mxu0 0.0
      %5109 = vmatmul.mubr.f32.gmra.mrb[0].mxu0 %v2843
      %v5110 = vpop.f32.mrb[0].mxu0
      %v5111 = vadd.f32 %v3053, %v5110
      %v5112 = vpop.f32.mrb[0].mxu0
      %5113 = vmatprep.mubr.f32.mxu0 0.0
      %5114 = vmatmul.mubr.f32.gmra.mrb[0].mxu0 %v2844
      %v5115 = vpop.f32.mrb[0].mxu0
      %v5116 = vadd.f32 %v3053, %v5115
      %v5117 = vpop.f32.mrb[0].mxu0
      %5118 = vmatprep.mubr.f32.mxu0 0.0
      %5119 = vmatmul.mubr.f32.gmra.mrb[0].mxu0 %v2845
      %v5120 = vpop.f32.mrb[0].mxu0
      %v5121 = vadd.f32 %v3053, %v5120
      %v5122 = vpop.f32.mrb[0].mxu0
      %5123 = vmatprep.mubr.f32.mxu0 0.0
      %5124 = vmatmul.mubr.f32.gmra.mrb[0].mxu0 %v2846
      %v5125 = vpop.f32.mrb[0].mxu0
      %v5126 = vadd.f32 %v3053, %v5125
      %v5127 = vpop.f32.mrb[0].mxu0
      %5128 = vmatprep.mubr.f32.mxu0 0.0
      %5129 = vmatmul.mubr.f32.gmra.mrb[0].mxu0 %v2847
      %v5130 = vpop.f32.mrb[0].mxu0
      %v5131 = vadd.f32 %v3053, %v5130
      %v5132 = vpop.f32.mrb[0].mxu0
      %5133 = vmatprep.mubr.f32.mxu0 0.0
      %5134 = vmatmul.mubr.f32.gmra.mrb[0].mxu0 %v2848
      %v5135 = vpop.f32.mrb[0].mxu0
      %v5136 = vadd.f32 %v3053, %v5135
      %v5137 = vpop.f32.mrb[0].mxu0
      %5138 = vmatprep.mubr.f32.mxu0 0.0
      %5139 = vmatmul.mubr.f32.gmra.mrb[0].mxu0 %v2849
      %v5140 = vpop.f32.mrb[0].mxu0
      %v5141 = vadd.f32 %v3053, %v5140
      %v5142 = vpop.f32.mrb[0].mxu0
      %5143 = vmatprep.mubr.f32.mxu0 0.0
      %5144 = vmatmul.mubr.f32.gmra.mrb[0].mxu0 %v2850
      %v5145 = vpop.f32.mrb[0].mxu0
      %v5146 = vadd.f32 %v3053, %v5145
      %v5147 = vpop.f32.mrb[0].mxu0
      %5148 = vmatprep.mubr.f32.mxu0 0.0
      %5149 = vmatmul.mubr.f32.gmra.mrb[0].mxu0 %v2851
      %v5150 = vpop.f32.mrb[0].mxu0
      %v5151 = vadd.f32 %v3053, %v5150
      %v5152 = vpop.f32.mrb[0].mxu0
      %5153 = vmatprep.mubr.f32.mxu0 0.0
      %5154 = vmatmul.mubr.f32.gmra.mrb[0].mxu0 %v2852
      %v5155 = vpop.f32.mrb[0].mxu0
      %v5156 = vadd.f32 %v3053, %v5155
      %v5157 = vpop.f32.mrb[0].mxu0
      %5158 = vmatprep.mubr.f32.mxu0 0.0
      %5159 = vmatmul.mubr.f32.gmra.mrb[0].mxu0 %v2853
      %v5160 = vpop.f32.mrb[0].mxu0
      %v5161 = vadd.f32 %v3053, %v5160
      %v5162 = vpop.f32.mrb[0].mxu0
      %5163 = vmatprep.mubr.f32.mxu0 0.0
      %5164 = vmatmul.mubr.f32.gmra.mrb[0].mxu0 %v2854
      %v5165 = vpop.f32.mrb[0].mxu0
      %v5166 = vadd.f32 %v3053, %v5165
      %v5167 = vpop.f32.mrb[0].mxu0
      %5168 = vmatprep.mubr.f32.mxu0 0.0
      %5169 = vmatmul.mubr.f32.gmra.mrb[0].mxu0 %v2855
      %v5170 = vpop.f32.mrb[0].mxu0
      %v5171 = vadd.f32 %v3053, %v5170
      %v5172 = vpop.f32.mrb[0].mxu0
      %5173 = vmatprep.mubr.f32.mxu0 0.0
      %5174 = vmatmul.mubr.f32.gmra.mrb[0].mxu0 %v2856
      %v5175 = vpop.f32.mrb[0].mxu0
      %v5176 = vadd.f32 %v3053, %v5175
      %v5177 = vpop.f32.mrb[0].mxu0
      %5178 = vmatprep.mubr.f32.mxu0 0.0
      %5179 = vmatmul.mubr.f32.gmra.mrb[0].mxu0 %v2857
      %v5180 = vpop.f32.mrb[0].mxu0
      %v5181 = vadd.f32 %v3053, %v5180
      %v5182 = vpop.f32.mrb[0].mxu0
      %5183 = vmatprep.mubr.f32.mxu0 0.0
      %5184 = vmatmul.mubr.f32.gmra.mrb[0].mxu0 %v2858
      %v5185 = vpop.f32.mrb[0].mxu0
      %v5186 = vadd.f32 %v3053, %v5185
      %v5187 = vpop.f32.mrb[0].mxu0
      %5188 = vmatprep.mubr.f32.mxu0 0.0
      %5189 = vmatmul.mubr.f32.gmra.mrb[0].mxu0 %v2859
      %v5190 = vpop.f32.mrb[0].mxu0
      %v5191 = vadd.f32 %v3053, %v5190
      %v5192 = vpop.f32.mrb[0].mxu0
      %5193 = vmatprep.mubr.f32.mxu0 0.0
      %5194 = vmatmul.mubr.f32.gmra.mrb[0].mxu0 %v2860
      %v5195 = vpop.f32.mrb[0].mxu0
      %v5196 = vadd.f32 %v3053, %v5195
      %v5197 = vpop.f32.mrb[0].mxu0
      %5198 = vmatprep.mubr.f32.mxu0 0.0
      %5199 = vmatmul.mubr.f32.gmra.mrb[0].mxu0 %v2861
      %v5200 = vpop.f32.mrb[0].mxu0
      %v5201 = vadd.f32 %v3053, %v5200
      %v5202 = vpop.f32.mrb[0].mxu0
      %5203 = vmatprep.mubr.f32.mxu0 0.0
      %5204 = vmatmul.mubr.f32.gmra.mrb[0].mxu0 %v2862
      %v5205 = vpop.f32.mrb[0].mxu0
      %v5206 = vadd.f32 %v3053, %v5205
      %v5207 = vpop.f32.mrb[0].mxu0
      %5208 = vmatprep.mubr.f32.mxu0 0.0
      %5209 = vmatmul.mubr.f32.gmra.mrb[0].mxu0 %v2863
      %v5210 = vpop.f32.mrb[0].mxu0
      %v5211 = vadd.f32 %v3053, %v5210
      %v5212 = vpop.f32.mrb[0].mxu0
      %5213 = vmatprep.mubr.f32.mxu0 0.0
      %5214 = vmatmul.mubr.f32.gmra.mrb[0].mxu0 %v2864
      %v5215 = vpop.f32.mrb[0].mxu0
      %v5216 = vadd.f32 %v3053, %v5215
      %v5217 = vpop.f32.mrb[0].mxu0
      %5218 = vmatprep.mubr.f32.mxu0 0.0
      %5219 = vmatmul.mubr.f32.gmra.mrb[0].mxu0 %v2865
      %v5220 = vpop.f32.mrb[0].mxu0
      %v5221 = vadd.f32 %v3053, %v5220
      %v5222 = vpop.f32.mrb[0].mxu0
      %5223 = vmatprep.mubr.f32.mxu0 0.0
      %5224 = vmatmul.mubr.f32.gmra.mrb[0].mxu0 %v2866
      %v5225 = vpop.f32.mrb[0].mxu0
      %v5226 = vadd.f32 %v3053, %v5225
      %v5227 = vpop.f32.mrb[0].mxu0
      %5228 = vmatprep.mubr.f32.mxu0 0.0
      %5229 = vmatmul.mubr.f32.gmra.mrb[0].mxu0 %v2867
      %v5230 = vpop.f32.mrb[0].mxu0
      %v5231 = vadd.f32 %v3053, %v5230
      %v5232 = vpop.f32.mrb[0].mxu0
      %5233 = vmatprep.mubr.f32.mxu0 0.0
      %5234 = vmatmul.mubr.f32.gmra.mrb[0].mxu0 %v2868
      %v5235 = vpop.f32.mrb[0].mxu0
      %v5236 = vadd.f32 %v3053, %v5235
      %v5237 = vpop.f32.mrb[0].mxu0
      %5238 = vmatprep.mubr.f32.mxu0 0.0
      %5239 = vmatmul.mubr.f32.gmra.mrb[0].mxu0 %v2869
      %v5240 = vpop.f32.mrb[0].mxu0
      %v5241 = vadd.f32 %v3053, %v5240
      %v5242 = vpop.f32.mrb[0].mxu0
      %5243 = vdwg.mxu0
      %v5244 = vtanh.pop %v3130
      %v5245 = vtanh.pop %v3132
      %v5246 = vtanh.pop %v3579
      %v5247 = vtanh.pop %v3581
      %v5248 = vtanh.pop %v4028
      %v5249 = vtanh.pop %v4030
      %v5250 = vtanh.pop %v4477
      %v5251 = vtanh.pop %v4479
      %v5252 = vtanh.pop %v4926
      %v5253 = vtanh.pop %v3136
      %v5254 = vtanh.pop %v3138
      %v5255 = vtanh.pop %v3585
      %v5256 = vtanh.pop %v3587
      %v5257 = vtanh.pop %v4034
      %v5258 = vtanh.pop %v4036
      %v5259 = vtanh.pop %v4483
      %v5260 = vtanh.pop %v4485
      %v5261 = vtanh.pop %v4931
      %v5262 = vtanh.pop %v3142
      %v5263 = vtanh.pop %v3144
      %v5264 = vtanh.pop %v3591
      %v5265 = vtanh.pop %v3593
      %v5266 = vtanh.pop %v4040
      %v5267 = vtanh.pop %v4042
      %v5268 = vtanh.pop %v4489
      %v5269 = vtanh.pop %v4491
      %v5270 = vtanh.pop %v4936
      %v5271 = vtanh.pop %v3148
      %v5272 = vtanh.pop %v3150
      %v5273 = vtanh.pop %v3597
      %v5274 = vtanh.pop %v3599
      %v5275 = vtanh.pop %v4046
      %v5276 = vtanh.pop %v4048
      %v5277 = vtanh.pop %v4495
      %v5278 = vtanh.pop %v4497
      %v5279 = vtanh.pop %v4941
      %v5280 = vtanh.pop %v3154
      %v5281 = vtanh.pop %v3156
      %v5282 = vtanh.pop %v3603
      %v5283 = vtanh.pop %v3605
      %v5284 = vtanh.pop %v4052
      %v5285 = vtanh.pop %v4054
      %v5286 = vtanh.pop %v4501
      %v5287 = vtanh.pop %v4503
      %v5288 = vtanh.pop %v4946
      %v5289 = vtanh.pop %v3160
      %v5290 = vtanh.pop %v3162
      %v5291 = vtanh.pop %v3609
      %v5292 = vtanh.pop %v3611
      %v5293 = vtanh.pop %v4058
      %v5294 = vtanh.pop %v4060
      %v5295 = vtanh.pop %v4507
      %v5296 = vtanh.pop %v4509
      %v5297 = vtanh.pop %v4951
      %v5298 = vtanh.pop %v3166
      %v5299 = vtanh.pop %v3168
      %v5300 = vtanh.pop %v3615
      %v5301 = vtanh.pop %v3617
      %v5302 = vtanh.pop %v4064
      %v5303 = vtanh.pop %v4066
      %v5304 = vtanh.pop %v4513
      %v5305 = vtanh.pop %v4515
      %v5306 = vtanh.pop %v4956
      %v5307 = vtanh.pop %v3172
      %v5308 = vtanh.pop %v3174
      %v5309 = vtanh.pop %v3621
      %v5310 = vtanh.pop %v3623
      %v5311 = vtanh.pop %v4070
      %v5312 = vtanh.pop %v4072
      %v5313 = vtanh.pop %v4519
      %v5314 = vtanh.pop %v4521
      %v5315 = vtanh.pop %v4961
      %v5316 = vtanh.pop %v3178
      %v5317 = vtanh.pop %v3180
      %v5318 = vtanh.pop %v3627
      %v5319 = vtanh.pop %v3629
      %v5320 = vtanh.pop %v4076
      %v5321 = vtanh.pop %v4078
      %v5322 = vtanh.pop %v4525
      %v5323 = vtanh.pop %v4527
      %v5324 = vtanh.pop %v4966
      %v5325 = vtanh.pop %v3184
      %v5326 = vtanh.pop %v3186
      %v5327 = vtanh.pop %v3633
      %v5328 = vtanh.pop %v3635
      %v5329 = vtanh.pop %v4082
      %v5330 = vtanh.pop %v4084
      %v5331 = vtanh.pop %v4531
      %v5332 = vtanh.pop %v4533
      %v5333 = vtanh.pop %v4971
      %v5334 = vtanh.pop %v3190
      %v5335 = vtanh.pop %v3192
      %v5336 = vtanh.pop %v3639
      %v5337 = vtanh.pop %v3641
      %v5338 = vtanh.pop %v4088
      %v5339 = vtanh.pop %v4090
      %v5340 = vtanh.pop %v4537
      %v5341 = vtanh.pop %v4539
      %v5342 = vtanh.pop %v4976
      %v5343 = vtanh.pop %v3196
      %v5344 = vtanh.pop %v3198
      %v5345 = vtanh.pop %v3645
      %v5346 = vtanh.pop %v3647
      %v5347 = vtanh.pop %v4094
      %v5348 = vtanh.pop %v4096
      %v5349 = vtanh.pop %v4543
      %v5350 = vtanh.pop %v4545
      %v5351 = vtanh.pop %v4981
      %v5352 = vtanh.pop %v3202
      %v5353 = vtanh.pop %v3204
      %v5354 = vtanh.pop %v3651
      %v5355 = vtanh.pop %v3653
      %v5356 = vtanh.pop %v4100
      %v5357 = vtanh.pop %v4102
      %v5358 = vtanh.pop %v4549
      %v5359 = vtanh.pop %v4551
      %v5360 = vtanh.pop %v4986
      %v5361 = vtanh.pop %v3208
      %v5362 = vtanh.pop %v3210
      %v5363 = vtanh.pop %v3657
      %v5364 = vtanh.pop %v3659
      %v5365 = vtanh.pop %v4106
      %v5366 = vtanh.pop %v4108
      %v5367 = vtanh.pop %v4555
      %v5368 = vtanh.pop %v4557
      %v5369 = vtanh.pop %v4991
      %v5370 = vtanh.pop %v3214
      %v5371 = vtanh.pop %v3216
      %v5372 = vtanh.pop %v3663
      %v5373 = vtanh.pop %v3665
      %v5374 = vtanh.pop %v4112
      %v5375 = vtanh.pop %v4114
      %v5376 = vtanh.pop %v4561
      %v5377 = vtanh.pop %v4563
      %v5378 = vtanh.pop %v4996
      %v5379 = vtanh.pop %v3220
      %v5380 = vtanh.pop %v3222
      %v5381 = vtanh.pop %v3669
      %v5382 = vtanh.pop %v3671
      %v5383 = vtanh.pop %v4118
      %v5384 = vtanh.pop %v4120
      %v5385 = vtanh.pop %v4567
      %v5386 = vtanh.pop %v4569
      %v5387 = vtanh.pop %v5001
      %v5388 = vtanh.pop %v3226
      %v5389 = vtanh.pop %v3228
      %v5390 = vtanh.pop %v3675
      %v5391 = vtanh.pop %v3677
      %v5392 = vtanh.pop %v4124
      %v5393 = vtanh.pop %v4126
      %v5394 = vtanh.pop %v4573
      %v5395 = vtanh.pop %v4575
      %v5396 = vtanh.pop %v5006
      %v5397 = vtanh.pop %v3232
      %v5398 = vtanh.pop %v3234
      %v5399 = vtanh.pop %v3681
      %v5400 = vtanh.pop %v3683
      %v5401 = vtanh.pop %v4130
      %v5402 = vtanh.pop %v4132
      %v5403 = vtanh.pop %v4579
      %v5404 = vtanh.pop %v4581
      %v5405 = vtanh.pop %v5011
      %v5406 = vtanh.pop %v3238
      %v5407 = vtanh.pop %v3240
      %v5408 = vtanh.pop %v3687
      %v5409 = vtanh.pop %v3689
      %v5410 = vtanh.pop %v4136
      %v5411 = vtanh.pop %v4138
      %v5412 = vtanh.pop %v4585
      %v5413 = vtanh.pop %v4587
      %v5414 = vtanh.pop %v5016
      %v5415 = vtanh.pop %v3244
      %v5416 = vtanh.pop %v3246
      %v5417 = vtanh.pop %v3693
      %v5418 = vtanh.pop %v3695
      %v5419 = vtanh.pop %v4142
      %v5420 = vtanh.pop %v4144
      %v5421 = vtanh.pop %v4591
      %v5422 = vtanh.pop %v4593
      %v5423 = vtanh.pop %v5021
      %v5424 = vtanh.pop %v3250
      %v5425 = vtanh.pop %v3252
      %v5426 = vtanh.pop %v3699
      %v5427 = vtanh.pop %v3701
      %v5428 = vtanh.pop %v4148
      %v5429 = vtanh.pop %v4150
      %v5430 = vtanh.pop %v4597
      %v5431 = vtanh.pop %v4599
      %v5432 = vtanh.pop %v5026
      %v5433 = vtanh.pop %v3256
      %v5434 = vtanh.pop %v3258
      %v5435 = vtanh.pop %v3705
      %v5436 = vtanh.pop %v3707
      %v5437 = vtanh.pop %v4154
      %v5438 = vtanh.pop %v4156
      %v5439 = vtanh.pop %v4603
      %v5440 = vtanh.pop %v4605
      %v5441 = vtanh.pop %v5031
      %v5442 = vtanh.pop %v3262
      %v5443 = vtanh.pop %v3264
      %v5444 = vtanh.pop %v3711
      %v5445 = vtanh.pop %v3713
      %v5446 = vtanh.pop %v4160
      %v5447 = vtanh.pop %v4162
      %v5448 = vtanh.pop %v4609
      %v5449 = vtanh.pop %v4611
      %v5450 = vtanh.pop %v5036
      %v5451 = vtanh.pop %v3268
      %v5452 = vtanh.pop %v3270
      %v5453 = vtanh.pop %v3717
      %v5454 = vtanh.pop %v3719
      %v5455 = vtanh.pop %v4166
      %v5456 = vtanh.pop %v4168
      %v5457 = vtanh.pop %v4615
      %v5458 = vtanh.pop %v4617
      %v5459 = vtanh.pop %v5041
      %v5460 = vtanh.pop %v3274
      %v5461 = vtanh.pop %v3276
      %v5462 = vtanh.pop %v3723
      %v5463 = vtanh.pop %v3725
      %v5464 = vtanh.pop %v4172
      %v5465 = vtanh.pop %v4174
      %v5466 = vtanh.pop %v4621
      %v5467 = vtanh.pop %v4623
      %v5468 = vtanh.pop %v5046
      %v5469 = vtanh.pop %v3280
      %v5470 = vtanh.pop %v3282
      %v5471 = vtanh.pop %v3729
      %v5472 = vtanh.pop %v3731
      %v5473 = vtanh.pop %v4178
      %v5474 = vtanh.pop %v4180
      %v5475 = vtanh.pop %v4627
      %v5476 = vtanh.pop %v4629
      %v5477 = vtanh.pop %v5051
      %v5478 = vtanh.pop %v3286
      %v5479 = vtanh.pop %v3288
      %v5480 = vtanh.pop %v3735
      %v5481 = vtanh.pop %v3737
      %v5482 = vtanh.pop %v4184
      %v5483 = vtanh.pop %v4186
      %v5484 = vtanh.pop %v4633
      %v5485 = vtanh.pop %v4635
      %v5486 = vtanh.pop %v5056
      %v5487 = vtanh.pop %v3292
      %v5488 = vtanh.pop %v3294
      %v5489 = vtanh.pop %v3741
      %v5490 = vtanh.pop %v3743
      %v5491 = vtanh.pop %v4190
      %v5492 = vtanh.pop %v4192
      %v5493 = vtanh.pop %v4639
      %v5494 = vtanh.pop %v4641
      %v5495 = vtanh.pop %v5061
      %v5496 = vtanh.pop %v3298
      %v5497 = vtanh.pop %v3300
      %v5498 = vtanh.pop %v3747
      %v5499 = vtanh.pop %v3749
      %v5500 = vtanh.pop %v4196
      %v5501 = vtanh.pop %v4198
      %v5502 = vtanh.pop %v4645
      %v5503 = vtanh.pop %v4647
      %v5504 = vtanh.pop %v5066
      %v5505 = vtanh.pop %v3304
      %v5506 = vtanh.pop %v3306
      %v5507 = vtanh.pop %v3753
      %v5508 = vtanh.pop %v3755
      %v5509 = vtanh.pop %v4202
      %v5510 = vtanh.pop %v4204
      %v5511 = vtanh.pop %v4651
      %v5512 = vtanh.pop %v4653
      %v5513 = vtanh.pop %v5071
      %v5514 = vtanh.pop %v3310
      %v5515 = vtanh.pop %v3312
      %v5516 = vtanh.pop %v3759
      %v5517 = vtanh.pop %v3761
      %v5518 = vtanh.pop %v4208
      %v5519 = vtanh.pop %v4210
      %v5520 = vtanh.pop %v4657
      %v5521 = vtanh.pop %v4659
      %v5522 = vtanh.pop %v5076
      %v5523 = vtanh.pop %v3316
      %v5524 = vtanh.pop %v3318
      %v5525 = vtanh.pop %v3765
      %v5526 = vtanh.pop %v3767
      %v5527 = vtanh.pop %v4214
      %v5528 = vtanh.pop %v4216
      %v5529 = vtanh.pop %v4663
      %v5530 = vtanh.pop %v4665
      %v5531 = vtanh.pop %v5081
      %v5532 = vtanh.pop %v3322
      %v5533 = vtanh.pop %v3324
      %v5534 = vtanh.pop %v3771
      %v5535 = vtanh.pop %v3773
      %v5536 = vtanh.pop %v4220
      %v5537 = vtanh.pop %v4222
      %v5538 = vtanh.pop %v4669
      %v5539 = vtanh.pop %v4671
      %v5540 = vtanh.pop %v5086
      %v5541 = vtanh.pop %v3328
      %v5542 = vtanh.pop %v3330
      %v5543 = vtanh.pop %v3777
      %v5544 = vtanh.pop %v3779
      %v5545 = vtanh.pop %v4226
      %v5546 = vtanh.pop %v4228
      %v5547 = vtanh.pop %v4675
      %v5548 = vtanh.pop %v4677
      %v5549 = vtanh.pop %v5091
      %v5550 = vtanh.pop %v3334
      %v5551 = vtanh.pop %v3336
      %v5552 = vtanh.pop %v3783
      %v5553 = vtanh.pop %v3785
      %v5554 = vtanh.pop %v4232
      %v5555 = vtanh.pop %v4234
      %v5556 = vtanh.pop %v4681
      %v5557 = vtanh.pop %v4683
      %v5558 = vtanh.pop %v5096
      %v5559 = vtanh.pop %v3340
      %v5560 = vtanh.pop %v3342
      %v5561 = vtanh.pop %v3789
      %v5562 = vtanh.pop %v3791
      %v5563 = vtanh.pop %v4238
      %v5564 = vtanh.pop %v4240
      %v5565 = vtanh.pop %v4687
      %v5566 = vtanh.pop %v4689
      %v5567 = vtanh.pop %v5101
      %v5568 = vtanh.pop %v3346
      %v5569 = vtanh.pop %v3348
      %v5570 = vtanh.pop %v3795
      %v5571 = vtanh.pop %v3797
      %v5572 = vtanh.pop %v4244
      %v5573 = vtanh.pop %v4246
      %v5574 = vtanh.pop %v4693
      %v5575 = vtanh.pop %v4695
      %v5576 = vtanh.pop %v5106
      %v5577 = vtanh.pop %v3352
      %v5578 = vtanh.pop %v3354
      %v5579 = vtanh.pop %v3801
      %v5580 = vtanh.pop %v3803
      %v5581 = vtanh.pop %v4250
      %v5582 = vtanh.pop %v4252
      %v5583 = vtanh.pop %v4699
      %v5584 = vtanh.pop %v4701
      %v5585 = vtanh.pop %v5111
      %v5586 = vtanh.pop %v3358
      %v5587 = vtanh.pop %v3360
      %v5588 = vtanh.pop %v3807
      %v5589 = vtanh.pop %v3809
      %v5590 = vtanh.pop %v4256
      %v5591 = vtanh.pop %v4258
      %v5592 = vtanh.pop %v4705
      %v5593 = vtanh.pop %v4707
      %v5594 = vtanh.pop %v5116
      %v5595 = vtanh.pop %v3364
      %v5596 = vtanh.pop %v3366
      %v5597 = vtanh.pop %v3813
      %v5598 = vtanh.pop %v3815
      %v5599 = vtanh.pop %v4262
      %v5600 = vtanh.pop %v4264
      %v5601 = vtanh.pop %v4711
      %v5602 = vtanh.pop %v4713
      %v5603 = vtanh.pop %v5121
      %v5604 = vtanh.pop %v3370
      %v5605 = vtanh.pop %v3372
      %v5606 = vtanh.pop %v3819
      %v5607 = vtanh.pop %v3821
      %v5608 = vtanh.pop %v4268
      %v5609 = vtanh.pop %v4270
      %v5610 = vtanh.pop %v4717
      %v5611 = vtanh.pop %v4719
      %v5612 = vtanh.pop %v5126
      %v5613 = vtanh.pop %v3376
      %v5614 = vtanh.pop %v3378
      %v5615 = vtanh.pop %v3825
      %v5616 = vtanh.pop %v3827
      %v5617 = vtanh.pop %v4274
      %v5618 = vtanh.pop %v4276
      %v5619 = vtanh.pop %v4723
      %v5620 = vtanh.pop %v4725
      %v5621 = vtanh.pop %v5131
      %v5622 = vtanh.pop %v3382
      %v5623 = vtanh.pop %v3384
      %v5624 = vtanh.pop %v3831
      %v5625 = vtanh.pop %v3833
      %v5626 = vtanh.pop %v4280
      %v5627 = vtanh.pop %v4282
      %v5628 = vtanh.pop %v4729
      %v5629 = vtanh.pop %v4731
      %v5630 = vtanh.pop %v5136
      %v5631 = vtanh.pop %v3388
      %v5632 = vtanh.pop %v3390
      %v5633 = vtanh.pop %v3837
      %v5634 = vtanh.pop %v3839
      %v5635 = vtanh.pop %v4286
      %v5636 = vtanh.pop %v4288
      %v5637 = vtanh.pop %v4735
      %v5638 = vtanh.pop %v4737
      %v5639 = vtanh.pop %v5141
      %v5640 = vtanh.pop %v3394
      %v5641 = vtanh.pop %v3396
      %v5642 = vtanh.pop %v3843
      %v5643 = vtanh.pop %v3845
      %v5644 = vtanh.pop %v4292
      %v5645 = vtanh.pop %v4294
      %v5646 = vtanh.pop %v4741
      %v5647 = vtanh.pop %v4743
      %v5648 = vtanh.pop %v5146
      %v5649 = vtanh.pop %v3400
      %v5650 = vtanh.pop %v3402
      %v5651 = vtanh.pop %v3849
      %v5652 = vtanh.pop %v3851
      %v5653 = vtanh.pop %v4298
      %v5654 = vtanh.pop %v4300
      %v5655 = vtanh.pop %v4747
      %v5656 = vtanh.pop %v4749
      %v5657 = vtanh.pop %v5151
      %v5658 = vtanh.pop %v3406
      %v5659 = vtanh.pop %v3408
      %v5660 = vtanh.pop %v3855
      %v5661 = vtanh.pop %v3857
      %v5662 = vtanh.pop %v4304
      %v5663 = vtanh.pop %v4306
      %v5664 = vtanh.pop %v4753
      %v5665 = vtanh.pop %v4755
      %v5666 = vtanh.pop %v5156
      %v5667 = vtanh.pop %v3412
      %v5668 = vtanh.pop %v3414
      %v5669 = vtanh.pop %v3861
      %v5670 = vtanh.pop %v3863
      %v5671 = vtanh.pop %v4310
      %v5672 = vtanh.pop %v4312
      %v5673 = vtanh.pop %v4759
      %v5674 = vtanh.pop %v4761
      %v5675 = vtanh.pop %v5161
      %v5676 = vtanh.pop %v3418
      %v5677 = vtanh.pop %v3420
      %v5678 = vtanh.pop %v3867
      %v5679 = vtanh.pop %v3869
      %v5680 = vtanh.pop %v4316
      %v5681 = vtanh.pop %v4318
      %v5682 = vtanh.pop %v4765
      %v5683 = vtanh.pop %v4767
      %v5684 = vtanh.pop %v5166
      %v5685 = vtanh.pop %v3424
      %v5686 = vtanh.pop %v3426
      %v5687 = vtanh.pop %v3873
      %v5688 = vtanh.pop %v3875
      %v5689 = vtanh.pop %v4322
      %v5690 = vtanh.pop %v4324
      %v5691 = vtanh.pop %v4771
      %v5692 = vtanh.pop %v4773
      %v5693 = vtanh.pop %v5171
      %v5694 = vtanh.pop %v3430
      %v5695 = vtanh.pop %v3432
      %v5696 = vtanh.pop %v3879
      %v5697 = vtanh.pop %v3881
      %v5698 = vtanh.pop %v4328
      %v5699 = vtanh.pop %v4330
      %v5700 = vtanh.pop %v4777
      %v5701 = vtanh.pop %v4779
      %v5702 = vtanh.pop %v5176
      %v5703 = vtanh.pop %v3436
      %v5704 = vtanh.pop %v3438
      %v5705 = vtanh.pop %v3885
      %v5706 = vtanh.pop %v3887
      %v5707 = vtanh.pop %v4334
      %v5708 = vtanh.pop %v4336
      %v5709 = vtanh.pop %v4783
      %v5710 = vtanh.pop %v4785
      %v5711 = vtanh.pop %v5181
      %v5712 = vtanh.pop %v3442
      %v5713 = vtanh.pop %v3444
      %v5714 = vtanh.pop %v3891
      %v5715 = vtanh.pop %v3893
      %v5716 = vtanh.pop %v4340
      %v5717 = vtanh.pop %v4342
      %v5718 = vtanh.pop %v4789
      %v5719 = vtanh.pop %v4791
      %v5720 = vtanh.pop %v5186
      %v5721 = vtanh.pop %v3448
      %v5722 = vtanh.pop %v3450
      %v5723 = vtanh.pop %v3897
      %v5724 = vtanh.pop %v3899
      %v5725 = vtanh.pop %v4346
      %v5726 = vtanh.pop %v4348
      %v5727 = vtanh.pop %v4795
      %v5728 = vtanh.pop %v4797
      %v5729 = vtanh.pop %v5191
      %v5730 = vtanh.pop %v3454
      %v5731 = vtanh.pop %v3456
      %v5732 = vtanh.pop %v3903
      %v5733 = vtanh.pop %v3905
      %v5734 = vtanh.pop %v4352
      %v5735 = vtanh.pop %v4354
      %v5736 = vtanh.pop %v4801
      %v5737 = vtanh.pop %v4803
      %v5738 = vtanh.pop %v5196
      %v5739 = vtanh.pop %v3460
      %v5740 = vtanh.pop %v3462
      %v5741 = vtanh.pop %v3909
      %v5742 = vtanh.pop %v3911
      %v5743 = vtanh.pop %v4358
      %v5744 = vtanh.pop %v4360
      %v5745 = vtanh.pop %v4807
      %v5746 = vtanh.pop %v4809
      %v5747 = vtanh.pop %v5201
      %v5748 = vtanh.pop %v3466
      %v5749 = vtanh.pop %v3468
      %v5750 = vtanh.pop %v3915
      %v5751 = vtanh.pop %v3917
      %v5752 = vtanh.pop %v4364
      %v5753 = vtanh.pop %v4366
      %v5754 = vtanh.pop %v4813
      %v5755 = vtanh.pop %v4815
      %v5756 = vtanh.pop %v5206
      %v5757 = vtanh.pop %v3472
      %v5758 = vtanh.pop %v3474
      %v5759 = vtanh.pop %v3921
      %v5760 = vtanh.pop %v3923
      %v5761 = vtanh.pop %v4370
      %v5762 = vtanh.pop %v4372
      %v5763 = vtanh.pop %v4819
      %v5764 = vtanh.pop %v4821
      %v5765 = vtanh.pop %v5211
      %v5766 = vtanh.pop %v3478
      %v5767 = vtanh.pop %v3480
      %v5768 = vtanh.pop %v3927
      %v5769 = vtanh.pop %v3929
      %v5770 = vtanh.pop %v4376
      %v5771 = vtanh.pop %v4378
      %v5772 = vtanh.pop %v4825
      %v5773 = vtanh.pop %v4827
      %v5774 = vtanh.pop %v5216
      %v5775 = vtanh.pop %v3484
      %v5776 = vtanh.pop %v3486
      %v5777 = vtanh.pop %v3933
      %v5778 = vtanh.pop %v3935
      %v5779 = vtanh.pop %v4382
      %v5780 = vtanh.pop %v4384
      %v5781 = vtanh.pop %v4831
      %v5782 = vtanh.pop %v4833
      %v5783 = vtanh.pop %v5221
      %v5784 = vtanh.pop %v3490
      %v5785 = vtanh.pop %v3492
      %v5786 = vtanh.pop %v3939
      %v5787 = vtanh.pop %v3941
      %v5788 = vtanh.pop %v4388
      %v5789 = vtanh.pop %v4390
      %v5790 = vtanh.pop %v4837
      %v5791 = vtanh.pop %v4839
      %v5792 = vtanh.pop %v5226
      %v5793 = vtanh.pop %v3496
      %v5794 = vtanh.pop %v3498
      %v5795 = vtanh.pop %v3945
      %v5796 = vtanh.pop %v3947
      %v5797 = vtanh.pop %v4394
      %v5798 = vtanh.pop %v4396
      %v5799 = vtanh.pop %v4843
      %v5800 = vtanh.pop %v4845
      %v5801 = vtanh.pop %v5231
      %v5802 = vtanh.pop %v3502
      %v5803 = vtanh.pop %v3504
      %v5804 = vtanh.pop %v3951
      %v5805 = vtanh.pop %v3953
      %v5806 = vtanh.pop %v4400
      %v5807 = vtanh.pop %v4402
      %v5808 = vtanh.pop %v4849
      %v5809 = vtanh.pop %v4851
      %v5810 = vtanh.pop %v5236
      %v5811 = vtanh.pop %v3508
      %v5812 = vtanh.pop %v3510
      %v5813 = vtanh.pop %v3957
      %v5814 = vtanh.pop %v3959
      %v5815 = vtanh.pop %v4406
      %v5816 = vtanh.pop %v4408
      %v5817 = vtanh.pop %v4855
      %v5818 = vtanh.pop %v4857
      %v5819 = vtanh.pop %v5241
      %v5820 = vmul.f32 %v5244, %v1077
      %v5821 = vmul.f32 %v5245, %v1079
      %v5822 = vmul.f32 %v5246, %v1526
      %v5823 = vmul.f32 %v5247, %v1528
      %v5824 = vmul.f32 %v5248, %v1975
      %v5825 = vmul.f32 %v5249, %v1977
      %v5826 = vmul.f32 %v5250, %v2424
      %v5827 = vmul.f32 %v5251, %v2426
      %v5828 = vmul.f32 %v5253, %v1083
      %v5829 = vmul.f32 %v5254, %v1085
      %v5830 = vmul.f32 %v5255, %v1532
      %v5831 = vmul.f32 %v5256, %v1534
      %v5832 = vmul.f32 %v5257, %v1981
      %v5833 = vmul.f32 %v5258, %v1983
      %v5834 = vmul.f32 %v5259, %v2430
      %v5835 = vmul.f32 %v5260, %v2432
      %v5836 = vmul.f32 %v5262, %v1089
      %v5837 = vmul.f32 %v5263, %v1091
      %v5838 = vmul.f32 %v5264, %v1538
      %v5839 = vmul.f32 %v5265, %v1540
      %v5840 = vmul.f32 %v5266, %v1987
      %v5841 = vmul.f32 %v5267, %v1989
      %v5842 = vmul.f32 %v5268, %v2436
      %v5843 = vmul.f32 %v5269, %v2438
      %v5844 = vmul.f32 %v5271, %v1095
      %v5845 = vmul.f32 %v5272, %v1097
      %v5846 = vmul.f32 %v5273, %v1544
      %v5847 = vmul.f32 %v5274, %v1546
      %v5848 = vmul.f32 %v5275, %v1993
      %v5849 = vmul.f32 %v5276, %v1995
      %v5850 = vmul.f32 %v5277, %v2442
      %v5851 = vmul.f32 %v5278, %v2444
      %v5852 = vmul.f32 %v5280, %v1101
      %v5853 = vmul.f32 %v5281, %v1103
      %v5854 = vmul.f32 %v5282, %v1550
      %v5855 = vmul.f32 %v5283, %v1552
      %v5856 = vmul.f32 %v5284, %v1999
      %v5857 = vmul.f32 %v5285, %v2001
      %v5858 = vmul.f32 %v5286, %v2448
      %v5859 = vmul.f32 %v5287, %v2450
      %v5860 = vmul.f32 %v5289, %v1107
      %v5861 = vmul.f32 %v5290, %v1109
      %v5862 = vmul.f32 %v5291, %v1556
      %v5863 = vmul.f32 %v5292, %v1558
      %v5864 = vmul.f32 %v5293, %v2005
      %v5865 = vmul.f32 %v5294, %v2007
      %v5866 = vmul.f32 %v5295, %v2454
      %v5867 = vmul.f32 %v5296, %v2456
      %v5868 = vmul.f32 %v5298, %v1113
      %v5869 = vmul.f32 %v5299, %v1115
      %v5870 = vmul.f32 %v5300, %v1562
      %v5871 = vmul.f32 %v5301, %v1564
      %v5872 = vmul.f32 %v5302, %v2011
      %v5873 = vmul.f32 %v5303, %v2013
      %v5874 = vmul.f32 %v5304, %v2460
      %v5875 = vmul.f32 %v5305, %v2462
      %v5876 = vmul.f32 %v5307, %v1119
      %v5877 = vmul.f32 %v5308, %v1121
      %v5878 = vmul.f32 %v5309, %v1568
      %v5879 = vmul.f32 %v5310, %v1570
      %v5880 = vmul.f32 %v5311, %v2017
      %v5881 = vmul.f32 %v5312, %v2019
      %v5882 = vmul.f32 %v5313, %v2466
      %v5883 = vmul.f32 %v5314, %v2468
      %v5884 = vmul.f32 %v5316, %v1125
      %v5885 = vmul.f32 %v5317, %v1127
      %v5886 = vmul.f32 %v5318, %v1574
      %v5887 = vmul.f32 %v5319, %v1576
      %v5888 = vmul.f32 %v5320, %v2023
      %v5889 = vmul.f32 %v5321, %v2025
      %v5890 = vmul.f32 %v5322, %v2472
      %v5891 = vmul.f32 %v5323, %v2474
      %v5892 = vmul.f32 %v5325, %v1131
      %v5893 = vmul.f32 %v5326, %v1133
      %v5894 = vmul.f32 %v5327, %v1580
      %v5895 = vmul.f32 %v5328, %v1582
      %v5896 = vmul.f32 %v5329, %v2029
      %v5897 = vmul.f32 %v5330, %v2031
      %v5898 = vmul.f32 %v5331, %v2478
      %v5899 = vmul.f32 %v5332, %v2480
      %v5900 = vmul.f32 %v5334, %v1137
      %v5901 = vmul.f32 %v5335, %v1139
      %v5902 = vmul.f32 %v5336, %v1586
      %v5903 = vmul.f32 %v5337, %v1588
      %v5904 = vmul.f32 %v5338, %v2035
      %v5905 = vmul.f32 %v5339, %v2037
      %v5906 = vmul.f32 %v5340, %v2484
      %v5907 = vmul.f32 %v5341, %v2486
      %v5908 = vmul.f32 %v5343, %v1143
      %v5909 = vmul.f32 %v5344, %v1145
      %v5910 = vmul.f32 %v5345, %v1592
      %v5911 = vmul.f32 %v5346, %v1594
      %v5912 = vmul.f32 %v5347, %v2041
      %v5913 = vmul.f32 %v5348, %v2043
      %v5914 = vmul.f32 %v5349, %v2490
      %v5915 = vmul.f32 %v5350, %v2492
      %v5916 = vmul.f32 %v5352, %v1149
      %v5917 = vmul.f32 %v5353, %v1151
      %v5918 = vmul.f32 %v5354, %v1598
      %v5919 = vmul.f32 %v5355, %v1600
      %v5920 = vmul.f32 %v5356, %v2047
      %v5921 = vmul.f32 %v5357, %v2049
      %v5922 = vmul.f32 %v5358, %v2496
      %v5923 = vmul.f32 %v5359, %v2498
      %v5924 = vmul.f32 %v5361, %v1155
      %v5925 = vmul.f32 %v5362, %v1157
      %v5926 = vmul.f32 %v5363, %v1604
      %v5927 = vmul.f32 %v5364, %v1606
      %v5928 = vmul.f32 %v5365, %v2053
      %v5929 = vmul.f32 %v5366, %v2055
      %v5930 = vmul.f32 %v5367, %v2502
      %v5931 = vmul.f32 %v5368, %v2504
      %v5932 = vmul.f32 %v5370, %v1161
      %v5933 = vmul.f32 %v5371, %v1163
      %v5934 = vmul.f32 %v5372, %v1610
      %v5935 = vmul.f32 %v5373, %v1612
      %v5936 = vmul.f32 %v5374, %v2059
      %v5937 = vmul.f32 %v5375, %v2061
      %v5938 = vmul.f32 %v5376, %v2508
      %v5939 = vmul.f32 %v5377, %v2510
      %v5940 = vmul.f32 %v5379, %v1167
      %v5941 = vmul.f32 %v5380, %v1169
      %v5942 = vmul.f32 %v5381, %v1616
      %v5943 = vmul.f32 %v5382, %v1618
      %v5944 = vmul.f32 %v5383, %v2065
      %v5945 = vmul.f32 %v5384, %v2067
      %v5946 = vmul.f32 %v5385, %v2514
      %v5947 = vmul.f32 %v5386, %v2516
      %v5948 = vmul.f32 %v5388, %v1173
      %v5949 = vmul.f32 %v5389, %v1175
      %v5950 = vmul.f32 %v5390, %v1622
      %v5951 = vmul.f32 %v5391, %v1624
      %v5952 = vmul.f32 %v5392, %v2071
      %v5953 = vmul.f32 %v5393, %v2073
      %v5954 = vmul.f32 %v5394, %v2520
      %v5955 = vmul.f32 %v5395, %v2522
      %v5956 = vmul.f32 %v5397, %v1179
      %v5957 = vmul.f32 %v5398, %v1181
      %v5958 = vmul.f32 %v5399, %v1628
      %v5959 = vmul.f32 %v5400, %v1630
      %v5960 = vmul.f32 %v5401, %v2077
      %v5961 = vmul.f32 %v5402, %v2079
      %v5962 = vmul.f32 %v5403, %v2526
      %v5963 = vmul.f32 %v5404, %v2528
      %v5964 = vmul.f32 %v5406, %v1185
      %v5965 = vmul.f32 %v5407, %v1187
      %v5966 = vmul.f32 %v5408, %v1634
      %v5967 = vmul.f32 %v5409, %v1636
      %v5968 = vmul.f32 %v5410, %v2083
      %v5969 = vmul.f32 %v5411, %v2085
      %v5970 = vmul.f32 %v5412, %v2532
      %v5971 = vmul.f32 %v5413, %v2534
      %v5972 = vmul.f32 %v5415, %v1191
      %v5973 = vmul.f32 %v5416, %v1193
      %v5974 = vmul.f32 %v5417, %v1640
      %v5975 = vmul.f32 %v5418, %v1642
      %v5976 = vmul.f32 %v5419, %v2089
      %v5977 = vmul.f32 %v5420, %v2091
      %v5978 = vmul.f32 %v5421, %v2538
      %v5979 = vmul.f32 %v5422, %v2540
      %v5980 = vmul.f32 %v5424, %v1197
      %v5981 = vmul.f32 %v5425, %v1199
      %v5982 = vmul.f32 %v5426, %v1646
      %v5983 = vmul.f32 %v5427, %v1648
      %v5984 = vmul.f32 %v5428, %v2095
      %v5985 = vmul.f32 %v5429, %v2097
      %v5986 = vmul.f32 %v5430, %v2544
      %v5987 = vmul.f32 %v5431, %v2546
      %v5988 = vmul.f32 %v5433, %v1203
      %v5989 = vmul.f32 %v5434, %v1205
      %v5990 = vmul.f32 %v5435, %v1652
      %v5991 = vmul.f32 %v5436, %v1654
      %v5992 = vmul.f32 %v5437, %v2101
      %v5993 = vmul.f32 %v5438, %v2103
      %v5994 = vmul.f32 %v5439, %v2550
      %v5995 = vmul.f32 %v5440, %v2552
      %v5996 = vmul.f32 %v5442, %v1209
      %v5997 = vmul.f32 %v5443, %v1211
      %v5998 = vmul.f32 %v5444, %v1658
      %v5999 = vmul.f32 %v5445, %v1660
      %v6000 = vmul.f32 %v5446, %v2107
      %v6001 = vmul.f32 %v5447, %v2109
      %v6002 = vmul.f32 %v5448, %v2556
      %v6003 = vmul.f32 %v5449, %v2558
      %v6004 = vmul.f32 %v5451, %v1215
      %v6005 = vmul.f32 %v5452, %v1217
      %v6006 = vmul.f32 %v5453, %v1664
      %v6007 = vmul.f32 %v5454, %v1666
      %v6008 = vmul.f32 %v5455, %v2113
      %v6009 = vmul.f32 %v5456, %v2115
      %v6010 = vmul.f32 %v5457, %v2562
      %v6011 = vmul.f32 %v5458, %v2564
      %v6012 = vmul.f32 %v5460, %v1221
      %v6013 = vmul.f32 %v5461, %v1223
      %v6014 = vmul.f32 %v5462, %v1670
      %v6015 = vmul.f32 %v5463, %v1672
      %v6016 = vmul.f32 %v5464, %v2119
      %v6017 = vmul.f32 %v5465, %v2121
      %v6018 = vmul.f32 %v5466, %v2568
      %v6019 = vmul.f32 %v5467, %v2570
      %v6020 = vmul.f32 %v5469, %v1227
      %v6021 = vmul.f32 %v5470, %v1229
      %v6022 = vmul.f32 %v5471, %v1676
      %v6023 = vmul.f32 %v5472, %v1678
      %v6024 = vmul.f32 %v5473, %v2125
      %v6025 = vmul.f32 %v5474, %v2127
      %v6026 = vmul.f32 %v5475, %v2574
      %v6027 = vmul.f32 %v5476, %v2576
      %v6028 = vmul.f32 %v5478, %v1233
      %v6029 = vmul.f32 %v5479, %v1235
      %v6030 = vmul.f32 %v5480, %v1682
      %v6031 = vmul.f32 %v5481, %v1684
      %v6032 = vmul.f32 %v5482, %v2131
      %v6033 = vmul.f32 %v5483, %v2133
      %v6034 = vmul.f32 %v5484, %v2580
      %v6035 = vmul.f32 %v5485, %v2582
      %v6036 = vmul.f32 %v5487, %v1239
      %v6037 = vmul.f32 %v5488, %v1241
      %v6038 = vmul.f32 %v5489, %v1688
      %v6039 = vmul.f32 %v5490, %v1690
      %v6040 = vmul.f32 %v5491, %v2137
      %v6041 = vmul.f32 %v5492, %v2139
      %v6042 = vmul.f32 %v5493, %v2586
      %v6043 = vmul.f32 %v5494, %v2588
      %v6044 = vmul.f32 %v5496, %v1245
      %v6045 = vmul.f32 %v5497, %v1247
      %v6046 = vmul.f32 %v5498, %v1694
      %v6047 = vmul.f32 %v5499, %v1696
      %v6048 = vmul.f32 %v5500, %v2143
      %v6049 = vmul.f32 %v5501, %v2145
      %v6050 = vmul.f32 %v5502, %v2592
      %v6051 = vmul.f32 %v5503, %v2594
      %v6052 = vmul.f32 %v5505, %v1251
      %v6053 = vmul.f32 %v5506, %v1253
      %v6054 = vmul.f32 %v5507, %v1700
      %v6055 = vmul.f32 %v5508, %v1702
      %v6056 = vmul.f32 %v5509, %v2149
      %v6057 = vmul.f32 %v5510, %v2151
      %v6058 = vmul.f32 %v5511, %v2598
      %v6059 = vmul.f32 %v5512, %v2600
      %v6060 = vmul.f32 %v5514, %v1257
      %v6061 = vmul.f32 %v5515, %v1259
      %v6062 = vmul.f32 %v5516, %v1706
      %v6063 = vmul.f32 %v5517, %v1708
      %v6064 = vmul.f32 %v5518, %v2155
      %v6065 = vmul.f32 %v5519, %v2157
      %v6066 = vmul.f32 %v5520, %v2604
      %v6067 = vmul.f32 %v5521, %v2606
      %v6068 = vmul.f32 %v5523, %v1263
      %v6069 = vmul.f32 %v5524, %v1265
      %v6070 = vmul.f32 %v5525, %v1712
      %v6071 = vmul.f32 %v5526, %v1714
      %v6072 = vmul.f32 %v5527, %v2161
      %v6073 = vmul.f32 %v5528, %v2163
      %v6074 = vmul.f32 %v5529, %v2610
      %v6075 = vmul.f32 %v5530, %v2612
      %v6076 = vmul.f32 %v5532, %v1269
      %v6077 = vmul.f32 %v5533, %v1271
      %v6078 = vmul.f32 %v5534, %v1718
      %v6079 = vmul.f32 %v5535, %v1720
      %v6080 = vmul.f32 %v5536, %v2167
      %v6081 = vmul.f32 %v5537, %v2169
      %v6082 = vmul.f32 %v5538, %v2616
      %v6083 = vmul.f32 %v5539, %v2618
      %v6084 = vmul.f32 %v5541, %v1275
      %v6085 = vmul.f32 %v5542, %v1277
      %v6086 = vmul.f32 %v5543, %v1724
      %v6087 = vmul.f32 %v5544, %v1726
      %v6088 = vmul.f32 %v5545, %v2173
      %v6089 = vmul.f32 %v5546, %v2175
      %v6090 = vmul.f32 %v5547, %v2622
      %v6091 = vmul.f32 %v5548, %v2624
      %v6092 = vmul.f32 %v5550, %v1281
      %v6093 = vmul.f32 %v5551, %v1283
      %v6094 = vmul.f32 %v5552, %v1730
      %v6095 = vmul.f32 %v5553, %v1732
      %v6096 = vmul.f32 %v5554, %v2179
      %v6097 = vmul.f32 %v5555, %v2181
      %v6098 = vmul.f32 %v5556, %v2628
      %v6099 = vmul.f32 %v5557, %v2630
      %v6100 = vmul.f32 %v5559, %v1287
      %v6101 = vmul.f32 %v5560, %v1289
      %v6102 = vmul.f32 %v5561, %v1736
      %v6103 = vmul.f32 %v5562, %v1738
      %v6104 = vmul.f32 %v5563, %v2185
      %v6105 = vmul.f32 %v5564, %v2187
      %v6106 = vmul.f32 %v5565, %v2634
      %v6107 = vmul.f32 %v5566, %v2636
      %v6108 = vmul.f32 %v5568, %v1293
      %v6109 = vmul.f32 %v5569, %v1295
      %v6110 = vmul.f32 %v5570, %v1742
      %v6111 = vmul.f32 %v5571, %v1744
      %v6112 = vmul.f32 %v5572, %v2191
      %v6113 = vmul.f32 %v5573, %v2193
      %v6114 = vmul.f32 %v5574, %v2640
      %v6115 = vmul.f32 %v5575, %v2642
      %v6116 = vmul.f32 %v5577, %v1299
      %v6117 = vmul.f32 %v5578, %v1301
      %v6118 = vmul.f32 %v5579, %v1748
      %v6119 = vmul.f32 %v5580, %v1750
      %v6120 = vmul.f32 %v5581, %v2197
      %v6121 = vmul.f32 %v5582, %v2199
      %v6122 = vmul.f32 %v5583, %v2646
      %v6123 = vmul.f32 %v5584, %v2648
      %v6124 = vmul.f32 %v5586, %v1305
      %v6125 = vmul.f32 %v5587, %v1307
      %v6126 = vmul.f32 %v5588, %v1754
      %v6127 = vmul.f32 %v5589, %v1756
      %v6128 = vmul.f32 %v5590, %v2203
      %v6129 = vmul.f32 %v5591, %v2205
      %v6130 = vmul.f32 %v5592, %v2652
      %v6131 = vmul.f32 %v5593, %v2654
      %v6132 = vmul.f32 %v5595, %v1311
      %v6133 = vmul.f32 %v5596, %v1313
      %v6134 = vmul.f32 %v5597, %v1760
      %v6135 = vmul.f32 %v5598, %v1762
      %v6136 = vmul.f32 %v5599, %v2209
      %v6137 = vmul.f32 %v5600, %v2211
      %v6138 = vmul.f32 %v5601, %v2658
      %v6139 = vmul.f32 %v5602, %v2660
      %v6140 = vmul.f32 %v5604, %v1317
      %v6141 = vmul.f32 %v5605, %v1319
      %v6142 = vmul.f32 %v5606, %v1766
      %v6143 = vmul.f32 %v5607, %v1768
      %v6144 = vmul.f32 %v5608, %v2215
      %v6145 = vmul.f32 %v5609, %v2217
      %v6146 = vmul.f32 %v5610, %v2664
      %v6147 = vmul.f32 %v5611, %v2666
      %v6148 = vmul.f32 %v5613, %v1323
      %v6149 = vmul.f32 %v5614, %v1325
      %v6150 = vmul.f32 %v5615, %v1772
      %v6151 = vmul.f32 %v5616, %v1774
      %v6152 = vmul.f32 %v5617, %v2221
      %v6153 = vmul.f32 %v5618, %v2223
      %v6154 = vmul.f32 %v5619, %v2670
      %v6155 = vmul.f32 %v5620, %v2672
      %v6156 = vmul.f32 %v5622, %v1329
      %v6157 = vmul.f32 %v5623, %v1331
      %v6158 = vmul.f32 %v5624, %v1778
      %v6159 = vmul.f32 %v5625, %v1780
      %v6160 = vmul.f32 %v5626, %v2227
      %v6161 = vmul.f32 %v5627, %v2229
      %v6162 = vmul.f32 %v5628, %v2676
      %v6163 = vmul.f32 %v5629, %v2678
      %v6164 = vmul.f32 %v5631, %v1335
      %v6165 = vmul.f32 %v5632, %v1337
      %v6166 = vmul.f32 %v5633, %v1784
      %v6167 = vmul.f32 %v5634, %v1786
      %v6168 = vmul.f32 %v5635, %v2233
      %v6169 = vmul.f32 %v5636, %v2235
      %v6170 = vmul.f32 %v5637, %v2682
      %v6171 = vmul.f32 %v5638, %v2684
      %v6172 = vmul.f32 %v5640, %v1341
      %v6173 = vmul.f32 %v5641, %v1343
      %v6174 = vmul.f32 %v5642, %v1790
      %v6175 = vmul.f32 %v5643, %v1792
      %v6176 = vmul.f32 %v5644, %v2239
      %v6177 = vmul.f32 %v5645, %v2241
      %v6178 = vmul.f32 %v5646, %v2688
      %v6179 = vmul.f32 %v5647, %v2690
      %v6180 = vmul.f32 %v5649, %v1347
      %v6181 = vmul.f32 %v5650, %v1349
      %v6182 = vmul.f32 %v5651, %v1796
      %v6183 = vmul.f32 %v5652, %v1798
      %v6184 = vmul.f32 %v5653, %v2245
      %v6185 = vmul.f32 %v5654, %v2247
      %v6186 = vmul.f32 %v5655, %v2694
      %v6187 = vmul.f32 %v5656, %v2696
      %v6188 = vmul.f32 %v5658, %v1353
      %v6189 = vmul.f32 %v5659, %v1355
      %v6190 = vmul.f32 %v5660, %v1802
      %v6191 = vmul.f32 %v5661, %v1804
      %v6192 = vmul.f32 %v5662, %v2251
      %v6193 = vmul.f32 %v5663, %v2253
      %v6194 = vmul.f32 %v5664, %v2700
      %v6195 = vmul.f32 %v5665, %v2702
      %v6196 = vmul.f32 %v5667, %v1359
      %v6197 = vmul.f32 %v5668, %v1361
      %v6198 = vmul.f32 %v5669, %v1808
      %v6199 = vmul.f32 %v5670, %v1810
      %v6200 = vmul.f32 %v5671, %v2257
      %v6201 = vmul.f32 %v5672, %v2259
      %v6202 = vmul.f32 %v5673, %v2706
      %v6203 = vmul.f32 %v5674, %v2708
      %v6204 = vmul.f32 %v5676, %v1365
      %v6205 = vmul.f32 %v5677, %v1367
      %v6206 = vmul.f32 %v5678, %v1814
      %v6207 = vmul.f32 %v5679, %v1816
      %v6208 = vmul.f32 %v5680, %v2263
      %v6209 = vmul.f32 %v5681, %v2265
      %v6210 = vmul.f32 %v5682, %v2712
      %v6211 = vmul.f32 %v5683, %v2714
      %v6212 = vmul.f32 %v5685, %v1371
      %v6213 = vmul.f32 %v5686, %v1373
      %v6214 = vmul.f32 %v5687, %v1820
      %v6215 = vmul.f32 %v5688, %v1822
      %v6216 = vmul.f32 %v5689, %v2269
      %v6217 = vmul.f32 %v5690, %v2271
      %v6218 = vmul.f32 %v5691, %v2718
      %v6219 = vmul.f32 %v5692, %v2720
      %v6220 = vmul.f32 %v5694, %v1377
      %v6221 = vmul.f32 %v5695, %v1379
      %v6222 = vmul.f32 %v5696, %v1826
      %v6223 = vmul.f32 %v5697, %v1828
      %v6224 = vmul.f32 %v5698, %v2275
      %v6225 = vmul.f32 %v5699, %v2277
      %v6226 = vmul.f32 %v5700, %v2724
      %v6227 = vmul.f32 %v5701, %v2726
      %v6228 = vmul.f32 %v5703, %v1383
      %v6229 = vmul.f32 %v5704, %v1385
      %v6230 = vmul.f32 %v5705, %v1832
      %v6231 = vmul.f32 %v5706, %v1834
      %v6232 = vmul.f32 %v5707, %v2281
      %v6233 = vmul.f32 %v5708, %v2283
      %v6234 = vmul.f32 %v5709, %v2730
      %v6235 = vmul.f32 %v5710, %v2732
      %v6236 = vmul.f32 %v5712, %v1389
      %v6237 = vmul.f32 %v5713, %v1391
      %v6238 = vmul.f32 %v5714, %v1838
      %v6239 = vmul.f32 %v5715, %v1840
      %v6240 = vmul.f32 %v5716, %v2287
      %v6241 = vmul.f32 %v5717, %v2289
      %v6242 = vmul.f32 %v5718, %v2736
      %v6243 = vmul.f32 %v5719, %v2738
      %v6244 = vmul.f32 %v5721, %v1395
      %v6245 = vmul.f32 %v5722, %v1397
      %v6246 = vmul.f32 %v5723, %v1844
      %v6247 = vmul.f32 %v5724, %v1846
      %v6248 = vmul.f32 %v5725, %v2293
      %v6249 = vmul.f32 %v5726, %v2295
      %v6250 = vmul.f32 %v5727, %v2742
      %v6251 = vmul.f32 %v5728, %v2744
      %v6252 = vmul.f32 %v5730, %v1401
      %v6253 = vmul.f32 %v5731, %v1403
      %v6254 = vmul.f32 %v5732, %v1850
      %v6255 = vmul.f32 %v5733, %v1852
      %v6256 = vmul.f32 %v5734, %v2299
      %v6257 = vmul.f32 %v5735, %v2301
      %v6258 = vmul.f32 %v5736, %v2748
      %v6259 = vmul.f32 %v5737, %v2750
      %v6260 = vmul.f32 %v5739, %v1407
      %v6261 = vmul.f32 %v5740, %v1409
      %v6262 = vmul.f32 %v5741, %v1856
      %v6263 = vmul.f32 %v5742, %v1858
      %v6264 = vmul.f32 %v5743, %v2305
      %v6265 = vmul.f32 %v5744, %v2307
      %v6266 = vmul.f32 %v5745, %v2754
      %v6267 = vmul.f32 %v5746, %v2756
      %v6268 = vmul.f32 %v5748, %v1413
      %v6269 = vmul.f32 %v5749, %v1415
      %v6270 = vmul.f32 %v5750, %v1862
      %v6271 = vmul.f32 %v5751, %v1864
      %v6272 = vmul.f32 %v5752, %v2311
      %v6273 = vmul.f32 %v5753, %v2313
      %v6274 = vmul.f32 %v5754, %v2760
      %v6275 = vmul.f32 %v5755, %v2762
      %v6276 = vmul.f32 %v5757, %v1419
      %v6277 = vmul.f32 %v5758, %v1421
      %v6278 = vmul.f32 %v5759, %v1868
      %v6279 = vmul.f32 %v5760, %v1870
      %v6280 = vmul.f32 %v5761, %v2317
      %v6281 = vmul.f32 %v5762, %v2319
      %v6282 = vmul.f32 %v5763, %v2766
      %v6283 = vmul.f32 %v5764, %v2768
      %v6284 = vmul.f32 %v5766, %v1425
      %v6285 = vmul.f32 %v5767, %v1427
      %v6286 = vmul.f32 %v5768, %v1874
      %v6287 = vmul.f32 %v5769, %v1876
      %v6288 = vmul.f32 %v5770, %v2323
      %v6289 = vmul.f32 %v5771, %v2325
      %v6290 = vmul.f32 %v5772, %v2772
      %v6291 = vmul.f32 %v5773, %v2774
      %v6292 = vmul.f32 %v5775, %v1431
      %v6293 = vmul.f32 %v5776, %v1433
      %v6294 = vmul.f32 %v5777, %v1880
      %v6295 = vmul.f32 %v5778, %v1882
      %v6296 = vmul.f32 %v5779, %v2329
      %v6297 = vmul.f32 %v5780, %v2331
      %v6298 = vmul.f32 %v5781, %v2778
      %v6299 = vmul.f32 %v5782, %v2780
      %v6300 = vmul.f32 %v5784, %v1437
      %v6301 = vmul.f32 %v5785, %v1439
      %v6302 = vmul.f32 %v5786, %v1886
      %v6303 = vmul.f32 %v5787, %v1888
      %v6304 = vmul.f32 %v5788, %v2335
      %v6305 = vmul.f32 %v5789, %v2337
      %v6306 = vmul.f32 %v5790, %v2784
      %v6307 = vmul.f32 %v5791, %v2786
      %v6308 = vmul.f32 %v5793, %v1443
      %v6309 = vmul.f32 %v5794, %v1445
      %v6310 = vmul.f32 %v5795, %v1892
      %v6311 = vmul.f32 %v5796, %v1894
      %v6312 = vmul.f32 %v5797, %v2341
      %v6313 = vmul.f32 %v5798, %v2343
      %v6314 = vmul.f32 %v5799, %v2790
      %v6315 = vmul.f32 %v5800, %v2792
      %v6316 = vmul.f32 %v5802, %v1449
      %v6317 = vmul.f32 %v5803, %v1451
      %v6318 = vmul.f32 %v5804, %v1898
      %v6319 = vmul.f32 %v5805, %v1900
      %v6320 = vmul.f32 %v5806, %v2347
      %v6321 = vmul.f32 %v5807, %v2349
      %v6322 = vmul.f32 %v5808, %v2796
      %v6323 = vmul.f32 %v5809, %v2798
      %v6324 = vmul.f32 %v5811, %v1455
      %v6325 = vmul.f32 %v5812, %v1457
      %v6326 = vmul.f32 %v5813, %v1904
      %v6327 = vmul.f32 %v5814, %v1906
      %v6328 = vmul.f32 %v5815, %v2353
      %v6329 = vmul.f32 %v5816, %v2355
      %v6330 = vmul.f32 %v5817, %v2802
      %v6331 = vmul.f32 %v5818, %v2804
      %v6332 = vld [vmem:[%s7] sm:$0xff]
      %v6333 = vld [vmem:[%s7 + $0x8] sm:$0xff]
      %v6334 = vld [vmem:[%s7 + $0x10] sm:$0xff]
      %v6335 = vld [vmem:[%s7 + $0x18] sm:$0xff]
      %v6336 = vld [vmem:[%s7 + $0x20] sm:$0xff]
      %v6337 = vld [vmem:[%s7 + $0x28] sm:$0xff]
      %v6338 = vld [vmem:[%s7 + $0x30] sm:$0xff]
      %v6339 = vld [vmem:[%s7 + $0x38] sm:$0xff]
      %v6340 = vld [vmem:[%s7 + $0x40] sm:$0xff]
      %v6341 = vld [vmem:[%s7 + $0x48] sm:$0xff]
      %v6342 = vld [vmem:[%s7 + $0x50] sm:$0xff]
      %v6343 = vld [vmem:[%s7 + $0x58] sm:$0xff]
      %v6344 = vld [vmem:[%s7 + $0x60] sm:$0xff]
      %v6345 = vld [vmem:[%s7 + $0x68] sm:$0xff]
      %v6346 = vld [vmem:[%s7 + $0x70] sm:$0xff]
      %v6347 = vld [vmem:[%s7 + $0x78] sm:$0xff]
      %v6348 = vld [vmem:[%s7 + $0x80] sm:$0xff]
      %v6349 = vld [vmem:[%s7 + $0x88] sm:$0xff]
      %v6350 = vld [vmem:[%s7 + $0x90] sm:$0xff]
      %v6351 = vld [vmem:[%s7 + $0x98] sm:$0xff]
      %v6352 = vld [vmem:[%s7 + $0xa0] sm:$0xff]
      %v6353 = vld [vmem:[%s7 + $0xa8] sm:$0xff]
      %v6354 = vld [vmem:[%s7 + $0xb0] sm:$0xff]
      %v6355 = vld [vmem:[%s7 + $0xb8] sm:$0xff]
      %v6356 = vld [vmem:[%s7 + $0xc0] sm:$0xff]
      %v6357 = vld [vmem:[%s7 + $0xc8] sm:$0xff]
      %v6358 = vld [vmem:[%s7 + $0xd0] sm:$0xff]
      %v6359 = vld [vmem:[%s7 + $0xd8] sm:$0xff]
      %v6360 = vld [vmem:[%s7 + $0xe0] sm:$0xff]
      %v6361 = vld [vmem:[%s7 + $0xe8] sm:$0xff]
      %v6362 = vld [vmem:[%s7 + $0xf0] sm:$0xff]
      %v6363 = vld [vmem:[%s7 + $0xf8] sm:$0xff]
      %v6364 = vld [vmem:[%s7 + $0x100] sm:$0xff]
      %v6365 = vld [vmem:[%s7 + $0x108] sm:$0xff]
      %v6366 = vld [vmem:[%s7 + $0x110] sm:$0xff]
      %v6367 = vld [vmem:[%s7 + $0x118] sm:$0xff]
      %v6368 = vld [vmem:[%s7 + $0x120] sm:$0xff]
      %v6369 = vld [vmem:[%s7 + $0x128] sm:$0xff]
      %v6370 = vld [vmem:[%s7 + $0x130] sm:$0xff]
      %v6371 = vld [vmem:[%s7 + $0x138] sm:$0xff]
      %v6372 = vld [vmem:[%s7 + $0x140] sm:$0xff]
      %v6373 = vld [vmem:[%s7 + $0x148] sm:$0xff]
      %v6374 = vld [vmem:[%s7 + $0x150] sm:$0xff]
      %v6375 = vld [vmem:[%s7 + $0x158] sm:$0xff]
      %v6376 = vld [vmem:[%s7 + $0x160] sm:$0xff]
      %v6377 = vld [vmem:[%s7 + $0x168] sm:$0xff]
      %v6378 = vld [vmem:[%s7 + $0x170] sm:$0xff]
      %v6379 = vld [vmem:[%s7 + $0x178] sm:$0xff]
      %v6380 = vld [vmem:[%s7 + $0x180] sm:$0xff]
      %v6381 = vld [vmem:[%s7 + $0x188] sm:$0xff]
      %v6382 = vld [vmem:[%s7 + $0x190] sm:$0xff]
      %v6383 = vld [vmem:[%s7 + $0x198] sm:$0xff]
      %v6384 = vld [vmem:[%s7 + $0x1a0] sm:$0xff]
      %v6385 = vld [vmem:[%s7 + $0x1a8] sm:$0xff]
      %v6386 = vld [vmem:[%s7 + $0x1b0] sm:$0xff]
      %v6387 = vld [vmem:[%s7 + $0x1b8] sm:$0xff]
      %v6388 = vld [vmem:[%s7 + $0x1c0] sm:$0xff]
      %v6389 = vld [vmem:[%s7 + $0x1c8] sm:$0xff]
      %v6390 = vld [vmem:[%s7 + $0x1d0] sm:$0xff]
      %v6391 = vld [vmem:[%s7 + $0x1d8] sm:$0xff]
      %v6392 = vld [vmem:[%s7 + $0x1e0] sm:$0xff]
      %v6393 = vld [vmem:[%s7 + $0x1e8] sm:$0xff]
      %v6394 = vld [vmem:[%s7 + $0x1f0] sm:$0xff]
      %v6395 = vld [vmem:[%s7 + $0x1f8] sm:$0xff]
      %v6396 = vld [vmem:[%s7 + $0x200] sm:$0xff]
      %v6397 = vld [vmem:[%s7 + $0x208] sm:$0xff]
      %v6398 = vld [vmem:[%s7 + $0x210] sm:$0xff]
      %v6399 = vld [vmem:[%s7 + $0x218] sm:$0xff]
      %v6400 = vld [vmem:[%s7 + $0x220] sm:$0xff]
      %v6401 = vld [vmem:[%s7 + $0x228] sm:$0xff]
      %v6402 = vld [vmem:[%s7 + $0x230] sm:$0xff]
      %v6403 = vld [vmem:[%s7 + $0x238] sm:$0xff]
      %v6404 = vld [vmem:[%s7 + $0x240] sm:$0xff]
      %v6405 = vld [vmem:[%s7 + $0x248] sm:$0xff]
      %v6406 = vld [vmem:[%s7 + $0x250] sm:$0xff]
      %v6407 = vld [vmem:[%s7 + $0x258] sm:$0xff]
      %v6408 = vld [vmem:[%s7 + $0x260] sm:$0xff]
      %v6409 = vld [vmem:[%s7 + $0x268] sm:$0xff]
      %v6410 = vld [vmem:[%s7 + $0x270] sm:$0xff]
      %v6411 = vld [vmem:[%s7 + $0x278] sm:$0xff]
      %v6412 = vld [vmem:[%s7 + $0x280] sm:$0xff]
      %v6413 = vld [vmem:[%s7 + $0x288] sm:$0xff]
      %v6414 = vld [vmem:[%s7 + $0x290] sm:$0xff]
      %v6415 = vld [vmem:[%s7 + $0x298] sm:$0xff]
      %v6416 = vld [vmem:[%s7 + $0x2a0] sm:$0xff]
      %v6417 = vld [vmem:[%s7 + $0x2a8] sm:$0xff]
      %v6418 = vld [vmem:[%s7 + $0x2b0] sm:$0xff]
      %v6419 = vld [vmem:[%s7 + $0x2b8] sm:$0xff]
      %v6420 = vld [vmem:[%s7 + $0x2c0] sm:$0xff]
      %v6421 = vld [vmem:[%s7 + $0x2c8] sm:$0xff]
      %v6422 = vld [vmem:[%s7 + $0x2d0] sm:$0xff]
      %v6423 = vld [vmem:[%s7 + $0x2d8] sm:$0xff]
      %v6424 = vld [vmem:[%s7 + $0x2e0] sm:$0xff]
      %v6425 = vld [vmem:[%s7 + $0x2e8] sm:$0xff]
      %v6426 = vld [vmem:[%s7 + $0x2f0] sm:$0xff]
      %v6427 = vld [vmem:[%s7 + $0x2f8] sm:$0xff]
      %v6428 = vld [vmem:[%s7 + $0x300] sm:$0xff]
      %v6429 = vld [vmem:[%s7 + $0x308] sm:$0xff]
      %v6430 = vld [vmem:[%s7 + $0x310] sm:$0xff]
      %v6431 = vld [vmem:[%s7 + $0x318] sm:$0xff]
      %v6432 = vld [vmem:[%s7 + $0x320] sm:$0xff]
      %v6433 = vld [vmem:[%s7 + $0x328] sm:$0xff]
      %v6434 = vld [vmem:[%s7 + $0x330] sm:$0xff]
      %v6435 = vld [vmem:[%s7 + $0x338] sm:$0xff]
      %v6436 = vld [vmem:[%s7 + $0x340] sm:$0xff]
      %v6437 = vld [vmem:[%s7 + $0x348] sm:$0xff]
      %v6438 = vld [vmem:[%s7 + $0x350] sm:$0xff]
      %v6439 = vld [vmem:[%s7 + $0x358] sm:$0xff]
      %v6440 = vld [vmem:[%s7 + $0x360] sm:$0xff]
      %v6441 = vld [vmem:[%s7 + $0x368] sm:$0xff]
      %v6442 = vld [vmem:[%s7 + $0x370] sm:$0xff]
      %v6443 = vld [vmem:[%s7 + $0x378] sm:$0xff]
      %v6444 = vld [vmem:[%s7 + $0x380] sm:$0xff]
      %v6445 = vld [vmem:[%s7 + $0x388] sm:$0xff]
      %v6446 = vld [vmem:[%s7 + $0x390] sm:$0xff]
      %v6447 = vld [vmem:[%s7 + $0x398] sm:$0xff]
      %v6448 = vld [vmem:[%s7 + $0x3a0] sm:$0xff]
      %v6449 = vld [vmem:[%s7 + $0x3a8] sm:$0xff]
      %v6450 = vld [vmem:[%s7 + $0x3b0] sm:$0xff]
      %v6451 = vld [vmem:[%s7 + $0x3b8] sm:$0xff]
      %v6452 = vld [vmem:[%s7 + $0x3c0] sm:$0xff]
      %v6453 = vld [vmem:[%s7 + $0x3c8] sm:$0xff]
      %v6454 = vld [vmem:[%s7 + $0x3d0] sm:$0xff]
      %v6455 = vld [vmem:[%s7 + $0x3d8] sm:$0xff]
      %v6456 = vld [vmem:[%s7 + $0x3e0] sm:$0xff]
      %v6457 = vld [vmem:[%s7 + $0x3e8] sm:$0xff]
      %v6458 = vld [vmem:[%s7 + $0x3f0] sm:$0xff]
      %v6459 = vld [vmem:[%s7 + $0x3f8] sm:$0xff]
      %6460 = vmatprep.subr.mxu0 0.0
      %6461 = vmatpush1.msra.mxu0 %v6332
      %6462 = vmatprep.subr.mxu0 0.0
      %6463 = vmatpush1.msra.mxu0 %v6333
      %6464 = vmatprep.subr.mxu0 0.0
      %6465 = vmatpush1.msra.mxu0 %v6334
      %6466 = vmatprep.subr.mxu0 0.0
      %6467 = vmatpush1.msra.mxu0 %v6335
      %6468 = vmatprep.subr.mxu0 0.0
      %6469 = vmatpush1.msra.mxu0 %v6336
      %6470 = vmatprep.subr.mxu0 0.0
      %6471 = vmatpush1.msra.mxu0 %v6337
      %6472 = vmatprep.subr.mxu0 0.0
      %6473 = vmatpush1.msra.mxu0 %v6338
      %6474 = vmatprep.subr.mxu0 0.0
      %6475 = vmatpush1.msra.mxu0 %v6339
      %6476 = vmatprep.subr.mxu0 0.0
      %6477 = vmatpush1.msra.mxu0 %v6340
      %6478 = vmatprep.subr.mxu0 0.0
      %6479 = vmatpush1.msra.mxu0 %v6341
      %6480 = vmatprep.subr.mxu0 0.0
      %6481 = vmatpush1.msra.mxu0 %v6342
      %6482 = vmatprep.subr.mxu0 0.0
      %6483 = vmatpush1.msra.mxu0 %v6343
      %6484 = vmatprep.subr.mxu0 0.0
      %6485 = vmatpush1.msra.mxu0 %v6344
      %6486 = vmatprep.subr.mxu0 0.0
      %6487 = vmatpush1.msra.mxu0 %v6345
      %6488 = vmatprep.subr.mxu0 0.0
      %6489 = vmatpush1.msra.mxu0 %v6346
      %6490 = vmatprep.subr.mxu0 0.0
      %6491 = vmatpush1.msra.mxu0 %v6347
      %6492 = vmatprep.subr.mxu0 0.0
      %6493 = vmatpush1.msra.mxu0 %v6348
      %6494 = vmatprep.subr.mxu0 0.0
      %6495 = vmatpush1.msra.mxu0 %v6349
      %6496 = vmatprep.subr.mxu0 0.0
      %6497 = vmatpush1.msra.mxu0 %v6350
      %6498 = vmatprep.subr.mxu0 0.0
      %6499 = vmatpush1.msra.mxu0 %v6351
      %6500 = vmatprep.subr.mxu0 0.0
      %6501 = vmatpush1.msra.mxu0 %v6352
      %6502 = vmatprep.subr.mxu0 0.0
      %6503 = vmatpush1.msra.mxu0 %v6353
      %6504 = vmatprep.subr.mxu0 0.0
      %6505 = vmatpush1.msra.mxu0 %v6354
      %6506 = vmatprep.subr.mxu0 0.0
      %6507 = vmatpush1.msra.mxu0 %v6355
      %6508 = vmatprep.subr.mxu0 0.0
      %6509 = vmatpush1.msra.mxu0 %v6356
      %6510 = vmatprep.subr.mxu0 0.0
      %6511 = vmatpush1.msra.mxu0 %v6357
      %6512 = vmatprep.subr.mxu0 0.0
      %6513 = vmatpush1.msra.mxu0 %v6358
      %6514 = vmatprep.subr.mxu0 0.0
      %6515 = vmatpush1.msra.mxu0 %v6359
      %6516 = vmatprep.subr.mxu0 0.0
      %6517 = vmatpush1.msra.mxu0 %v6360
      %6518 = vmatprep.subr.mxu0 0.0
      %6519 = vmatpush1.msra.mxu0 %v6361
      %6520 = vmatprep.subr.mxu0 0.0
      %6521 = vmatpush1.msra.mxu0 %v6362
      %6522 = vmatprep.subr.mxu0 0.0
      %6523 = vmatpush1.msra.mxu0 %v6363
      %6524 = vmatprep.mubr.f32.mxu0 %v5821
      %6525 = vmatmul.mubr.f32.gmra.mrb[0].mxu0 %v5820
      %v6526 = vpop.f32.mrb[0].mxu0
      %v6527 = vadd.f32 0.0, %v6526
      %v6528 = vpop.f32.mrb[0].mxu0
      %6529 = vmatprep.mubr.f32.mxu0 %v5829
      %6530 = vmatmul.mubr.f32.gmra.mrb[0].mxu0 %v5828
      %v6531 = vpop.f32.mrb[0].mxu0
      %v6532 = vadd.f32 0.0, %v6531
      %v6533 = vpop.f32.mrb[0].mxu0
      %6534 = vmatprep.mubr.f32.mxu0 %v5837
      %6535 = vmatmul.mubr.f32.gmra.mrb[0].mxu0 %v5836
      %v6536 = vpop.f32.mrb[0].mxu0
      %v6537 = vadd.f32 0.0, %v6536
      %v6538 = vpop.f32.mrb[0].mxu0
      %6539 = vmatprep.mubr.f32.mxu0 %v5845
      %6540 = vmatmul.mubr.f32.gmra.mrb[0].mxu0 %v5844
      %v6541 = vpop.f32.mrb[0].mxu0
      %v6542 = vadd.f32 0.0, %v6541
      %v6543 = vpop.f32.mrb[0].mxu0
      %6544 = vmatprep.mubr.f32.mxu0 %v5853
      %6545 = vmatmul.mubr.f32.gmra.mrb[0].mxu0 %v5852
      %v6546 = vpop.f32.mrb[0].mxu0
      %v6547 = vadd.f32 0.0, %v6546
      %v6548 = vpop.f32.mrb[0].mxu0
      %6549 = vmatprep.mubr.f32.mxu0 %v5861
      %6550 = vmatmul.mubr.f32.gmra.mrb[0].mxu0 %v5860
      %v6551 = vpop.f32.mrb[0].mxu0
      %v6552 = vadd.f32 0.0, %v6551
      %v6553 = vpop.f32.mrb[0].mxu0
      %6554 = vmatprep.mubr.f32.mxu0 %v5869
      %6555 = vmatmul.mubr.f32.gmra.mrb[0].mxu0 %v5868
      %v6556 = vpop.f32.mrb[0].mxu0
      %v6557 = vadd.f32 0.0, %v6556
      %v6558 = vpop.f32.mrb[0].mxu0
      %6559 = vmatprep.mubr.f32.mxu0 %v5877
      %6560 = vmatmul.mubr.f32.gmra.mrb[0].mxu0 %v5876
      %v6561 = vpop.f32.mrb[0].mxu0
      %v6562 = vadd.f32 0.0, %v6561
      %v6563 = vpop.f32.mrb[0].mxu0
      %6564 = vmatprep.mubr.f32.mxu0 %v5885
      %6565 = vmatmul.mubr.f32.gmra.mrb[0].mxu0 %v5884
      %v6566 = vpop.f32.mrb[0].mxu0
      %v6567 = vadd.f32 0.0, %v6566
      %v6568 = vpop.f32.mrb[0].mxu0
      %6569 = vmatprep.mubr.f32.mxu0 %v5893
      %6570 = vmatmul.mubr.f32.gmra.mrb[0].mxu0 %v5892
      %v6571 = vpop.f32.mrb[0].mxu0
      %v6572 = vadd.f32 0.0, %v6571
      %v6573 = vpop.f32.mrb[0].mxu0
      %6574 = vmatprep.mubr.f32.mxu0 %v5901
      %6575 = vmatmul.mubr.f32.gmra.mrb[0].mxu0 %v5900
      %v6576 = vpop.f32.mrb[0].mxu0
      %v6577 = vadd.f32 0.0, %v6576
      %v6578 = vpop.f32.mrb[0].mxu0
      %6579 = vmatprep.mubr.f32.mxu0 %v5909
      %6580 = vmatmul.mubr.f32.gmra.mrb[0].mxu0 %v5908
      %v6581 = vpop.f32.mrb[0].mxu0
      %v6582 = vadd.f32 0.0, %v6581
      %v6583 = vpop.f32.mrb[0].mxu0
      %6584 = vmatprep.mubr.f32.mxu0 %v5917
      %6585 = vmatmul.mubr.f32.gmra.mrb[0].mxu0 %v5916
      %v6586 = vpop.f32.mrb[0].mxu0
      %v6587 = vadd.f32 0.0, %v6586
      %v6588 = vpop.f32.mrb[0].mxu0
      %6589 = vmatprep.mubr.f32.mxu0 %v5925
      %6590 = vmatmul.mubr.f32.gmra.mrb[0].mxu0 %v5924
      %v6591 = vpop.f32.mrb[0].mxu0
      %v6592 = vadd.f32 0.0, %v6591
      %v6593 = vpop.f32.mrb[0].mxu0
      %6594 = vmatprep.mubr.f32.mxu0 %v5933
      %6595 = vmatmul.mubr.f32.gmra.mrb[0].mxu0 %v5932
      %v6596 = vpop.f32.mrb[0].mxu0
      %v6597 = vadd.f32 0.0, %v6596
      %v6598 = vpop.f32.mrb[0].mxu0
      %6599 = vmatprep.mubr.f32.mxu0 %v5941
      %6600 = vmatmul.mubr.f32.gmra.mrb[0].mxu0 %v5940
      %v6601 = vpop.f32.mrb[0].mxu0
      %v6602 = vadd.f32 0.0, %v6601
      %v6603 = vpop.f32.mrb[0].mxu0
      %6604 = vmatprep.mubr.f32.mxu0 %v5949
      %6605 = vmatmul.mubr.f32.gmra.mrb[0].mxu0 %v5948
      %v6606 = vpop.f32.mrb[0].mxu0
      %v6607 = vadd.f32 0.0, %v6606
      %v6608 = vpop.f32.mrb[0].mxu0
      %6609 = vmatprep.mubr.f32.mxu0 %v5957
      %6610 = vmatmul.mubr.f32.gmra.mrb[0].mxu0 %v5956
      %v6611 = vpop.f32.mrb[0].mxu0
      %v6612 = vadd.f32 0.0, %v6611
      %v6613 = vpop.f32.mrb[0].mxu0
      %6614 = vmatprep.mubr.f32.mxu0 %v5965
      %6615 = vmatmul.mubr.f32.gmra.mrb[0].mxu0 %v5964
      %v6616 = vpop.f32.mrb[0].mxu0
      %v6617 = vadd.f32 0.0, %v6616
      %v6618 = vpop.f32.mrb[0].mxu0
      %6619 = vmatprep.mubr.f32.mxu0 %v5973
      %6620 = vmatmul.mubr.f32.gmra.mrb[0].mxu0 %v5972
      %v6621 = vpop.f32.mrb[0].mxu0
      %v6622 = vadd.f32 0.0, %v6621
      %v6623 = vpop.f32.mrb[0].mxu0
      %6624 = vmatprep.mubr.f32.mxu0 %v5981
      %6625 = vmatmul.mubr.f32.gmra.mrb[0].mxu0 %v5980
      %v6626 = vpop.f32.mrb[0].mxu0
      %v6627 = vadd.f32 0.0, %v6626
      %v6628 = vpop.f32.mrb[0].mxu0
      %6629 = vmatprep.mubr.f32.mxu0 %v5989
      %6630 = vmatmul.mubr.f32.gmra.mrb[0].mxu0 %v5988
      %v6631 = vpop.f32.mrb[0].mxu0
      %v6632 = vadd.f32 0.0, %v6631
      %v6633 = vpop.f32.mrb[0].mxu0
      %6634 = vmatprep.mubr.f32.mxu0 %v5997
      %6635 = vmatmul.mubr.f32.gmra.mrb[0].mxu0 %v5996
      %v6636 = vpop.f32.mrb[0].mxu0
      %v6637 = vadd.f32 0.0, %v6636
      %v6638 = vpop.f32.mrb[0].mxu0
      %6639 = vmatprep.mubr.f32.mxu0 %v6005
      %6640 = vmatmul.mubr.f32.gmra.mrb[0].mxu0 %v6004
      %v6641 = vpop.f32.mrb[0].mxu0
      %v6642 = vadd.f32 0.0, %v6641
      %v6643 = vpop.f32.mrb[0].mxu0
      %6644 = vmatprep.mubr.f32.mxu0 %v6013
      %6645 = vmatmul.mubr.f32.gmra.mrb[0].mxu0 %v6012
      %v6646 = vpop.f32.mrb[0].mxu0
      %v6647 = vadd.f32 0.0, %v6646
      %v6648 = vpop.f32.mrb[0].mxu0
      %6649 = vmatprep.mubr.f32.mxu0 %v6021
      %6650 = vmatmul.mubr.f32.gmra.mrb[0].mxu0 %v6020
      %v6651 = vpop.f32.mrb[0].mxu0
      %v6652 = vadd.f32 0.0, %v6651
      %v6653 = vpop.f32.mrb[0].mxu0
      %6654 = vmatprep.mubr.f32.mxu0 %v6029
      %6655 = vmatmul.mubr.f32.gmra.mrb[0].mxu0 %v6028
      %v6656 = vpop.f32.mrb[0].mxu0
      %v6657 = vadd.f32 0.0, %v6656
      %v6658 = vpop.f32.mrb[0].mxu0
      %6659 = vmatprep.mubr.f32.mxu0 %v6037
      %6660 = vmatmul.mubr.f32.gmra.mrb[0].mxu0 %v6036
      %v6661 = vpop.f32.mrb[0].mxu0
      %v6662 = vadd.f32 0.0, %v6661
      %v6663 = vpop.f32.mrb[0].mxu0
      %6664 = vmatprep.mubr.f32.mxu0 %v6045
      %6665 = vmatmul.mubr.f32.gmra.mrb[0].mxu0 %v6044
      %v6666 = vpop.f32.mrb[0].mxu0
      %v6667 = vadd.f32 0.0, %v6666
      %v6668 = vpop.f32.mrb[0].mxu0
      %6669 = vmatprep.mubr.f32.mxu0 %v6053
      %6670 = vmatmul.mubr.f32.gmra.mrb[0].mxu0 %v6052
      %v6671 = vpop.f32.mrb[0].mxu0
      %v6672 = vadd.f32 0.0, %v6671
      %v6673 = vpop.f32.mrb[0].mxu0
      %6674 = vmatprep.mubr.f32.mxu0 %v6061
      %6675 = vmatmul.mubr.f32.gmra.mrb[0].mxu0 %v6060
      %v6676 = vpop.f32.mrb[0].mxu0
      %v6677 = vadd.f32 0.0, %v6676
      %v6678 = vpop.f32.mrb[0].mxu0
      %6679 = vmatprep.mubr.f32.mxu0 %v6069
      %6680 = vmatmul.mubr.f32.gmra.mrb[0].mxu0 %v6068
      %v6681 = vpop.f32.mrb[0].mxu0
      %v6682 = vadd.f32 0.0, %v6681
      %v6683 = vpop.f32.mrb[0].mxu0
      %6684 = vmatprep.mubr.f32.mxu0 %v6077
      %6685 = vmatmul.mubr.f32.gmra.mrb[0].mxu0 %v6076
      %v6686 = vpop.f32.mrb[0].mxu0
      %v6687 = vadd.f32 0.0, %v6686
      %v6688 = vpop.f32.mrb[0].mxu0
      %6689 = vmatprep.mubr.f32.mxu0 %v6085
      %6690 = vmatmul.mubr.f32.gmra.mrb[0].mxu0 %v6084
      %v6691 = vpop.f32.mrb[0].mxu0
      %v6692 = vadd.f32 0.0, %v6691
      %v6693 = vpop.f32.mrb[0].mxu0
      %6694 = vmatprep.mubr.f32.mxu0 %v6093
      %6695 = vmatmul.mubr.f32.gmra.mrb[0].mxu0 %v6092
      %v6696 = vpop.f32.mrb[0].mxu0
      %v6697 = vadd.f32 0.0, %v6696
      %v6698 = vpop.f32.mrb[0].mxu0
      %6699 = vmatprep.mubr.f32.mxu0 %v6101
      %6700 = vmatmul.mubr.f32.gmra.mrb[0].mxu0 %v6100
      %v6701 = vpop.f32.mrb[0].mxu0
      %v6702 = vadd.f32 0.0, %v6701
      %v6703 = vpop.f32.mrb[0].mxu0
      %6704 = vmatprep.mubr.f32.mxu0 %v6109
      %6705 = vmatmul.mubr.f32.gmra.mrb[0].mxu0 %v6108
      %v6706 = vpop.f32.mrb[0].mxu0
      %v6707 = vadd.f32 0.0, %v6706
      %v6708 = vpop.f32.mrb[0].mxu0
      %6709 = vmatprep.mubr.f32.mxu0 %v6117
      %6710 = vmatmul.mubr.f32.gmra.mrb[0].mxu0 %v6116
      %v6711 = vpop.f32.mrb[0].mxu0
      %v6712 = vadd.f32 0.0, %v6711
      %v6713 = vpop.f32.mrb[0].mxu0
      %6714 = vmatprep.mubr.f32.mxu0 %v6125
      %6715 = vmatmul.mubr.f32.gmra.mrb[0].mxu0 %v6124
      %v6716 = vpop.f32.mrb[0].mxu0
      %v6717 = vadd.f32 0.0, %v6716
      %v6718 = vpop.f32.mrb[0].mxu0
      %6719 = vmatprep.mubr.f32.mxu0 %v6133
      %6720 = vmatmul.mubr.f32.gmra.mrb[0].mxu0 %v6132
      %v6721 = vpop.f32.mrb[0].mxu0
      %v6722 = vadd.f32 0.0, %v6721
      %v6723 = vpop.f32.mrb[0].mxu0
      %6724 = vmatprep.mubr.f32.mxu0 %v6141
      %6725 = vmatmul.mubr.f32.gmra.mrb[0].mxu0 %v6140
      %v6726 = vpop.f32.mrb[0].mxu0
      %v6727 = vadd.f32 0.0, %v6726
      %v6728 = vpop.f32.mrb[0].mxu0
      %6729 = vmatprep.mubr.f32.mxu0 %v6149
      %6730 = vmatmul.mubr.f32.gmra.mrb[0].mxu0 %v6148
      %v6731 = vpop.f32.mrb[0].mxu0
      %v6732 = vadd.f32 0.0, %v6731
      %v6733 = vpop.f32.mrb[0].mxu0
      %6734 = vmatprep.mubr.f32.mxu0 %v6157
      %6735 = vmatmul.mubr.f32.gmra.mrb[0].mxu0 %v6156
      %v6736 = vpop.f32.mrb[0].mxu0
      %v6737 = vadd.f32 0.0, %v6736
      %v6738 = vpop.f32.mrb[0].mxu0
      %6739 = vmatprep.mubr.f32.mxu0 %v6165
      %6740 = vmatmul.mubr.f32.gmra.mrb[0].mxu0 %v6164
      %v6741 = vpop.f32.mrb[0].mxu0
      %v6742 = vadd.f32 0.0, %v6741
      %v6743 = vpop.f32.mrb[0].mxu0
      %6744 = vmatprep.mubr.f32.mxu0 %v6173
      %6745 = vmatmul.mubr.f32.gmra.mrb[0].mxu0 %v6172
      %v6746 = vpop.f32.mrb[0].mxu0
      %v6747 = vadd.f32 0.0, %v6746
      %v6748 = vpop.f32.mrb[0].mxu0
      %6749 = vmatprep.mubr.f32.mxu0 %v6181
      %6750 = vmatmul.mubr.f32.gmra.mrb[0].mxu0 %v6180
      %v6751 = vpop.f32.mrb[0].mxu0
      %v6752 = vadd.f32 0.0, %v6751
      %v6753 = vpop.f32.mrb[0].mxu0
      %6754 = vmatprep.mubr.f32.mxu0 %v6189
      %6755 = vmatmul.mubr.f32.gmra.mrb[0].mxu0 %v6188
      %v6756 = vpop.f32.mrb[0].mxu0
      %v6757 = vadd.f32 0.0, %v6756
      %v6758 = vpop.f32.mrb[0].mxu0
      %6759 = vmatprep.mubr.f32.mxu0 %v6197
      %6760 = vmatmul.mubr.f32.gmra.mrb[0].mxu0 %v6196
      %v6761 = vpop.f32.mrb[0].mxu0
      %v6762 = vadd.f32 0.0, %v6761
      %v6763 = vpop.f32.mrb[0].mxu0
      %6764 = vmatprep.mubr.f32.mxu0 %v6205
      %6765 = vmatmul.mubr.f32.gmra.mrb[0].mxu0 %v6204
      %v6766 = vpop.f32.mrb[0].mxu0
      %v6767 = vadd.f32 0.0, %v6766
      %v6768 = vpop.f32.mrb[0].mxu0
      %6769 = vmatprep.mubr.f32.mxu0 %v6213
      %6770 = vmatmul.mubr.f32.gmra.mrb[0].mxu0 %v6212
      %v6771 = vpop.f32.mrb[0].mxu0
      %v6772 = vadd.f32 0.0, %v6771
      %v6773 = vpop.f32.mrb[0].mxu0
      %6774 = vmatprep.mubr.f32.mxu0 %v6221
      %6775 = vmatmul.mubr.f32.gmra.mrb[0].mxu0 %v6220
      %v6776 = vpop.f32.mrb[0].mxu0
      %v6777 = vadd.f32 0.0, %v6776
      %v6778 = vpop.f32.mrb[0].mxu0
      %6779 = vmatprep.mubr.f32.mxu0 %v6229
      %6780 = vmatmul.mubr.f32.gmra.mrb[0].mxu0 %v6228
      %v6781 = vpop.f32.mrb[0].mxu0
      %v6782 = vadd.f32 0.0, %v6781
      %v6783 = vpop.f32.mrb[0].mxu0
      %6784 = vmatprep.mubr.f32.mxu0 %v6237
      %6785 = vmatmul.mubr.f32.gmra.mrb[0].mxu0 %v6236
      %v6786 = vpop.f32.mrb[0].mxu0
      %v6787 = vadd.f32 0.0, %v6786
      %v6788 = vpop.f32.mrb[0].mxu0
      %6789 = vmatprep.mubr.f32.mxu0 %v6245
      %6790 = vmatmul.mubr.f32.gmra.mrb[0].mxu0 %v6244
      %v6791 = vpop.f32.mrb[0].mxu0
      %v6792 = vadd.f32 0.0, %v6791
      %v6793 = vpop.f32.mrb[0].mxu0
      %6794 = vmatprep.mubr.f32.mxu0 %v6253
      %6795 = vmatmul.mubr.f32.gmra.mrb[0].mxu0 %v6252
      %v6796 = vpop.f32.mrb[0].mxu0
      %v6797 = vadd.f32 0.0, %v6796
      %v6798 = vpop.f32.mrb[0].mxu0
      %6799 = vmatprep.mubr.f32.mxu0 %v6261
      %6800 = vmatmul.mubr.f32.gmra.mrb[0].mxu0 %v6260
      %v6801 = vpop.f32.mrb[0].mxu0
      %v6802 = vadd.f32 0.0, %v6801
      %v6803 = vpop.f32.mrb[0].mxu0
      %6804 = vmatprep.mubr.f32.mxu0 %v6269
      %6805 = vmatmul.mubr.f32.gmra.mrb[0].mxu0 %v6268
      %v6806 = vpop.f32.mrb[0].mxu0
      %v6807 = vadd.f32 0.0, %v6806
      %v6808 = vpop.f32.mrb[0].mxu0
      %6809 = vmatprep.mubr.f32.mxu0 %v6277
      %6810 = vmatmul.mubr.f32.gmra.mrb[0].mxu0 %v6276
      %v6811 = vpop.f32.mrb[0].mxu0
      %v6812 = vadd.f32 0.0, %v6811
      %v6813 = vpop.f32.mrb[0].mxu0
      %6814 = vmatprep.mubr.f32.mxu0 %v6285
      %6815 = vmatmul.mubr.f32.gmra.mrb[0].mxu0 %v6284
      %v6816 = vpop.f32.mrb[0].mxu0
      %v6817 = vadd.f32 0.0, %v6816
      %v6818 = vpop.f32.mrb[0].mxu0
      %6819 = vmatprep.mubr.f32.mxu0 %v6293
      %6820 = vmatmul.mubr.f32.gmra.mrb[0].mxu0 %v6292
      %v6821 = vpop.f32.mrb[0].mxu0
      %v6822 = vadd.f32 0.0, %v6821
      %v6823 = vpop.f32.mrb[0].mxu0
      %6824 = vmatprep.mubr.f32.mxu0 %v6301
      %6825 = vmatmul.mubr.f32.gmra.mrb[0].mxu0 %v6300
      %v6826 = vpop.f32.mrb[0].mxu0
      %v6827 = vadd.f32 0.0, %v6826
      %v6828 = vpop.f32.mrb[0].mxu0
      %6829 = vmatprep.mubr.f32.mxu0 %v6309
      %6830 = vmatmul.mubr.f32.gmra.mrb[0].mxu0 %v6308
      %v6831 = vpop.f32.mrb[0].mxu0
      %v6832 = vadd.f32 0.0, %v6831
      %v6833 = vpop.f32.mrb[0].mxu0
      %6834 = vmatprep.mubr.f32.mxu0 %v6317
      %6835 = vmatmul.mubr.f32.gmra.mrb[0].mxu0 %v6316
      %v6836 = vpop.f32.mrb[0].mxu0
      %v6837 = vadd.f32 0.0, %v6836
      %v6838 = vpop.f32.mrb[0].mxu0
      %6839 = vmatprep.mubr.f32.mxu0 %v6325
      %6840 = vmatmul.mubr.f32.gmra.mrb[0].mxu0 %v6324
      %v6841 = vpop.f32.mrb[0].mxu0
      %v6842 = vadd.f32 0.0, %v6841
      %v6843 = vpop.f32.mrb[0].mxu0
      %6844 = vdwg.mxu0
      %6845 = vmatprep.subr.mxu0 0.0
      %6846 = vmatpush1.msra.mxu0 %v6364
      %6847 = vmatprep.subr.mxu0 0.0
      %6848 = vmatpush1.msra.mxu0 %v6365
      %6849 = vmatprep.subr.mxu0 0.0
      %6850 = vmatpush1.msra.mxu0 %v6366
      %6851 = vmatprep.subr.mxu0 0.0
      %6852 = vmatpush1.msra.mxu0 %v6367
      %6853 = vmatprep.subr.mxu0 0.0
      %6854 = vmatpush1.msra.mxu0 %v6368
      %6855 = vmatprep.subr.mxu0 0.0
      %6856 = vmatpush1.msra.mxu0 %v6369
      %6857 = vmatprep.subr.mxu0 0.0
      %6858 = vmatpush1.msra.mxu0 %v6370
      %6859 = vmatprep.subr.mxu0 0.0
      %6860 = vmatpush1.msra.mxu0 %v6371
      %6861 = vmatprep.subr.mxu0 0.0
      %6862 = vmatpush1.msra.mxu0 %v6372
      %6863 = vmatprep.subr.mxu0 0.0
      %6864 = vmatpush1.msra.mxu0 %v6373
      %6865 = vmatprep.subr.mxu0 0.0
      %6866 = vmatpush1.msra.mxu0 %v6374
      %6867 = vmatprep.subr.mxu0 0.0
      %6868 = vmatpush1.msra.mxu0 %v6375
      %6869 = vmatprep.subr.mxu0 0.0
      %6870 = vmatpush1.msra.mxu0 %v6376
      %6871 = vmatprep.subr.mxu0 0.0
      %6872 = vmatpush1.msra.mxu0 %v6377
      %6873 = vmatprep.subr.mxu0 0.0
      %6874 = vmatpush1.msra.mxu0 %v6378
      %6875 = vmatprep.subr.mxu0 0.0
      %6876 = vmatpush1.msra.mxu0 %v6379
      %6877 = vmatprep.subr.mxu0 0.0
      %6878 = vmatpush1.msra.mxu0 %v6380
      %6879 = vmatprep.subr.mxu0 0.0
      %6880 = vmatpush1.msra.mxu0 %v6381
      %6881 = vmatprep.subr.mxu0 0.0
      %6882 = vmatpush1.msra.mxu0 %v6382
      %6883 = vmatprep.subr.mxu0 0.0
      %6884 = vmatpush1.msra.mxu0 %v6383
      %6885 = vmatprep.subr.mxu0 0.0
      %6886 = vmatpush1.msra.mxu0 %v6384
      %6887 = vmatprep.subr.mxu0 0.0
      %6888 = vmatpush1.msra.mxu0 %v6385
      %6889 = vmatprep.subr.mxu0 0.0
      %6890 = vmatpush1.msra.mxu0 %v6386
      %6891 = vmatprep.subr.mxu0 0.0
      %6892 = vmatpush1.msra.mxu0 %v6387
      %6893 = vmatprep.subr.mxu0 0.0
      %6894 = vmatpush1.msra.mxu0 %v6388
      %6895 = vmatprep.subr.mxu0 0.0
      %6896 = vmatpush1.msra.mxu0 %v6389
      %6897 = vmatprep.subr.mxu0 0.0
      %6898 = vmatpush1.msra.mxu0 %v6390
      %6899 = vmatprep.subr.mxu0 0.0
      %6900 = vmatpush1.msra.mxu0 %v6391
      %6901 = vmatprep.subr.mxu0 0.0
      %6902 = vmatpush1.msra.mxu0 %v6392
      %6903 = vmatprep.subr.mxu0 0.0
      %6904 = vmatpush1.msra.mxu0 %v6393
      %6905 = vmatprep.subr.mxu0 0.0
      %6906 = vmatpush1.msra.mxu0 %v6394
      %6907 = vmatprep.subr.mxu0 0.0
      %6908 = vmatpush1.msra.mxu0 %v6395
      %6909 = vmatprep.mubr.f32.mxu0 %v5823
      %6910 = vmatmul.mubr.f32.gmra.mrb[0].mxu0 %v5822
      %v6911 = vpop.f32.mrb[0].mxu0
      %v6912 = vadd.f32 %v6527, %v6911
      %v6913 = vpop.f32.mrb[0].mxu0
      %6914 = vmatprep.mubr.f32.mxu0 %v5831
      %6915 = vmatmul.mubr.f32.gmra.mrb[0].mxu0 %v5830
      %v6916 = vpop.f32.mrb[0].mxu0
      %v6917 = vadd.f32 %v6532, %v6916
      %v6918 = vpop.f32.mrb[0].mxu0
      %6919 = vmatprep.mubr.f32.mxu0 %v5839
      %6920 = vmatmul.mubr.f32.gmra.mrb[0].mxu0 %v5838
      %v6921 = vpop.f32.mrb[0].mxu0
      %v6922 = vadd.f32 %v6537, %v6921
      %v6923 = vpop.f32.mrb[0].mxu0
      %6924 = vmatprep.mubr.f32.mxu0 %v5847
      %6925 = vmatmul.mubr.f32.gmra.mrb[0].mxu0 %v5846
      %v6926 = vpop.f32.mrb[0].mxu0
      %v6927 = vadd.f32 %v6542, %v6926
      %v6928 = vpop.f32.mrb[0].mxu0
      %6929 = vmatprep.mubr.f32.mxu0 %v5855
      %6930 = vmatmul.mubr.f32.gmra.mrb[0].mxu0 %v5854
      %v6931 = vpop.f32.mrb[0].mxu0
      %v6932 = vadd.f32 %v6547, %v6931
      %v6933 = vpop.f32.mrb[0].mxu0
      %6934 = vmatprep.mubr.f32.mxu0 %v5863
      %6935 = vmatmul.mubr.f32.gmra.mrb[0].mxu0 %v5862
      %v6936 = vpop.f32.mrb[0].mxu0
      %v6937 = vadd.f32 %v6552, %v6936
      %v6938 = vpop.f32.mrb[0].mxu0
      %6939 = vmatprep.mubr.f32.mxu0 %v5871
      %6940 = vmatmul.mubr.f32.gmra.mrb[0].mxu0 %v5870
      %v6941 = vpop.f32.mrb[0].mxu0
      %v6942 = vadd.f32 %v6557, %v6941
      %v6943 = vpop.f32.mrb[0].mxu0
      %6944 = vmatprep.mubr.f32.mxu0 %v5879
      %6945 = vmatmul.mubr.f32.gmra.mrb[0].mxu0 %v5878
      %v6946 = vpop.f32.mrb[0].mxu0
      %v6947 = vadd.f32 %v6562, %v6946
      %v6948 = vpop.f32.mrb[0].mxu0
      %6949 = vmatprep.mubr.f32.mxu0 %v5887
      %6950 = vmatmul.mubr.f32.gmra.mrb[0].mxu0 %v5886
      %v6951 = vpop.f32.mrb[0].mxu0
      %v6952 = vadd.f32 %v6567, %v6951
      %v6953 = vpop.f32.mrb[0].mxu0
      %6954 = vmatprep.mubr.f32.mxu0 %v5895
      %6955 = vmatmul.mubr.f32.gmra.mrb[0].mxu0 %v5894
      %v6956 = vpop.f32.mrb[0].mxu0
      %v6957 = vadd.f32 %v6572, %v6956
      %v6958 = vpop.f32.mrb[0].mxu0
      %6959 = vmatprep.mubr.f32.mxu0 %v5903
      %6960 = vmatmul.mubr.f32.gmra.mrb[0].mxu0 %v5902
      %v6961 = vpop.f32.mrb[0].mxu0
      %v6962 = vadd.f32 %v6577, %v6961
      %v6963 = vpop.f32.mrb[0].mxu0
      %6964 = vmatprep.mubr.f32.mxu0 %v5911
      %6965 = vmatmul.mubr.f32.gmra.mrb[0].mxu0 %v5910
      %v6966 = vpop.f32.mrb[0].mxu0
      %v6967 = vadd.f32 %v6582, %v6966
      %v6968 = vpop.f32.mrb[0].mxu0
      %6969 = vmatprep.mubr.f32.mxu0 %v5919
      %6970 = vmatmul.mubr.f32.gmra.mrb[0].mxu0 %v5918
      %v6971 = vpop.f32.mrb[0].mxu0
      %v6972 = vadd.f32 %v6587, %v6971
      %v6973 = vpop.f32.mrb[0].mxu0
      %6974 = vmatprep.mubr.f32.mxu0 %v5927
      %6975 = vmatmul.mubr.f32.gmra.mrb[0].mxu0 %v5926
      %v6976 = vpop.f32.mrb[0].mxu0
      %v6977 = vadd.f32 %v6592, %v6976
      %v6978 = vpop.f32.mrb[0].mxu0
      %6979 = vmatprep.mubr.f32.mxu0 %v5935
      %6980 = vmatmul.mubr.f32.gmra.mrb[0].mxu0 %v5934
      %v6981 = vpop.f32.mrb[0].mxu0
      %v6982 = vadd.f32 %v6597, %v6981
      %v6983 = vpop.f32.mrb[0].mxu0
      %6984 = vmatprep.mubr.f32.mxu0 %v5943
      %6985 = vmatmul.mubr.f32.gmra.mrb[0].mxu0 %v5942
      %v6986 = vpop.f32.mrb[0].mxu0
      %v6987 = vadd.f32 %v6602, %v6986
      %v6988 = vpop.f32.mrb[0].mxu0
      %6989 = vmatprep.mubr.f32.mxu0 %v5951
      %6990 = vmatmul.mubr.f32.gmra.mrb[0].mxu0 %v5950
      %v6991 = vpop.f32.mrb[0].mxu0
      %v6992 = vadd.f32 %v6607, %v6991
      %v6993 = vpop.f32.mrb[0].mxu0
      %6994 = vmatprep.mubr.f32.mxu0 %v5959
      %6995 = vmatmul.mubr.f32.gmra.mrb[0].mxu0 %v5958
      %v6996 = vpop.f32.mrb[0].mxu0
      %v6997 = vadd.f32 %v6612, %v6996
      %v6998 = vpop.f32.mrb[0].mxu0
      %6999 = vmatprep.mubr.f32.mxu0 %v5967
      %7000 = vmatmul.mubr.f32.gmra.mrb[0].mxu0 %v5966
      %v7001 = vpop.f32.mrb[0].mxu0
      %v7002 = vadd.f32 %v6617, %v7001
      %v7003 = vpop.f32.mrb[0].mxu0
      %7004 = vmatprep.mubr.f32.mxu0 %v5975
      %7005 = vmatmul.mubr.f32.gmra.mrb[0].mxu0 %v5974
      %v7006 = vpop.f32.mrb[0].mxu0
      %v7007 = vadd.f32 %v6622, %v7006
      %v7008 = vpop.f32.mrb[0].mxu0
      %7009 = vmatprep.mubr.f32.mxu0 %v5983
      %7010 = vmatmul.mubr.f32.gmra.mrb[0].mxu0 %v5982
      %v7011 = vpop.f32.mrb[0].mxu0
      %v7012 = vadd.f32 %v6627, %v7011
      %v7013 = vpop.f32.mrb[0].mxu0
      %7014 = vmatprep.mubr.f32.mxu0 %v5991
      %7015 = vmatmul.mubr.f32.gmra.mrb[0].mxu0 %v5990
      %v7016 = vpop.f32.mrb[0].mxu0
      %v7017 = vadd.f32 %v6632, %v7016
      %v7018 = vpop.f32.mrb[0].mxu0
      %7019 = vmatprep.mubr.f32.mxu0 %v5999
      %7020 = vmatmul.mubr.f32.gmra.mrb[0].mxu0 %v5998
      %v7021 = vpop.f32.mrb[0].mxu0
      %v7022 = vadd.f32 %v6637, %v7021
      %v7023 = vpop.f32.mrb[0].mxu0
      %7024 = vmatprep.mubr.f32.mxu0 %v6007
      %7025 = vmatmul.mubr.f32.gmra.mrb[0].mxu0 %v6006
      %v7026 = vpop.f32.mrb[0].mxu0
      %v7027 = vadd.f32 %v6642, %v7026
      %v7028 = vpop.f32.mrb[0].mxu0
      %7029 = vmatprep.mubr.f32.mxu0 %v6015
      %7030 = vmatmul.mubr.f32.gmra.mrb[0].mxu0 %v6014
      %v7031 = vpop.f32.mrb[0].mxu0
      %v7032 = vadd.f32 %v6647, %v7031
      %v7033 = vpop.f32.mrb[0].mxu0
      %7034 = vmatprep.mubr.f32.mxu0 %v6023
      %7035 = vmatmul.mubr.f32.gmra.mrb[0].mxu0 %v6022
      %v7036 = vpop.f32.mrb[0].mxu0
      %v7037 = vadd.f32 %v6652, %v7036
      %v7038 = vpop.f32.mrb[0].mxu0
      %7039 = vmatprep.mubr.f32.mxu0 %v6031
      %7040 = vmatmul.mubr.f32.gmra.mrb[0].mxu0 %v6030
      %v7041 = vpop.f32.mrb[0].mxu0
      %v7042 = vadd.f32 %v6657, %v7041
      %v7043 = vpop.f32.mrb[0].mxu0
      %7044 = vmatprep.mubr.f32.mxu0 %v6039
      %7045 = vmatmul.mubr.f32.gmra.mrb[0].mxu0 %v6038
      %v7046 = vpop.f32.mrb[0].mxu0
      %v7047 = vadd.f32 %v6662, %v7046
      %v7048 = vpop.f32.mrb[0].mxu0
      %7049 = vmatprep.mubr.f32.mxu0 %v6047
      %7050 = vmatmul.mubr.f32.gmra.mrb[0].mxu0 %v6046
      %v7051 = vpop.f32.mrb[0].mxu0
      %v7052 = vadd.f32 %v6667, %v7051
      %v7053 = vpop.f32.mrb[0].mxu0
      %7054 = vmatprep.mubr.f32.mxu0 %v6055
      %7055 = vmatmul.mubr.f32.gmra.mrb[0].mxu0 %v6054
      %v7056 = vpop.f32.mrb[0].mxu0
      %v7057 = vadd.f32 %v6672, %v7056
      %v7058 = vpop.f32.mrb[0].mxu0
      %7059 = vmatprep.mubr.f32.mxu0 %v6063
      %7060 = vmatmul.mubr.f32.gmra.mrb[0].mxu0 %v6062
      %v7061 = vpop.f32.mrb[0].mxu0
      %v7062 = vadd.f32 %v6677, %v7061
      %v7063 = vpop.f32.mrb[0].mxu0
      %7064 = vmatprep.mubr.f32.mxu0 %v6071
      %7065 = vmatmul.mubr.f32.gmra.mrb[0].mxu0 %v6070
      %v7066 = vpop.f32.mrb[0].mxu0
      %v7067 = vadd.f32 %v6682, %v7066
      %v7068 = vpop.f32.mrb[0].mxu0
      %7069 = vmatprep.mubr.f32.mxu0 %v6079
      %7070 = vmatmul.mubr.f32.gmra.mrb[0].mxu0 %v6078
      %v7071 = vpop.f32.mrb[0].mxu0
      %v7072 = vadd.f32 %v6687, %v7071
      %v7073 = vpop.f32.mrb[0].mxu0
      %7074 = vmatprep.mubr.f32.mxu0 %v6087
      %7075 = vmatmul.mubr.f32.gmra.mrb[0].mxu0 %v6086
      %v7076 = vpop.f32.mrb[0].mxu0
      %v7077 = vadd.f32 %v6692, %v7076
      %v7078 = vpop.f32.mrb[0].mxu0
      %7079 = vmatprep.mubr.f32.mxu0 %v6095
      %7080 = vmatmul.mubr.f32.gmra.mrb[0].mxu0 %v6094
      %v7081 = vpop.f32.mrb[0].mxu0
      %v7082 = vadd.f32 %v6697, %v7081
      %v7083 = vpop.f32.mrb[0].mxu0
      %7084 = vmatprep.mubr.f32.mxu0 %v6103
      %7085 = vmatmul.mubr.f32.gmra.mrb[0].mxu0 %v6102
      %v7086 = vpop.f32.mrb[0].mxu0
      %v7087 = vadd.f32 %v6702, %v7086
      %v7088 = vpop.f32.mrb[0].mxu0
      %7089 = vmatprep.mubr.f32.mxu0 %v6111
      %7090 = vmatmul.mubr.f32.gmra.mrb[0].mxu0 %v6110
      %v7091 = vpop.f32.mrb[0].mxu0
      %v7092 = vadd.f32 %v6707, %v7091
      %v7093 = vpop.f32.mrb[0].mxu0
      %7094 = vmatprep.mubr.f32.mxu0 %v6119
      %7095 = vmatmul.mubr.f32.gmra.mrb[0].mxu0 %v6118
      %v7096 = vpop.f32.mrb[0].mxu0
      %v7097 = vadd.f32 %v6712, %v7096
      %v7098 = vpop.f32.mrb[0].mxu0
      %7099 = vmatprep.mubr.f32.mxu0 %v6127
      %7100 = vmatmul.mubr.f32.gmra.mrb[0].mxu0 %v6126
      %v7101 = vpop.f32.mrb[0].mxu0
      %v7102 = vadd.f32 %v6717, %v7101
      %v7103 = vpop.f32.mrb[0].mxu0
      %7104 = vmatprep.mubr.f32.mxu0 %v6135
      %7105 = vmatmul.mubr.f32.gmra.mrb[0].mxu0 %v6134
      %v7106 = vpop.f32.mrb[0].mxu0
      %v7107 = vadd.f32 %v6722, %v7106
      %v7108 = vpop.f32.mrb[0].mxu0
      %7109 = vmatprep.mubr.f32.mxu0 %v6143
      %7110 = vmatmul.mubr.f32.gmra.mrb[0].mxu0 %v6142
      %v7111 = vpop.f32.mrb[0].mxu0
      %v7112 = vadd.f32 %v6727, %v7111
      %v7113 = vpop.f32.mrb[0].mxu0
      %7114 = vmatprep.mubr.f32.mxu0 %v6151
      %7115 = vmatmul.mubr.f32.gmra.mrb[0].mxu0 %v6150
      %v7116 = vpop.f32.mrb[0].mxu0
      %v7117 = vadd.f32 %v6732, %v7116
      %v7118 = vpop.f32.mrb[0].mxu0
      %7119 = vmatprep.mubr.f32.mxu0 %v6159
      %7120 = vmatmul.mubr.f32.gmra.mrb[0].mxu0 %v6158
      %v7121 = vpop.f32.mrb[0].mxu0
      %v7122 = vadd.f32 %v6737, %v7121
      %v7123 = vpop.f32.mrb[0].mxu0
      %7124 = vmatprep.mubr.f32.mxu0 %v6167
      %7125 = vmatmul.mubr.f32.gmra.mrb[0].mxu0 %v6166
      %v7126 = vpop.f32.mrb[0].mxu0
      %v7127 = vadd.f32 %v6742, %v7126
      %v7128 = vpop.f32.mrb[0].mxu0
      %7129 = vmatprep.mubr.f32.mxu0 %v6175
      %7130 = vmatmul.mubr.f32.gmra.mrb[0].mxu0 %v6174
      %v7131 = vpop.f32.mrb[0].mxu0
      %v7132 = vadd.f32 %v6747, %v7131
      %v7133 = vpop.f32.mrb[0].mxu0
      %7134 = vmatprep.mubr.f32.mxu0 %v6183
      %7135 = vmatmul.mubr.f32.gmra.mrb[0].mxu0 %v6182
      %v7136 = vpop.f32.mrb[0].mxu0
      %v7137 = vadd.f32 %v6752, %v7136
      %v7138 = vpop.f32.mrb[0].mxu0
      %7139 = vmatprep.mubr.f32.mxu0 %v6191
      %7140 = vmatmul.mubr.f32.gmra.mrb[0].mxu0 %v6190
      %v7141 = vpop.f32.mrb[0].mxu0
      %v7142 = vadd.f32 %v6757, %v7141
      %v7143 = vpop.f32.mrb[0].mxu0
      %7144 = vmatprep.mubr.f32.mxu0 %v6199
      %7145 = vmatmul.mubr.f32.gmra.mrb[0].mxu0 %v6198
      %v7146 = vpop.f32.mrb[0].mxu0
      %v7147 = vadd.f32 %v6762, %v7146
      %v7148 = vpop.f32.mrb[0].mxu0
      %7149 = vmatprep.mubr.f32.mxu0 %v6207
      %7150 = vmatmul.mubr.f32.gmra.mrb[0].mxu0 %v6206
      %v7151 = vpop.f32.mrb[0].mxu0
      %v7152 = vadd.f32 %v6767, %v7151
      %v7153 = vpop.f32.mrb[0].mxu0
      %7154 = vmatprep.mubr.f32.mxu0 %v6215
      %7155 = vmatmul.mubr.f32.gmra.mrb[0].mxu0 %v6214
      %v7156 = vpop.f32.mrb[0].mxu0
      %v7157 = vadd.f32 %v6772, %v7156
      %v7158 = vpop.f32.mrb[0].mxu0
      %7159 = vmatprep.mubr.f32.mxu0 %v6223
      %7160 = vmatmul.mubr.f32.gmra.mrb[0].mxu0 %v6222
      %v7161 = vpop.f32.mrb[0].mxu0
      %v7162 = vadd.f32 %v6777, %v7161
      %v7163 = vpop.f32.mrb[0].mxu0
      %7164 = vmatprep.mubr.f32.mxu0 %v6231
      %7165 = vmatmul.mubr.f32.gmra.mrb[0].mxu0 %v6230
      %v7166 = vpop.f32.mrb[0].mxu0
      %v7167 = vadd.f32 %v6782, %v7166
      %v7168 = vpop.f32.mrb[0].mxu0
      %7169 = vmatprep.mubr.f32.mxu0 %v6239
      %7170 = vmatmul.mubr.f32.gmra.mrb[0].mxu0 %v6238
      %v7171 = vpop.f32.mrb[0].mxu0
      %v7172 = vadd.f32 %v6787, %v7171
      %v7173 = vpop.f32.mrb[0].mxu0
      %7174 = vmatprep.mubr.f32.mxu0 %v6247
      %7175 = vmatmul.mubr.f32.gmra.mrb[0].mxu0 %v6246
      %v7176 = vpop.f32.mrb[0].mxu0
      %v7177 = vadd.f32 %v6792, %v7176
      %v7178 = vpop.f32.mrb[0].mxu0
      %7179 = vmatprep.mubr.f32.mxu0 %v6255
      %7180 = vmatmul.mubr.f32.gmra.mrb[0].mxu0 %v6254
      %v7181 = vpop.f32.mrb[0].mxu0
      %v7182 = vadd.f32 %v6797, %v7181
      %v7183 = vpop.f32.mrb[0].mxu0
      %7184 = vmatprep.mubr.f32.mxu0 %v6263
      %7185 = vmatmul.mubr.f32.gmra.mrb[0].mxu0 %v6262
      %v7186 = vpop.f32.mrb[0].mxu0
      %v7187 = vadd.f32 %v6802, %v7186
      %v7188 = vpop.f32.mrb[0].mxu0
      %7189 = vmatprep.mubr.f32.mxu0 %v6271
      %7190 = vmatmul.mubr.f32.gmra.mrb[0].mxu0 %v6270
      %v7191 = vpop.f32.mrb[0].mxu0
      %v7192 = vadd.f32 %v6807, %v7191
      %v7193 = vpop.f32.mrb[0].mxu0
      %7194 = vmatprep.mubr.f32.mxu0 %v6279
      %7195 = vmatmul.mubr.f32.gmra.mrb[0].mxu0 %v6278
      %v7196 = vpop.f32.mrb[0].mxu0
      %v7197 = vadd.f32 %v6812, %v7196
      %v7198 = vpop.f32.mrb[0].mxu0
      %7199 = vmatprep.mubr.f32.mxu0 %v6287
      %7200 = vmatmul.mubr.f32.gmra.mrb[0].mxu0 %v6286
      %v7201 = vpop.f32.mrb[0].mxu0
      %v7202 = vadd.f32 %v6817, %v7201
      %v7203 = vpop.f32.mrb[0].mxu0
      %7204 = vmatprep.mubr.f32.mxu0 %v6295
      %7205 = vmatmul.mubr.f32.gmra.mrb[0].mxu0 %v6294
      %v7206 = vpop.f32.mrb[0].mxu0
      %v7207 = vadd.f32 %v6822, %v7206
      %v7208 = vpop.f32.mrb[0].mxu0
      %7209 = vmatprep.mubr.f32.mxu0 %v6303
      %7210 = vmatmul.mubr.f32.gmra.mrb[0].mxu0 %v6302
      %v7211 = vpop.f32.mrb[0].mxu0
      %v7212 = vadd.f32 %v6827, %v7211
      %v7213 = vpop.f32.mrb[0].mxu0
      %7214 = vmatprep.mubr.f32.mxu0 %v6311
      %7215 = vmatmul.mubr.f32.gmra.mrb[0].mxu0 %v6310
      %v7216 = vpop.f32.mrb[0].mxu0
      %v7217 = vadd.f32 %v6832, %v7216
      %v7218 = vpop.f32.mrb[0].mxu0
      %7219 = vmatprep.mubr.f32.mxu0 %v6319
      %7220 = vmatmul.mubr.f32.gmra.mrb[0].mxu0 %v6318
      %v7221 = vpop.f32.mrb[0].mxu0
      %v7222 = vadd.f32 %v6837, %v7221
      %v7223 = vpop.f32.mrb[0].mxu0
      %7224 = vmatprep.mubr.f32.mxu0 %v6327
      %7225 = vmatmul.mubr.f32.gmra.mrb[0].mxu0 %v6326
      %v7226 = vpop.f32.mrb[0].mxu0
      %v7227 = vadd.f32 %v6842, %v7226
      %v7228 = vpop.f32.mrb[0].mxu0
      %7229 = vdwg.mxu0
      %7230 = vmatprep.subr.mxu0 0.0
      %7231 = vmatpush1.msra.mxu0 %v6396
      %7232 = vmatprep.subr.mxu0 0.0
      %7233 = vmatpush1.msra.mxu0 %v6397
      %7234 = vmatprep.subr.mxu0 0.0
      %7235 = vmatpush1.msra.mxu0 %v6398
      %7236 = vmatprep.subr.mxu0 0.0
      %7237 = vmatpush1.msra.mxu0 %v6399
      %7238 = vmatprep.subr.mxu0 0.0
      %7239 = vmatpush1.msra.mxu0 %v6400
      %7240 = vmatprep.subr.mxu0 0.0
      %7241 = vmatpush1.msra.mxu0 %v6401
      %7242 = vmatprep.subr.mxu0 0.0
      %7243 = vmatpush1.msra.mxu0 %v6402
      %7244 = vmatprep.subr.mxu0 0.0
      %7245 = vmatpush1.msra.mxu0 %v6403
      %7246 = vmatprep.subr.mxu0 0.0
      %7247 = vmatpush1.msra.mxu0 %v6404
      %7248 = vmatprep.subr.mxu0 0.0
      %7249 = vmatpush1.msra.mxu0 %v6405
      %7250 = vmatprep.subr.mxu0 0.0
      %7251 = vmatpush1.msra.mxu0 %v6406
      %7252 = vmatprep.subr.mxu0 0.0
      %7253 = vmatpush1.msra.mxu0 %v6407
      %7254 = vmatprep.subr.mxu0 0.0
      %7255 = vmatpush1.msra.mxu0 %v6408
      %7256 = vmatprep.subr.mxu0 0.0
      %7257 = vmatpush1.msra.mxu0 %v6409
      %7258 = vmatprep.subr.mxu0 0.0
      %7259 = vmatpush1.msra.mxu0 %v6410
      %7260 = vmatprep.subr.mxu0 0.0
      %7261 = vmatpush1.msra.mxu0 %v6411
      %7262 = vmatprep.subr.mxu0 0.0
      %7263 = vmatpush1.msra.mxu0 %v6412
      %7264 = vmatprep.subr.mxu0 0.0
      %7265 = vmatpush1.msra.mxu0 %v6413
      %7266 = vmatprep.subr.mxu0 0.0
      %7267 = vmatpush1.msra.mxu0 %v6414
      %7268 = vmatprep.subr.mxu0 0.0
      %7269 = vmatpush1.msra.mxu0 %v6415
      %7270 = vmatprep.subr.mxu0 0.0
      %7271 = vmatpush1.msra.mxu0 %v6416
      %7272 = vmatprep.subr.mxu0 0.0
      %7273 = vmatpush1.msra.mxu0 %v6417
      %7274 = vmatprep.subr.mxu0 0.0
      %7275 = vmatpush1.msra.mxu0 %v6418
      %7276 = vmatprep.subr.mxu0 0.0
      %7277 = vmatpush1.msra.mxu0 %v6419
      %7278 = vmatprep.subr.mxu0 0.0
      %7279 = vmatpush1.msra.mxu0 %v6420
      %7280 = vmatprep.subr.mxu0 0.0
      %7281 = vmatpush1.msra.mxu0 %v6421
      %7282 = vmatprep.subr.mxu0 0.0
      %7283 = vmatpush1.msra.mxu0 %v6422
      %7284 = vmatprep.subr.mxu0 0.0
      %7285 = vmatpush1.msra.mxu0 %v6423
      %7286 = vmatprep.subr.mxu0 0.0
      %7287 = vmatpush1.msra.mxu0 %v6424
      %7288 = vmatprep.subr.mxu0 0.0
      %7289 = vmatpush1.msra.mxu0 %v6425
      %7290 = vmatprep.subr.mxu0 0.0
      %7291 = vmatpush1.msra.mxu0 %v6426
      %7292 = vmatprep.subr.mxu0 0.0
      %7293 = vmatpush1.msra.mxu0 %v6427
      %7294 = vmatprep.mubr.f32.mxu0 %v5825
      %7295 = vmatmul.mubr.f32.gmra.mrb[0].mxu0 %v5824
      %v7296 = vpop.f32.mrb[0].mxu0
      %v7297 = vadd.f32 %v6912, %v7296
      %v7298 = vpop.f32.mrb[0].mxu0
      %7299 = vmatprep.mubr.f32.mxu0 %v5833
      %7300 = vmatmul.mubr.f32.gmra.mrb[0].mxu0 %v5832
      %v7301 = vpop.f32.mrb[0].mxu0
      %v7302 = vadd.f32 %v6917, %v7301
      %v7303 = vpop.f32.mrb[0].mxu0
      %7304 = vmatprep.mubr.f32.mxu0 %v5841
      %7305 = vmatmul.mubr.f32.gmra.mrb[0].mxu0 %v5840
      %v7306 = vpop.f32.mrb[0].mxu0
      %v7307 = vadd.f32 %v6922, %v7306
      %v7308 = vpop.f32.mrb[0].mxu0
      %7309 = vmatprep.mubr.f32.mxu0 %v5849
      %7310 = vmatmul.mubr.f32.gmra.mrb[0].mxu0 %v5848
      %v7311 = vpop.f32.mrb[0].mxu0
      %v7312 = vadd.f32 %v6927, %v7311
      %v7313 = vpop.f32.mrb[0].mxu0
      %7314 = vmatprep.mubr.f32.mxu0 %v5857
      %7315 = vmatmul.mubr.f32.gmra.mrb[0].mxu0 %v5856
      %v7316 = vpop.f32.mrb[0].mxu0
      %v7317 = vadd.f32 %v6932, %v7316
      %v7318 = vpop.f32.mrb[0].mxu0
      %7319 = vmatprep.mubr.f32.mxu0 %v5865
      %7320 = vmatmul.mubr.f32.gmra.mrb[0].mxu0 %v5864
      %v7321 = vpop.f32.mrb[0].mxu0
      %v7322 = vadd.f32 %v6937, %v7321
      %v7323 = vpop.f32.mrb[0].mxu0
      %7324 = vmatprep.mubr.f32.mxu0 %v5873
      %7325 = vmatmul.mubr.f32.gmra.mrb[0].mxu0 %v5872
      %v7326 = vpop.f32.mrb[0].mxu0
      %v7327 = vadd.f32 %v6942, %v7326
      %v7328 = vpop.f32.mrb[0].mxu0
      %7329 = vmatprep.mubr.f32.mxu0 %v5881
      %7330 = vmatmul.mubr.f32.gmra.mrb[0].mxu0 %v5880
      %v7331 = vpop.f32.mrb[0].mxu0
      %v7332 = vadd.f32 %v6947, %v7331
      %v7333 = vpop.f32.mrb[0].mxu0
      %7334 = vmatprep.mubr.f32.mxu0 %v5889
      %7335 = vmatmul.mubr.f32.gmra.mrb[0].mxu0 %v5888
      %v7336 = vpop.f32.mrb[0].mxu0
      %v7337 = vadd.f32 %v6952, %v7336
      %v7338 = vpop.f32.mrb[0].mxu0
      %7339 = vmatprep.mubr.f32.mxu0 %v5897
      %7340 = vmatmul.mubr.f32.gmra.mrb[0].mxu0 %v5896
      %v7341 = vpop.f32.mrb[0].mxu0
      %v7342 = vadd.f32 %v6957, %v7341
      %v7343 = vpop.f32.mrb[0].mxu0
      %7344 = vmatprep.mubr.f32.mxu0 %v5905
      %7345 = vmatmul.mubr.f32.gmra.mrb[0].mxu0 %v5904
      %v7346 = vpop.f32.mrb[0].mxu0
      %v7347 = vadd.f32 %v6962, %v7346
      %v7348 = vpop.f32.mrb[0].mxu0
      %7349 = vmatprep.mubr.f32.mxu0 %v5913
      %7350 = vmatmul.mubr.f32.gmra.mrb[0].mxu0 %v5912
      %v7351 = vpop.f32.mrb[0].mxu0
      %v7352 = vadd.f32 %v6967, %v7351
      %v7353 = vpop.f32.mrb[0].mxu0
      %7354 = vmatprep.mubr.f32.mxu0 %v5921
      %7355 = vmatmul.mubr.f32.gmra.mrb[0].mxu0 %v5920
      %v7356 = vpop.f32.mrb[0].mxu0
      %v7357 = vadd.f32 %v6972, %v7356
      %v7358 = vpop.f32.mrb[0].mxu0
      %7359 = vmatprep.mubr.f32.mxu0 %v5929
      %7360 = vmatmul.mubr.f32.gmra.mrb[0].mxu0 %v5928
      %v7361 = vpop.f32.mrb[0].mxu0
      %v7362 = vadd.f32 %v6977, %v7361
      %v7363 = vpop.f32.mrb[0].mxu0
      %7364 = vmatprep.mubr.f32.mxu0 %v5937
      %7365 = vmatmul.mubr.f32.gmra.mrb[0].mxu0 %v5936
      %v7366 = vpop.f32.mrb[0].mxu0
      %v7367 = vadd.f32 %v6982, %v7366
      %v7368 = vpop.f32.mrb[0].mxu0
      %7369 = vmatprep.mubr.f32.mxu0 %v5945
      %7370 = vmatmul.mubr.f32.gmra.mrb[0].mxu0 %v5944
      %v7371 = vpop.f32.mrb[0].mxu0
      %v7372 = vadd.f32 %v6987, %v7371
      %v7373 = vpop.f32.mrb[0].mxu0
      %7374 = vmatprep.mubr.f32.mxu0 %v5953
      %7375 = vmatmul.mubr.f32.gmra.mrb[0].mxu0 %v5952
      %v7376 = vpop.f32.mrb[0].mxu0
      %v7377 = vadd.f32 %v6992, %v7376
      %v7378 = vpop.f32.mrb[0].mxu0
      %7379 = vmatprep.mubr.f32.mxu0 %v5961
      %7380 = vmatmul.mubr.f32.gmra.mrb[0].mxu0 %v5960
      %v7381 = vpop.f32.mrb[0].mxu0
      %v7382 = vadd.f32 %v6997, %v7381
      %v7383 = vpop.f32.mrb[0].mxu0
      %7384 = vmatprep.mubr.f32.mxu0 %v5969
      %7385 = vmatmul.mubr.f32.gmra.mrb[0].mxu0 %v5968
      %v7386 = vpop.f32.mrb[0].mxu0
      %v7387 = vadd.f32 %v7002, %v7386
      %v7388 = vpop.f32.mrb[0].mxu0
      %7389 = vmatprep.mubr.f32.mxu0 %v5977
      %7390 = vmatmul.mubr.f32.gmra.mrb[0].mxu0 %v5976
      %v7391 = vpop.f32.mrb[0].mxu0
      %v7392 = vadd.f32 %v7007, %v7391
      %v7393 = vpop.f32.mrb[0].mxu0
      %7394 = vmatprep.mubr.f32.mxu0 %v5985
      %7395 = vmatmul.mubr.f32.gmra.mrb[0].mxu0 %v5984
      %v7396 = vpop.f32.mrb[0].mxu0
      %v7397 = vadd.f32 %v7012, %v7396
      %v7398 = vpop.f32.mrb[0].mxu0
      %7399 = vmatprep.mubr.f32.mxu0 %v5993
      %7400 = vmatmul.mubr.f32.gmra.mrb[0].mxu0 %v5992
      %v7401 = vpop.f32.mrb[0].mxu0
      %v7402 = vadd.f32 %v7017, %v7401
      %v7403 = vpop.f32.mrb[0].mxu0
      %7404 = vmatprep.mubr.f32.mxu0 %v6001
      %7405 = vmatmul.mubr.f32.gmra.mrb[0].mxu0 %v6000
      %v7406 = vpop.f32.mrb[0].mxu0
      %v7407 = vadd.f32 %v7022, %v7406
      %v7408 = vpop.f32.mrb[0].mxu0
      %7409 = vmatprep.mubr.f32.mxu0 %v6009
      %7410 = vmatmul.mubr.f32.gmra.mrb[0].mxu0 %v6008
      %v7411 = vpop.f32.mrb[0].mxu0
      %v7412 = vadd.f32 %v7027, %v7411
      %v7413 = vpop.f32.mrb[0].mxu0
      %7414 = vmatprep.mubr.f32.mxu0 %v6017
      %7415 = vmatmul.mubr.f32.gmra.mrb[0].mxu0 %v6016
      %v7416 = vpop.f32.mrb[0].mxu0
      %v7417 = vadd.f32 %v7032, %v7416
      %v7418 = vpop.f32.mrb[0].mxu0
      %7419 = vmatprep.mubr.f32.mxu0 %v6025
      %7420 = vmatmul.mubr.f32.gmra.mrb[0].mxu0 %v6024
      %v7421 = vpop.f32.mrb[0].mxu0
      %v7422 = vadd.f32 %v7037, %v7421
      %v7423 = vpop.f32.mrb[0].mxu0
      %7424 = vmatprep.mubr.f32.mxu0 %v6033
      %7425 = vmatmul.mubr.f32.gmra.mrb[0].mxu0 %v6032
      %v7426 = vpop.f32.mrb[0].mxu0
      %v7427 = vadd.f32 %v7042, %v7426
      %v7428 = vpop.f32.mrb[0].mxu0
      %7429 = vmatprep.mubr.f32.mxu0 %v6041
      %7430 = vmatmul.mubr.f32.gmra.mrb[0].mxu0 %v6040
      %v7431 = vpop.f32.mrb[0].mxu0
      %v7432 = vadd.f32 %v7047, %v7431
      %v7433 = vpop.f32.mrb[0].mxu0
      %7434 = vmatprep.mubr.f32.mxu0 %v6049
      %7435 = vmatmul.mubr.f32.gmra.mrb[0].mxu0 %v6048
      %v7436 = vpop.f32.mrb[0].mxu0
      %v7437 = vadd.f32 %v7052, %v7436
      %v7438 = vpop.f32.mrb[0].mxu0
      %7439 = vmatprep.mubr.f32.mxu0 %v6057
      %7440 = vmatmul.mubr.f32.gmra.mrb[0].mxu0 %v6056
      %v7441 = vpop.f32.mrb[0].mxu0
      %v7442 = vadd.f32 %v7057, %v7441
      %v7443 = vpop.f32.mrb[0].mxu0
      %7444 = vmatprep.mubr.f32.mxu0 %v6065
      %7445 = vmatmul.mubr.f32.gmra.mrb[0].mxu0 %v6064
      %v7446 = vpop.f32.mrb[0].mxu0
      %v7447 = vadd.f32 %v7062, %v7446
      %v7448 = vpop.f32.mrb[0].mxu0
      %7449 = vmatprep.mubr.f32.mxu0 %v6073
      %7450 = vmatmul.mubr.f32.gmra.mrb[0].mxu0 %v6072
      %v7451 = vpop.f32.mrb[0].mxu0
      %v7452 = vadd.f32 %v7067, %v7451
      %v7453 = vpop.f32.mrb[0].mxu0
      %7454 = vmatprep.mubr.f32.mxu0 %v6081
      %7455 = vmatmul.mubr.f32.gmra.mrb[0].mxu0 %v6080
      %v7456 = vpop.f32.mrb[0].mxu0
      %v7457 = vadd.f32 %v7072, %v7456
      %v7458 = vpop.f32.mrb[0].mxu0
      %7459 = vmatprep.mubr.f32.mxu0 %v6089
      %7460 = vmatmul.mubr.f32.gmra.mrb[0].mxu0 %v6088
      %v7461 = vpop.f32.mrb[0].mxu0
      %v7462 = vadd.f32 %v7077, %v7461
      %v7463 = vpop.f32.mrb[0].mxu0
      %7464 = vmatprep.mubr.f32.mxu0 %v6097
      %7465 = vmatmul.mubr.f32.gmra.mrb[0].mxu0 %v6096
      %v7466 = vpop.f32.mrb[0].mxu0
      %v7467 = vadd.f32 %v7082, %v7466
      %v7468 = vpop.f32.mrb[0].mxu0
      %7469 = vmatprep.mubr.f32.mxu0 %v6105
      %7470 = vmatmul.mubr.f32.gmra.mrb[0].mxu0 %v6104
      %v7471 = vpop.f32.mrb[0].mxu0
      %v7472 = vadd.f32 %v7087, %v7471
      %v7473 = vpop.f32.mrb[0].mxu0
      %7474 = vmatprep.mubr.f32.mxu0 %v6113
      %7475 = vmatmul.mubr.f32.gmra.mrb[0].mxu0 %v6112
      %v7476 = vpop.f32.mrb[0].mxu0
      %v7477 = vadd.f32 %v7092, %v7476
      %v7478 = vpop.f32.mrb[0].mxu0
      %7479 = vmatprep.mubr.f32.mxu0 %v6121
      %7480 = vmatmul.mubr.f32.gmra.mrb[0].mxu0 %v6120
      %v7481 = vpop.f32.mrb[0].mxu0
      %v7482 = vadd.f32 %v7097, %v7481
      %v7483 = vpop.f32.mrb[0].mxu0
      %7484 = vmatprep.mubr.f32.mxu0 %v6129
      %7485 = vmatmul.mubr.f32.gmra.mrb[0].mxu0 %v6128
      %v7486 = vpop.f32.mrb[0].mxu0
      %v7487 = vadd.f32 %v7102, %v7486
      %v7488 = vpop.f32.mrb[0].mxu0
      %7489 = vmatprep.mubr.f32.mxu0 %v6137
      %7490 = vmatmul.mubr.f32.gmra.mrb[0].mxu0 %v6136
      %v7491 = vpop.f32.mrb[0].mxu0
      %v7492 = vadd.f32 %v7107, %v7491
      %v7493 = vpop.f32.mrb[0].mxu0
      %7494 = vmatprep.mubr.f32.mxu0 %v6145
      %7495 = vmatmul.mubr.f32.gmra.mrb[0].mxu0 %v6144
      %v7496 = vpop.f32.mrb[0].mxu0
      %v7497 = vadd.f32 %v7112, %v7496
      %v7498 = vpop.f32.mrb[0].mxu0
      %7499 = vmatprep.mubr.f32.mxu0 %v6153
      %7500 = vmatmul.mubr.f32.gmra.mrb[0].mxu0 %v6152
      %v7501 = vpop.f32.mrb[0].mxu0
      %v7502 = vadd.f32 %v7117, %v7501
      %v7503 = vpop.f32.mrb[0].mxu0
      %7504 = vmatprep.mubr.f32.mxu0 %v6161
      %7505 = vmatmul.mubr.f32.gmra.mrb[0].mxu0 %v6160
      %v7506 = vpop.f32.mrb[0].mxu0
      %v7507 = vadd.f32 %v7122, %v7506
      %v7508 = vpop.f32.mrb[0].mxu0
      %7509 = vmatprep.mubr.f32.mxu0 %v6169
      %7510 = vmatmul.mubr.f32.gmra.mrb[0].mxu0 %v6168
      %v7511 = vpop.f32.mrb[0].mxu0
      %v7512 = vadd.f32 %v7127, %v7511
      %v7513 = vpop.f32.mrb[0].mxu0
      %7514 = vmatprep.mubr.f32.mxu0 %v6177
      %7515 = vmatmul.mubr.f32.gmra.mrb[0].mxu0 %v6176
      %v7516 = vpop.f32.mrb[0].mxu0
      %v7517 = vadd.f32 %v7132, %v7516
      %v7518 = vpop.f32.mrb[0].mxu0
      %7519 = vmatprep.mubr.f32.mxu0 %v6185
      %7520 = vmatmul.mubr.f32.gmra.mrb[0].mxu0 %v6184
      %v7521 = vpop.f32.mrb[0].mxu0
      %v7522 = vadd.f32 %v7137, %v7521
      %v7523 = vpop.f32.mrb[0].mxu0
      %7524 = vmatprep.mubr.f32.mxu0 %v6193
      %7525 = vmatmul.mubr.f32.gmra.mrb[0].mxu0 %v6192
      %v7526 = vpop.f32.mrb[0].mxu0
      %v7527 = vadd.f32 %v7142, %v7526
      %v7528 = vpop.f32.mrb[0].mxu0
      %7529 = vmatprep.mubr.f32.mxu0 %v6201
      %7530 = vmatmul.mubr.f32.gmra.mrb[0].mxu0 %v6200
      %v7531 = vpop.f32.mrb[0].mxu0
      %v7532 = vadd.f32 %v7147, %v7531
      %v7533 = vpop.f32.mrb[0].mxu0
      %7534 = vmatprep.mubr.f32.mxu0 %v6209
      %7535 = vmatmul.mubr.f32.gmra.mrb[0].mxu0 %v6208
      %v7536 = vpop.f32.mrb[0].mxu0
      %v7537 = vadd.f32 %v7152, %v7536
      %v7538 = vpop.f32.mrb[0].mxu0
      %7539 = vmatprep.mubr.f32.mxu0 %v6217
      %7540 = vmatmul.mubr.f32.gmra.mrb[0].mxu0 %v6216
      %v7541 = vpop.f32.mrb[0].mxu0
      %v7542 = vadd.f32 %v7157, %v7541
      %v7543 = vpop.f32.mrb[0].mxu0
      %7544 = vmatprep.mubr.f32.mxu0 %v6225
      %7545 = vmatmul.mubr.f32.gmra.mrb[0].mxu0 %v6224
      %v7546 = vpop.f32.mrb[0].mxu0
      %v7547 = vadd.f32 %v7162, %v7546
      %v7548 = vpop.f32.mrb[0].mxu0
      %7549 = vmatprep.mubr.f32.mxu0 %v6233
      %7550 = vmatmul.mubr.f32.gmra.mrb[0].mxu0 %v6232
      %v7551 = vpop.f32.mrb[0].mxu0
      %v7552 = vadd.f32 %v7167, %v7551
      %v7553 = vpop.f32.mrb[0].mxu0
      %7554 = vmatprep.mubr.f32.mxu0 %v6241
      %7555 = vmatmul.mubr.f32.gmra.mrb[0].mxu0 %v6240
      %v7556 = vpop.f32.mrb[0].mxu0
      %v7557 = vadd.f32 %v7172, %v7556
      %v7558 = vpop.f32.mrb[0].mxu0
      %7559 = vmatprep.mubr.f32.mxu0 %v6249
      %7560 = vmatmul.mubr.f32.gmra.mrb[0].mxu0 %v6248
      %v7561 = vpop.f32.mrb[0].mxu0
      %v7562 = vadd.f32 %v7177, %v7561
      %v7563 = vpop.f32.mrb[0].mxu0
      %7564 = vmatprep.mubr.f32.mxu0 %v6257
      %7565 = vmatmul.mubr.f32.gmra.mrb[0].mxu0 %v6256
      %v7566 = vpop.f32.mrb[0].mxu0
      %v7567 = vadd.f32 %v7182, %v7566
      %v7568 = vpop.f32.mrb[0].mxu0
      %7569 = vmatprep.mubr.f32.mxu0 %v6265
      %7570 = vmatmul.mubr.f32.gmra.mrb[0].mxu0 %v6264
      %v7571 = vpop.f32.mrb[0].mxu0
      %v7572 = vadd.f32 %v7187, %v7571
      %v7573 = vpop.f32.mrb[0].mxu0
      %7574 = vmatprep.mubr.f32.mxu0 %v6273
      %7575 = vmatmul.mubr.f32.gmra.mrb[0].mxu0 %v6272
      %v7576 = vpop.f32.mrb[0].mxu0
      %v7577 = vadd.f32 %v7192, %v7576
      %v7578 = vpop.f32.mrb[0].mxu0
      %7579 = vmatprep.mubr.f32.mxu0 %v6281
      %7580 = vmatmul.mubr.f32.gmra.mrb[0].mxu0 %v6280
      %v7581 = vpop.f32.mrb[0].mxu0
      %v7582 = vadd.f32 %v7197, %v7581
      %v7583 = vpop.f32.mrb[0].mxu0
      %7584 = vmatprep.mubr.f32.mxu0 %v6289
      %7585 = vmatmul.mubr.f32.gmra.mrb[0].mxu0 %v6288
      %v7586 = vpop.f32.mrb[0].mxu0
      %v7587 = vadd.f32 %v7202, %v7586
      %v7588 = vpop.f32.mrb[0].mxu0
      %7589 = vmatprep.mubr.f32.mxu0 %v6297
      %7590 = vmatmul.mubr.f32.gmra.mrb[0].mxu0 %v6296
      %v7591 = vpop.f32.mrb[0].mxu0
      %v7592 = vadd.f32 %v7207, %v7591
      %v7593 = vpop.f32.mrb[0].mxu0
      %7594 = vmatprep.mubr.f32.mxu0 %v6305
      %7595 = vmatmul.mubr.f32.gmra.mrb[0].mxu0 %v6304
      %v7596 = vpop.f32.mrb[0].mxu0
      %v7597 = vadd.f32 %v7212, %v7596
      %v7598 = vpop.f32.mrb[0].mxu0
      %7599 = vmatprep.mubr.f32.mxu0 %v6313
      %7600 = vmatmul.mubr.f32.gmra.mrb[0].mxu0 %v6312
      %v7601 = vpop.f32.mrb[0].mxu0
      %v7602 = vadd.f32 %v7217, %v7601
      %v7603 = vpop.f32.mrb[0].mxu0
      %7604 = vmatprep.mubr.f32.mxu0 %v6321
      %7605 = vmatmul.mubr.f32.gmra.mrb[0].mxu0 %v6320
      %v7606 = vpop.f32.mrb[0].mxu0
      %v7607 = vadd.f32 %v7222, %v7606
      %v7608 = vpop.f32.mrb[0].mxu0
      %7609 = vmatprep.mubr.f32.mxu0 %v6329
      %7610 = vmatmul.mubr.f32.gmra.mrb[0].mxu0 %v6328
      %v7611 = vpop.f32.mrb[0].mxu0
      %v7612 = vadd.f32 %v7227, %v7611
      %v7613 = vpop.f32.mrb[0].mxu0
      %7614 = vdwg.mxu0
      %7615 = vmatprep.subr.mxu0 0.0
      %7616 = vmatpush1.msra.mxu0 %v6428
      %7617 = vmatprep.subr.mxu0 0.0
      %7618 = vmatpush1.msra.mxu0 %v6429
      %7619 = vmatprep.subr.mxu0 0.0
      %7620 = vmatpush1.msra.mxu0 %v6430
      %7621 = vmatprep.subr.mxu0 0.0
      %7622 = vmatpush1.msra.mxu0 %v6431
      %7623 = vmatprep.subr.mxu0 0.0
      %7624 = vmatpush1.msra.mxu0 %v6432
      %7625 = vmatprep.subr.mxu0 0.0
      %7626 = vmatpush1.msra.mxu0 %v6433
      %7627 = vmatprep.subr.mxu0 0.0
      %7628 = vmatpush1.msra.mxu0 %v6434
      %7629 = vmatprep.subr.mxu0 0.0
      %7630 = vmatpush1.msra.mxu0 %v6435
      %7631 = vmatprep.subr.mxu0 0.0
      %7632 = vmatpush1.msra.mxu0 %v6436
      %7633 = vmatprep.subr.mxu0 0.0
      %7634 = vmatpush1.msra.mxu0 %v6437
      %7635 = vmatprep.subr.mxu0 0.0
      %7636 = vmatpush1.msra.mxu0 %v6438
      %7637 = vmatprep.subr.mxu0 0.0
      %7638 = vmatpush1.msra.mxu0 %v6439
      %7639 = vmatprep.subr.mxu0 0.0
      %7640 = vmatpush1.msra.mxu0 %v6440
      %7641 = vmatprep.subr.mxu0 0.0
      %7642 = vmatpush1.msra.mxu0 %v6441
      %7643 = vmatprep.subr.mxu0 0.0
      %7644 = vmatpush1.msra.mxu0 %v6442
      %7645 = vmatprep.subr.mxu0 0.0
      %7646 = vmatpush1.msra.mxu0 %v6443
      %7647 = vmatprep.subr.mxu0 0.0
      %7648 = vmatpush1.msra.mxu0 %v6444
      %7649 = vmatprep.subr.mxu0 0.0
      %7650 = vmatpush1.msra.mxu0 %v6445
      %7651 = vmatprep.subr.mxu0 0.0
      %7652 = vmatpush1.msra.mxu0 %v6446
      %7653 = vmatprep.subr.mxu0 0.0
      %7654 = vmatpush1.msra.mxu0 %v6447
      %7655 = vmatprep.subr.mxu0 0.0
      %7656 = vmatpush1.msra.mxu0 %v6448
      %7657 = vmatprep.subr.mxu0 0.0
      %7658 = vmatpush1.msra.mxu0 %v6449
      %7659 = vmatprep.subr.mxu0 0.0
      %7660 = vmatpush1.msra.mxu0 %v6450
      %7661 = vmatprep.subr.mxu0 0.0
      %7662 = vmatpush1.msra.mxu0 %v6451
      %7663 = vmatprep.subr.mxu0 0.0
      %7664 = vmatpush1.msra.mxu0 %v6452
      %7665 = vmatprep.subr.mxu0 0.0
      %7666 = vmatpush1.msra.mxu0 %v6453
      %7667 = vmatprep.subr.mxu0 0.0
      %7668 = vmatpush1.msra.mxu0 %v6454
      %7669 = vmatprep.subr.mxu0 0.0
      %7670 = vmatpush1.msra.mxu0 %v6455
      %7671 = vmatprep.subr.mxu0 0.0
      %7672 = vmatpush1.msra.mxu0 %v6456
      %7673 = vmatprep.subr.mxu0 0.0
      %7674 = vmatpush1.msra.mxu0 %v6457
      %7675 = vmatprep.subr.mxu0 0.0
      %7676 = vmatpush1.msra.mxu0 %v6458
      %7677 = vmatprep.subr.mxu0 0.0
      %7678 = vmatpush1.msra.mxu0 %v6459
      %7679 = vmatprep.mubr.f32.mxu0 %v5827
      %7680 = vmatmul.mubr.f32.gmra.mrb[0].mxu0 %v5826
      %v7681 = vpop.f32.mrb[0].mxu0
      %v7682 = vadd.f32 %v7297, %v7681
      %v7683 = vpop.f32.mrb[0].mxu0
      %7684 = vmatprep.mubr.f32.mxu0 %v5835
      %7685 = vmatmul.mubr.f32.gmra.mrb[0].mxu0 %v5834
      %v7686 = vpop.f32.mrb[0].mxu0
      %v7687 = vadd.f32 %v7302, %v7686
      %v7688 = vpop.f32.mrb[0].mxu0
      %7689 = vmatprep.mubr.f32.mxu0 %v5843
      %7690 = vmatmul.mubr.f32.gmra.mrb[0].mxu0 %v5842
      %v7691 = vpop.f32.mrb[0].mxu0
      %v7692 = vadd.f32 %v7307, %v7691
      %v7693 = vpop.f32.mrb[0].mxu0
      %7694 = vmatprep.mubr.f32.mxu0 %v5851
      %7695 = vmatmul.mubr.f32.gmra.mrb[0].mxu0 %v5850
      %v7696 = vpop.f32.mrb[0].mxu0
      %v7697 = vadd.f32 %v7312, %v7696
      %v7698 = vpop.f32.mrb[0].mxu0
      %7699 = vmatprep.mubr.f32.mxu0 %v5859
      %7700 = vmatmul.mubr.f32.gmra.mrb[0].mxu0 %v5858
      %v7701 = vpop.f32.mrb[0].mxu0
      %v7702 = vadd.f32 %v7317, %v7701
      %v7703 = vpop.f32.mrb[0].mxu0
      %7704 = vmatprep.mubr.f32.mxu0 %v5867
      %7705 = vmatmul.mubr.f32.gmra.mrb[0].mxu0 %v5866
      %v7706 = vpop.f32.mrb[0].mxu0
      %v7707 = vadd.f32 %v7322, %v7706
      %v7708 = vpop.f32.mrb[0].mxu0
      %7709 = vmatprep.mubr.f32.mxu0 %v5875
      %7710 = vmatmul.mubr.f32.gmra.mrb[0].mxu0 %v5874
      %v7711 = vpop.f32.mrb[0].mxu0
      %v7712 = vadd.f32 %v7327, %v7711
      %v7713 = vpop.f32.mrb[0].mxu0
      %7714 = vmatprep.mubr.f32.mxu0 %v5883
      %7715 = vmatmul.mubr.f32.gmra.mrb[0].mxu0 %v5882
      %v7716 = vpop.f32.mrb[0].mxu0
      %v7717 = vadd.f32 %v7332, %v7716
      %v7718 = vpop.f32.mrb[0].mxu0
      %7719 = vmatprep.mubr.f32.mxu0 %v5891
      %7720 = vmatmul.mubr.f32.gmra.mrb[0].mxu0 %v5890
      %v7721 = vpop.f32.mrb[0].mxu0
      %v7722 = vadd.f32 %v7337, %v7721
      %v7723 = vpop.f32.mrb[0].mxu0
      %7724 = vmatprep.mubr.f32.mxu0 %v5899
      %7725 = vmatmul.mubr.f32.gmra.mrb[0].mxu0 %v5898
      %v7726 = vpop.f32.mrb[0].mxu0
      %v7727 = vadd.f32 %v7342, %v7726
      %v7728 = vpop.f32.mrb[0].mxu0
      %7729 = vmatprep.mubr.f32.mxu0 %v5907
      %7730 = vmatmul.mubr.f32.gmra.mrb[0].mxu0 %v5906
      %v7731 = vpop.f32.mrb[0].mxu0
      %v7732 = vadd.f32 %v7347, %v7731
      %v7733 = vpop.f32.mrb[0].mxu0
      %7734 = vmatprep.mubr.f32.mxu0 %v5915
      %7735 = vmatmul.mubr.f32.gmra.mrb[0].mxu0 %v5914
      %v7736 = vpop.f32.mrb[0].mxu0
      %v7737 = vadd.f32 %v7352, %v7736
      %v7738 = vpop.f32.mrb[0].mxu0
      %7739 = vmatprep.mubr.f32.mxu0 %v5923
      %7740 = vmatmul.mubr.f32.gmra.mrb[0].mxu0 %v5922
      %v7741 = vpop.f32.mrb[0].mxu0
      %v7742 = vadd.f32 %v7357, %v7741
      %v7743 = vpop.f32.mrb[0].mxu0
      %7744 = vmatprep.mubr.f32.mxu0 %v5931
      %7745 = vmatmul.mubr.f32.gmra.mrb[0].mxu0 %v5930
      %v7746 = vpop.f32.mrb[0].mxu0
      %v7747 = vadd.f32 %v7362, %v7746
      %v7748 = vpop.f32.mrb[0].mxu0
      %7749 = vmatprep.mubr.f32.mxu0 %v5939
      %7750 = vmatmul.mubr.f32.gmra.mrb[0].mxu0 %v5938
      %v7751 = vpop.f32.mrb[0].mxu0
      %v7752 = vadd.f32 %v7367, %v7751
      %v7753 = vpop.f32.mrb[0].mxu0
      %7754 = vmatprep.mubr.f32.mxu0 %v5947
      %7755 = vmatmul.mubr.f32.gmra.mrb[0].mxu0 %v5946
      %v7756 = vpop.f32.mrb[0].mxu0
      %v7757 = vadd.f32 %v7372, %v7756
      %v7758 = vpop.f32.mrb[0].mxu0
      %7759 = vmatprep.mubr.f32.mxu0 %v5955
      %7760 = vmatmul.mubr.f32.gmra.mrb[0].mxu0 %v5954
      %v7761 = vpop.f32.mrb[0].mxu0
      %v7762 = vadd.f32 %v7377, %v7761
      %v7763 = vpop.f32.mrb[0].mxu0
      %7764 = vmatprep.mubr.f32.mxu0 %v5963
      %7765 = vmatmul.mubr.f32.gmra.mrb[0].mxu0 %v5962
      %v7766 = vpop.f32.mrb[0].mxu0
      %v7767 = vadd.f32 %v7382, %v7766
      %v7768 = vpop.f32.mrb[0].mxu0
      %7769 = vmatprep.mubr.f32.mxu0 %v5971
      %7770 = vmatmul.mubr.f32.gmra.mrb[0].mxu0 %v5970
      %v7771 = vpop.f32.mrb[0].mxu0
      %v7772 = vadd.f32 %v7387, %v7771
      %v7773 = vpop.f32.mrb[0].mxu0
      %7774 = vmatprep.mubr.f32.mxu0 %v5979
      %7775 = vmatmul.mubr.f32.gmra.mrb[0].mxu0 %v5978
      %v7776 = vpop.f32.mrb[0].mxu0
      %v7777 = vadd.f32 %v7392, %v7776
      %v7778 = vpop.f32.mrb[0].mxu0
      %7779 = vmatprep.mubr.f32.mxu0 %v5987
      %7780 = vmatmul.mubr.f32.gmra.mrb[0].mxu0 %v5986
      %v7781 = vpop.f32.mrb[0].mxu0
      %v7782 = vadd.f32 %v7397, %v7781
      %v7783 = vpop.f32.mrb[0].mxu0
      %7784 = vmatprep.mubr.f32.mxu0 %v5995
      %7785 = vmatmul.mubr.f32.gmra.mrb[0].mxu0 %v5994
      %v7786 = vpop.f32.mrb[0].mxu0
      %v7787 = vadd.f32 %v7402, %v7786
      %v7788 = vpop.f32.mrb[0].mxu0
      %7789 = vmatprep.mubr.f32.mxu0 %v6003
      %7790 = vmatmul.mubr.f32.gmra.mrb[0].mxu0 %v6002
      %v7791 = vpop.f32.mrb[0].mxu0
      %v7792 = vadd.f32 %v7407, %v7791
      %v7793 = vpop.f32.mrb[0].mxu0
      %7794 = vmatprep.mubr.f32.mxu0 %v6011
      %7795 = vmatmul.mubr.f32.gmra.mrb[0].mxu0 %v6010
      %v7796 = vpop.f32.mrb[0].mxu0
      %v7797 = vadd.f32 %v7412, %v7796
      %v7798 = vpop.f32.mrb[0].mxu0
      %7799 = vmatprep.mubr.f32.mxu0 %v6019
      %7800 = vmatmul.mubr.f32.gmra.mrb[0].mxu0 %v6018
      %v7801 = vpop.f32.mrb[0].mxu0
      %v7802 = vadd.f32 %v7417, %v7801
      %v7803 = vpop.f32.mrb[0].mxu0
      %7804 = vmatprep.mubr.f32.mxu0 %v6027
      %7805 = vmatmul.mubr.f32.gmra.mrb[0].mxu0 %v6026
      %v7806 = vpop.f32.mrb[0].mxu0
      %v7807 = vadd.f32 %v7422, %v7806
      %v7808 = vpop.f32.mrb[0].mxu0
      %7809 = vmatprep.mubr.f32.mxu0 %v6035
      %7810 = vmatmul.mubr.f32.gmra.mrb[0].mxu0 %v6034
      %v7811 = vpop.f32.mrb[0].mxu0
      %v7812 = vadd.f32 %v7427, %v7811
      %v7813 = vpop.f32.mrb[0].mxu0
      %7814 = vmatprep.mubr.f32.mxu0 %v6043
      %7815 = vmatmul.mubr.f32.gmra.mrb[0].mxu0 %v6042
      %v7816 = vpop.f32.mrb[0].mxu0
      %v7817 = vadd.f32 %v7432, %v7816
      %v7818 = vpop.f32.mrb[0].mxu0
      %7819 = vmatprep.mubr.f32.mxu0 %v6051
      %7820 = vmatmul.mubr.f32.gmra.mrb[0].mxu0 %v6050
      %v7821 = vpop.f32.mrb[0].mxu0
      %v7822 = vadd.f32 %v7437, %v7821
      %v7823 = vpop.f32.mrb[0].mxu0
      %7824 = vmatprep.mubr.f32.mxu0 %v6059
      %7825 = vmatmul.mubr.f32.gmra.mrb[0].mxu0 %v6058
      %v7826 = vpop.f32.mrb[0].mxu0
      %v7827 = vadd.f32 %v7442, %v7826
      %v7828 = vpop.f32.mrb[0].mxu0
      %7829 = vmatprep.mubr.f32.mxu0 %v6067
      %7830 = vmatmul.mubr.f32.gmra.mrb[0].mxu0 %v6066
      %v7831 = vpop.f32.mrb[0].mxu0
      %v7832 = vadd.f32 %v7447, %v7831
      %v7833 = vpop.f32.mrb[0].mxu0
      %7834 = vmatprep.mubr.f32.mxu0 %v6075
      %7835 = vmatmul.mubr.f32.gmra.mrb[0].mxu0 %v6074
      %v7836 = vpop.f32.mrb[0].mxu0
      %v7837 = vadd.f32 %v7452, %v7836
      %v7838 = vpop.f32.mrb[0].mxu0
      %7839 = vmatprep.mubr.f32.mxu0 %v6083
      %7840 = vmatmul.mubr.f32.gmra.mrb[0].mxu0 %v6082
      %v7841 = vpop.f32.mrb[0].mxu0
      %v7842 = vadd.f32 %v7457, %v7841
      %v7843 = vpop.f32.mrb[0].mxu0
      %7844 = vmatprep.mubr.f32.mxu0 %v6091
      %7845 = vmatmul.mubr.f32.gmra.mrb[0].mxu0 %v6090
      %v7846 = vpop.f32.mrb[0].mxu0
      %v7847 = vadd.f32 %v7462, %v7846
      %v7848 = vpop.f32.mrb[0].mxu0
      %7849 = vmatprep.mubr.f32.mxu0 %v6099
      %7850 = vmatmul.mubr.f32.gmra.mrb[0].mxu0 %v6098
      %v7851 = vpop.f32.mrb[0].mxu0
      %v7852 = vadd.f32 %v7467, %v7851
      %v7853 = vpop.f32.mrb[0].mxu0
      %7854 = vmatprep.mubr.f32.mxu0 %v6107
      %7855 = vmatmul.mubr.f32.gmra.mrb[0].mxu0 %v6106
      %v7856 = vpop.f32.mrb[0].mxu0
      %v7857 = vadd.f32 %v7472, %v7856
      %v7858 = vpop.f32.mrb[0].mxu0
      %7859 = vmatprep.mubr.f32.mxu0 %v6115
      %7860 = vmatmul.mubr.f32.gmra.mrb[0].mxu0 %v6114
      %v7861 = vpop.f32.mrb[0].mxu0
      %v7862 = vadd.f32 %v7477, %v7861
      %v7863 = vpop.f32.mrb[0].mxu0
      %7864 = vmatprep.mubr.f32.mxu0 %v6123
      %7865 = vmatmul.mubr.f32.gmra.mrb[0].mxu0 %v6122
      %v7866 = vpop.f32.mrb[0].mxu0
      %v7867 = vadd.f32 %v7482, %v7866
      %v7868 = vpop.f32.mrb[0].mxu0
      %7869 = vmatprep.mubr.f32.mxu0 %v6131
      %7870 = vmatmul.mubr.f32.gmra.mrb[0].mxu0 %v6130
      %v7871 = vpop.f32.mrb[0].mxu0
      %v7872 = vadd.f32 %v7487, %v7871
      %v7873 = vpop.f32.mrb[0].mxu0
      %7874 = vmatprep.mubr.f32.mxu0 %v6139
      %7875 = vmatmul.mubr.f32.gmra.mrb[0].mxu0 %v6138
      %v7876 = vpop.f32.mrb[0].mxu0
      %v7877 = vadd.f32 %v7492, %v7876
      %v7878 = vpop.f32.mrb[0].mxu0
      %7879 = vmatprep.mubr.f32.mxu0 %v6147
      %7880 = vmatmul.mubr.f32.gmra.mrb[0].mxu0 %v6146
      %v7881 = vpop.f32.mrb[0].mxu0
      %v7882 = vadd.f32 %v7497, %v7881
      %v7883 = vpop.f32.mrb[0].mxu0
      %7884 = vmatprep.mubr.f32.mxu0 %v6155
      %7885 = vmatmul.mubr.f32.gmra.mrb[0].mxu0 %v6154
      %v7886 = vpop.f32.mrb[0].mxu0
      %v7887 = vadd.f32 %v7502, %v7886
      %v7888 = vpop.f32.mrb[0].mxu0
      %7889 = vmatprep.mubr.f32.mxu0 %v6163
      %7890 = vmatmul.mubr.f32.gmra.mrb[0].mxu0 %v6162
      %v7891 = vpop.f32.mrb[0].mxu0
      %v7892 = vadd.f32 %v7507, %v7891
      %v7893 = vpop.f32.mrb[0].mxu0
      %7894 = vmatprep.mubr.f32.mxu0 %v6171
      %7895 = vmatmul.mubr.f32.gmra.mrb[0].mxu0 %v6170
      %v7896 = vpop.f32.mrb[0].mxu0
      %v7897 = vadd.f32 %v7512, %v7896
      %v7898 = vpop.f32.mrb[0].mxu0
      %7899 = vmatprep.mubr.f32.mxu0 %v6179
      %7900 = vmatmul.mubr.f32.gmra.mrb[0].mxu0 %v6178
      %v7901 = vpop.f32.mrb[0].mxu0
      %v7902 = vadd.f32 %v7517, %v7901
      %v7903 = vpop.f32.mrb[0].mxu0
      %7904 = vmatprep.mubr.f32.mxu0 %v6187
      %7905 = vmatmul.mubr.f32.gmra.mrb[0].mxu0 %v6186
      %v7906 = vpop.f32.mrb[0].mxu0
      %v7907 = vadd.f32 %v7522, %v7906
      %v7908 = vpop.f32.mrb[0].mxu0
      %7909 = vmatprep.mubr.f32.mxu0 %v6195
      %7910 = vmatmul.mubr.f32.gmra.mrb[0].mxu0 %v6194
      %v7911 = vpop.f32.mrb[0].mxu0
      %v7912 = vadd.f32 %v7527, %v7911
      %v7913 = vpop.f32.mrb[0].mxu0
      %7914 = vmatprep.mubr.f32.mxu0 %v6203
      %7915 = vmatmul.mubr.f32.gmra.mrb[0].mxu0 %v6202
      %v7916 = vpop.f32.mrb[0].mxu0
      %v7917 = vadd.f32 %v7532, %v7916
      %v7918 = vpop.f32.mrb[0].mxu0
      %7919 = vmatprep.mubr.f32.mxu0 %v6211
      %7920 = vmatmul.mubr.f32.gmra.mrb[0].mxu0 %v6210
      %v7921 = vpop.f32.mrb[0].mxu0
      %v7922 = vadd.f32 %v7537, %v7921
      %v7923 = vpop.f32.mrb[0].mxu0
      %7924 = vmatprep.mubr.f32.mxu0 %v6219
      %7925 = vmatmul.mubr.f32.gmra.mrb[0].mxu0 %v6218
      %v7926 = vpop.f32.mrb[0].mxu0
      %v7927 = vadd.f32 %v7542, %v7926
      %v7928 = vpop.f32.mrb[0].mxu0
      %7929 = vmatprep.mubr.f32.mxu0 %v6227
      %7930 = vmatmul.mubr.f32.gmra.mrb[0].mxu0 %v6226
      %v7931 = vpop.f32.mrb[0].mxu0
      %v7932 = vadd.f32 %v7547, %v7931
      %v7933 = vpop.f32.mrb[0].mxu0
      %7934 = vmatprep.mubr.f32.mxu0 %v6235
      %7935 = vmatmul.mubr.f32.gmra.mrb[0].mxu0 %v6234
      %v7936 = vpop.f32.mrb[0].mxu0
      %v7937 = vadd.f32 %v7552, %v7936
      %v7938 = vpop.f32.mrb[0].mxu0
      %7939 = vmatprep.mubr.f32.mxu0 %v6243
      %7940 = vmatmul.mubr.f32.gmra.mrb[0].mxu0 %v6242
      %v7941 = vpop.f32.mrb[0].mxu0
      %v7942 = vadd.f32 %v7557, %v7941
      %v7943 = vpop.f32.mrb[0].mxu0
      %7944 = vmatprep.mubr.f32.mxu0 %v6251
      %7945 = vmatmul.mubr.f32.gmra.mrb[0].mxu0 %v6250
      %v7946 = vpop.f32.mrb[0].mxu0
      %v7947 = vadd.f32 %v7562, %v7946
      %v7948 = vpop.f32.mrb[0].mxu0
      %7949 = vmatprep.mubr.f32.mxu0 %v6259
      %7950 = vmatmul.mubr.f32.gmra.mrb[0].mxu0 %v6258
      %v7951 = vpop.f32.mrb[0].mxu0
      %v7952 = vadd.f32 %v7567, %v7951
      %v7953 = vpop.f32.mrb[0].mxu0
      %7954 = vmatprep.mubr.f32.mxu0 %v6267
      %7955 = vmatmul.mubr.f32.gmra.mrb[0].mxu0 %v6266
      %v7956 = vpop.f32.mrb[0].mxu0
      %v7957 = vadd.f32 %v7572, %v7956
      %v7958 = vpop.f32.mrb[0].mxu0
      %7959 = vmatprep.mubr.f32.mxu0 %v6275
      %7960 = vmatmul.mubr.f32.gmra.mrb[0].mxu0 %v6274
      %v7961 = vpop.f32.mrb[0].mxu0
      %v7962 = vadd.f32 %v7577, %v7961
      %v7963 = vpop.f32.mrb[0].mxu0
      %7964 = vmatprep.mubr.f32.mxu0 %v6283
      %7965 = vmatmul.mubr.f32.gmra.mrb[0].mxu0 %v6282
      %v7966 = vpop.f32.mrb[0].mxu0
      %v7967 = vadd.f32 %v7582, %v7966
      %v7968 = vpop.f32.mrb[0].mxu0
      %7969 = vmatprep.mubr.f32.mxu0 %v6291
      %7970 = vmatmul.mubr.f32.gmra.mrb[0].mxu0 %v6290
      %v7971 = vpop.f32.mrb[0].mxu0
      %v7972 = vadd.f32 %v7587, %v7971
      %v7973 = vpop.f32.mrb[0].mxu0
      %7974 = vmatprep.mubr.f32.mxu0 %v6299
      %7975 = vmatmul.mubr.f32.gmra.mrb[0].mxu0 %v6298
      %v7976 = vpop.f32.mrb[0].mxu0
      %v7977 = vadd.f32 %v7592, %v7976
      %v7978 = vpop.f32.mrb[0].mxu0
      %7979 = vmatprep.mubr.f32.mxu0 %v6307
      %7980 = vmatmul.mubr.f32.gmra.mrb[0].mxu0 %v6306
      %v7981 = vpop.f32.mrb[0].mxu0
      %v7982 = vadd.f32 %v7597, %v7981
      %v7983 = vpop.f32.mrb[0].mxu0
      %7984 = vmatprep.mubr.f32.mxu0 %v6315
      %7985 = vmatmul.mubr.f32.gmra.mrb[0].mxu0 %v6314
      %v7986 = vpop.f32.mrb[0].mxu0
      %v7987 = vadd.f32 %v7602, %v7986
      %v7988 = vpop.f32.mrb[0].mxu0
      %7989 = vmatprep.mubr.f32.mxu0 %v6323
      %7990 = vmatmul.mubr.f32.gmra.mrb[0].mxu0 %v6322
      %v7991 = vpop.f32.mrb[0].mxu0
      %v7992 = vadd.f32 %v7607, %v7991
      %v7993 = vpop.f32.mrb[0].mxu0
      %7994 = vmatprep.mubr.f32.mxu0 %v6331
      %7995 = vmatmul.mubr.f32.gmra.mrb[0].mxu0 %v6330
      %v7996 = vpop.f32.mrb[0].mxu0
      %v7997 = vadd.f32 %v7612, %v7996
      %v7998 = vpop.f32.mrb[0].mxu0
      %7999 = vdwg.mxu0
      %v8000 = vld [vmem:[%s388] sm:$0xff]
      %v8001 = vld [vmem:[%s388 + $0x8] sm:$0xff]
      %v8002 = vld [vmem:[%s388 + $0x10] sm:$0xff]
      %v8003 = vld [vmem:[%s388 + $0x18] sm:$0xff]
      %v8004 = vld [vmem:[%s388 + $0x20] sm:$0xff]
      %v8005 = vld [vmem:[%s388 + $0x28] sm:$0xff]
      %v8006 = vld [vmem:[%s388 + $0x30] sm:$0xff]
      %v8007 = vld [vmem:[%s388 + $0x38] sm:$0xff]
      %v8008 = vld [vmem:[%s388 + $0x40] sm:$0xff]
      %v8009 = vld [vmem:[%s388 + $0x48] sm:$0xff]
      %v8010 = vld [vmem:[%s388 + $0x50] sm:$0xff]
      %v8011 = vld [vmem:[%s388 + $0x58] sm:$0xff]
      %v8012 = vld [vmem:[%s388 + $0x60] sm:$0xff]
      %v8013 = vld [vmem:[%s388 + $0x68] sm:$0xff]
      %v8014 = vld [vmem:[%s388 + $0x70] sm:$0xff]
      %v8015 = vld [vmem:[%s388 + $0x78] sm:$0xff]
      %v8016 = vld [vmem:[%s388 + $0x80] sm:$0xff]
      %v8017 = vld [vmem:[%s388 + $0x88] sm:$0xff]
      %v8018 = vld [vmem:[%s388 + $0x90] sm:$0xff]
      %v8019 = vld [vmem:[%s388 + $0x98] sm:$0xff]
      %v8020 = vld [vmem:[%s388 + $0xa0] sm:$0xff]
      %v8021 = vld [vmem:[%s388 + $0xa8] sm:$0xff]
      %v8022 = vld [vmem:[%s388 + $0xb0] sm:$0xff]
      %v8023 = vld [vmem:[%s388 + $0xb8] sm:$0xff]
      %v8024 = vld [vmem:[%s388 + $0xc0] sm:$0xff]
      %v8025 = vld [vmem:[%s388 + $0xc8] sm:$0xff]
      %v8026 = vld [vmem:[%s388 + $0xd0] sm:$0xff]
      %v8027 = vld [vmem:[%s388 + $0xd8] sm:$0xff]
      %v8028 = vld [vmem:[%s388 + $0xe0] sm:$0xff]
      %v8029 = vld [vmem:[%s388 + $0xe8] sm:$0xff]
      %v8030 = vld [vmem:[%s388 + $0xf0] sm:$0xff]
      %v8031 = vld [vmem:[%s388 + $0xf8] sm:$0xff]
      %v8032 = vld [vmem:[%s388 + $0x100] sm:$0xff]
      %v8033 = vld [vmem:[%s388 + $0x108] sm:$0xff]
      %v8034 = vld [vmem:[%s388 + $0x110] sm:$0xff]
      %v8035 = vld [vmem:[%s388 + $0x118] sm:$0xff]
      %v8036 = vld [vmem:[%s388 + $0x120] sm:$0xff]
      %v8037 = vld [vmem:[%s388 + $0x128] sm:$0xff]
      %v8038 = vld [vmem:[%s388 + $0x130] sm:$0xff]
      %v8039 = vld [vmem:[%s388 + $0x138] sm:$0xff]
      %v8040 = vld [vmem:[%s388 + $0x140] sm:$0xff]
      %v8041 = vld [vmem:[%s388 + $0x148] sm:$0xff]
      %v8042 = vld [vmem:[%s388 + $0x150] sm:$0xff]
      %v8043 = vld [vmem:[%s388 + $0x158] sm:$0xff]
      %v8044 = vld [vmem:[%s388 + $0x160] sm:$0xff]
      %v8045 = vld [vmem:[%s388 + $0x168] sm:$0xff]
      %v8046 = vld [vmem:[%s388 + $0x170] sm:$0xff]
      %v8047 = vld [vmem:[%s388 + $0x178] sm:$0xff]
      %v8048 = vld [vmem:[%s388 + $0x180] sm:$0xff]
      %v8049 = vld [vmem:[%s388 + $0x188] sm:$0xff]
      %v8050 = vld [vmem:[%s388 + $0x190] sm:$0xff]
      %v8051 = vld [vmem:[%s388 + $0x198] sm:$0xff]
      %v8052 = vld [vmem:[%s388 + $0x1a0] sm:$0xff]
      %v8053 = vld [vmem:[%s388 + $0x1a8] sm:$0xff]
      %v8054 = vld [vmem:[%s388 + $0x1b0] sm:$0xff]
      %v8055 = vld [vmem:[%s388 + $0x1b8] sm:$0xff]
      %v8056 = vld [vmem:[%s388 + $0x1c0] sm:$0xff]
      %v8057 = vld [vmem:[%s388 + $0x1c8] sm:$0xff]
      %v8058 = vld [vmem:[%s388 + $0x1d0] sm:$0xff]
      %v8059 = vld [vmem:[%s388 + $0x1d8] sm:$0xff]
      %v8060 = vld [vmem:[%s388 + $0x1e0] sm:$0xff]
      %v8061 = vld [vmem:[%s388 + $0x1e8] sm:$0xff]
      %v8062 = vld [vmem:[%s388 + $0x1f0] sm:$0xff]
      %v8063 = vld [vmem:[%s388 + $0x1f8] sm:$0xff]
      %8065 = vset.pattern.permute.xlu0 0
      %8066 = vperm.xlu0 %8065, %v8000
      %v8067 = vpop.permute.xlu0 %8066
      %8070 = vset.pattern.permute.xlu0 0
      %8071 = vperm.xlu0 %8070, %v8001
      %v8072 = vpop.permute.xlu0 %8071
      %8075 = vset.pattern.permute.xlu0 0
      %8076 = vperm.xlu0 %8075, %v8002
      %v8077 = vpop.permute.xlu0 %8076
      %8080 = vset.pattern.permute.xlu0 0
      %8081 = vperm.xlu0 %8080, %v8003
      %v8082 = vpop.permute.xlu0 %8081
      %8085 = vset.pattern.permute.xlu0 0
      %8086 = vperm.xlu0 %8085, %v8004
      %v8087 = vpop.permute.xlu0 %8086
      %8090 = vset.pattern.permute.xlu0 0
      %8091 = vperm.xlu0 %8090, %v8005
      %v8092 = vpop.permute.xlu0 %8091
      %8095 = vset.pattern.permute.xlu0 0
      %8096 = vperm.xlu0 %8095, %v8006
      %v8097 = vpop.permute.xlu0 %8096
      %8100 = vset.pattern.permute.xlu0 0
      %8101 = vperm.xlu0 %8100, %v8007
      %v8102 = vpop.permute.xlu0 %8101
      %8105 = vset.pattern.permute.xlu0 0
      %8106 = vperm.xlu0 %8105, %v8008
      %v8107 = vpop.permute.xlu0 %8106
      %8110 = vset.pattern.permute.xlu0 0
      %8111 = vperm.xlu0 %8110, %v8009
      %v8112 = vpop.permute.xlu0 %8111
      %8115 = vset.pattern.permute.xlu0 0
      %8116 = vperm.xlu0 %8115, %v8010
      %v8117 = vpop.permute.xlu0 %8116
      %8120 = vset.pattern.permute.xlu0 0
      %8121 = vperm.xlu0 %8120, %v8011
      %v8122 = vpop.permute.xlu0 %8121
      %8125 = vset.pattern.permute.xlu0 0
      %8126 = vperm.xlu0 %8125, %v8012
      %v8127 = vpop.permute.xlu0 %8126
      %8130 = vset.pattern.permute.xlu0 0
      %8131 = vperm.xlu0 %8130, %v8013
      %v8132 = vpop.permute.xlu0 %8131
      %8135 = vset.pattern.permute.xlu0 0
      %8136 = vperm.xlu0 %8135, %v8014
      %v8137 = vpop.permute.xlu0 %8136
      %8140 = vset.pattern.permute.xlu0 0
      %8141 = vperm.xlu0 %8140, %v8015
      %v8142 = vpop.permute.xlu0 %8141
      %8145 = vset.pattern.permute.xlu0 0
      %8146 = vperm.xlu0 %8145, %v8016
      %v8147 = vpop.permute.xlu0 %8146
      %8150 = vset.pattern.permute.xlu0 0
      %8151 = vperm.xlu0 %8150, %v8017
      %v8152 = vpop.permute.xlu0 %8151
      %8155 = vset.pattern.permute.xlu0 0
      %8156 = vperm.xlu0 %8155, %v8018
      %v8157 = vpop.permute.xlu0 %8156
      %8160 = vset.pattern.permute.xlu0 0
      %8161 = vperm.xlu0 %8160, %v8019
      %v8162 = vpop.permute.xlu0 %8161
      %8165 = vset.pattern.permute.xlu0 0
      %8166 = vperm.xlu0 %8165, %v8020
      %v8167 = vpop.permute.xlu0 %8166
      %8170 = vset.pattern.permute.xlu0 0
      %8171 = vperm.xlu0 %8170, %v8021
      %v8172 = vpop.permute.xlu0 %8171
      %8175 = vset.pattern.permute.xlu0 0
      %8176 = vperm.xlu0 %8175, %v8022
      %v8177 = vpop.permute.xlu0 %8176
      %8180 = vset.pattern.permute.xlu0 0
      %8181 = vperm.xlu0 %8180, %v8023
      %v8182 = vpop.permute.xlu0 %8181
      %8185 = vset.pattern.permute.xlu0 0
      %8186 = vperm.xlu0 %8185, %v8024
      %v8187 = vpop.permute.xlu0 %8186
      %8190 = vset.pattern.permute.xlu0 0
      %8191 = vperm.xlu0 %8190, %v8025
      %v8192 = vpop.permute.xlu0 %8191
      %8195 = vset.pattern.permute.xlu0 0
      %8196 = vperm.xlu0 %8195, %v8026
      %v8197 = vpop.permute.xlu0 %8196
      %8200 = vset.pattern.permute.xlu0 0
      %8201 = vperm.xlu0 %8200, %v8027
      %v8202 = vpop.permute.xlu0 %8201
      %8205 = vset.pattern.permute.xlu0 0
      %8206 = vperm.xlu0 %8205, %v8028
      %v8207 = vpop.permute.xlu0 %8206
      %8210 = vset.pattern.permute.xlu0 0
      %8211 = vperm.xlu0 %8210, %v8029
      %v8212 = vpop.permute.xlu0 %8211
      %8215 = vset.pattern.permute.xlu0 0
      %8216 = vperm.xlu0 %8215, %v8030
      %v8217 = vpop.permute.xlu0 %8216
      %8220 = vset.pattern.permute.xlu0 0
      %8221 = vperm.xlu0 %8220, %v8031
      %v8222 = vpop.permute.xlu0 %8221
      %8225 = vset.pattern.permute.xlu0 0
      %8226 = vperm.xlu0 %8225, %v8032
      %v8227 = vpop.permute.xlu0 %8226
      %8230 = vset.pattern.permute.xlu0 0
      %8231 = vperm.xlu0 %8230, %v8033
      %v8232 = vpop.permute.xlu0 %8231
      %8235 = vset.pattern.permute.xlu0 0
      %8236 = vperm.xlu0 %8235, %v8034
      %v8237 = vpop.permute.xlu0 %8236
      %8240 = vset.pattern.permute.xlu0 0
      %8241 = vperm.xlu0 %8240, %v8035
      %v8242 = vpop.permute.xlu0 %8241
      %8245 = vset.pattern.permute.xlu0 0
      %8246 = vperm.xlu0 %8245, %v8036
      %v8247 = vpop.permute.xlu0 %8246
      %8250 = vset.pattern.permute.xlu0 0
      %8251 = vperm.xlu0 %8250, %v8037
      %v8252 = vpop.permute.xlu0 %8251
      %8255 = vset.pattern.permute.xlu0 0
      %8256 = vperm.xlu0 %8255, %v8038
      %v8257 = vpop.permute.xlu0 %8256
      %8260 = vset.pattern.permute.xlu0 0
      %8261 = vperm.xlu0 %8260, %v8039
      %v8262 = vpop.permute.xlu0 %8261
      %8265 = vset.pattern.permute.xlu0 0
      %8266 = vperm.xlu0 %8265, %v8040
      %v8267 = vpop.permute.xlu0 %8266
      %8270 = vset.pattern.permute.xlu0 0
      %8271 = vperm.xlu0 %8270, %v8041
      %v8272 = vpop.permute.xlu0 %8271
      %8275 = vset.pattern.permute.xlu0 0
      %8276 = vperm.xlu0 %8275, %v8042
      %v8277 = vpop.permute.xlu0 %8276
      %8280 = vset.pattern.permute.xlu0 0
      %8281 = vperm.xlu0 %8280, %v8043
      %v8282 = vpop.permute.xlu0 %8281
      %8285 = vset.pattern.permute.xlu0 0
      %8286 = vperm.xlu0 %8285, %v8044
      %v8287 = vpop.permute.xlu0 %8286
      %8290 = vset.pattern.permute.xlu0 0
      %8291 = vperm.xlu0 %8290, %v8045
      %v8292 = vpop.permute.xlu0 %8291
      %8295 = vset.pattern.permute.xlu0 0
      %8296 = vperm.xlu0 %8295, %v8046
      %v8297 = vpop.permute.xlu0 %8296
      %8300 = vset.pattern.permute.xlu0 0
      %8301 = vperm.xlu0 %8300, %v8047
      %v8302 = vpop.permute.xlu0 %8301
      %8305 = vset.pattern.permute.xlu0 0
      %8306 = vperm.xlu0 %8305, %v8048
      %v8307 = vpop.permute.xlu0 %8306
      %8310 = vset.pattern.permute.xlu0 0
      %8311 = vperm.xlu0 %8310, %v8049
      %v8312 = vpop.permute.xlu0 %8311
      %8315 = vset.pattern.permute.xlu0 0
      %8316 = vperm.xlu0 %8315, %v8050
      %v8317 = vpop.permute.xlu0 %8316
      %8320 = vset.pattern.permute.xlu0 0
      %8321 = vperm.xlu0 %8320, %v8051
      %v8322 = vpop.permute.xlu0 %8321
      %8325 = vset.pattern.permute.xlu0 0
      %8326 = vperm.xlu0 %8325, %v8052
      %v8327 = vpop.permute.xlu0 %8326
      %8330 = vset.pattern.permute.xlu0 0
      %8331 = vperm.xlu0 %8330, %v8053
      %v8332 = vpop.permute.xlu0 %8331
      %8335 = vset.pattern.permute.xlu0 0
      %8336 = vperm.xlu0 %8335, %v8054
      %v8337 = vpop.permute.xlu0 %8336
      %8340 = vset.pattern.permute.xlu0 0
      %8341 = vperm.xlu0 %8340, %v8055
      %v8342 = vpop.permute.xlu0 %8341
      %8345 = vset.pattern.permute.xlu0 0
      %8346 = vperm.xlu0 %8345, %v8056
      %v8347 = vpop.permute.xlu0 %8346
      %8350 = vset.pattern.permute.xlu0 0
      %8351 = vperm.xlu0 %8350, %v8057
      %v8352 = vpop.permute.xlu0 %8351
      %8355 = vset.pattern.permute.xlu0 0
      %8356 = vperm.xlu0 %8355, %v8058
      %v8357 = vpop.permute.xlu0 %8356
      %8360 = vset.pattern.permute.xlu0 0
      %8361 = vperm.xlu0 %8360, %v8059
      %v8362 = vpop.permute.xlu0 %8361
      %8365 = vset.pattern.permute.xlu0 0
      %8366 = vperm.xlu0 %8365, %v8060
      %v8367 = vpop.permute.xlu0 %8366
      %8370 = vset.pattern.permute.xlu0 0
      %8371 = vperm.xlu0 %8370, %v8061
      %v8372 = vpop.permute.xlu0 %8371
      %8375 = vset.pattern.permute.xlu0 0
      %8376 = vperm.xlu0 %8375, %v8062
      %v8377 = vpop.permute.xlu0 %8376
      %8380 = vset.pattern.permute.xlu0 0
      %8381 = vperm.xlu0 %8380, %v8063
      %v8382 = vpop.permute.xlu0 %8381
      %v8384 = vmul.f32 %v8067, %v7682
      %v8385 = vmul.f32 %v8072, %v7687
      %v8386 = vmul.f32 %v8077, %v7692
      %v8387 = vmul.f32 %v8082, %v7697
      %v8388 = vmul.f32 %v8087, %v7702
      %v8389 = vmul.f32 %v8092, %v7707
      %v8390 = vmul.f32 %v8097, %v7712
      %v8391 = vmul.f32 %v8102, %v7717
      %v8392 = vmul.f32 %v8107, %v7722
      %v8393 = vmul.f32 %v8112, %v7727
      %v8394 = vmul.f32 %v8117, %v7732
      %v8395 = vmul.f32 %v8122, %v7737
      %v8396 = vmul.f32 %v8127, %v7742
      %v8397 = vmul.f32 %v8132, %v7747
      %v8398 = vmul.f32 %v8137, %v7752
      %v8399 = vmul.f32 %v8142, %v7757
      %v8400 = vmul.f32 %v8147, %v7762
      %v8401 = vmul.f32 %v8152, %v7767
      %v8402 = vmul.f32 %v8157, %v7772
      %v8403 = vmul.f32 %v8162, %v7777
      %v8404 = vmul.f32 %v8167, %v7782
      %v8405 = vmul.f32 %v8172, %v7787
      %v8406 = vmul.f32 %v8177, %v7792
      %v8407 = vmul.f32 %v8182, %v7797
      %v8408 = vmul.f32 %v8187, %v7802
      %v8409 = vmul.f32 %v8192, %v7807
      %v8410 = vmul.f32 %v8197, %v7812
      %v8411 = vmul.f32 %v8202, %v7817
      %v8412 = vmul.f32 %v8207, %v7822
      %v8413 = vmul.f32 %v8212, %v7827
      %v8414 = vmul.f32 %v8217, %v7832
      %v8415 = vmul.f32 %v8222, %v7837
      %v8416 = vmul.f32 %v8227, %v7842
      %v8417 = vmul.f32 %v8232, %v7847
      %v8418 = vmul.f32 %v8237, %v7852
      %v8419 = vmul.f32 %v8242, %v7857
      %v8420 = vmul.f32 %v8247, %v7862
      %v8421 = vmul.f32 %v8252, %v7867
      %v8422 = vmul.f32 %v8257, %v7872
      %v8423 = vmul.f32 %v8262, %v7877
      %v8424 = vmul.f32 %v8267, %v7882
      %v8425 = vmul.f32 %v8272, %v7887
      %v8426 = vmul.f32 %v8277, %v7892
      %v8427 = vmul.f32 %v8282, %v7897
      %v8428 = vmul.f32 %v8287, %v7902
      %v8429 = vmul.f32 %v8292, %v7907
      %v8430 = vmul.f32 %v8297, %v7912
      %v8431 = vmul.f32 %v8302, %v7917
      %v8432 = vmul.f32 %v8307, %v7922
      %v8433 = vmul.f32 %v8312, %v7927
      %v8434 = vmul.f32 %v8317, %v7932
      %v8435 = vmul.f32 %v8322, %v7937
      %v8436 = vmul.f32 %v8327, %v7942
      %v8437 = vmul.f32 %v8332, %v7947
      %v8438 = vmul.f32 %v8337, %v7952
      %v8439 = vmul.f32 %v8342, %v7957
      %v8440 = vmul.f32 %v8347, %v7962
      %v8441 = vmul.f32 %v8352, %v7967
      %v8442 = vmul.f32 %v8357, %v7972
      %v8443 = vmul.f32 %v8362, %v7977
      %v8444 = vmul.f32 %v8367, %v7982
      %v8445 = vmul.f32 %v8372, %v7987
      %v8446 = vmul.f32 %v8377, %v7992
      %v8447 = vmul.f32 %v8382, %v7997
      %v8448 = vadd.f32 %v8384, %v5252
      %v8449 = vadd.f32 %v8385, %v5261
      %v8450 = vadd.f32 %v8386, %v5270
      %v8451 = vadd.f32 %v8387, %v5279
      %v8452 = vadd.f32 %v8388, %v5288
      %v8453 = vadd.f32 %v8389, %v5297
      %v8454 = vadd.f32 %v8390, %v5306
      %v8455 = vadd.f32 %v8391, %v5315
      %v8456 = vadd.f32 %v8392, %v5324
      %v8457 = vadd.f32 %v8393, %v5333
      %v8458 = vadd.f32 %v8394, %v5342
      %v8459 = vadd.f32 %v8395, %v5351
      %v8460 = vadd.f32 %v8396, %v5360
      %v8461 = vadd.f32 %v8397, %v5369
      %v8462 = vadd.f32 %v8398, %v5378
      %v8463 = vadd.f32 %v8399, %v5387
      %v8464 = vadd.f32 %v8400, %v5396
      %v8465 = vadd.f32 %v8401, %v5405
      %v8466 = vadd.f32 %v8402, %v5414
      %v8467 = vadd.f32 %v8403, %v5423
      %v8468 = vadd.f32 %v8404, %v5432
      %v8469 = vadd.f32 %v8405, %v5441
      %v8470 = vadd.f32 %v8406, %v5450
      %v8471 = vadd.f32 %v8407, %v5459
      %v8472 = vadd.f32 %v8408, %v5468
      %v8473 = vadd.f32 %v8409, %v5477
      %v8474 = vadd.f32 %v8410, %v5486
      %v8475 = vadd.f32 %v8411, %v5495
      %v8476 = vadd.f32 %v8412, %v5504
      %v8477 = vadd.f32 %v8413, %v5513
      %v8478 = vadd.f32 %v8414, %v5522
      %v8479 = vadd.f32 %v8415, %v5531
      %v8480 = vadd.f32 %v8416, %v5540
      %v8481 = vadd.f32 %v8417, %v5549
      %v8482 = vadd.f32 %v8418, %v5558
      %v8483 = vadd.f32 %v8419, %v5567
      %v8484 = vadd.f32 %v8420, %v5576
      %v8485 = vadd.f32 %v8421, %v5585
      %v8486 = vadd.f32 %v8422, %v5594
      %v8487 = vadd.f32 %v8423, %v5603
      %v8488 = vadd.f32 %v8424, %v5612
      %v8489 = vadd.f32 %v8425, %v5621
      %v8490 = vadd.f32 %v8426, %v5630
      %v8491 = vadd.f32 %v8427, %v5639
      %v8492 = vadd.f32 %v8428, %v5648
      %v8493 = vadd.f32 %v8429, %v5657
      %v8494 = vadd.f32 %v8430, %v5666
      %v8495 = vadd.f32 %v8431, %v5675
      %v8496 = vadd.f32 %v8432, %v5684
      %v8497 = vadd.f32 %v8433, %v5693
      %v8498 = vadd.f32 %v8434, %v5702
      %v8499 = vadd.f32 %v8435, %v5711
      %v8500 = vadd.f32 %v8436, %v5720
      %v8501 = vadd.f32 %v8437, %v5729
      %v8502 = vadd.f32 %v8438, %v5738
      %v8503 = vadd.f32 %v8439, %v5747
      %v8504 = vadd.f32 %v8440, %v5756
      %v8505 = vadd.f32 %v8441, %v5765
      %v8506 = vadd.f32 %v8442, %v5774
      %v8507 = vadd.f32 %v8443, %v5783
      %v8508 = vadd.f32 %v8444, %v5792
      %v8509 = vadd.f32 %v8445, %v5801
      %v8510 = vadd.f32 %v8446, %v5810
      %v8511 = vadd.f32 %v8447, %v5819
      %v8512 = vlaneseq
      %v8513 = vshrl.u32 %v8512, 7
      %v8514 = vadd.s32 %v8513, 8
      %v8515 = vadd.s32 %v8513, 16
      %v8516 = vadd.s32 %v8513, 24
      %v8517 = vadd.s32 %v8513, 32
      %v8518 = vadd.s32 %v8513, 40
      %v8519 = vadd.s32 %v8513, 48
      %v8520 = vadd.s32 %v8513, 56
      %v8521 = vadd.s32 %v8513, 64
      %v8522 = vadd.s32 %v8513, 72
      %v8523 = vadd.s32 %v8513, 80
      %v8524 = vadd.s32 %v8513, 88
      %v8525 = vadd.s32 %v8513, 96
      %v8526 = vadd.s32 %v8513, 104
      %v8527 = vadd.s32 %v8513, 112
      %v8528 = vadd.s32 %v8513, 120
      %v8529 = vld [vmem:[%s403] sm:$0xf]
      %v8530 = vlaneseq
      %v8531 = vshrl.u32 %v8530, 7
      %v8532 = vsub.s32 0, %v8531
      %v8533 = vrot.slane %v8529, %v8532
      %v8534 = vlaneseq
      %v8535 = vshrl.u32 %v8534, 7
      %v8536 = vsub.s32 1, %v8535
      %v8537 = vrot.slane %v8529, %v8536
      %v8538 = vlaneseq
      %v8539 = vshrl.u32 %v8538, 7
      %v8540 = vsub.s32 2, %v8539
      %v8541 = vrot.slane %v8529, %v8540
      %v8542 = vlaneseq
      %v8543 = vshrl.u32 %v8542, 7
      %v8544 = vsub.s32 3, %v8543
      %v8545 = vrot.slane %v8529, %v8544
      %vm8546 = vcmp.eq.s32.totalorder %v8533, %v8513
      %vm8547 = vcmp.eq.s32.totalorder %v8537, %v8513
      %vm8548 = vcmp.eq.s32.totalorder %v8541, %v8513
      %vm8549 = vcmp.eq.s32.totalorder %v8545, %v8513
      %vm8550 = vcmp.eq.s32.totalorder %v8533, %v8514
      %vm8551 = vcmp.eq.s32.totalorder %v8537, %v8514
      %vm8552 = vcmp.eq.s32.totalorder %v8541, %v8514
      %vm8553 = vcmp.eq.s32.totalorder %v8545, %v8514
      %vm8554 = vcmp.eq.s32.totalorder %v8533, %v8515
      %vm8555 = vcmp.eq.s32.totalorder %v8537, %v8515
      %vm8556 = vcmp.eq.s32.totalorder %v8541, %v8515
      %vm8557 = vcmp.eq.s32.totalorder %v8545, %v8515
      %vm8558 = vcmp.eq.s32.totalorder %v8533, %v8516
      %vm8559 = vcmp.eq.s32.totalorder %v8537, %v8516
      %vm8560 = vcmp.eq.s32.totalorder %v8541, %v8516
      %vm8561 = vcmp.eq.s32.totalorder %v8545, %v8516
      %vm8562 = vcmp.eq.s32.totalorder %v8533, %v8517
      %vm8563 = vcmp.eq.s32.totalorder %v8537, %v8517
      %vm8564 = vcmp.eq.s32.totalorder %v8541, %v8517
      %vm8565 = vcmp.eq.s32.totalorder %v8545, %v8517
      %vm8566 = vcmp.eq.s32.totalorder %v8533, %v8518
      %vm8567 = vcmp.eq.s32.totalorder %v8537, %v8518
      %vm8568 = vcmp.eq.s32.totalorder %v8541, %v8518
      %vm8569 = vcmp.eq.s32.totalorder %v8545, %v8518
      %vm8570 = vcmp.eq.s32.totalorder %v8533, %v8519
      %vm8571 = vcmp.eq.s32.totalorder %v8537, %v8519
      %vm8572 = vcmp.eq.s32.totalorder %v8541, %v8519
      %vm8573 = vcmp.eq.s32.totalorder %v8545, %v8519
      %vm8574 = vcmp.eq.s32.totalorder %v8533, %v8520
      %vm8575 = vcmp.eq.s32.totalorder %v8537, %v8520
      %vm8576 = vcmp.eq.s32.totalorder %v8541, %v8520
      %vm8577 = vcmp.eq.s32.totalorder %v8545, %v8520
      %vm8578 = vcmp.eq.s32.totalorder %v8533, %v8521
      %vm8579 = vcmp.eq.s32.totalorder %v8537, %v8521
      %vm8580 = vcmp.eq.s32.totalorder %v8541, %v8521
      %vm8581 = vcmp.eq.s32.totalorder %v8545, %v8521
      %vm8582 = vcmp.eq.s32.totalorder %v8533, %v8522
      %vm8583 = vcmp.eq.s32.totalorder %v8537, %v8522
      %vm8584 = vcmp.eq.s32.totalorder %v8541, %v8522
      %vm8585 = vcmp.eq.s32.totalorder %v8545, %v8522
      %vm8586 = vcmp.eq.s32.totalorder %v8533, %v8523
      %vm8587 = vcmp.eq.s32.totalorder %v8537, %v8523
      %vm8588 = vcmp.eq.s32.totalorder %v8541, %v8523
      %vm8589 = vcmp.eq.s32.totalorder %v8545, %v8523
      %vm8590 = vcmp.eq.s32.totalorder %v8533, %v8524
      %vm8591 = vcmp.eq.s32.totalorder %v8537, %v8524
      %vm8592 = vcmp.eq.s32.totalorder %v8541, %v8524
      %vm8593 = vcmp.eq.s32.totalorder %v8545, %v8524
      %vm8594 = vcmp.eq.s32.totalorder %v8533, %v8525
      %vm8595 = vcmp.eq.s32.totalorder %v8537, %v8525
      %vm8596 = vcmp.eq.s32.totalorder %v8541, %v8525
      %vm8597 = vcmp.eq.s32.totalorder %v8545, %v8525
      %vm8598 = vcmp.eq.s32.totalorder %v8533, %v8526
      %vm8599 = vcmp.eq.s32.totalorder %v8537, %v8526
      %vm8600 = vcmp.eq.s32.totalorder %v8541, %v8526
      %vm8601 = vcmp.eq.s32.totalorder %v8545, %v8526
      %vm8602 = vcmp.eq.s32.totalorder %v8533, %v8527
      %vm8603 = vcmp.eq.s32.totalorder %v8537, %v8527
      %vm8604 = vcmp.eq.s32.totalorder %v8541, %v8527
      %vm8605 = vcmp.eq.s32.totalorder %v8545, %v8527
      %vm8606 = vcmp.eq.s32.totalorder %v8533, %v8528
      %vm8607 = vcmp.eq.s32.totalorder %v8537, %v8528
      %vm8608 = vcmp.eq.s32.totalorder %v8541, %v8528
      %vm8609 = vcmp.eq.s32.totalorder %v8545, %v8528
      %v8610 = vsel %vm8546, 1, 0
      %v8611 = vsel %vm8547, 1, 0
      %v8612 = vsel %vm8548, 1, 0
      %v8613 = vsel %vm8549, 1, 0
      %v8614 = vsel %vm8550, 1, 0
      %v8615 = vsel %vm8551, 1, 0
      %v8616 = vsel %vm8552, 1, 0
      %v8617 = vsel %vm8553, 1, 0
      %v8618 = vsel %vm8554, 1, 0
      %v8619 = vsel %vm8555, 1, 0
      %v8620 = vsel %vm8556, 1, 0
      %v8621 = vsel %vm8557, 1, 0
      %v8622 = vsel %vm8558, 1, 0
      %v8623 = vsel %vm8559, 1, 0
      %v8624 = vsel %vm8560, 1, 0
      %v8625 = vsel %vm8561, 1, 0
      %v8626 = vsel %vm8562, 1, 0
      %v8627 = vsel %vm8563, 1, 0
      %v8628 = vsel %vm8564, 1, 0
      %v8629 = vsel %vm8565, 1, 0
      %v8630 = vsel %vm8566, 1, 0
      %v8631 = vsel %vm8567, 1, 0
      %v8632 = vsel %vm8568, 1, 0
      %v8633 = vsel %vm8569, 1, 0
      %v8634 = vsel %vm8570, 1, 0
      %v8635 = vsel %vm8571, 1, 0
      %v8636 = vsel %vm8572, 1, 0
      %v8637 = vsel %vm8573, 1, 0
      %v8638 = vsel %vm8574, 1, 0
      %v8639 = vsel %vm8575, 1, 0
      %v8640 = vsel %vm8576, 1, 0
      %v8641 = vsel %vm8577, 1, 0
      %v8642 = vsel %vm8578, 1, 0
      %v8643 = vsel %vm8579, 1, 0
      %v8644 = vsel %vm8580, 1, 0
      %v8645 = vsel %vm8581, 1, 0
      %v8646 = vsel %vm8582, 1, 0
      %v8647 = vsel %vm8583, 1, 0
      %v8648 = vsel %vm8584, 1, 0
      %v8649 = vsel %vm8585, 1, 0
      %v8650 = vsel %vm8586, 1, 0
      %v8651 = vsel %vm8587, 1, 0
      %v8652 = vsel %vm8588, 1, 0
      %v8653 = vsel %vm8589, 1, 0
      %v8654 = vsel %vm8590, 1, 0
      %v8655 = vsel %vm8591, 1, 0
      %v8656 = vsel %vm8592, 1, 0
      %v8657 = vsel %vm8593, 1, 0
      %v8658 = vsel %vm8594, 1, 0
      %v8659 = vsel %vm8595, 1, 0
      %v8660 = vsel %vm8596, 1, 0
      %v8661 = vsel %vm8597, 1, 0
      %v8662 = vsel %vm8598, 1, 0
      %v8663 = vsel %vm8599, 1, 0
      %v8664 = vsel %vm8600, 1, 0
      %v8665 = vsel %vm8601, 1, 0
      %v8666 = vsel %vm8602, 1, 0
      %v8667 = vsel %vm8603, 1, 0
      %v8668 = vsel %vm8604, 1, 0
      %v8669 = vsel %vm8605, 1, 0
      %v8670 = vsel %vm8606, 1, 0
      %v8671 = vsel %vm8607, 1, 0
      %v8672 = vsel %vm8608, 1, 0
      %v8673 = vsel %vm8609, 1, 0
      %v8674 = vcvt.s32.f32 %v8610
      %v8675 = vcvt.s32.f32 %v8611
      %v8676 = vcvt.s32.f32 %v8612
      %v8677 = vcvt.s32.f32 %v8613
      %v8678 = vcvt.s32.f32 %v8614
      %v8679 = vcvt.s32.f32 %v8615
      %v8680 = vcvt.s32.f32 %v8616
      %v8681 = vcvt.s32.f32 %v8617
      %v8682 = vcvt.s32.f32 %v8618
      %v8683 = vcvt.s32.f32 %v8619
      %v8684 = vcvt.s32.f32 %v8620
      %v8685 = vcvt.s32.f32 %v8621
      %v8686 = vcvt.s32.f32 %v8622
      %v8687 = vcvt.s32.f32 %v8623
      %v8688 = vcvt.s32.f32 %v8624
      %v8689 = vcvt.s32.f32 %v8625
      %v8690 = vcvt.s32.f32 %v8626
      %v8691 = vcvt.s32.f32 %v8627
      %v8692 = vcvt.s32.f32 %v8628
      %v8693 = vcvt.s32.f32 %v8629
      %v8694 = vcvt.s32.f32 %v8630
      %v8695 = vcvt.s32.f32 %v8631
      %v8696 = vcvt.s32.f32 %v8632
      %v8697 = vcvt.s32.f32 %v8633
      %v8698 = vcvt.s32.f32 %v8634
      %v8699 = vcvt.s32.f32 %v8635
      %v8700 = vcvt.s32.f32 %v8636
      %v8701 = vcvt.s32.f32 %v8637
      %v8702 = vcvt.s32.f32 %v8638
      %v8703 = vcvt.s32.f32 %v8639
      %v8704 = vcvt.s32.f32 %v8640
      %v8705 = vcvt.s32.f32 %v8641
      %v8706 = vcvt.s32.f32 %v8642
      %v8707 = vcvt.s32.f32 %v8643
      %v8708 = vcvt.s32.f32 %v8644
      %v8709 = vcvt.s32.f32 %v8645
      %v8710 = vcvt.s32.f32 %v8646
      %v8711 = vcvt.s32.f32 %v8647
      %v8712 = vcvt.s32.f32 %v8648
      %v8713 = vcvt.s32.f32 %v8649
      %v8714 = vcvt.s32.f32 %v8650
      %v8715 = vcvt.s32.f32 %v8651
      %v8716 = vcvt.s32.f32 %v8652
      %v8717 = vcvt.s32.f32 %v8653
      %v8718 = vcvt.s32.f32 %v8654
      %v8719 = vcvt.s32.f32 %v8655
      %v8720 = vcvt.s32.f32 %v8656
      %v8721 = vcvt.s32.f32 %v8657
      %v8722 = vcvt.s32.f32 %v8658
      %v8723 = vcvt.s32.f32 %v8659
      %v8724 = vcvt.s32.f32 %v8660
      %v8725 = vcvt.s32.f32 %v8661
      %v8726 = vcvt.s32.f32 %v8662
      %v8727 = vcvt.s32.f32 %v8663
      %v8728 = vcvt.s32.f32 %v8664
      %v8729 = vcvt.s32.f32 %v8665
      %v8730 = vcvt.s32.f32 %v8666
      %v8731 = vcvt.s32.f32 %v8667
      %v8732 = vcvt.s32.f32 %v8668
      %v8733 = vcvt.s32.f32 %v8669
      %v8734 = vcvt.s32.f32 %v8670
      %v8735 = vcvt.s32.f32 %v8671
      %v8736 = vcvt.s32.f32 %v8672
      %v8737 = vcvt.s32.f32 %v8673
      %v8738 = vld [vmem:[%s410] sm:$0xff]
      %v8739 = vld [vmem:[%s410 + $0x8] sm:$0xff]
      %v8740 = vld [vmem:[%s410 + $0x10] sm:$0xff]
      %v8741 = vld [vmem:[%s410 + $0x18] sm:$0xff]
      %v8742 = vld [vmem:[%s410 + $0x20] sm:$0xff]
      %v8743 = vld [vmem:[%s410 + $0x28] sm:$0xff]
      %v8744 = vld [vmem:[%s410 + $0x30] sm:$0xff]
      %v8745 = vld [vmem:[%s410 + $0x38] sm:$0xff]
      %v8746 = vld [vmem:[%s410 + $0x40] sm:$0xff]
      %v8747 = vld [vmem:[%s410 + $0x48] sm:$0xff]
      %v8748 = vld [vmem:[%s410 + $0x50] sm:$0xff]
      %v8749 = vld [vmem:[%s410 + $0x58] sm:$0xff]
      %v8750 = vld [vmem:[%s410 + $0x60] sm:$0xff]
      %v8751 = vld [vmem:[%s410 + $0x68] sm:$0xff]
      %v8752 = vld [vmem:[%s410 + $0x70] sm:$0xff]
      %v8753 = vld [vmem:[%s410 + $0x78] sm:$0xff]
      %8754 = vmatprep.subr.mxu0 0.0
      %8755 = vmatpush1.msra.mxu0 %v8448
      %8756 = vmatprep.subr.mxu0 0.0
      %8757 = vmatpush1.msra.mxu0 %v8449
      %8758 = vmatprep.subr.mxu0 0.0
      %8759 = vmatpush1.msra.mxu0 %v8450
      %8760 = vmatprep.subr.mxu0 0.0
      %8761 = vmatpush1.msra.mxu0 %v8451
      %8762 = vmatprep.subr.mxu0 0.0
      %8763 = vmatpush1.msra.mxu0 %v8452
      %8764 = vmatprep.subr.mxu0 0.0
      %8765 = vmatpush1.msra.mxu0 %v8453
      %8766 = vmatprep.subr.mxu0 0.0
      %8767 = vmatpush1.msra.mxu0 %v8454
      %8768 = vmatprep.subr.mxu0 0.0
      %8769 = vmatpush1.msra.mxu0 %v8455
      %8770 = vmatprep.subr.mxu0 0.0
      %8771 = vmatpush1.msra.mxu0 %v8456
      %8772 = vmatprep.subr.mxu0 0.0
      %8773 = vmatpush1.msra.mxu0 %v8457
      %8774 = vmatprep.subr.mxu0 0.0
      %8775 = vmatpush1.msra.mxu0 %v8458
      %8776 = vmatprep.subr.mxu0 0.0
      %8777 = vmatpush1.msra.mxu0 %v8459
      %8778 = vmatprep.subr.mxu0 0.0
      %8779 = vmatpush1.msra.mxu0 %v8460
      %8780 = vmatprep.subr.mxu0 0.0
      %8781 = vmatpush1.msra.mxu0 %v8461
      %8782 = vmatprep.subr.mxu0 0.0
      %8783 = vmatpush1.msra.mxu0 %v8462
      %8784 = vmatprep.subr.mxu0 0.0
      %8785 = vmatpush1.msra.mxu0 %v8463
      %8786 = vmatprep.subr.mxu0 0.0
      %8787 = vmatpush1.msra.mxu0 %v8464
      %8788 = vmatprep.subr.mxu0 0.0
      %8789 = vmatpush1.msra.mxu0 %v8465
      %8790 = vmatprep.subr.mxu0 0.0
      %8791 = vmatpush1.msra.mxu0 %v8466
      %8792 = vmatprep.subr.mxu0 0.0
      %8793 = vmatpush1.msra.mxu0 %v8467
      %8794 = vmatprep.subr.mxu0 0.0
      %8795 = vmatpush1.msra.mxu0 %v8468
      %8796 = vmatprep.subr.mxu0 0.0
      %8797 = vmatpush1.msra.mxu0 %v8469
      %8798 = vmatprep.subr.mxu0 0.0
      %8799 = vmatpush1.msra.mxu0 %v8470
      %8800 = vmatprep.subr.mxu0 0.0
      %8801 = vmatpush1.msra.mxu0 %v8471
      %8802 = vmatprep.subr.mxu0 0.0
      %8803 = vmatpush1.msra.mxu0 %v8472
      %8804 = vmatprep.subr.mxu0 0.0
      %8805 = vmatpush1.msra.mxu0 %v8473
      %8806 = vmatprep.subr.mxu0 0.0
      %8807 = vmatpush1.msra.mxu0 %v8474
      %8808 = vmatprep.subr.mxu0 0.0
      %8809 = vmatpush1.msra.mxu0 %v8475
      %8810 = vmatprep.subr.mxu0 0.0
      %8811 = vmatpush1.msra.mxu0 %v8476
      %8812 = vmatprep.subr.mxu0 0.0
      %8813 = vmatpush1.msra.mxu0 %v8477
      %8814 = vmatprep.subr.mxu0 0.0
      %8815 = vmatpush1.msra.mxu0 %v8478
      %8816 = vmatprep.subr.mxu0 0.0
      %8817 = vmatpush1.msra.mxu0 %v8479
      %8818 = vmatprep.mubr.f32.mxu0 %v8675
      %8819 = vmatmul.mubr.f32.gmra.mrb[0].mxu0 %v8674
      %v8820 = vpop.f32.mrb[0].mxu0
      %v8821 = vadd.f32 0.0, %v8820
      %v8822 = vpop.f32.mrb[0].mxu0
      %8823 = vmatprep.mubr.f32.mxu0 %v8679
      %8824 = vmatmul.mubr.f32.gmra.mrb[0].mxu0 %v8678
      %v8825 = vpop.f32.mrb[0].mxu0
      %v8826 = vadd.f32 0.0, %v8825
      %v8827 = vpop.f32.mrb[0].mxu0
      %8828 = vmatprep.mubr.f32.mxu0 %v8683
      %8829 = vmatmul.mubr.f32.gmra.mrb[0].mxu0 %v8682
      %v8830 = vpop.f32.mrb[0].mxu0
      %v8831 = vadd.f32 0.0, %v8830
      %v8832 = vpop.f32.mrb[0].mxu0
      %8833 = vmatprep.mubr.f32.mxu0 %v8687
      %8834 = vmatmul.mubr.f32.gmra.mrb[0].mxu0 %v8686
      %v8835 = vpop.f32.mrb[0].mxu0
      %v8836 = vadd.f32 0.0, %v8835
      %v8837 = vpop.f32.mrb[0].mxu0
      %8838 = vmatprep.mubr.f32.mxu0 %v8691
      %8839 = vmatmul.mubr.f32.gmra.mrb[0].mxu0 %v8690
      %v8840 = vpop.f32.mrb[0].mxu0
      %v8841 = vadd.f32 0.0, %v8840
      %v8842 = vpop.f32.mrb[0].mxu0
      %8843 = vmatprep.mubr.f32.mxu0 %v8695
      %8844 = vmatmul.mubr.f32.gmra.mrb[0].mxu0 %v8694
      %v8845 = vpop.f32.mrb[0].mxu0
      %v8846 = vadd.f32 0.0, %v8845
      %v8847 = vpop.f32.mrb[0].mxu0
      %8848 = vmatprep.mubr.f32.mxu0 %v8699
      %8849 = vmatmul.mubr.f32.gmra.mrb[0].mxu0 %v8698
      %v8850 = vpop.f32.mrb[0].mxu0
      %v8851 = vadd.f32 0.0, %v8850
      %v8852 = vpop.f32.mrb[0].mxu0
      %8853 = vmatprep.mubr.f32.mxu0 %v8703
      %8854 = vmatmul.mubr.f32.gmra.mrb[0].mxu0 %v8702
      %v8855 = vpop.f32.mrb[0].mxu0
      %v8856 = vadd.f32 0.0, %v8855
      %v8857 = vpop.f32.mrb[0].mxu0
      %8858 = vmatprep.mubr.f32.mxu0 %v8707
      %8859 = vmatmul.mubr.f32.gmra.mrb[0].mxu0 %v8706
      %v8860 = vpop.f32.mrb[0].mxu0
      %v8861 = vadd.f32 0.0, %v8860
      %v8862 = vpop.f32.mrb[0].mxu0
      %8863 = vmatprep.mubr.f32.mxu0 %v8711
      %8864 = vmatmul.mubr.f32.gmra.mrb[0].mxu0 %v8710
      %v8865 = vpop.f32.mrb[0].mxu0
      %v8866 = vadd.f32 0.0, %v8865
      %v8867 = vpop.f32.mrb[0].mxu0
      %8868 = vmatprep.mubr.f32.mxu0 %v8715
      %8869 = vmatmul.mubr.f32.gmra.mrb[0].mxu0 %v8714
      %v8870 = vpop.f32.mrb[0].mxu0
      %v8871 = vadd.f32 0.0, %v8870
      %v8872 = vpop.f32.mrb[0].mxu0
      %8873 = vmatprep.mubr.f32.mxu0 %v8719
      %8874 = vmatmul.mubr.f32.gmra.mrb[0].mxu0 %v8718
      %v8875 = vpop.f32.mrb[0].mxu0
      %v8876 = vadd.f32 0.0, %v8875
      %v8877 = vpop.f32.mrb[0].mxu0
      %8878 = vmatprep.mubr.f32.mxu0 %v8723
      %8879 = vmatmul.mubr.f32.gmra.mrb[0].mxu0 %v8722
      %v8880 = vpop.f32.mrb[0].mxu0
      %v8881 = vadd.f32 0.0, %v8880
      %v8882 = vpop.f32.mrb[0].mxu0
      %8883 = vmatprep.mubr.f32.mxu0 %v8727
      %8884 = vmatmul.mubr.f32.gmra.mrb[0].mxu0 %v8726
      %v8885 = vpop.f32.mrb[0].mxu0
      %v8886 = vadd.f32 0.0, %v8885
      %v8887 = vpop.f32.mrb[0].mxu0
      %8888 = vmatprep.mubr.f32.mxu0 %v8731
      %8889 = vmatmul.mubr.f32.gmra.mrb[0].mxu0 %v8730
      %v8890 = vpop.f32.mrb[0].mxu0
      %v8891 = vadd.f32 0.0, %v8890
      %v8892 = vpop.f32.mrb[0].mxu0
      %8893 = vmatprep.mubr.f32.mxu0 %v8735
      %8894 = vmatmul.mubr.f32.gmra.mrb[0].mxu0 %v8734
      %v8895 = vpop.f32.mrb[0].mxu0
      %v8896 = vadd.f32 0.0, %v8895
      %v8897 = vpop.f32.mrb[0].mxu0
      %8898 = vdwg.mxu0
      %8899 = vmatprep.subr.mxu0 0.0
      %8900 = vmatpush1.msra.mxu0 %v8480
      %8901 = vmatprep.subr.mxu0 0.0
      %8902 = vmatpush1.msra.mxu0 %v8481
      %8903 = vmatprep.subr.mxu0 0.0
      %8904 = vmatpush1.msra.mxu0 %v8482
      %8905 = vmatprep.subr.mxu0 0.0
      %8906 = vmatpush1.msra.mxu0 %v8483
      %8907 = vmatprep.subr.mxu0 0.0
      %8908 = vmatpush1.msra.mxu0 %v8484
      %8909 = vmatprep.subr.mxu0 0.0
      %8910 = vmatpush1.msra.mxu0 %v8485
      %8911 = vmatprep.subr.mxu0 0.0
      %8912 = vmatpush1.msra.mxu0 %v8486
      %8913 = vmatprep.subr.mxu0 0.0
      %8914 = vmatpush1.msra.mxu0 %v8487
      %8915 = vmatprep.subr.mxu0 0.0
      %8916 = vmatpush1.msra.mxu0 %v8488
      %8917 = vmatprep.subr.mxu0 0.0
      %8918 = vmatpush1.msra.mxu0 %v8489
      %8919 = vmatprep.subr.mxu0 0.0
      %8920 = vmatpush1.msra.mxu0 %v8490
      %8921 = vmatprep.subr.mxu0 0.0
      %8922 = vmatpush1.msra.mxu0 %v8491
      %8923 = vmatprep.subr.mxu0 0.0
      %8924 = vmatpush1.msra.mxu0 %v8492
      %8925 = vmatprep.subr.mxu0 0.0
      %8926 = vmatpush1.msra.mxu0 %v8493
      %8927 = vmatprep.subr.mxu0 0.0
      %8928 = vmatpush1.msra.mxu0 %v8494
      %8929 = vmatprep.subr.mxu0 0.0
      %8930 = vmatpush1.msra.mxu0 %v8495
      %8931 = vmatprep.subr.mxu0 0.0
      %8932 = vmatpush1.msra.mxu0 %v8496
      %8933 = vmatprep.subr.mxu0 0.0
      %8934 = vmatpush1.msra.mxu0 %v8497
      %8935 = vmatprep.subr.mxu0 0.0
      %8936 = vmatpush1.msra.mxu0 %v8498
      %8937 = vmatprep.subr.mxu0 0.0
      %8938 = vmatpush1.msra.mxu0 %v8499
      %8939 = vmatprep.subr.mxu0 0.0
      %8940 = vmatpush1.msra.mxu0 %v8500
      %8941 = vmatprep.subr.mxu0 0.0
      %8942 = vmatpush1.msra.mxu0 %v8501
      %8943 = vmatprep.subr.mxu0 0.0
      %8944 = vmatpush1.msra.mxu0 %v8502
      %8945 = vmatprep.subr.mxu0 0.0
      %8946 = vmatpush1.msra.mxu0 %v8503
      %8947 = vmatprep.subr.mxu0 0.0
      %8948 = vmatpush1.msra.mxu0 %v8504
      %8949 = vmatprep.subr.mxu0 0.0
      %8950 = vmatpush1.msra.mxu0 %v8505
      %8951 = vmatprep.subr.mxu0 0.0
      %8952 = vmatpush1.msra.mxu0 %v8506
      %8953 = vmatprep.subr.mxu0 0.0
      %8954 = vmatpush1.msra.mxu0 %v8507
      %8955 = vmatprep.subr.mxu0 0.0
      %8956 = vmatpush1.msra.mxu0 %v8508
      %8957 = vmatprep.subr.mxu0 0.0
      %8958 = vmatpush1.msra.mxu0 %v8509
      %8959 = vmatprep.subr.mxu0 0.0
      %8960 = vmatpush1.msra.mxu0 %v8510
      %8961 = vmatprep.subr.mxu0 0.0
      %8962 = vmatpush1.msra.mxu0 %v8511
      %8963 = vmatprep.mubr.f32.mxu0 %v8677
      %8964 = vmatmul.mubr.f32.gmra.mrb[0].mxu0 %v8676
      %v8965 = vpop.f32.mrb[0].mxu0
      %v8966 = vadd.f32 %v8821, %v8965
      %v8967 = vpop.f32.mrb[0].mxu0
      %8968 = vmatprep.mubr.f32.mxu0 %v8681
      %8969 = vmatmul.mubr.f32.gmra.mrb[0].mxu0 %v8680
      %v8970 = vpop.f32.mrb[0].mxu0
      %v8971 = vadd.f32 %v8826, %v8970
      %v8972 = vpop.f32.mrb[0].mxu0
      %8973 = vmatprep.mubr.f32.mxu0 %v8685
      %8974 = vmatmul.mubr.f32.gmra.mrb[0].mxu0 %v8684
      %v8975 = vpop.f32.mrb[0].mxu0
      %v8976 = vadd.f32 %v8831, %v8975
      %v8977 = vpop.f32.mrb[0].mxu0
      %8978 = vmatprep.mubr.f32.mxu0 %v8689
      %8979 = vmatmul.mubr.f32.gmra.mrb[0].mxu0 %v8688
      %v8980 = vpop.f32.mrb[0].mxu0
      %v8981 = vadd.f32 %v8836, %v8980
      %v8982 = vpop.f32.mrb[0].mxu0
      %8983 = vmatprep.mubr.f32.mxu0 %v8693
      %8984 = vmatmul.mubr.f32.gmra.mrb[0].mxu0 %v8692
      %v8985 = vpop.f32.mrb[0].mxu0
      %v8986 = vadd.f32 %v8841, %v8985
      %v8987 = vpop.f32.mrb[0].mxu0
      %8988 = vmatprep.mubr.f32.mxu0 %v8697
      %8989 = vmatmul.mubr.f32.gmra.mrb[0].mxu0 %v8696
      %v8990 = vpop.f32.mrb[0].mxu0
      %v8991 = vadd.f32 %v8846, %v8990
      %v8992 = vpop.f32.mrb[0].mxu0
      %8993 = vmatprep.mubr.f32.mxu0 %v8701
      %8994 = vmatmul.mubr.f32.gmra.mrb[0].mxu0 %v8700
      %v8995 = vpop.f32.mrb[0].mxu0
      %v8996 = vadd.f32 %v8851, %v8995
      %v8997 = vpop.f32.mrb[0].mxu0
      %8998 = vmatprep.mubr.f32.mxu0 %v8705
      %8999 = vmatmul.mubr.f32.gmra.mrb[0].mxu0 %v8704
      %v9000 = vpop.f32.mrb[0].mxu0
      %v9001 = vadd.f32 %v8856, %v9000
      %v9002 = vpop.f32.mrb[0].mxu0
      %9003 = vmatprep.mubr.f32.mxu0 %v8709
      %9004 = vmatmul.mubr.f32.gmra.mrb[0].mxu0 %v8708
      %v9005 = vpop.f32.mrb[0].mxu0
      %v9006 = vadd.f32 %v8861, %v9005
      %v9007 = vpop.f32.mrb[0].mxu0
      %9008 = vmatprep.mubr.f32.mxu0 %v8713
      %9009 = vmatmul.mubr.f32.gmra.mrb[0].mxu0 %v8712
      %v9010 = vpop.f32.mrb[0].mxu0
      %v9011 = vadd.f32 %v8866, %v9010
      %v9012 = vpop.f32.mrb[0].mxu0
      %9013 = vmatprep.mubr.f32.mxu0 %v8717
      %9014 = vmatmul.mubr.f32.gmra.mrb[0].mxu0 %v8716
      %v9015 = vpop.f32.mrb[0].mxu0
      %v9016 = vadd.f32 %v8871, %v9015
      %v9017 = vpop.f32.mrb[0].mxu0
      %9018 = vmatprep.mubr.f32.mxu0 %v8721
      %9019 = vmatmul.mubr.f32.gmra.mrb[0].mxu0 %v8720
      %v9020 = vpop.f32.mrb[0].mxu0
      %v9021 = vadd.f32 %v8876, %v9020
      %v9022 = vpop.f32.mrb[0].mxu0
      %9023 = vmatprep.mubr.f32.mxu0 %v8725
      %9024 = vmatmul.mubr.f32.gmra.mrb[0].mxu0 %v8724
      %v9025 = vpop.f32.mrb[0].mxu0
      %v9026 = vadd.f32 %v8881, %v9025
      %v9027 = vpop.f32.mrb[0].mxu0
      %9028 = vmatprep.mubr.f32.mxu0 %v8729
      %9029 = vmatmul.mubr.f32.gmra.mrb[0].mxu0 %v8728
      %v9030 = vpop.f32.mrb[0].mxu0
      %v9031 = vadd.f32 %v8886, %v9030
      %v9032 = vpop.f32.mrb[0].mxu0
      %9033 = vmatprep.mubr.f32.mxu0 %v8733
      %9034 = vmatmul.mubr.f32.gmra.mrb[0].mxu0 %v8732
      %v9035 = vpop.f32.mrb[0].mxu0
      %v9036 = vadd.f32 %v8891, %v9035
      %v9037 = vpop.f32.mrb[0].mxu0
      %9038 = vmatprep.mubr.f32.mxu0 %v8737
      %9039 = vmatmul.mubr.f32.gmra.mrb[0].mxu0 %v8736
      %v9040 = vpop.f32.mrb[0].mxu0
      %v9041 = vadd.f32 %v8896, %v9040
      %v9042 = vpop.f32.mrb[0].mxu0
      %9043 = vdwg.mxu0
      %v9044 = vadd.f32 %v8738, %v8966
      %v9045 = vadd.f32 %v8739, %v8971
      %v9046 = vadd.f32 %v8740, %v8976
      %v9047 = vadd.f32 %v8741, %v8981
      %v9048 = vadd.f32 %v8742, %v8986
      %v9049 = vadd.f32 %v8743, %v8991
      %v9050 = vadd.f32 %v8744, %v8996
      %v9051 = vadd.f32 %v8745, %v9001
      %v9052 = vadd.f32 %v8746, %v9006
      %v9053 = vadd.f32 %v8747, %v9011
      %v9054 = vadd.f32 %v8748, %v9016
      %v9055 = vadd.f32 %v8749, %v9021
      %v9056 = vadd.f32 %v8750, %v9026
      %v9057 = vadd.f32 %v8751, %v9031
      %v9058 = vadd.f32 %v8752, %v9036
      %v9059 = vadd.f32 %v8753, %v9041
      %9060 = vst [vmem:[%s410] sm:$0xff] %v9044
      %9061 = vst [vmem:[%s410 + $0x8] sm:$0xff] %v9045
      %9062 = vst [vmem:[%s410 + $0x10] sm:$0xff] %v9046
      %9063 = vst [vmem:[%s410 + $0x18] sm:$0xff] %v9047
      %9064 = vst [vmem:[%s410 + $0x20] sm:$0xff] %v9048
      %9065 = vst [vmem:[%s410 + $0x28] sm:$0xff] %v9049
      %9066 = vst [vmem:[%s410 + $0x30] sm:$0xff] %v9050
      %9067 = vst [vmem:[%s410 + $0x38] sm:$0xff] %v9051
      %9068 = vst [vmem:[%s410 + $0x40] sm:$0xff] %v9052
      %9069 = vst [vmem:[%s410 + $0x48] sm:$0xff] %v9053
      %9070 = vst [vmem:[%s410 + $0x50] sm:$0xff] %v9054
      %9071 = vst [vmem:[%s410 + $0x58] sm:$0xff] %v9055
      %9072 = vst [vmem:[%s410 + $0x60] sm:$0xff] %v9056
      %9073 = vst [vmem:[%s410 + $0x68] sm:$0xff] %v9057
      %9074 = vst [vmem:[%s410 + $0x70] sm:$0xff] %v9058
      %9075 = vst [vmem:[%s410 + $0x78] sm:$0xff] %v9059
      %s9076 = smul.u32 16, %s23
      %p9077 = scmp.lt.s32.totalorder %s9076, 31
      %s9078 = scalar_select %p9077, %s9076, 31
      %s9079 = smul.addr %s9078, 8
      %s9080 = scalar_lea.vmem %s8, %s9079
      // Predicated region
      $region57: #{hybrid_forward.2} parent=51 // pred_check
        %p9081 = pneg %p245
      $region58: #{hybrid_forward.2} parent=51 // pred_check_branch
        %9083 = sbr.rel (%p9081) target = $region60
      $region59: #{hybrid_forward.2} parent=51 // pred_region
        %s9084 = smul.u32 16, %s23
      $region60: #{hybrid_forward.2} parent=51 // pred_fallthru
        _
    $region52: #{hybrid_forward.2} parent=5 // pred_fallthru
      _
    %p9085 = scmp.le.s32.totalorder 2, %s14
    // Predicated region
    $region61: #{hybrid_forward.2} parent=5 // pred_check
      %p9086 = pneg %p9085
    $region62: #{hybrid_forward.2} parent=5 // pred_check_branch
      %9088 = sbr.rel (%p9086) target = $region64
    $region63: #{hybrid_forward.2} parent=5 // pred_region
      %s9089 = ssub.s32 %s14, 2
      // Predicated region
      $region65: #{hybrid_forward.2} parent=63 // pred_check
        %p9090 = pneg %p251
      $region66: #{hybrid_forward.2} parent=63 // pred_check_branch
        %9092 = sbr.rel (%p9090) target = $region68
      $region67: #{hybrid_forward.2} parent=63 // pred_region
        %s9093 = smul.u32 16, %s25
        %p9094 = scmp.lt.s32.totalorder %s9093, 31
        %s9095 = scalar_select %p9094, %s9093, 31
        %s9096 = smul.addr %s9095, 8
        %s9097 = scalar_lea.vmem %s8, %s9096
      $region68: #{hybrid_forward.2} parent=63 // pred_fallthru
        _
    $region64: #{hybrid_forward.2} parent=5 // pred_fallthru
      _
  $region6: #{hybrid_forward.2} parent=0 // loop_footer
    %s18 = sadd.s32 1, %s14
  $region7: #{hybrid_forward.2} parent=0 // loop_footer_branch
    %13 = sbr.rel target = $region3
  $region8: #{hybrid_forward.2} parent=0 // loop_exit
    _

</llo_original>
